<compile_context>
chip_gen: v7x
topology: tpu7x:2x2x1
jax: 0.10.0
libtpu: 0.0.40
codegen_flags: <defaults>
</compile_context>

<pallas_src>
import functools

import jax
import jax.numpy as jnp
from jax import lax
from jax.experimental import pallas as pl
from jax.experimental.pallas import tpu as pltpu

EPS = 1e-5  # PyTorch InstanceNorm1d default eps (affine=False, no running stats)


def _fcn_fused_kernel(xc_ref, w1_ref, w2_ref, w3_ref, o_ref, *, Bb, L, k2, k3):
    """Whole FCN encoder for Bb batch samples, fully VMEM-resident.

    xc_ref : (Bb, L, KC1p)   layer-1 im2col (lane-padded) of the raw input
    w1_ref : (KC1p, 128)     flattened layer-1 weight (zero-padded rows)
    w2_ref : (k2, 128, 256)  per-tap layer-2 weights
    w3_ref : (k3, 256, 128)  per-tap layer-3 weights
    o_ref  : (Bb, 128)       time-mean of the last block's output
    """
    M = Bb * L
    inv_L = 1.0 / L

    # Within-sample time index of every flat row (for 'same'-padding masking).
    t_idx = lax.broadcasted_iota(jnp.int32, (M, 1), 0) % L

    def inst_norm_relu(h_flat, cout):
        # InstanceNorm1d over time (per sample, per channel), single pass.
        h3 = h_flat.reshape(Bb, L, cout)
        s = jnp.sum(h3, axis=1, keepdims=True)             # (Bb, 1, cout)
        sq = jnp.sum(h3 * h3, axis=1, keepdims=True)
        mu = s * inv_L
        var = jnp.maximum(sq * inv_L - mu * mu, 0.0)       # clamp -> no NaN
        y = (h3 - mu) * lax.rsqrt(var + EPS)
        y = jnp.maximum(y, 0.0)                            # ReLU
        return y.reshape(M, cout)

    def conv_taps(h_flat, w_ref, ksize, cout):
        # 'same' Conv1d as per-tap shifted dots accumulated in f32.  Each tap
        # is one sublane roll of the flat (M, Cin) activation; rows whose
        # shifted source falls outside their own sample (including rows that
        # wrapped across a sample boundary) are masked to zero.
        p = (ksize - 1) // 2
        acc = jnp.zeros((M, cout), jnp.float32)
        for k in range(ksize):
            d = k - p
            if d == 0:
                shifted = h_flat
            else:
                shifted = pltpu.roll(h_flat, (-d) % M, axis=0)
                valid = (t_idx + d >= 0) & (t_idx + d < L)
                shifted = jnp.where(valid, shifted, 0.0)
            acc = acc + jnp.dot(shifted, w_ref[k],
                                preferred_element_type=jnp.float32)
        return acc

    # ---- layer 1: im2col built in the wrapper (raw input), one dense dot.
    x = xc_ref[...].reshape(M, xc_ref.shape[-1])
    h = jnp.dot(x, w1_ref[...], preferred_element_type=jnp.float32)
    h = inst_norm_relu(h, 128)

    # ---- layers 2 / 3: roll-based per-tap accumulation (no scratch im2col).
    h = inst_norm_relu(conv_taps(h, w2_ref, k2, 256), 256)
    h = inst_norm_relu(conv_taps(h, w3_ref, k3, 128), 128)

    # ---- final global average pooling over time.
    o_ref[...] = jnp.mean(h.reshape(Bb, L, 128), axis=1)


def init_params(key, n_features):
    """Deterministic parameter init. PyTorch-convention weight shapes (Cout, Cin, K)."""
    specs = [(128, n_features, 9), (256, 128, 5), (128, 256, 3)]
    params_pt = []
    for i, (co, ci, k) in enumerate(specs):
        kw, kb = jax.random.split(jax.random.fold_in(key, i))
        bound = 1.0 / jnp.sqrt(ci * k)
        w = jax.random.uniform(kw, (co, ci, k), jnp.float32, -bound, bound)
        b = jax.random.uniform(kb, (co,), jnp.float32, -bound, bound)
        params_pt.append((w, b))
    return params_pt


@functools.partial(jax.jit, static_argnums=(2,))
def _fcn_encoder_forward_jit(x_ncl, params_pt, block_b):
    """x_ncl: (B, C, L) like PyTorch. Returns (B, 128)."""
    ksizes = (9, 5, 3)
    x = jnp.transpose(x_ncl, (0, 2, 1)).astype(jnp.float32)   # (B, L, Cin)
    B, L, Cin = x.shape
    assert L % 8 == 0, "time length must be a multiple of 8 (sublane tiling)"
    # TODO(synk): masked InstanceNorm stats / mean for L not a multiple of 8.

    Bb = block_b
    B_pad = -(-B // Bb) * Bb
    if B_pad != B:
        # Padded samples compute zeros (no bias, clamped variance) and are
        # sliced off at the end.
        x = jnp.pad(x, ((0, B_pad - B), (0, 0), (0, 0)))

    # One-time im2col of the (tiny) raw input for layer 1, lane-padded to a
    # multiple of 128 so the per-step input block and layer-1 dot are dense.
    k1 = ksizes[0]
    p1 = (k1 - 1) // 2
    xp = jnp.pad(x, ((0, 0), (p1, p1), (0, 0)))
    xcol = jnp.concatenate([xp[:, k:k + L, :] for k in range(k1)], axis=-1)
    kc1 = k1 * Cin
    kc1_pad = -(-kc1 // 128) * 128
    if kc1_pad != kc1:
        xcol = jnp.pad(xcol, ((0, 0), (0, 0), (0, kc1_pad - kc1)))

    # Weights.  Conv biases are dropped: under affine=False InstanceNorm1d a
    # per-channel pre-norm constant cancels exactly (mean shifts by b).
    (w1_pt, _), (w2_pt, _), (w3_pt, _) = params_pt
    w1 = jnp.transpose(w1_pt, (2, 1, 0)).reshape(kc1, 128)    # (9*Cin, 128)
    if kc1_pad != kc1:
        w1 = jnp.pad(w1, ((0, kc1_pad - kc1), (0, 0)))
    w2 = jnp.transpose(w2_pt, (2, 1, 0))                      # (5, 128, 256)
    w3 = jnp.transpose(w3_pt, (2, 1, 0))                      # (3, 256, 128)

    kern = functools.partial(_fcn_fused_kernel, Bb=Bb, L=L,
                             k2=ksizes[1], k3=ksizes[2])

    out = pl.pallas_call(
        kern,
        out_shape=jax.ShapeDtypeStruct((B_pad, 128), jnp.float32),
        grid_spec=pltpu.PrefetchScalarGridSpec(
            num_scalar_prefetch=0,
            grid=(B_pad // Bb,),
            in_specs=[
                pl.BlockSpec((Bb, L, kc1_pad), lambda g: (g, 0, 0)),
                pl.BlockSpec(w1.shape, lambda g: (0, 0)),
                pl.BlockSpec(w2.shape, lambda g: (0, 0, 0)),
                pl.BlockSpec(w3.shape, lambda g: (0, 0, 0)),
            ],
            out_specs=pl.BlockSpec((Bb, 128), lambda g: (g, 0)),
        ),
        compiler_params=pltpu.CompilerParams(
            # "parallel" lets v7x's two TensorCores split grid steps when the
            # batch yields more than one step; on v5e/v6e it is just a loop.
            dimension_semantics=("parallel",)),
    )(xcol, w1, w2, w3)

    return out[:B]


def fcn_encoder_forward(x_ncl, params_pt, block_b=8):
    return _fcn_encoder_forward_jit(x_ncl, params_pt, block_b)


def reference_forward(x_ncl, params_pt):
    """Pure-JAX reference matching PyTorch semantics (bias included)."""
    h = x_ncl.astype(jnp.float32)
    for (w, b) in params_pt:
        h = lax.conv_general_dilated(
            h, w, window_strides=(1,), padding="SAME",
            dimension_numbers=("NCH", "OIH", "NCH"))
        h = h + b[None, :, None]
        mu = h.mean(axis=-1, keepdims=True)
        var = ((h - mu) ** 2).mean(axis=-1, keepdims=True)
        h = (h - mu) / jnp.sqrt(var + EPS)
        h = jnp.maximum(h, 0.0)
    return h.mean(axis=-1)


if __name__ == "__main__":
    # Small shapes consistent with the module: batch=2, 8 sensors, 64 steps.
    B, C_IN, T = 2, 8, 64
    key = jax.random.PRNGKey(0)
    kx, kp = jax.random.split(key)
    x = jax.random.normal(kx, (B, C_IN, T), jnp.float32)       # NCL, like PyTorch
    params = init_params(kp, C_IN)

    out = fcn_encoder_forward(x, params)
    out = jax.block_until_ready(out)
    assert out.shape == (B, 128), out.shape

    ref = reference_forward(x, params)
    assert jnp.allclose(out, ref, rtol=2e-4, atol=2e-4), (
        float(jnp.max(jnp.abs(out - ref))))

    print("KERNEL_OK")
</pallas_src>

<mosaic_0001>
module attributes {stable_mosaic.version = 11 : i64} {
  func.func @_fcn_fused_kernel(%arg0: i32, %arg1: memref<8x64x128xf32, #tpu.memory_space<vmem>>, %arg2: memref<128x128xf32, #tpu.memory_space<vmem>>, %arg3: memref<5x128x256xf32, #tpu.memory_space<vmem>>, %arg4: memref<3x256x128xf32, #tpu.memory_space<vmem>>, %arg5: memref<8x128xf32, #tpu.memory_space<vmem>>) attributes {dimension_semantics = [#tpu.dimension_semantics<parallel>], iteration_bounds = array<i64: 1>, scalar_prefetch = 0 : i64, scratch_operands = 0 : i64, tpu.core_type = #tpu.core_type<tc>, window_params = [{transform_indices = @transform_0, window_bounds = array<i64: 8, 64, 128>}, {pipeline_mode = #tpu.pipeline_mode<synchronous>, transform_indices = @transform_1, window_bounds = array<i64: 128, 128>}, {pipeline_mode = #tpu.pipeline_mode<synchronous>, transform_indices = @transform_2, window_bounds = array<i64: 5, 128, 256>}, {pipeline_mode = #tpu.pipeline_mode<synchronous>, transform_indices = @transform_3, window_bounds = array<i64: 3, 256, 128>}, {transform_indices = @transform_4, window_bounds = array<i64: 8, 128>}]} {
    %0 = tpu.iota {dimensions = array<i32: 0>} : vector<512x1xi32>
    %c64_i32 = arith.constant 64 : i32
    %c0_i32 = arith.constant 0 : i32
    %1 = arith.cmpi eq, %c64_i32, %c0_i32 : i32
    %c1_i32 = arith.constant 1 : i32
    %2 = arith.select %1, %c1_i32, %c64_i32 : i32
    %3 = vector.broadcast %2 : i32 to vector<512x1xi32>
    %4 = arith.remsi %0, %3 : vector<512x1xi32>
    %c0_i32_0 = arith.constant 0 : i32
    %5 = vector.broadcast %c0_i32_0 : i32 to vector<512x1xi32>
    %6 = arith.cmpi ne, %4, %5 : vector<512x1xi32>
    %c0_i32_1 = arith.constant 0 : i32
    %7 = vector.broadcast %c0_i32_1 : i32 to vector<512x1xi32>
    %8 = arith.cmpi slt, %4, %7 : vector<512x1xi32>
    %c0_i32_2 = arith.constant 0 : i32
    %9 = arith.cmpi slt, %2, %c0_i32_2 : i32
    %10 = vector.broadcast %9 : i1 to vector<512x1xi1>
    %11 = vector.broadcast %10 : vector<512x1xi1> to vector<512x1xi1>
    %12 = arith.xori %8, %11 : vector<512x1xi1>
    %13 = arith.andi %12, %6 : vector<512x1xi1>
    %14 = vector.broadcast %2 : i32 to vector<512x1xi32>
    %15 = arith.addi %4, %14 : vector<512x1xi32>
    %16 = arith.select %13, %15, %4 : vector<512x1xi1>, vector<512x1xi32>
    %c0 = arith.constant 0 : index
    %c0_3 = arith.constant 0 : index
    %c0_4 = arith.constant 0 : index
    %17 = vector.load %arg1[%c0, %c0_3, %c0_4] : memref<8x64x128xf32, #tpu.memory_space<vmem>>, vector<8x64x128xf32>
    %18 = vector.shape_cast %17 : vector<8x64x128xf32> to vector<512x128xf32>
    %c0_5 = arith.constant 0 : index
    %c0_6 = arith.constant 0 : index
    %19 = vector.load %arg2[%c0_5, %c0_6] : memref<128x128xf32, #tpu.memory_space<vmem>>, vector<128x128xf32>
    %cst = arith.constant dense<0.000000e+00> : vector<512x128xf32>
    %20 = tpu.matmul %18, %19, %cst {dimension_numbers = #tpu.dot_dimension_numbers<[1], [0], [0], [1], [0, 0, 1, 1], [], []>} : vector<512x128xf32>, vector<128x128xf32>, vector<512x128xf32> -> vector<512x128xf32>
    %21 = vector.shape_cast %20 : vector<512x128xf32> to vector<8x64x128xf32>
    %cst_7 = arith.constant dense<0.000000e+00> : vector<8x128xf32>
    %22 = vector.multi_reduction <add>, %21, %cst_7 [1] : vector<8x64x128xf32> to vector<8x128xf32>
    %23 = vector.shape_cast %22 : vector<8x128xf32> to vector<8x1x128xf32>
    %24 = arith.mulf %21, %21 : vector<8x64x128xf32>
    %cst_8 = arith.constant dense<0.000000e+00> : vector<8x128xf32>
    %25 = vector.multi_reduction <add>, %24, %cst_8 [1] : vector<8x64x128xf32> to vector<8x128xf32>
    %26 = vector.shape_cast %25 : vector<8x128xf32> to vector<8x1x128xf32>
    %cst_9 = arith.constant 1.562500e-02 : f32
    %27 = vector.broadcast %cst_9 : f32 to vector<8x1x128xf32>
    %28 = arith.mulf %23, %27 : vector<8x1x128xf32>
    %cst_10 = arith.constant 1.562500e-02 : f32
    %29 = vector.broadcast %cst_10 : f32 to vector<8x1x128xf32>
    %30 = arith.mulf %26, %29 : vector<8x1x128xf32>
    %31 = arith.mulf %28, %28 : vector<8x1x128xf32>
    %32 = arith.subf %30, %31 : vector<8x1x128xf32>
    %cst_11 = arith.constant 0.000000e+00 : f32
    %33 = vector.broadcast %cst_11 : f32 to vector<8x1x128xf32>
    %34 = arith.maximumf %32, %33 : vector<8x1x128xf32>
    %35 = vector.broadcast %28 : vector<8x1x128xf32> to vector<8x64x128xf32>
    %36 = arith.subf %21, %35 : vector<8x64x128xf32>
    %cst_12 = arith.constant 9.99999974E-6 : f32
    %37 = vector.broadcast %cst_12 : f32 to vector<8x1x128xf32>
    %38 = arith.addf %34, %37 : vector<8x1x128xf32>
    %39 = math.rsqrt %38 : vector<8x1x128xf32>
    %40 = vector.broadcast %39 : vector<8x1x128xf32> to vector<8x64x128xf32>
    %41 = arith.mulf %36, %40 : vector<8x64x128xf32>
    %cst_13 = arith.constant 0.000000e+00 : f32
    %42 = vector.broadcast %cst_13 : f32 to vector<8x64x128xf32>
    %43 = arith.maximumf %41, %42 : vector<8x64x128xf32>
    %44 = vector.shape_cast %43 : vector<8x64x128xf32> to vector<512x128xf32>
    %cst_14 = arith.constant 0.000000e+00 : f32
    %45 = vector.broadcast %cst_14 : f32 to vector<512x256xf32>
    %c2_i32 = arith.constant 2 : i32
    %46 = tpu.dynamic_rotate %44 by %c2_i32 dim 0 : vector<512x128xf32>, i32 -> vector<512x128xf32>
    %c-2_i32 = arith.constant -2 : i32
    %47 = vector.broadcast %c-2_i32 : i32 to vector<512x1xi32>
    %48 = arith.addi %16, %47 : vector<512x1xi32>
    %c0_i32_15 = arith.constant 0 : i32
    %49 = vector.broadcast %c0_i32_15 : i32 to vector<512x1xi32>
    %50 = arith.cmpi sge, %48, %49 : vector<512x1xi32>
    %c-2_i32_16 = arith.constant -2 : i32
    %51 = vector.broadcast %c-2_i32_16 : i32 to vector<512x1xi32>
    %52 = arith.addi %16, %51 : vector<512x1xi32>
    %c64_i32_17 = arith.constant 64 : i32
    %53 = vector.broadcast %c64_i32_17 : i32 to vector<512x1xi32>
    %54 = arith.cmpi slt, %52, %53 : vector<512x1xi32>
    %55 = arith.andi %50, %54 : vector<512x1xi1>
    %cst_18 = arith.constant 0.000000e+00 : f32
    %56 = vector.shape_cast %55 : vector<512x1xi1> to vector<512x1xi1>
    %57 = vector.broadcast %56 : vector<512x1xi1> to vector<512x128xi1>
    %58 = vector.broadcast %cst_18 : f32 to vector<512x128xf32>
    %59 = arith.select %57, %46, %58 : vector<512x128xi1>, vector<512x128xf32>
    %c0_19 = arith.constant 0 : index
    %c0_20 = arith.constant 0 : index
    %c0_21 = arith.constant 0 : index
    %60 = vector.load %arg3[%c0_19, %c0_20, %c0_21] : memref<5x128x256xf32, #tpu.memory_space<vmem>>, vector<1x128x256xf32>
    %61 = vector.shape_cast %60 : vector<1x128x256xf32> to vector<128x256xf32>
    %cst_22 = arith.constant dense<0.000000e+00> : vector<512x256xf32>
    %62 = tpu.matmul %59, %61, %cst_22 {dimension_numbers = #tpu.dot_dimension_numbers<[1], [0], [0], [1], [0, 0, 1, 1], [], []>} : vector<512x128xf32>, vector<128x256xf32>, vector<512x256xf32> -> vector<512x256xf32>
    %63 = arith.addf %45, %62 : vector<512x256xf32>
    %c1_i32_23 = arith.constant 1 : i32
    %64 = tpu.dynamic_rotate %44 by %c1_i32_23 dim 0 : vector<512x128xf32>, i32 -> vector<512x128xf32>
    %c-1_i32 = arith.constant -1 : i32
    %65 = vector.broadcast %c-1_i32 : i32 to vector<512x1xi32>
    %66 = arith.addi %16, %65 : vector<512x1xi32>
    %c0_i32_24 = arith.constant 0 : i32
    %67 = vector.broadcast %c0_i32_24 : i32 to vector<512x1xi32>
    %68 = arith.cmpi sge, %66, %67 : vector<512x1xi32>
    %c-1_i32_25 = arith.constant -1 : i32
    %69 = vector.broadcast %c-1_i32_25 : i32 to vector<512x1xi32>
    %70 = arith.addi %16, %69 : vector<512x1xi32>
    %c64_i32_26 = arith.constant 64 : i32
    %71 = vector.broadcast %c64_i32_26 : i32 to vector<512x1xi32>
    %72 = arith.cmpi slt, %70, %71 : vector<512x1xi32>
    %73 = arith.andi %68, %72 : vector<512x1xi1>
    %cst_27 = arith.constant 0.000000e+00 : f32
    %74 = vector.shape_cast %73 : vector<512x1xi1> to vector<512x1xi1>
    %75 = vector.broadcast %74 : vector<512x1xi1> to vector<512x128xi1>
    %76 = vector.broadcast %cst_27 : f32 to vector<512x128xf32>
    %77 = arith.select %75, %64, %76 : vector<512x128xi1>, vector<512x128xf32>
    %c1 = arith.constant 1 : index
    %c0_28 = arith.constant 0 : index
    %c0_29 = arith.constant 0 : index
    %78 = vector.load %arg3[%c1, %c0_28, %c0_29] : memref<5x128x256xf32, #tpu.memory_space<vmem>>, vector<1x128x256xf32>
    %79 = vector.shape_cast %78 : vector<1x128x256xf32> to vector<128x256xf32>
    %cst_30 = arith.constant dense<0.000000e+00> : vector<512x256xf32>
    %80 = tpu.matmul %77, %79, %cst_30 {dimension_numbers = #tpu.dot_dimension_numbers<[1], [0], [0], [1], [0, 0, 1, 1], [], []>} : vector<512x128xf32>, vector<128x256xf32>, vector<512x256xf32> -> vector<512x256xf32>
    %81 = arith.addf %63, %80 : vector<512x256xf32>
    %c2 = arith.constant 2 : index
    %c0_31 = arith.constant 0 : index
    %c0_32 = arith.constant 0 : index
    %82 = vector.load %arg3[%c2, %c0_31, %c0_32] : memref<5x128x256xf32, #tpu.memory_space<vmem>>, vector<1x128x256xf32>
    %83 = vector.shape_cast %82 : vector<1x128x256xf32> to vector<128x256xf32>
    %cst_33 = arith.constant dense<0.000000e+00> : vector<512x256xf32>
    %84 = tpu.matmul %44, %83, %cst_33 {dimension_numbers = #tpu.dot_dimension_numbers<[1], [0], [0], [1], [0, 0, 1, 1], [], []>} : vector<512x128xf32>, vector<128x256xf32>, vector<512x256xf32> -> vector<512x256xf32>
    %85 = arith.addf %81, %84 : vector<512x256xf32>
    %c511_i32 = arith.constant 511 : i32
    %86 = tpu.dynamic_rotate %44 by %c511_i32 dim 0 : vector<512x128xf32>, i32 -> vector<512x128xf32>
    %c1_i32_34 = arith.constant 1 : i32
    %87 = vector.broadcast %c1_i32_34 : i32 to vector<512x1xi32>
    %88 = arith.addi %16, %87 : vector<512x1xi32>
    %c0_i32_35 = arith.constant 0 : i32
    %89 = vector.broadcast %c0_i32_35 : i32 to vector<512x1xi32>
    %90 = arith.cmpi sge, %88, %89 : vector<512x1xi32>
    %c1_i32_36 = arith.constant 1 : i32
    %91 = vector.broadcast %c1_i32_36 : i32 to vector<512x1xi32>
    %92 = arith.addi %16, %91 : vector<512x1xi32>
    %c64_i32_37 = arith.constant 64 : i32
    %93 = vector.broadcast %c64_i32_37 : i32 to vector<512x1xi32>
    %94 = arith.cmpi slt, %92, %93 : vector<512x1xi32>
    %95 = arith.andi %90, %94 : vector<512x1xi1>
    %cst_38 = arith.constant 0.000000e+00 : f32
    %96 = vector.shape_cast %95 : vector<512x1xi1> to vector<512x1xi1>
    %97 = vector.broadcast %96 : vector<512x1xi1> to vector<512x128xi1>
    %98 = vector.broadcast %cst_38 : f32 to vector<512x128xf32>
    %99 = arith.select %97, %86, %98 : vector<512x128xi1>, vector<512x128xf32>
    %c3 = arith.constant 3 : index
    %c0_39 = arith.constant 0 : index
    %c0_40 = arith.constant 0 : index
    %100 = vector.load %arg3[%c3, %c0_39, %c0_40] : memref<5x128x256xf32, #tpu.memory_space<vmem>>, vector<1x128x256xf32>
    %101 = vector.shape_cast %100 : vector<1x128x256xf32> to vector<128x256xf32>
    %cst_41 = arith.constant dense<0.000000e+00> : vector<512x256xf32>
    %102 = tpu.matmul %99, %101, %cst_41 {dimension_numbers = #tpu.dot_dimension_numbers<[1], [0], [0], [1], [0, 0, 1, 1], [], []>} : vector<512x128xf32>, vector<128x256xf32>, vector<512x256xf32> -> vector<512x256xf32>
    %103 = arith.addf %85, %102 : vector<512x256xf32>
    %c510_i32 = arith.constant 510 : i32
    %104 = tpu.dynamic_rotate %44 by %c510_i32 dim 0 : vector<512x128xf32>, i32 -> vector<512x128xf32>
    %c2_i32_42 = arith.constant 2 : i32
    %105 = vector.broadcast %c2_i32_42 : i32 to vector<512x1xi32>
    %106 = arith.addi %16, %105 : vector<512x1xi32>
    %c0_i32_43 = arith.constant 0 : i32
    %107 = vector.broadcast %c0_i32_43 : i32 to vector<512x1xi32>
    %108 = arith.cmpi sge, %106, %107 : vector<512x1xi32>
    %c2_i32_44 = arith.constant 2 : i32
    %109 = vector.broadcast %c2_i32_44 : i32 to vector<512x1xi32>
    %110 = arith.addi %16, %109 : vector<512x1xi32>
    %c64_i32_45 = arith.constant 64 : i32
    %111 = vector.broadcast %c64_i32_45 : i32 to vector<512x1xi32>
    %112 = arith.cmpi slt, %110, %111 : vector<512x1xi32>
    %113 = arith.andi %108, %112 : vector<512x1xi1>
    %cst_46 = arith.constant 0.000000e+00 : f32
    %114 = vector.shape_cast %113 : vector<512x1xi1> to vector<512x1xi1>
    %115 = vector.broadcast %114 : vector<512x1xi1> to vector<512x128xi1>
    %116 = vector.broadcast %cst_46 : f32 to vector<512x128xf32>
    %117 = arith.select %115, %104, %116 : vector<512x128xi1>, vector<512x128xf32>
    %c4 = arith.constant 4 : index
    %c0_47 = arith.constant 0 : index
    %c0_48 = arith.constant 0 : index
    %118 = vector.load %arg3[%c4, %c0_47, %c0_48] : memref<5x128x256xf32, #tpu.memory_space<vmem>>, vector<1x128x256xf32>
    %119 = vector.shape_cast %118 : vector<1x128x256xf32> to vector<128x256xf32>
    %cst_49 = arith.constant dense<0.000000e+00> : vector<512x256xf32>
    %120 = tpu.matmul %117, %119, %cst_49 {dimension_numbers = #tpu.dot_dimension_numbers<[1], [0], [0], [1], [0, 0, 1, 1], [], []>} : vector<512x128xf32>, vector<128x256xf32>, vector<512x256xf32> -> vector<512x256xf32>
    %121 = arith.addf %103, %120 : vector<512x256xf32>
    %122 = vector.shape_cast %121 : vector<512x256xf32> to vector<8x64x256xf32>
    %cst_50 = arith.constant dense<0.000000e+00> : vector<8x256xf32>
    %123 = vector.multi_reduction <add>, %122, %cst_50 [1] : vector<8x64x256xf32> to vector<8x256xf32>
    %124 = vector.shape_cast %123 : vector<8x256xf32> to vector<8x1x256xf32>
    %125 = arith.mulf %122, %122 : vector<8x64x256xf32>
    %cst_51 = arith.constant dense<0.000000e+00> : vector<8x256xf32>
    %126 = vector.multi_reduction <add>, %125, %cst_51 [1] : vector<8x64x256xf32> to vector<8x256xf32>
    %127 = vector.shape_cast %126 : vector<8x256xf32> to vector<8x1x256xf32>
    %cst_52 = arith.constant 1.562500e-02 : f32
    %128 = vector.broadcast %cst_52 : f32 to vector<8x1x256xf32>
    %129 = arith.mulf %124, %128 : vector<8x1x256xf32>
    %cst_53 = arith.constant 1.562500e-02 : f32
    %130 = vector.broadcast %cst_53 : f32 to vector<8x1x256xf32>
    %131 = arith.mulf %127, %130 : vector<8x1x256xf32>
    %132 = arith.mulf %129, %129 : vector<8x1x256xf32>
    %133 = arith.subf %131, %132 : vector<8x1x256xf32>
    %cst_54 = arith.constant 0.000000e+00 : f32
    %134 = vector.broadcast %cst_54 : f32 to vector<8x1x256xf32>
    %135 = arith.maximumf %133, %134 : vector<8x1x256xf32>
    %136 = vector.broadcast %129 : vector<8x1x256xf32> to vector<8x64x256xf32>
    %137 = arith.subf %122, %136 : vector<8x64x256xf32>
    %cst_55 = arith.constant 9.99999974E-6 : f32
    %138 = vector.broadcast %cst_55 : f32 to vector<8x1x256xf32>
    %139 = arith.addf %135, %138 : vector<8x1x256xf32>
    %140 = math.rsqrt %139 : vector<8x1x256xf32>
    %141 = vector.broadcast %140 : vector<8x1x256xf32> to vector<8x64x256xf32>
    %142 = arith.mulf %137, %141 : vector<8x64x256xf32>
    %cst_56 = arith.constant 0.000000e+00 : f32
    %143 = vector.broadcast %cst_56 : f32 to vector<8x64x256xf32>
    %144 = arith.maximumf %142, %143 : vector<8x64x256xf32>
    %145 = vector.shape_cast %144 : vector<8x64x256xf32> to vector<512x256xf32>
    %cst_57 = arith.constant 0.000000e+00 : f32
    %146 = vector.broadcast %cst_57 : f32 to vector<512x128xf32>
    %c1_i32_58 = arith.constant 1 : i32
    %147 = tpu.dynamic_rotate %145 by %c1_i32_58 dim 0 : vector<512x256xf32>, i32 -> vector<512x256xf32>
    %c-1_i32_59 = arith.constant -1 : i32
    %148 = vector.broadcast %c-1_i32_59 : i32 to vector<512x1xi32>
    %149 = arith.addi %16, %148 : vector<512x1xi32>
    %c0_i32_60 = arith.constant 0 : i32
    %150 = vector.broadcast %c0_i32_60 : i32 to vector<512x1xi32>
    %151 = arith.cmpi sge, %149, %150 : vector<512x1xi32>
    %c-1_i32_61 = arith.constant -1 : i32
    %152 = vector.broadcast %c-1_i32_61 : i32 to vector<512x1xi32>
    %153 = arith.addi %16, %152 : vector<512x1xi32>
    %c64_i32_62 = arith.constant 64 : i32
    %154 = vector.broadcast %c64_i32_62 : i32 to vector<512x1xi32>
    %155 = arith.cmpi slt, %153, %154 : vector<512x1xi32>
    %156 = arith.andi %151, %155 : vector<512x1xi1>
    %cst_63 = arith.constant 0.000000e+00 : f32
    %157 = vector.shape_cast %156 : vector<512x1xi1> to vector<512x1xi1>
    %158 = vector.broadcast %157 : vector<512x1xi1> to vector<512x256xi1>
    %159 = vector.broadcast %cst_63 : f32 to vector<512x256xf32>
    %160 = arith.select %158, %147, %159 : vector<512x256xi1>, vector<512x256xf32>
    %c0_64 = arith.constant 0 : index
    %c0_65 = arith.constant 0 : index
    %c0_66 = arith.constant 0 : index
    %161 = vector.load %arg4[%c0_64, %c0_65, %c0_66] : memref<3x256x128xf32, #tpu.memory_space<vmem>>, vector<1x256x128xf32>
    %162 = vector.shape_cast %161 : vector<1x256x128xf32> to vector<256x128xf32>
    %cst_67 = arith.constant dense<0.000000e+00> : vector<512x128xf32>
    %163 = tpu.matmul %160, %162, %cst_67 {dimension_numbers = #tpu.dot_dimension_numbers<[1], [0], [0], [1], [0, 0, 1, 1], [], []>} : vector<512x256xf32>, vector<256x128xf32>, vector<512x128xf32> -> vector<512x128xf32>
    %164 = arith.addf %146, %163 : vector<512x128xf32>
    %c1_68 = arith.constant 1 : index
    %c0_69 = arith.constant 0 : index
    %c0_70 = arith.constant 0 : index
    %165 = vector.load %arg4[%c1_68, %c0_69, %c0_70] : memref<3x256x128xf32, #tpu.memory_space<vmem>>, vector<1x256x128xf32>
    %166 = vector.shape_cast %165 : vector<1x256x128xf32> to vector<256x128xf32>
    %cst_71 = arith.constant dense<0.000000e+00> : vector<512x128xf32>
    %167 = tpu.matmul %145, %166, %cst_71 {dimension_numbers = #tpu.dot_dimension_numbers<[1], [0], [0], [1], [0, 0, 1, 1], [], []>} : vector<512x256xf32>, vector<256x128xf32>, vector<512x128xf32> -> vector<512x128xf32>
    %168 = arith.addf %164, %167 : vector<512x128xf32>
    %c511_i32_72 = arith.constant 511 : i32
    %169 = tpu.dynamic_rotate %145 by %c511_i32_72 dim 0 : vector<512x256xf32>, i32 -> vector<512x256xf32>
    %c1_i32_73 = arith.constant 1 : i32
    %170 = vector.broadcast %c1_i32_73 : i32 to vector<512x1xi32>
    %171 = arith.addi %16, %170 : vector<512x1xi32>
    %c0_i32_74 = arith.constant 0 : i32
    %172 = vector.broadcast %c0_i32_74 : i32 to vector<512x1xi32>
    %173 = arith.cmpi sge, %171, %172 : vector<512x1xi32>
    %c1_i32_75 = arith.constant 1 : i32
    %174 = vector.broadcast %c1_i32_75 : i32 to vector<512x1xi32>
    %175 = arith.addi %16, %174 : vector<512x1xi32>
    %c64_i32_76 = arith.constant 64 : i32
    %176 = vector.broadcast %c64_i32_76 : i32 to vector<512x1xi32>
    %177 = arith.cmpi slt, %175, %176 : vector<512x1xi32>
    %178 = arith.andi %173, %177 : vector<512x1xi1>
    %cst_77 = arith.constant 0.000000e+00 : f32
    %179 = vector.shape_cast %178 : vector<512x1xi1> to vector<512x1xi1>
    %180 = vector.broadcast %179 : vector<512x1xi1> to vector<512x256xi1>
    %181 = vector.broadcast %cst_77 : f32 to vector<512x256xf32>
    %182 = arith.select %180, %169, %181 : vector<512x256xi1>, vector<512x256xf32>
    %c2_78 = arith.constant 2 : index
    %c0_79 = arith.constant 0 : index
    %c0_80 = arith.constant 0 : index
    %183 = vector.load %arg4[%c2_78, %c0_79, %c0_80] : memref<3x256x128xf32, #tpu.memory_space<vmem>>, vector<1x256x128xf32>
    %184 = vector.shape_cast %183 : vector<1x256x128xf32> to vector<256x128xf32>
    %cst_81 = arith.constant dense<0.000000e+00> : vector<512x128xf32>
    %185 = tpu.matmul %182, %184, %cst_81 {dimension_numbers = #tpu.dot_dimension_numbers<[1], [0], [0], [1], [0, 0, 1, 1], [], []>} : vector<512x256xf32>, vector<256x128xf32>, vector<512x128xf32> -> vector<512x128xf32>
    %186 = arith.addf %168, %185 : vector<512x128xf32>
    %187 = vector.shape_cast %186 : vector<512x128xf32> to vector<8x64x128xf32>
    %cst_82 = arith.constant dense<0.000000e+00> : vector<8x128xf32>
    %188 = vector.multi_reduction <add>, %187, %cst_82 [1] : vector<8x64x128xf32> to vector<8x128xf32>
    %189 = vector.shape_cast %188 : vector<8x128xf32> to vector<8x1x128xf32>
    %190 = arith.mulf %187, %187 : vector<8x64x128xf32>
    %cst_83 = arith.constant dense<0.000000e+00> : vector<8x128xf32>
    %191 = vector.multi_reduction <add>, %190, %cst_83 [1] : vector<8x64x128xf32> to vector<8x128xf32>
    %192 = vector.shape_cast %191 : vector<8x128xf32> to vector<8x1x128xf32>
    %cst_84 = arith.constant 1.562500e-02 : f32
    %193 = vector.broadcast %cst_84 : f32 to vector<8x1x128xf32>
    %194 = arith.mulf %189, %193 : vector<8x1x128xf32>
    %cst_85 = arith.constant 1.562500e-02 : f32
    %195 = vector.broadcast %cst_85 : f32 to vector<8x1x128xf32>
    %196 = arith.mulf %192, %195 : vector<8x1x128xf32>
    %197 = arith.mulf %194, %194 : vector<8x1x128xf32>
    %198 = arith.subf %196, %197 : vector<8x1x128xf32>
    %cst_86 = arith.constant 0.000000e+00 : f32
    %199 = vector.broadcast %cst_86 : f32 to vector<8x1x128xf32>
    %200 = arith.maximumf %198, %199 : vector<8x1x128xf32>
    %201 = vector.broadcast %194 : vector<8x1x128xf32> to vector<8x64x128xf32>
    %202 = arith.subf %187, %201 : vector<8x64x128xf32>
    %cst_87 = arith.constant 9.99999974E-6 : f32
    %203 = vector.broadcast %cst_87 : f32 to vector<8x1x128xf32>
    %204 = arith.addf %200, %203 : vector<8x1x128xf32>
    %205 = math.rsqrt %204 : vector<8x1x128xf32>
    %206 = vector.broadcast %205 : vector<8x1x128xf32> to vector<8x64x128xf32>
    %207 = arith.mulf %202, %206 : vector<8x64x128xf32>
    %cst_88 = arith.constant 0.000000e+00 : f32
    %208 = vector.broadcast %cst_88 : f32 to vector<8x64x128xf32>
    %209 = arith.maximumf %207, %208 : vector<8x64x128xf32>
    %210 = vector.shape_cast %209 : vector<8x64x128xf32> to vector<512x128xf32>
    %211 = vector.shape_cast %210 : vector<512x128xf32> to vector<8x64x128xf32>
    %cst_89 = arith.constant dense<0.000000e+00> : vector<8x128xf32>
    %212 = vector.multi_reduction <add>, %211, %cst_89 [1] : vector<8x64x128xf32> to vector<8x128xf32>
    %cst_90 = arith.constant 6.400000e+01 : f32
    %213 = vector.broadcast %cst_90 : f32 to vector<8x128xf32>
    %214 = arith.divf %212, %213 : vector<8x128xf32>
    %c0_91 = arith.constant 0 : index
    %c0_92 = arith.constant 0 : index
    %215 = vector.load %arg5[%c0_91, %c0_92] : memref<8x128xf32, #tpu.memory_space<vmem>>, vector<8x128xf32>
    tpu.vector_store %arg5[%c0_91, %c0_92], %214 {strides = array<i32>} : memref<8x128xf32, #tpu.memory_space<vmem>>, vector<8x128xf32>,
    return
  }
  func.func @transform_0(%arg0: i32) -> (i32, i32, i32) {
    %c0_i32 = arith.constant 0 : i32
    %c0_i32_0 = arith.constant 0 : i32
    %c0_i32_1 = arith.constant 0 : i32
    return %arg0, %c0_i32, %c0_i32_0 : i32, i32, i32
  }
  func.func @transform_1(%arg0: i32) -> (i32, i32) {
    %c0_i32 = arith.constant 0 : i32
    %c0_i32_0 = arith.constant 0 : i32
    %c0_i32_1 = arith.constant 0 : i32
    return %c0_i32, %c0_i32_0 : i32, i32
  }
  func.func @transform_2(%arg0: i32) -> (i32, i32, i32) {
    %c0_i32 = arith.constant 0 : i32
    %c0_i32_0 = arith.constant 0 : i32
    %c0_i32_1 = arith.constant 0 : i32
    %c0_i32_2 = arith.constant 0 : i32
    return %c0_i32, %c0_i32_0, %c0_i32_1 : i32, i32, i32
  }
  func.func @transform_3(%arg0: i32) -> (i32, i32, i32) {
    %c0_i32 = arith.constant 0 : i32
    %c0_i32_0 = arith.constant 0 : i32
    %c0_i32_1 = arith.constant 0 : i32
    %c0_i32_2 = arith.constant 0 : i32
    return %c0_i32, %c0_i32_0, %c0_i32_1 : i32, i32, i32
  }
  func.func @transform_4(%arg0: i32) -> (i32, i32) {
    %c0_i32 = arith.constant 0 : i32
    %c0_i32_0 = arith.constant 0 : i32
    return %arg0, %c0_i32 : i32, i32
  }
}

</mosaic_0001>

<llo_original>
// kernel: _fcn_encoder_forward_jit.1
$region0: #{_fcn_encoder_forward_jit.1}
  #allocation0 [shape = 'u32[]', space=smem, size = 0x4, offset = 0x4, fixed_abs, tag = 'smem constant byte address 0x4 - core index']
  #allocation1 [shape = 'u32[144,128]{1,0:T(1,128)}', space=vmem, size = 0x12000, scoped, tag = 'internal scratch']
  %s0 = inlined_call_operand.vmem [shape: f32[8,64,128], index: 0, kind: input, shape index: {}]
  %s1 = inlined_call_operand.vmem [shape: f32[128,128], index: 1, kind: input, shape index: {}]
  %s2 = inlined_call_operand.vmem [shape: f32[5,128,256], index: 2, kind: input, shape index: {}]
  %s3 = inlined_call_operand.vmem [shape: f32[3,256,128], index: 3, kind: input, shape index: {}]
  %s4 = inlined_call_operand.vmem [shape: f32[8,128], index: 4, kind: output, shape index: {}]
  %s5 = sld [smem:[#allocation0]]
  $region26: #{_fcn_encoder_forward_jit.1} parent=0
    _
  %s7 = ssub.s32 1, %s5
  %s8 = scalar_select 0, %s7, %s5
  // Predicated region
  $region2: #{_fcn_encoder_forward_jit.1} parent=0 // pred_check
    _
  $region3: #{_fcn_encoder_forward_jit.1} parent=0 // pred_check_branch
    %10 = sbr.rel (0) target = $region5
  $region4: #{_fcn_encoder_forward_jit.1} parent=0 // pred_region
    _
  $region5: #{_fcn_encoder_forward_jit.1} parent=0 // pred_fallthru
    _
  // Predicated region
  $region6: #{_fcn_encoder_forward_jit.1} parent=0 // pred_check
    _
  $region7: #{_fcn_encoder_forward_jit.1} parent=0 // pred_check_branch
    %12 = sbr.rel (0) target = $region9
  $region8: #{_fcn_encoder_forward_jit.1} parent=0 // pred_region
    _
  $region9: #{_fcn_encoder_forward_jit.1} parent=0 // pred_fallthru
    _
  // Predicated region
  $region10: #{_fcn_encoder_forward_jit.1} parent=0 // pred_check
    _
  $region11: #{_fcn_encoder_forward_jit.1} parent=0 // pred_check_branch
    %14 = sbr.rel (0) target = $region13
  $region12: #{_fcn_encoder_forward_jit.1} parent=0 // pred_region
    _
  $region13: #{_fcn_encoder_forward_jit.1} parent=0 // pred_fallthru
    _
  // Predicated region
  $region14: #{_fcn_encoder_forward_jit.1} parent=0 // pred_check
    _
  $region15: #{_fcn_encoder_forward_jit.1} parent=0 // pred_check_branch
    %16 = sbr.rel (0) target = $region17
  $region16: #{_fcn_encoder_forward_jit.1} parent=0 // pred_region
    _
  $region17: #{_fcn_encoder_forward_jit.1} parent=0 // pred_fallthru
    _
  %v17 = vlaneseq
  %v18 = vshrl.u32 %v17, 7
  %v19 = vadd.s32 %v18, 8
  %v20 = vadd.s32 %v18, 16
  %v21 = vadd.s32 %v18, 24
  %v22 = vadd.s32 %v18, 32
  %v23 = vadd.s32 %v18, 40
  %v24 = vadd.s32 %v18, 48
  %v25 = vadd.s32 %v18, 56
  %v26 = vadd.s32 %v18, 64
  %v27 = vadd.s32 %v18, 72
  %v28 = vadd.s32 %v18, 80
  %v29 = vadd.s32 %v18, 88
  %v30 = vadd.s32 %v18, 96
  %v31 = vadd.s32 %v18, 104
  %v32 = vadd.s32 %v18, 112
  %v33 = vadd.s32 %v18, 120
  %v34 = vadd.s32 %v18, 128
  %v35 = vadd.s32 %v18, 136
  %v36 = vadd.s32 %v18, 144
  %v37 = vadd.s32 %v18, 152
  %v38 = vadd.s32 %v18, 160
  %v39 = vadd.s32 %v18, 168
  %v40 = vadd.s32 %v18, 176
  %v41 = vadd.s32 %v18, 184
  %v42 = vadd.s32 %v18, 192
  %v43 = vadd.s32 %v18, 200
  %v44 = vadd.s32 %v18, 208
  %v45 = vadd.s32 %v18, 216
  %v46 = vadd.s32 %v18, 224
  %v47 = vadd.s32 %v18, 232
  %v48 = vadd.s32 %v18, 240
  %v49 = vadd.s32 %v18, 248
  %v50 = vadd.s32 %v18, 256
  %v51 = vadd.s32 %v18, 264
  %v52 = vadd.s32 %v18, 272
  %v53 = vadd.s32 %v18, 280
  %v54 = vadd.s32 %v18, 288
  %v55 = vadd.s32 %v18, 296
  %v56 = vadd.s32 %v18, 304
  %v57 = vadd.s32 %v18, 312
  %v58 = vadd.s32 %v18, 320
  %v59 = vadd.s32 %v18, 328
  %v60 = vadd.s32 %v18, 336
  %v61 = vadd.s32 %v18, 344
  %v62 = vadd.s32 %v18, 352
  %v63 = vadd.s32 %v18, 360
  %v64 = vadd.s32 %v18, 368
  %v65 = vadd.s32 %v18, 376
  %v66 = vadd.s32 %v18, 384
  %v67 = vadd.s32 %v18, 392
  %v68 = vadd.s32 %v18, 400
  %v69 = vadd.s32 %v18, 408
  %v70 = vadd.s32 %v18, 416
  %v71 = vadd.s32 %v18, 424
  %v72 = vadd.s32 %v18, 432
  %v73 = vadd.s32 %v18, 440
  %v74 = vadd.s32 %v18, 448
  %v75 = vadd.s32 %v18, 456
  %v76 = vadd.s32 %v18, 464
  %v77 = vadd.s32 %v18, 472
  %v78 = vadd.s32 %v18, 480
  %v79 = vadd.s32 %v18, 488
  %v80 = vadd.s32 %v18, 496
  %v81 = vadd.s32 %v18, 504
  %vm82 = vcmp.lt.s32.totalorder %v18, 0
  %v83 = vsub.s32 0, %v18
  %v84 = vsel %vm82, %v83, %v18
  %v85 = vshrl.u32 %v84, 6
  %v86 = vand.u32 %v84, 63
  %v87 = vsub.s32 0, %v86
  %v88 = vsel %vm82, %v87, %v86
  %vm89 = vcmp.lt.s32.totalorder %v19, 0
  %v90 = vsub.s32 0, %v19
  %v91 = vsel %vm89, %v90, %v19
  %v92 = vshrl.u32 %v91, 6
  %v93 = vand.u32 %v91, 63
  %v94 = vsub.s32 0, %v93
  %v95 = vsel %vm89, %v94, %v93
  %vm96 = vcmp.lt.s32.totalorder %v20, 0
  %v97 = vsub.s32 0, %v20
  %v98 = vsel %vm96, %v97, %v20
  %v99 = vshrl.u32 %v98, 6
  %v100 = vand.u32 %v98, 63
  %v101 = vsub.s32 0, %v100
  %v102 = vsel %vm96, %v101, %v100
  %vm103 = vcmp.lt.s32.totalorder %v21, 0
  %v104 = vsub.s32 0, %v21
  %v105 = vsel %vm103, %v104, %v21
  %v106 = vshrl.u32 %v105, 6
  %v107 = vand.u32 %v105, 63
  %v108 = vsub.s32 0, %v107
  %v109 = vsel %vm103, %v108, %v107
  %vm110 = vcmp.lt.s32.totalorder %v22, 0
  %v111 = vsub.s32 0, %v22
  %v112 = vsel %vm110, %v111, %v22
  %v113 = vshrl.u32 %v112, 6
  %v114 = vand.u32 %v112, 63
  %v115 = vsub.s32 0, %v114
  %v116 = vsel %vm110, %v115, %v114
  %vm117 = vcmp.lt.s32.totalorder %v23, 0
  %v118 = vsub.s32 0, %v23
  %v119 = vsel %vm117, %v118, %v23
  %v120 = vshrl.u32 %v119, 6
  %v121 = vand.u32 %v119, 63
  %v122 = vsub.s32 0, %v121
  %v123 = vsel %vm117, %v122, %v121
  %vm124 = vcmp.lt.s32.totalorder %v24, 0
  %v125 = vsub.s32 0, %v24
  %v126 = vsel %vm124, %v125, %v24
  %v127 = vshrl.u32 %v126, 6
  %v128 = vand.u32 %v126, 63
  %v129 = vsub.s32 0, %v128
  %v130 = vsel %vm124, %v129, %v128
  %vm131 = vcmp.lt.s32.totalorder %v25, 0
  %v132 = vsub.s32 0, %v25
  %v133 = vsel %vm131, %v132, %v25
  %v134 = vshrl.u32 %v133, 6
  %v135 = vand.u32 %v133, 63
  %v136 = vsub.s32 0, %v135
  %v137 = vsel %vm131, %v136, %v135
  %vm138 = vcmp.lt.s32.totalorder %v26, 0
  %v139 = vsub.s32 0, %v26
  %v140 = vsel %vm138, %v139, %v26
  %v141 = vshrl.u32 %v140, 6
  %v142 = vand.u32 %v140, 63
  %v143 = vsub.s32 0, %v142
  %v144 = vsel %vm138, %v143, %v142
  %vm145 = vcmp.lt.s32.totalorder %v27, 0
  %v146 = vsub.s32 0, %v27
  %v147 = vsel %vm145, %v146, %v27
  %v148 = vshrl.u32 %v147, 6
  %v149 = vand.u32 %v147, 63
  %v150 = vsub.s32 0, %v149
  %v151 = vsel %vm145, %v150, %v149
  %vm152 = vcmp.lt.s32.totalorder %v28, 0
  %v153 = vsub.s32 0, %v28
  %v154 = vsel %vm152, %v153, %v28
  %v155 = vshrl.u32 %v154, 6
  %v156 = vand.u32 %v154, 63
  %v157 = vsub.s32 0, %v156
  %v158 = vsel %vm152, %v157, %v156
  %vm159 = vcmp.lt.s32.totalorder %v29, 0
  %v160 = vsub.s32 0, %v29
  %v161 = vsel %vm159, %v160, %v29
  %v162 = vshrl.u32 %v161, 6
  %v163 = vand.u32 %v161, 63
  %v164 = vsub.s32 0, %v163
  %v165 = vsel %vm159, %v164, %v163
  %vm166 = vcmp.lt.s32.totalorder %v30, 0
  %v167 = vsub.s32 0, %v30
  %v168 = vsel %vm166, %v167, %v30
  %v169 = vshrl.u32 %v168, 6
  %v170 = vand.u32 %v168, 63
  %v171 = vsub.s32 0, %v170
  %v172 = vsel %vm166, %v171, %v170
  %vm173 = vcmp.lt.s32.totalorder %v31, 0
  %v174 = vsub.s32 0, %v31
  %v175 = vsel %vm173, %v174, %v31
  %v176 = vshrl.u32 %v175, 6
  %v177 = vand.u32 %v175, 63
  %v178 = vsub.s32 0, %v177
  %v179 = vsel %vm173, %v178, %v177
  %vm180 = vcmp.lt.s32.totalorder %v32, 0
  %v181 = vsub.s32 0, %v32
  %v182 = vsel %vm180, %v181, %v32
  %v183 = vshrl.u32 %v182, 6
  %v184 = vand.u32 %v182, 63
  %v185 = vsub.s32 0, %v184
  %v186 = vsel %vm180, %v185, %v184
  %vm187 = vcmp.lt.s32.totalorder %v33, 0
  %v188 = vsub.s32 0, %v33
  %v189 = vsel %vm187, %v188, %v33
  %v190 = vshrl.u32 %v189, 6
  %v191 = vand.u32 %v189, 63
  %v192 = vsub.s32 0, %v191
  %v193 = vsel %vm187, %v192, %v191
  %vm194 = vcmp.lt.s32.totalorder %v34, 0
  %v195 = vsub.s32 0, %v34
  %v196 = vsel %vm194, %v195, %v34
  %v197 = vshrl.u32 %v196, 6
  %v198 = vand.u32 %v196, 63
  %v199 = vsub.s32 0, %v198
  %v200 = vsel %vm194, %v199, %v198
  %vm201 = vcmp.lt.s32.totalorder %v35, 0
  %v202 = vsub.s32 0, %v35
  %v203 = vsel %vm201, %v202, %v35
  %v204 = vshrl.u32 %v203, 6
  %v205 = vand.u32 %v203, 63
  %v206 = vsub.s32 0, %v205
  %v207 = vsel %vm201, %v206, %v205
  %vm208 = vcmp.lt.s32.totalorder %v36, 0
  %v209 = vsub.s32 0, %v36
  %v210 = vsel %vm208, %v209, %v36
  %v211 = vshrl.u32 %v210, 6
  %v212 = vand.u32 %v210, 63
  %v213 = vsub.s32 0, %v212
  %v214 = vsel %vm208, %v213, %v212
  %vm215 = vcmp.lt.s32.totalorder %v37, 0
  %v216 = vsub.s32 0, %v37
  %v217 = vsel %vm215, %v216, %v37
  %v218 = vshrl.u32 %v217, 6
  %v219 = vand.u32 %v217, 63
  %v220 = vsub.s32 0, %v219
  %v221 = vsel %vm215, %v220, %v219
  %vm222 = vcmp.lt.s32.totalorder %v38, 0
  %v223 = vsub.s32 0, %v38
  %v224 = vsel %vm222, %v223, %v38
  %v225 = vshrl.u32 %v224, 6
  %v226 = vand.u32 %v224, 63
  %v227 = vsub.s32 0, %v226
  %v228 = vsel %vm222, %v227, %v226
  %vm229 = vcmp.lt.s32.totalorder %v39, 0
  %v230 = vsub.s32 0, %v39
  %v231 = vsel %vm229, %v230, %v39
  %v232 = vshrl.u32 %v231, 6
  %v233 = vand.u32 %v231, 63
  %v234 = vsub.s32 0, %v233
  %v235 = vsel %vm229, %v234, %v233
  %vm236 = vcmp.lt.s32.totalorder %v40, 0
  %v237 = vsub.s32 0, %v40
  %v238 = vsel %vm236, %v237, %v40
  %v239 = vshrl.u32 %v238, 6
  %v240 = vand.u32 %v238, 63
  %v241 = vsub.s32 0, %v240
  %v242 = vsel %vm236, %v241, %v240
  %vm243 = vcmp.lt.s32.totalorder %v41, 0
  %v244 = vsub.s32 0, %v41
  %v245 = vsel %vm243, %v244, %v41
  %v246 = vshrl.u32 %v245, 6
  %v247 = vand.u32 %v245, 63
  %v248 = vsub.s32 0, %v247
  %v249 = vsel %vm243, %v248, %v247
  %vm250 = vcmp.lt.s32.totalorder %v42, 0
  %v251 = vsub.s32 0, %v42
  %v252 = vsel %vm250, %v251, %v42
  %v253 = vshrl.u32 %v252, 6
  %v254 = vand.u32 %v252, 63
  %v255 = vsub.s32 0, %v254
  %v256 = vsel %vm250, %v255, %v254
  %vm257 = vcmp.lt.s32.totalorder %v43, 0
  %v258 = vsub.s32 0, %v43
  %v259 = vsel %vm257, %v258, %v43
  %v260 = vshrl.u32 %v259, 6
  %v261 = vand.u32 %v259, 63
  %v262 = vsub.s32 0, %v261
  %v263 = vsel %vm257, %v262, %v261
  %vm264 = vcmp.lt.s32.totalorder %v44, 0
  %v265 = vsub.s32 0, %v44
  %v266 = vsel %vm264, %v265, %v44
  %v267 = vshrl.u32 %v266, 6
  %v268 = vand.u32 %v266, 63
  %v269 = vsub.s32 0, %v268
  %v270 = vsel %vm264, %v269, %v268
  %vm271 = vcmp.lt.s32.totalorder %v45, 0
  %v272 = vsub.s32 0, %v45
  %v273 = vsel %vm271, %v272, %v45
  %v274 = vshrl.u32 %v273, 6
  %v275 = vand.u32 %v273, 63
  %v276 = vsub.s32 0, %v275
  %v277 = vsel %vm271, %v276, %v275
  %vm278 = vcmp.lt.s32.totalorder %v46, 0
  %v279 = vsub.s32 0, %v46
  %v280 = vsel %vm278, %v279, %v46
  %v281 = vshrl.u32 %v280, 6
  %v282 = vand.u32 %v280, 63
  %v283 = vsub.s32 0, %v282
  %v284 = vsel %vm278, %v283, %v282
  %vm285 = vcmp.lt.s32.totalorder %v47, 0
  %v286 = vsub.s32 0, %v47
  %v287 = vsel %vm285, %v286, %v47
  %v288 = vshrl.u32 %v287, 6
  %v289 = vand.u32 %v287, 63
  %v290 = vsub.s32 0, %v289
  %v291 = vsel %vm285, %v290, %v289
  %vm292 = vcmp.lt.s32.totalorder %v48, 0
  %v293 = vsub.s32 0, %v48
  %v294 = vsel %vm292, %v293, %v48
  %v295 = vshrl.u32 %v294, 6
  %v296 = vand.u32 %v294, 63
  %v297 = vsub.s32 0, %v296
  %v298 = vsel %vm292, %v297, %v296
  %vm299 = vcmp.lt.s32.totalorder %v49, 0
  %v300 = vsub.s32 0, %v49
  %v301 = vsel %vm299, %v300, %v49
  %v302 = vshrl.u32 %v301, 6
  %v303 = vand.u32 %v301, 63
  %v304 = vsub.s32 0, %v303
  %v305 = vsel %vm299, %v304, %v303
  %vm306 = vcmp.lt.s32.totalorder %v50, 0
  %v307 = vsub.s32 0, %v50
  %v308 = vsel %vm306, %v307, %v50
  %v309 = vshrl.u32 %v308, 6
  %v310 = vand.u32 %v308, 63
  %v311 = vsub.s32 0, %v310
  %v312 = vsel %vm306, %v311, %v310
  %vm313 = vcmp.lt.s32.totalorder %v51, 0
  %v314 = vsub.s32 0, %v51
  %v315 = vsel %vm313, %v314, %v51
  %v316 = vshrl.u32 %v315, 6
  %v317 = vand.u32 %v315, 63
  %v318 = vsub.s32 0, %v317
  %v319 = vsel %vm313, %v318, %v317
  %vm320 = vcmp.lt.s32.totalorder %v52, 0
  %v321 = vsub.s32 0, %v52
  %v322 = vsel %vm320, %v321, %v52
  %v323 = vshrl.u32 %v322, 6
  %v324 = vand.u32 %v322, 63
  %v325 = vsub.s32 0, %v324
  %v326 = vsel %vm320, %v325, %v324
  %vm327 = vcmp.lt.s32.totalorder %v53, 0
  %v328 = vsub.s32 0, %v53
  %v329 = vsel %vm327, %v328, %v53
  %v330 = vshrl.u32 %v329, 6
  %v331 = vand.u32 %v329, 63
  %v332 = vsub.s32 0, %v331
  %v333 = vsel %vm327, %v332, %v331
  %vm334 = vcmp.lt.s32.totalorder %v54, 0
  %v335 = vsub.s32 0, %v54
  %v336 = vsel %vm334, %v335, %v54
  %v337 = vshrl.u32 %v336, 6
  %v338 = vand.u32 %v336, 63
  %v339 = vsub.s32 0, %v338
  %v340 = vsel %vm334, %v339, %v338
  %vm341 = vcmp.lt.s32.totalorder %v55, 0
  %v342 = vsub.s32 0, %v55
  %v343 = vsel %vm341, %v342, %v55
  %v344 = vshrl.u32 %v343, 6
  %v345 = vand.u32 %v343, 63
  %v346 = vsub.s32 0, %v345
  %v347 = vsel %vm341, %v346, %v345
  %vm348 = vcmp.lt.s32.totalorder %v56, 0
  %v349 = vsub.s32 0, %v56
  %v350 = vsel %vm348, %v349, %v56
  %v351 = vshrl.u32 %v350, 6
  %v352 = vand.u32 %v350, 63
  %v353 = vsub.s32 0, %v352
  %v354 = vsel %vm348, %v353, %v352
  %vm355 = vcmp.lt.s32.totalorder %v57, 0
  %v356 = vsub.s32 0, %v57
  %v357 = vsel %vm355, %v356, %v57
  %v358 = vshrl.u32 %v357, 6
  %v359 = vand.u32 %v357, 63
  %v360 = vsub.s32 0, %v359
  %v361 = vsel %vm355, %v360, %v359
  %vm362 = vcmp.lt.s32.totalorder %v58, 0
  %v363 = vsub.s32 0, %v58
  %v364 = vsel %vm362, %v363, %v58
  %v365 = vshrl.u32 %v364, 6
  %v366 = vand.u32 %v364, 63
  %v367 = vsub.s32 0, %v366
  %v368 = vsel %vm362, %v367, %v366
  %vm369 = vcmp.lt.s32.totalorder %v59, 0
  %v370 = vsub.s32 0, %v59
  %v371 = vsel %vm369, %v370, %v59
  %v372 = vshrl.u32 %v371, 6
  %v373 = vand.u32 %v371, 63
  %v374 = vsub.s32 0, %v373
  %v375 = vsel %vm369, %v374, %v373
  %vm376 = vcmp.lt.s32.totalorder %v60, 0
  %v377 = vsub.s32 0, %v60
  %v378 = vsel %vm376, %v377, %v60
  %v379 = vshrl.u32 %v378, 6
  %v380 = vand.u32 %v378, 63
  %v381 = vsub.s32 0, %v380
  %v382 = vsel %vm376, %v381, %v380
  %vm383 = vcmp.lt.s32.totalorder %v61, 0
  %v384 = vsub.s32 0, %v61
  %v385 = vsel %vm383, %v384, %v61
  %v386 = vshrl.u32 %v385, 6
  %v387 = vand.u32 %v385, 63
  %v388 = vsub.s32 0, %v387
  %v389 = vsel %vm383, %v388, %v387
  %vm390 = vcmp.lt.s32.totalorder %v62, 0
  %v391 = vsub.s32 0, %v62
  %v392 = vsel %vm390, %v391, %v62
  %v393 = vshrl.u32 %v392, 6
  %v394 = vand.u32 %v392, 63
  %v395 = vsub.s32 0, %v394
  %v396 = vsel %vm390, %v395, %v394
  %vm397 = vcmp.lt.s32.totalorder %v63, 0
  %v398 = vsub.s32 0, %v63
  %v399 = vsel %vm397, %v398, %v63
  %v400 = vshrl.u32 %v399, 6
  %v401 = vand.u32 %v399, 63
  %v402 = vsub.s32 0, %v401
  %v403 = vsel %vm397, %v402, %v401
  %vm404 = vcmp.lt.s32.totalorder %v64, 0
  %v405 = vsub.s32 0, %v64
  %v406 = vsel %vm404, %v405, %v64
  %v407 = vshrl.u32 %v406, 6
  %v408 = vand.u32 %v406, 63
  %v409 = vsub.s32 0, %v408
  %v410 = vsel %vm404, %v409, %v408
  %vm411 = vcmp.lt.s32.totalorder %v65, 0
  %v412 = vsub.s32 0, %v65
  %v413 = vsel %vm411, %v412, %v65
  %v414 = vshrl.u32 %v413, 6
  %v415 = vand.u32 %v413, 63
  %v416 = vsub.s32 0, %v415
  %v417 = vsel %vm411, %v416, %v415
  %vm418 = vcmp.lt.s32.totalorder %v66, 0
  %v419 = vsub.s32 0, %v66
  %v420 = vsel %vm418, %v419, %v66
  %v421 = vshrl.u32 %v420, 6
  %v422 = vand.u32 %v420, 63
  %v423 = vsub.s32 0, %v422
  %v424 = vsel %vm418, %v423, %v422
  %vm425 = vcmp.lt.s32.totalorder %v67, 0
  %v426 = vsub.s32 0, %v67
  %v427 = vsel %vm425, %v426, %v67
  %v428 = vshrl.u32 %v427, 6
  %v429 = vand.u32 %v427, 63
  %v430 = vsub.s32 0, %v429
  %v431 = vsel %vm425, %v430, %v429
  %vm432 = vcmp.lt.s32.totalorder %v68, 0
  %v433 = vsub.s32 0, %v68
  %v434 = vsel %vm432, %v433, %v68
  %v435 = vshrl.u32 %v434, 6
  %v436 = vand.u32 %v434, 63
  %v437 = vsub.s32 0, %v436
  %v438 = vsel %vm432, %v437, %v436
  %vm439 = vcmp.lt.s32.totalorder %v69, 0
  %v440 = vsub.s32 0, %v69
  %v441 = vsel %vm439, %v440, %v69
  %v442 = vshrl.u32 %v441, 6
  %v443 = vand.u32 %v441, 63
  %v444 = vsub.s32 0, %v443
  %v445 = vsel %vm439, %v444, %v443
  %vm446 = vcmp.lt.s32.totalorder %v70, 0
  %v447 = vsub.s32 0, %v70
  %v448 = vsel %vm446, %v447, %v70
  %v449 = vshrl.u32 %v448, 6
  %v450 = vand.u32 %v448, 63
  %v451 = vsub.s32 0, %v450
  %v452 = vsel %vm446, %v451, %v450
  %vm453 = vcmp.lt.s32.totalorder %v71, 0
  %v454 = vsub.s32 0, %v71
  %v455 = vsel %vm453, %v454, %v71
  %v456 = vshrl.u32 %v455, 6
  %v457 = vand.u32 %v455, 63
  %v458 = vsub.s32 0, %v457
  %v459 = vsel %vm453, %v458, %v457
  %vm460 = vcmp.lt.s32.totalorder %v72, 0
  %v461 = vsub.s32 0, %v72
  %v462 = vsel %vm460, %v461, %v72
  %v463 = vshrl.u32 %v462, 6
  %v464 = vand.u32 %v462, 63
  %v465 = vsub.s32 0, %v464
  %v466 = vsel %vm460, %v465, %v464
  %vm467 = vcmp.lt.s32.totalorder %v73, 0
  %v468 = vsub.s32 0, %v73
  %v469 = vsel %vm467, %v468, %v73
  %v470 = vshrl.u32 %v469, 6
  %v471 = vand.u32 %v469, 63
  %v472 = vsub.s32 0, %v471
  %v473 = vsel %vm467, %v472, %v471
  %vm474 = vcmp.lt.s32.totalorder %v74, 0
  %v475 = vsub.s32 0, %v74
  %v476 = vsel %vm474, %v475, %v74
  %v477 = vshrl.u32 %v476, 6
  %v478 = vand.u32 %v476, 63
  %v479 = vsub.s32 0, %v478
  %v480 = vsel %vm474, %v479, %v478
  %vm481 = vcmp.lt.s32.totalorder %v75, 0
  %v482 = vsub.s32 0, %v75
  %v483 = vsel %vm481, %v482, %v75
  %v484 = vshrl.u32 %v483, 6
  %v485 = vand.u32 %v483, 63
  %v486 = vsub.s32 0, %v485
  %v487 = vsel %vm481, %v486, %v485
  %vm488 = vcmp.lt.s32.totalorder %v76, 0
  %v489 = vsub.s32 0, %v76
  %v490 = vsel %vm488, %v489, %v76
  %v491 = vshrl.u32 %v490, 6
  %v492 = vand.u32 %v490, 63
  %v493 = vsub.s32 0, %v492
  %v494 = vsel %vm488, %v493, %v492
  %vm495 = vcmp.lt.s32.totalorder %v77, 0
  %v496 = vsub.s32 0, %v77
  %v497 = vsel %vm495, %v496, %v77
  %v498 = vshrl.u32 %v497, 6
  %v499 = vand.u32 %v497, 63
  %v500 = vsub.s32 0, %v499
  %v501 = vsel %vm495, %v500, %v499
  %vm502 = vcmp.lt.s32.totalorder %v78, 0
  %v503 = vsub.s32 0, %v78
  %v504 = vsel %vm502, %v503, %v78
  %v505 = vshrl.u32 %v504, 6
  %v506 = vand.u32 %v504, 63
  %v507 = vsub.s32 0, %v506
  %v508 = vsel %vm502, %v507, %v506
  %vm509 = vcmp.lt.s32.totalorder %v79, 0
  %v510 = vsub.s32 0, %v79
  %v511 = vsel %vm509, %v510, %v79
  %v512 = vshrl.u32 %v511, 6
  %v513 = vand.u32 %v511, 63
  %v514 = vsub.s32 0, %v513
  %v515 = vsel %vm509, %v514, %v513
  %vm516 = vcmp.lt.s32.totalorder %v80, 0
  %v517 = vsub.s32 0, %v80
  %v518 = vsel %vm516, %v517, %v80
  %v519 = vshrl.u32 %v518, 6
  %v520 = vand.u32 %v518, 63
  %v521 = vsub.s32 0, %v520
  %v522 = vsel %vm516, %v521, %v520
  %vm523 = vcmp.lt.s32.totalorder %v81, 0
  %v524 = vsub.s32 0, %v81
  %v525 = vsel %vm523, %v524, %v81
  %v526 = vshrl.u32 %v525, 6
  %v527 = vand.u32 %v525, 63
  %v528 = vsub.s32 0, %v527
  %v529 = vsel %vm523, %v528, %v527
  %vm530 = vcmp.ne.s32.totalorder %v88, 0
  %vm531 = vcmp.ne.s32.totalorder %v95, 0
  %vm532 = vcmp.ne.s32.totalorder %v102, 0
  %vm533 = vcmp.ne.s32.totalorder %v109, 0
  %vm534 = vcmp.ne.s32.totalorder %v116, 0
  %vm535 = vcmp.ne.s32.totalorder %v123, 0
  %vm536 = vcmp.ne.s32.totalorder %v130, 0
  %vm537 = vcmp.ne.s32.totalorder %v137, 0
  %vm538 = vcmp.ne.s32.totalorder %v144, 0
  %vm539 = vcmp.ne.s32.totalorder %v151, 0
  %vm540 = vcmp.ne.s32.totalorder %v158, 0
  %vm541 = vcmp.ne.s32.totalorder %v165, 0
  %vm542 = vcmp.ne.s32.totalorder %v172, 0
  %vm543 = vcmp.ne.s32.totalorder %v179, 0
  %vm544 = vcmp.ne.s32.totalorder %v186, 0
  %vm545 = vcmp.ne.s32.totalorder %v193, 0
  %vm546 = vcmp.ne.s32.totalorder %v200, 0
  %vm547 = vcmp.ne.s32.totalorder %v207, 0
  %vm548 = vcmp.ne.s32.totalorder %v214, 0
  %vm549 = vcmp.ne.s32.totalorder %v221, 0
  %vm550 = vcmp.ne.s32.totalorder %v228, 0
  %vm551 = vcmp.ne.s32.totalorder %v235, 0
  %vm552 = vcmp.ne.s32.totalorder %v242, 0
  %vm553 = vcmp.ne.s32.totalorder %v249, 0
  %vm554 = vcmp.ne.s32.totalorder %v256, 0
  %vm555 = vcmp.ne.s32.totalorder %v263, 0
  %vm556 = vcmp.ne.s32.totalorder %v270, 0
  %vm557 = vcmp.ne.s32.totalorder %v277, 0
  %vm558 = vcmp.ne.s32.totalorder %v284, 0
  %vm559 = vcmp.ne.s32.totalorder %v291, 0
  %vm560 = vcmp.ne.s32.totalorder %v298, 0
  %vm561 = vcmp.ne.s32.totalorder %v305, 0
  %vm562 = vcmp.ne.s32.totalorder %v312, 0
  %vm563 = vcmp.ne.s32.totalorder %v319, 0
  %vm564 = vcmp.ne.s32.totalorder %v326, 0
  %vm565 = vcmp.ne.s32.totalorder %v333, 0
  %vm566 = vcmp.ne.s32.totalorder %v340, 0
  %vm567 = vcmp.ne.s32.totalorder %v347, 0
  %vm568 = vcmp.ne.s32.totalorder %v354, 0
  %vm569 = vcmp.ne.s32.totalorder %v361, 0
  %vm570 = vcmp.ne.s32.totalorder %v368, 0
  %vm571 = vcmp.ne.s32.totalorder %v375, 0
  %vm572 = vcmp.ne.s32.totalorder %v382, 0
  %vm573 = vcmp.ne.s32.totalorder %v389, 0
  %vm574 = vcmp.ne.s32.totalorder %v396, 0
  %vm575 = vcmp.ne.s32.totalorder %v403, 0
  %vm576 = vcmp.ne.s32.totalorder %v410, 0
  %vm577 = vcmp.ne.s32.totalorder %v417, 0
  %vm578 = vcmp.ne.s32.totalorder %v424, 0
  %vm579 = vcmp.ne.s32.totalorder %v431, 0
  %vm580 = vcmp.ne.s32.totalorder %v438, 0
  %vm581 = vcmp.ne.s32.totalorder %v445, 0
  %vm582 = vcmp.ne.s32.totalorder %v452, 0
  %vm583 = vcmp.ne.s32.totalorder %v459, 0
  %vm584 = vcmp.ne.s32.totalorder %v466, 0
  %vm585 = vcmp.ne.s32.totalorder %v473, 0
  %vm586 = vcmp.ne.s32.totalorder %v480, 0
  %vm587 = vcmp.ne.s32.totalorder %v487, 0
  %vm588 = vcmp.ne.s32.totalorder %v494, 0
  %vm589 = vcmp.ne.s32.totalorder %v501, 0
  %vm590 = vcmp.ne.s32.totalorder %v508, 0
  %vm591 = vcmp.ne.s32.totalorder %v515, 0
  %vm592 = vcmp.ne.s32.totalorder %v522, 0
  %vm593 = vcmp.ne.s32.totalorder %v529, 0
  %vm594 = vcmp.lt.s32.totalorder %v88, 0
  %vm595 = vcmp.lt.s32.totalorder %v95, 0
  %vm596 = vcmp.lt.s32.totalorder %v102, 0
  %vm597 = vcmp.lt.s32.totalorder %v109, 0
  %vm598 = vcmp.lt.s32.totalorder %v116, 0
  %vm599 = vcmp.lt.s32.totalorder %v123, 0
  %vm600 = vcmp.lt.s32.totalorder %v130, 0
  %vm601 = vcmp.lt.s32.totalorder %v137, 0
  %vm602 = vcmp.lt.s32.totalorder %v144, 0
  %vm603 = vcmp.lt.s32.totalorder %v151, 0
  %vm604 = vcmp.lt.s32.totalorder %v158, 0
  %vm605 = vcmp.lt.s32.totalorder %v165, 0
  %vm606 = vcmp.lt.s32.totalorder %v172, 0
  %vm607 = vcmp.lt.s32.totalorder %v179, 0
  %vm608 = vcmp.lt.s32.totalorder %v186, 0
  %vm609 = vcmp.lt.s32.totalorder %v193, 0
  %vm610 = vcmp.lt.s32.totalorder %v200, 0
  %vm611 = vcmp.lt.s32.totalorder %v207, 0
  %vm612 = vcmp.lt.s32.totalorder %v214, 0
  %vm613 = vcmp.lt.s32.totalorder %v221, 0
  %vm614 = vcmp.lt.s32.totalorder %v228, 0
  %vm615 = vcmp.lt.s32.totalorder %v235, 0
  %vm616 = vcmp.lt.s32.totalorder %v242, 0
  %vm617 = vcmp.lt.s32.totalorder %v249, 0
  %vm618 = vcmp.lt.s32.totalorder %v256, 0
  %vm619 = vcmp.lt.s32.totalorder %v263, 0
  %vm620 = vcmp.lt.s32.totalorder %v270, 0
  %vm621 = vcmp.lt.s32.totalorder %v277, 0
  %vm622 = vcmp.lt.s32.totalorder %v284, 0
  %vm623 = vcmp.lt.s32.totalorder %v291, 0
  %vm624 = vcmp.lt.s32.totalorder %v298, 0
  %vm625 = vcmp.lt.s32.totalorder %v305, 0
  %vm626 = vcmp.lt.s32.totalorder %v312, 0
  %vm627 = vcmp.lt.s32.totalorder %v319, 0
  %vm628 = vcmp.lt.s32.totalorder %v326, 0
  %vm629 = vcmp.lt.s32.totalorder %v333, 0
  %vm630 = vcmp.lt.s32.totalorder %v340, 0
  %vm631 = vcmp.lt.s32.totalorder %v347, 0
  %vm632 = vcmp.lt.s32.totalorder %v354, 0
  %vm633 = vcmp.lt.s32.totalorder %v361, 0
  %vm634 = vcmp.lt.s32.totalorder %v368, 0
  %vm635 = vcmp.lt.s32.totalorder %v375, 0
  %vm636 = vcmp.lt.s32.totalorder %v382, 0
  %vm637 = vcmp.lt.s32.totalorder %v389, 0
  %vm638 = vcmp.lt.s32.totalorder %v396, 0
  %vm639 = vcmp.lt.s32.totalorder %v403, 0
  %vm640 = vcmp.lt.s32.totalorder %v410, 0
  %vm641 = vcmp.lt.s32.totalorder %v417, 0
  %vm642 = vcmp.lt.s32.totalorder %v424, 0
  %vm643 = vcmp.lt.s32.totalorder %v431, 0
  %vm644 = vcmp.lt.s32.totalorder %v438, 0
  %vm645 = vcmp.lt.s32.totalorder %v445, 0
  %vm646 = vcmp.lt.s32.totalorder %v452, 0
  %vm647 = vcmp.lt.s32.totalorder %v459, 0
  %vm648 = vcmp.lt.s32.totalorder %v466, 0
  %vm649 = vcmp.lt.s32.totalorder %v473, 0
  %vm650 = vcmp.lt.s32.totalorder %v480, 0
  %vm651 = vcmp.lt.s32.totalorder %v487, 0
  %vm652 = vcmp.lt.s32.totalorder %v494, 0
  %vm653 = vcmp.lt.s32.totalorder %v501, 0
  %vm654 = vcmp.lt.s32.totalorder %v508, 0
  %vm655 = vcmp.lt.s32.totalorder %v515, 0
  %vm656 = vcmp.lt.s32.totalorder %v522, 0
  %vm657 = vcmp.lt.s32.totalorder %v529, 0
  %vm658 = vmand %vm594, %vm530
  %vm659 = vmand %vm595, %vm531
  %vm660 = vmand %vm596, %vm532
  %vm661 = vmand %vm597, %vm533
  %vm662 = vmand %vm598, %vm534
  %vm663 = vmand %vm599, %vm535
  %vm664 = vmand %vm600, %vm536
  %vm665 = vmand %vm601, %vm537
  %vm666 = vmand %vm602, %vm538
  %vm667 = vmand %vm603, %vm539
  %vm668 = vmand %vm604, %vm540
  %vm669 = vmand %vm605, %vm541
  %vm670 = vmand %vm606, %vm542
  %vm671 = vmand %vm607, %vm543
  %vm672 = vmand %vm608, %vm544
  %vm673 = vmand %vm609, %vm545
  %vm674 = vmand %vm610, %vm546
  %vm675 = vmand %vm611, %vm547
  %vm676 = vmand %vm612, %vm548
  %vm677 = vmand %vm613, %vm549
  %vm678 = vmand %vm614, %vm550
  %vm679 = vmand %vm615, %vm551
  %vm680 = vmand %vm616, %vm552
  %vm681 = vmand %vm617, %vm553
  %vm682 = vmand %vm618, %vm554
  %vm683 = vmand %vm619, %vm555
  %vm684 = vmand %vm620, %vm556
  %vm685 = vmand %vm621, %vm557
  %vm686 = vmand %vm622, %vm558
  %vm687 = vmand %vm623, %vm559
  %vm688 = vmand %vm624, %vm560
  %vm689 = vmand %vm625, %vm561
  %vm690 = vmand %vm626, %vm562
  %vm691 = vmand %vm627, %vm563
  %vm692 = vmand %vm628, %vm564
  %vm693 = vmand %vm629, %vm565
  %vm694 = vmand %vm630, %vm566
  %vm695 = vmand %vm631, %vm567
  %vm696 = vmand %vm632, %vm568
  %vm697 = vmand %vm633, %vm569
  %vm698 = vmand %vm634, %vm570
  %vm699 = vmand %vm635, %vm571
  %vm700 = vmand %vm636, %vm572
  %vm701 = vmand %vm637, %vm573
  %vm702 = vmand %vm638, %vm574
  %vm703 = vmand %vm639, %vm575
  %vm704 = vmand %vm640, %vm576
  %vm705 = vmand %vm641, %vm577
  %vm706 = vmand %vm642, %vm578
  %vm707 = vmand %vm643, %vm579
  %vm708 = vmand %vm644, %vm580
  %vm709 = vmand %vm645, %vm581
  %vm710 = vmand %vm646, %vm582
  %vm711 = vmand %vm647, %vm583
  %vm712 = vmand %vm648, %vm584
  %vm713 = vmand %vm649, %vm585
  %vm714 = vmand %vm650, %vm586
  %vm715 = vmand %vm651, %vm587
  %vm716 = vmand %vm652, %vm588
  %vm717 = vmand %vm653, %vm589
  %vm718 = vmand %vm654, %vm590
  %vm719 = vmand %vm655, %vm591
  %vm720 = vmand %vm656, %vm592
  %vm721 = vmand %vm657, %vm593
  %v722 = vadd.s32 %v88, 64
  %v723 = vadd.s32 %v95, 64
  %v724 = vadd.s32 %v102, 64
  %v725 = vadd.s32 %v109, 64
  %v726 = vadd.s32 %v116, 64
  %v727 = vadd.s32 %v123, 64
  %v728 = vadd.s32 %v130, 64
  %v729 = vadd.s32 %v137, 64
  %v730 = vadd.s32 %v144, 64
  %v731 = vadd.s32 %v151, 64
  %v732 = vadd.s32 %v158, 64
  %v733 = vadd.s32 %v165, 64
  %v734 = vadd.s32 %v172, 64
  %v735 = vadd.s32 %v179, 64
  %v736 = vadd.s32 %v186, 64
  %v737 = vadd.s32 %v193, 64
  %v738 = vadd.s32 %v200, 64
  %v739 = vadd.s32 %v207, 64
  %v740 = vadd.s32 %v214, 64
  %v741 = vadd.s32 %v221, 64
  %v742 = vadd.s32 %v228, 64
  %v743 = vadd.s32 %v235, 64
  %v744 = vadd.s32 %v242, 64
  %v745 = vadd.s32 %v249, 64
  %v746 = vadd.s32 %v256, 64
  %v747 = vadd.s32 %v263, 64
  %v748 = vadd.s32 %v270, 64
  %v749 = vadd.s32 %v277, 64
  %v750 = vadd.s32 %v284, 64
  %v751 = vadd.s32 %v291, 64
  %v752 = vadd.s32 %v298, 64
  %v753 = vadd.s32 %v305, 64
  %v754 = vadd.s32 %v312, 64
  %v755 = vadd.s32 %v319, 64
  %v756 = vadd.s32 %v326, 64
  %v757 = vadd.s32 %v333, 64
  %v758 = vadd.s32 %v340, 64
  %v759 = vadd.s32 %v347, 64
  %v760 = vadd.s32 %v354, 64
  %v761 = vadd.s32 %v361, 64
  %v762 = vadd.s32 %v368, 64
  %v763 = vadd.s32 %v375, 64
  %v764 = vadd.s32 %v382, 64
  %v765 = vadd.s32 %v389, 64
  %v766 = vadd.s32 %v396, 64
  %v767 = vadd.s32 %v403, 64
  %v768 = vadd.s32 %v410, 64
  %v769 = vadd.s32 %v417, 64
  %v770 = vadd.s32 %v424, 64
  %v771 = vadd.s32 %v431, 64
  %v772 = vadd.s32 %v438, 64
  %v773 = vadd.s32 %v445, 64
  %v774 = vadd.s32 %v452, 64
  %v775 = vadd.s32 %v459, 64
  %v776 = vadd.s32 %v466, 64
  %v777 = vadd.s32 %v473, 64
  %v778 = vadd.s32 %v480, 64
  %v779 = vadd.s32 %v487, 64
  %v780 = vadd.s32 %v494, 64
  %v781 = vadd.s32 %v501, 64
  %v782 = vadd.s32 %v508, 64
  %v783 = vadd.s32 %v515, 64
  %v784 = vadd.s32 %v522, 64
  %v785 = vadd.s32 %v529, 64
  %v786 = vsel %vm658, %v722, %v88
  %v787 = vsel %vm659, %v723, %v95
  %v788 = vsel %vm660, %v724, %v102
  %v789 = vsel %vm661, %v725, %v109
  %v790 = vsel %vm662, %v726, %v116
  %v791 = vsel %vm663, %v727, %v123
  %v792 = vsel %vm664, %v728, %v130
  %v793 = vsel %vm665, %v729, %v137
  %v794 = vsel %vm666, %v730, %v144
  %v795 = vsel %vm667, %v731, %v151
  %v796 = vsel %vm668, %v732, %v158
  %v797 = vsel %vm669, %v733, %v165
  %v798 = vsel %vm670, %v734, %v172
  %v799 = vsel %vm671, %v735, %v179
  %v800 = vsel %vm672, %v736, %v186
  %v801 = vsel %vm673, %v737, %v193
  %v802 = vsel %vm674, %v738, %v200
  %v803 = vsel %vm675, %v739, %v207
  %v804 = vsel %vm676, %v740, %v214
  %v805 = vsel %vm677, %v741, %v221
  %v806 = vsel %vm678, %v742, %v228
  %v807 = vsel %vm679, %v743, %v235
  %v808 = vsel %vm680, %v744, %v242
  %v809 = vsel %vm681, %v745, %v249
  %v810 = vsel %vm682, %v746, %v256
  %v811 = vsel %vm683, %v747, %v263
  %v812 = vsel %vm684, %v748, %v270
  %v813 = vsel %vm685, %v749, %v277
  %v814 = vsel %vm686, %v750, %v284
  %v815 = vsel %vm687, %v751, %v291
  %v816 = vsel %vm688, %v752, %v298
  %v817 = vsel %vm689, %v753, %v305
  %v818 = vsel %vm690, %v754, %v312
  %v819 = vsel %vm691, %v755, %v319
  %v820 = vsel %vm692, %v756, %v326
  %v821 = vsel %vm693, %v757, %v333
  %v822 = vsel %vm694, %v758, %v340
  %v823 = vsel %vm695, %v759, %v347
  %v824 = vsel %vm696, %v760, %v354
  %v825 = vsel %vm697, %v761, %v361
  %v826 = vsel %vm698, %v762, %v368
  %v827 = vsel %vm699, %v763, %v375
  %v828 = vsel %vm700, %v764, %v382
  %v829 = vsel %vm701, %v765, %v389
  %v830 = vsel %vm702, %v766, %v396
  %v831 = vsel %vm703, %v767, %v403
  %v832 = vsel %vm704, %v768, %v410
  %v833 = vsel %vm705, %v769, %v417
  %v834 = vsel %vm706, %v770, %v424
  %v835 = vsel %vm707, %v771, %v431
  %v836 = vsel %vm708, %v772, %v438
  %v837 = vsel %vm709, %v773, %v445
  %v838 = vsel %vm710, %v774, %v452
  %v839 = vsel %vm711, %v775, %v459
  %v840 = vsel %vm712, %v776, %v466
  %v841 = vsel %vm713, %v777, %v473
  %v842 = vsel %vm714, %v778, %v480
  %v843 = vsel %vm715, %v779, %v487
  %v844 = vsel %vm716, %v780, %v494
  %v845 = vsel %vm717, %v781, %v501
  %v846 = vsel %vm718, %v782, %v508
  %v847 = vsel %vm719, %v783, %v515
  %v848 = vsel %vm720, %v784, %v522
  %v849 = vsel %vm721, %v785, %v529
  %v850 = vld [vmem:[%s0] sm:$0xff]
  %v851 = vld [vmem:[%s0 + $0x8] sm:$0xff]
  %v852 = vld [vmem:[%s0 + $0x10] sm:$0xff]
  %v853 = vld [vmem:[%s0 + $0x18] sm:$0xff]
  %v854 = vld [vmem:[%s0 + $0x20] sm:$0xff]
  %v855 = vld [vmem:[%s0 + $0x28] sm:$0xff]
  %v856 = vld [vmem:[%s0 + $0x30] sm:$0xff]
  %v857 = vld [vmem:[%s0 + $0x38] sm:$0xff]
  %v858 = vld [vmem:[%s0 + $0x40] sm:$0xff]
  %v859 = vld [vmem:[%s0 + $0x48] sm:$0xff]
  %v860 = vld [vmem:[%s0 + $0x50] sm:$0xff]
  %v861 = vld [vmem:[%s0 + $0x58] sm:$0xff]
  %v862 = vld [vmem:[%s0 + $0x60] sm:$0xff]
  %v863 = vld [vmem:[%s0 + $0x68] sm:$0xff]
  %v864 = vld [vmem:[%s0 + $0x70] sm:$0xff]
  %v865 = vld [vmem:[%s0 + $0x78] sm:$0xff]
  %v866 = vld [vmem:[%s0 + $0x80] sm:$0xff]
  %v867 = vld [vmem:[%s0 + $0x88] sm:$0xff]
  %v868 = vld [vmem:[%s0 + $0x90] sm:$0xff]
  %v869 = vld [vmem:[%s0 + $0x98] sm:$0xff]
  %v870 = vld [vmem:[%s0 + $0xa0] sm:$0xff]
  %v871 = vld [vmem:[%s0 + $0xa8] sm:$0xff]
  %v872 = vld [vmem:[%s0 + $0xb0] sm:$0xff]
  %v873 = vld [vmem:[%s0 + $0xb8] sm:$0xff]
  %v874 = vld [vmem:[%s0 + $0xc0] sm:$0xff]
  %v875 = vld [vmem:[%s0 + $0xc8] sm:$0xff]
  %v876 = vld [vmem:[%s0 + $0xd0] sm:$0xff]
  %v877 = vld [vmem:[%s0 + $0xd8] sm:$0xff]
  %v878 = vld [vmem:[%s0 + $0xe0] sm:$0xff]
  %v879 = vld [vmem:[%s0 + $0xe8] sm:$0xff]
  %v880 = vld [vmem:[%s0 + $0xf0] sm:$0xff]
  %v881 = vld [vmem:[%s0 + $0xf8] sm:$0xff]
  %v882 = vld [vmem:[%s0 + $0x100] sm:$0xff]
  %v883 = vld [vmem:[%s0 + $0x108] sm:$0xff]
  %v884 = vld [vmem:[%s0 + $0x110] sm:$0xff]
  %v885 = vld [vmem:[%s0 + $0x118] sm:$0xff]
  %v886 = vld [vmem:[%s0 + $0x120] sm:$0xff]
  %v887 = vld [vmem:[%s0 + $0x128] sm:$0xff]
  %v888 = vld [vmem:[%s0 + $0x130] sm:$0xff]
  %v889 = vld [vmem:[%s0 + $0x138] sm:$0xff]
  %v890 = vld [vmem:[%s0 + $0x140] sm:$0xff]
  %v891 = vld [vmem:[%s0 + $0x148] sm:$0xff]
  %v892 = vld [vmem:[%s0 + $0x150] sm:$0xff]
  %v893 = vld [vmem:[%s0 + $0x158] sm:$0xff]
  %v894 = vld [vmem:[%s0 + $0x160] sm:$0xff]
  %v895 = vld [vmem:[%s0 + $0x168] sm:$0xff]
  %v896 = vld [vmem:[%s0 + $0x170] sm:$0xff]
  %v897 = vld [vmem:[%s0 + $0x178] sm:$0xff]
  %v898 = vld [vmem:[%s0 + $0x180] sm:$0xff]
  %v899 = vld [vmem:[%s0 + $0x188] sm:$0xff]
  %v900 = vld [vmem:[%s0 + $0x190] sm:$0xff]
  %v901 = vld [vmem:[%s0 + $0x198] sm:$0xff]
  %v902 = vld [vmem:[%s0 + $0x1a0] sm:$0xff]
  %v903 = vld [vmem:[%s0 + $0x1a8] sm:$0xff]
  %v904 = vld [vmem:[%s0 + $0x1b0] sm:$0xff]
  %v905 = vld [vmem:[%s0 + $0x1b8] sm:$0xff]
  %v906 = vld [vmem:[%s0 + $0x1c0] sm:$0xff]
  %v907 = vld [vmem:[%s0 + $0x1c8] sm:$0xff]
  %v908 = vld [vmem:[%s0 + $0x1d0] sm:$0xff]
  %v909 = vld [vmem:[%s0 + $0x1d8] sm:$0xff]
  %v910 = vld [vmem:[%s0 + $0x1e0] sm:$0xff]
  %v911 = vld [vmem:[%s0 + $0x1e8] sm:$0xff]
  %v912 = vld [vmem:[%s0 + $0x1f0] sm:$0xff]
  %v913 = vld [vmem:[%s0 + $0x1f8] sm:$0xff]
  %v914 = vld [vmem:[%s1] sm:$0xff]
  %v915 = vld [vmem:[%s1 + $0x8] sm:$0xff]
  %v916 = vld [vmem:[%s1 + $0x10] sm:$0xff]
  %v917 = vld [vmem:[%s1 + $0x18] sm:$0xff]
  %v918 = vld [vmem:[%s1 + $0x20] sm:$0xff]
  %v919 = vld [vmem:[%s1 + $0x28] sm:$0xff]
  %v920 = vld [vmem:[%s1 + $0x30] sm:$0xff]
  %v921 = vld [vmem:[%s1 + $0x38] sm:$0xff]
  %v922 = vld [vmem:[%s1 + $0x40] sm:$0xff]
  %v923 = vld [vmem:[%s1 + $0x48] sm:$0xff]
  %v924 = vld [vmem:[%s1 + $0x50] sm:$0xff]
  %v925 = vld [vmem:[%s1 + $0x58] sm:$0xff]
  %v926 = vld [vmem:[%s1 + $0x60] sm:$0xff]
  %v927 = vld [vmem:[%s1 + $0x68] sm:$0xff]
  %v928 = vld [vmem:[%s1 + $0x70] sm:$0xff]
  %v929 = vld [vmem:[%s1 + $0x78] sm:$0xff]
  %930 = vmatprep.subr.mxu0 0.0
  %931 = vmatpush1.msra.mxu0 %v914
  %932 = vmatprep.subr.mxu0 0.0
  %933 = vmatpush1.msra.mxu0 %v915
  %934 = vmatprep.subr.mxu0 0.0
  %935 = vmatpush1.msra.mxu0 %v916
  %936 = vmatprep.subr.mxu0 0.0
  %937 = vmatpush1.msra.mxu0 %v917
  %938 = vmatprep.subr.mxu0 0.0
  %939 = vmatpush1.msra.mxu0 %v918
  %940 = vmatprep.subr.mxu0 0.0
  %941 = vmatpush1.msra.mxu0 %v919
  %942 = vmatprep.subr.mxu0 0.0
  %943 = vmatpush1.msra.mxu0 %v920
  %944 = vmatprep.subr.mxu0 0.0
  %945 = vmatpush1.msra.mxu0 %v921
  %946 = vmatprep.subr.mxu0 0.0
  %947 = vmatpush1.msra.mxu0 %v922
  %948 = vmatprep.subr.mxu0 0.0
  %949 = vmatpush1.msra.mxu0 %v923
  %950 = vmatprep.subr.mxu0 0.0
  %951 = vmatpush1.msra.mxu0 %v924
  %952 = vmatprep.subr.mxu0 0.0
  %953 = vmatpush1.msra.mxu0 %v925
  %954 = vmatprep.subr.mxu0 0.0
  %955 = vmatpush1.msra.mxu0 %v926
  %956 = vmatprep.subr.mxu0 0.0
  %957 = vmatpush1.msra.mxu0 %v927
  %958 = vmatprep.subr.mxu0 0.0
  %959 = vmatpush1.msra.mxu0 %v928
  %960 = vmatprep.subr.mxu0 0.0
  %961 = vmatpush1.msra.mxu0 %v929
  %962 = vmatprep.subr.mxu0 0.0
  %963 = vmatpush1.msra.mxu0 0.0
  %964 = vmatprep.subr.mxu0 0.0
  %965 = vmatpush1.msra.mxu0 0.0
  %966 = vmatprep.subr.mxu0 0.0
  %967 = vmatpush1.msra.mxu0 0.0
  %968 = vmatprep.subr.mxu0 0.0
  %969 = vmatpush1.msra.mxu0 0.0
  %970 = vmatprep.subr.mxu0 0.0
  %971 = vmatpush1.msra.mxu0 0.0
  %972 = vmatprep.subr.mxu0 0.0
  %973 = vmatpush1.msra.mxu0 0.0
  %974 = vmatprep.subr.mxu0 0.0
  %975 = vmatpush1.msra.mxu0 0.0
  %976 = vmatprep.subr.mxu0 0.0
  %977 = vmatpush1.msra.mxu0 0.0
  %978 = vmatprep.subr.mxu0 0.0
  %979 = vmatpush1.msra.mxu0 0.0
  %980 = vmatprep.subr.mxu0 0.0
  %981 = vmatpush1.msra.mxu0 0.0
  %982 = vmatprep.subr.mxu0 0.0
  %983 = vmatpush1.msra.mxu0 0.0
  %984 = vmatprep.subr.mxu0 0.0
  %985 = vmatpush1.msra.mxu0 0.0
  %986 = vmatprep.subr.mxu0 0.0
  %987 = vmatpush1.msra.mxu0 0.0
  %988 = vmatprep.subr.mxu0 0.0
  %989 = vmatpush1.msra.mxu0 0.0
  %990 = vmatprep.subr.mxu0 0.0
  %991 = vmatpush1.msra.mxu0 0.0
  %992 = vmatprep.subr.mxu0 0.0
  %993 = vmatpush1.msra.mxu0 0.0
  %994 = vmatprep.mubr.f32.mxu0 0.0
  %995 = vmatmul.mubr.f32.gmra.mrb[0].mxu0 %v850
  %v996 = vpop.f32.mrb[0].mxu0
  %v997 = vadd.f32 0.0, %v996
  %v998 = vpop.f32.mrb[0].mxu0
  %999 = vmatprep.mubr.f32.mxu0 0.0
  %1000 = vmatmul.mubr.f32.gmra.mrb[0].mxu0 %v851
  %v1001 = vpop.f32.mrb[0].mxu0
  %v1002 = vadd.f32 0.0, %v1001
  %v1003 = vpop.f32.mrb[0].mxu0
  %1004 = vmatprep.mubr.f32.mxu0 0.0
  %1005 = vmatmul.mubr.f32.gmra.mrb[0].mxu0 %v852
  %v1006 = vpop.f32.mrb[0].mxu0
  %v1007 = vadd.f32 0.0, %v1006
  %v1008 = vpop.f32.mrb[0].mxu0
  %1009 = vmatprep.mubr.f32.mxu0 0.0
  %1010 = vmatmul.mubr.f32.gmra.mrb[0].mxu0 %v853
  %v1011 = vpop.f32.mrb[0].mxu0
  %v1012 = vadd.f32 0.0, %v1011
  %v1013 = vpop.f32.mrb[0].mxu0
  %1014 = vmatprep.mubr.f32.mxu0 0.0
  %1015 = vmatmul.mubr.f32.gmra.mrb[0].mxu0 %v854
  %v1016 = vpop.f32.mrb[0].mxu0
  %v1017 = vadd.f32 0.0, %v1016
  %v1018 = vpop.f32.mrb[0].mxu0
  %1019 = vmatprep.mubr.f32.mxu0 0.0
  %1020 = vmatmul.mubr.f32.gmra.mrb[0].mxu0 %v855
  %v1021 = vpop.f32.mrb[0].mxu0
  %v1022 = vadd.f32 0.0, %v1021
  %v1023 = vpop.f32.mrb[0].mxu0
  %1024 = vmatprep.mubr.f32.mxu0 0.0
  %1025 = vmatmul.mubr.f32.gmra.mrb[0].mxu0 %v856
  %v1026 = vpop.f32.mrb[0].mxu0
  %v1027 = vadd.f32 0.0, %v1026
  %v1028 = vpop.f32.mrb[0].mxu0
  %1029 = vmatprep.mubr.f32.mxu0 0.0
  %1030 = vmatmul.mubr.f32.gmra.mrb[0].mxu0 %v857
  %v1031 = vpop.f32.mrb[0].mxu0
  %v1032 = vadd.f32 0.0, %v1031
  %v1033 = vpop.f32.mrb[0].mxu0
  %1034 = vmatprep.mubr.f32.mxu0 0.0
  %1035 = vmatmul.mubr.f32.gmra.mrb[0].mxu0 %v858
  %v1036 = vpop.f32.mrb[0].mxu0
  %v1037 = vadd.f32 0.0, %v1036
  %v1038 = vpop.f32.mrb[0].mxu0
  %1039 = vmatprep.mubr.f32.mxu0 0.0
  %1040 = vmatmul.mubr.f32.gmra.mrb[0].mxu0 %v859
  %v1041 = vpop.f32.mrb[0].mxu0
  %v1042 = vadd.f32 0.0, %v1041
  %v1043 = vpop.f32.mrb[0].mxu0
  %1044 = vmatprep.mubr.f32.mxu0 0.0
  %1045 = vmatmul.mubr.f32.gmra.mrb[0].mxu0 %v860
  %v1046 = vpop.f32.mrb[0].mxu0
  %v1047 = vadd.f32 0.0, %v1046
  %v1048 = vpop.f32.mrb[0].mxu0
  %1049 = vmatprep.mubr.f32.mxu0 0.0
  %1050 = vmatmul.mubr.f32.gmra.mrb[0].mxu0 %v861
  %v1051 = vpop.f32.mrb[0].mxu0
  %v1052 = vadd.f32 0.0, %v1051
  %v1053 = vpop.f32.mrb[0].mxu0
  %1054 = vmatprep.mubr.f32.mxu0 0.0
  %1055 = vmatmul.mubr.f32.gmra.mrb[0].mxu0 %v862
  %v1056 = vpop.f32.mrb[0].mxu0
  %v1057 = vadd.f32 0.0, %v1056
  %v1058 = vpop.f32.mrb[0].mxu0
  %1059 = vmatprep.mubr.f32.mxu0 0.0
  %1060 = vmatmul.mubr.f32.gmra.mrb[0].mxu0 %v863
  %v1061 = vpop.f32.mrb[0].mxu0
  %v1062 = vadd.f32 0.0, %v1061
  %v1063 = vpop.f32.mrb[0].mxu0
  %1064 = vmatprep.mubr.f32.mxu0 0.0
  %1065 = vmatmul.mubr.f32.gmra.mrb[0].mxu0 %v864
  %v1066 = vpop.f32.mrb[0].mxu0
  %v1067 = vadd.f32 0.0, %v1066
  %v1068 = vpop.f32.mrb[0].mxu0
  %1069 = vmatprep.mubr.f32.mxu0 0.0
  %1070 = vmatmul.mubr.f32.gmra.mrb[0].mxu0 %v865
  %v1071 = vpop.f32.mrb[0].mxu0
  %v1072 = vadd.f32 0.0, %v1071
  %v1073 = vpop.f32.mrb[0].mxu0
  %1074 = vmatprep.mubr.f32.mxu0 0.0
  %1075 = vmatmul.mubr.f32.gmra.mrb[0].mxu0 %v866
  %v1076 = vpop.f32.mrb[0].mxu0
  %v1077 = vadd.f32 0.0, %v1076
  %v1078 = vpop.f32.mrb[0].mxu0
  %1079 = vmatprep.mubr.f32.mxu0 0.0
  %1080 = vmatmul.mubr.f32.gmra.mrb[0].mxu0 %v867
  %v1081 = vpop.f32.mrb[0].mxu0
  %v1082 = vadd.f32 0.0, %v1081
  %v1083 = vpop.f32.mrb[0].mxu0
  %1084 = vmatprep.mubr.f32.mxu0 0.0
  %1085 = vmatmul.mubr.f32.gmra.mrb[0].mxu0 %v868
  %v1086 = vpop.f32.mrb[0].mxu0
  %v1087 = vadd.f32 0.0, %v1086
  %v1088 = vpop.f32.mrb[0].mxu0
  %1089 = vmatprep.mubr.f32.mxu0 0.0
  %1090 = vmatmul.mubr.f32.gmra.mrb[0].mxu0 %v869
  %v1091 = vpop.f32.mrb[0].mxu0
  %v1092 = vadd.f32 0.0, %v1091
  %v1093 = vpop.f32.mrb[0].mxu0
  %1094 = vmatprep.mubr.f32.mxu0 0.0
  %1095 = vmatmul.mubr.f32.gmra.mrb[0].mxu0 %v870
  %v1096 = vpop.f32.mrb[0].mxu0
  %v1097 = vadd.f32 0.0, %v1096
  %v1098 = vpop.f32.mrb[0].mxu0
  %1099 = vmatprep.mubr.f32.mxu0 0.0
  %1100 = vmatmul.mubr.f32.gmra.mrb[0].mxu0 %v871
  %v1101 = vpop.f32.mrb[0].mxu0
  %v1102 = vadd.f32 0.0, %v1101
  %v1103 = vpop.f32.mrb[0].mxu0
  %1104 = vmatprep.mubr.f32.mxu0 0.0
  %1105 = vmatmul.mubr.f32.gmra.mrb[0].mxu0 %v872
  %v1106 = vpop.f32.mrb[0].mxu0
  %v1107 = vadd.f32 0.0, %v1106
  %v1108 = vpop.f32.mrb[0].mxu0
  %1109 = vmatprep.mubr.f32.mxu0 0.0
  %1110 = vmatmul.mubr.f32.gmra.mrb[0].mxu0 %v873
  %v1111 = vpop.f32.mrb[0].mxu0
  %v1112 = vadd.f32 0.0, %v1111
  %v1113 = vpop.f32.mrb[0].mxu0
  %1114 = vmatprep.mubr.f32.mxu0 0.0
  %1115 = vmatmul.mubr.f32.gmra.mrb[0].mxu0 %v874
  %v1116 = vpop.f32.mrb[0].mxu0
  %v1117 = vadd.f32 0.0, %v1116
  %v1118 = vpop.f32.mrb[0].mxu0
  %1119 = vmatprep.mubr.f32.mxu0 0.0
  %1120 = vmatmul.mubr.f32.gmra.mrb[0].mxu0 %v875
  %v1121 = vpop.f32.mrb[0].mxu0
  %v1122 = vadd.f32 0.0, %v1121
  %v1123 = vpop.f32.mrb[0].mxu0
  %1124 = vmatprep.mubr.f32.mxu0 0.0
  %1125 = vmatmul.mubr.f32.gmra.mrb[0].mxu0 %v876
  %v1126 = vpop.f32.mrb[0].mxu0
  %v1127 = vadd.f32 0.0, %v1126
  %v1128 = vpop.f32.mrb[0].mxu0
  %1129 = vmatprep.mubr.f32.mxu0 0.0
  %1130 = vmatmul.mubr.f32.gmra.mrb[0].mxu0 %v877
  %v1131 = vpop.f32.mrb[0].mxu0
  %v1132 = vadd.f32 0.0, %v1131
  %v1133 = vpop.f32.mrb[0].mxu0
  %1134 = vmatprep.mubr.f32.mxu0 0.0
  %1135 = vmatmul.mubr.f32.gmra.mrb[0].mxu0 %v878
  %v1136 = vpop.f32.mrb[0].mxu0
  %v1137 = vadd.f32 0.0, %v1136
  %v1138 = vpop.f32.mrb[0].mxu0
  %1139 = vmatprep.mubr.f32.mxu0 0.0
  %1140 = vmatmul.mubr.f32.gmra.mrb[0].mxu0 %v879
  %v1141 = vpop.f32.mrb[0].mxu0
  %v1142 = vadd.f32 0.0, %v1141
  %v1143 = vpop.f32.mrb[0].mxu0
  %1144 = vmatprep.mubr.f32.mxu0 0.0
  %1145 = vmatmul.mubr.f32.gmra.mrb[0].mxu0 %v880
  %v1146 = vpop.f32.mrb[0].mxu0
  %v1147 = vadd.f32 0.0, %v1146
  %v1148 = vpop.f32.mrb[0].mxu0
  %1149 = vmatprep.mubr.f32.mxu0 0.0
  %1150 = vmatmul.mubr.f32.gmra.mrb[0].mxu0 %v881
  %v1151 = vpop.f32.mrb[0].mxu0
  %v1152 = vadd.f32 0.0, %v1151
  %v1153 = vpop.f32.mrb[0].mxu0
  %1154 = vmatprep.mubr.f32.mxu0 0.0
  %1155 = vmatmul.mubr.f32.gmra.mrb[0].mxu0 %v882
  %v1156 = vpop.f32.mrb[0].mxu0
  %v1157 = vadd.f32 0.0, %v1156
  %v1158 = vpop.f32.mrb[0].mxu0
  %1159 = vmatprep.mubr.f32.mxu0 0.0
  %1160 = vmatmul.mubr.f32.gmra.mrb[0].mxu0 %v883
  %v1161 = vpop.f32.mrb[0].mxu0
  %v1162 = vadd.f32 0.0, %v1161
  %v1163 = vpop.f32.mrb[0].mxu0
  %1164 = vmatprep.mubr.f32.mxu0 0.0
  %1165 = vmatmul.mubr.f32.gmra.mrb[0].mxu0 %v884
  %v1166 = vpop.f32.mrb[0].mxu0
  %v1167 = vadd.f32 0.0, %v1166
  %v1168 = vpop.f32.mrb[0].mxu0
  %1169 = vmatprep.mubr.f32.mxu0 0.0
  %1170 = vmatmul.mubr.f32.gmra.mrb[0].mxu0 %v885
  %v1171 = vpop.f32.mrb[0].mxu0
  %v1172 = vadd.f32 0.0, %v1171
  %v1173 = vpop.f32.mrb[0].mxu0
  %1174 = vmatprep.mubr.f32.mxu0 0.0
  %1175 = vmatmul.mubr.f32.gmra.mrb[0].mxu0 %v886
  %v1176 = vpop.f32.mrb[0].mxu0
  %v1177 = vadd.f32 0.0, %v1176
  %v1178 = vpop.f32.mrb[0].mxu0
  %1179 = vmatprep.mubr.f32.mxu0 0.0
  %1180 = vmatmul.mubr.f32.gmra.mrb[0].mxu0 %v887
  %v1181 = vpop.f32.mrb[0].mxu0
  %v1182 = vadd.f32 0.0, %v1181
  %v1183 = vpop.f32.mrb[0].mxu0
  %1184 = vmatprep.mubr.f32.mxu0 0.0
  %1185 = vmatmul.mubr.f32.gmra.mrb[0].mxu0 %v888
  %v1186 = vpop.f32.mrb[0].mxu0
  %v1187 = vadd.f32 0.0, %v1186
  %v1188 = vpop.f32.mrb[0].mxu0
  %1189 = vmatprep.mubr.f32.mxu0 0.0
  %1190 = vmatmul.mubr.f32.gmra.mrb[0].mxu0 %v889
  %v1191 = vpop.f32.mrb[0].mxu0
  %v1192 = vadd.f32 0.0, %v1191
  %v1193 = vpop.f32.mrb[0].mxu0
  %1194 = vmatprep.mubr.f32.mxu0 0.0
  %1195 = vmatmul.mubr.f32.gmra.mrb[0].mxu0 %v890
  %v1196 = vpop.f32.mrb[0].mxu0
  %v1197 = vadd.f32 0.0, %v1196
  %v1198 = vpop.f32.mrb[0].mxu0
  %1199 = vmatprep.mubr.f32.mxu0 0.0
  %1200 = vmatmul.mubr.f32.gmra.mrb[0].mxu0 %v891
  %v1201 = vpop.f32.mrb[0].mxu0
  %v1202 = vadd.f32 0.0, %v1201
  %v1203 = vpop.f32.mrb[0].mxu0
  %1204 = vmatprep.mubr.f32.mxu0 0.0
  %1205 = vmatmul.mubr.f32.gmra.mrb[0].mxu0 %v892
  %v1206 = vpop.f32.mrb[0].mxu0
  %v1207 = vadd.f32 0.0, %v1206
  %v1208 = vpop.f32.mrb[0].mxu0
  %1209 = vmatprep.mubr.f32.mxu0 0.0
  %1210 = vmatmul.mubr.f32.gmra.mrb[0].mxu0 %v893
  %v1211 = vpop.f32.mrb[0].mxu0
  %v1212 = vadd.f32 0.0, %v1211
  %v1213 = vpop.f32.mrb[0].mxu0
  %1214 = vmatprep.mubr.f32.mxu0 0.0
  %1215 = vmatmul.mubr.f32.gmra.mrb[0].mxu0 %v894
  %v1216 = vpop.f32.mrb[0].mxu0
  %v1217 = vadd.f32 0.0, %v1216
  %v1218 = vpop.f32.mrb[0].mxu0
  %1219 = vmatprep.mubr.f32.mxu0 0.0
  %1220 = vmatmul.mubr.f32.gmra.mrb[0].mxu0 %v895
  %v1221 = vpop.f32.mrb[0].mxu0
  %v1222 = vadd.f32 0.0, %v1221
  %v1223 = vpop.f32.mrb[0].mxu0
  %1224 = vmatprep.mubr.f32.mxu0 0.0
  %1225 = vmatmul.mubr.f32.gmra.mrb[0].mxu0 %v896
  %v1226 = vpop.f32.mrb[0].mxu0
  %v1227 = vadd.f32 0.0, %v1226
  %v1228 = vpop.f32.mrb[0].mxu0
  %1229 = vmatprep.mubr.f32.mxu0 0.0
  %1230 = vmatmul.mubr.f32.gmra.mrb[0].mxu0 %v897
  %v1231 = vpop.f32.mrb[0].mxu0
  %v1232 = vadd.f32 0.0, %v1231
  %v1233 = vpop.f32.mrb[0].mxu0
  %1234 = vmatprep.mubr.f32.mxu0 0.0
  %1235 = vmatmul.mubr.f32.gmra.mrb[0].mxu0 %v898
  %v1236 = vpop.f32.mrb[0].mxu0
  %v1237 = vadd.f32 0.0, %v1236
  %v1238 = vpop.f32.mrb[0].mxu0
  %1239 = vmatprep.mubr.f32.mxu0 0.0
  %1240 = vmatmul.mubr.f32.gmra.mrb[0].mxu0 %v899
  %v1241 = vpop.f32.mrb[0].mxu0
  %v1242 = vadd.f32 0.0, %v1241
  %v1243 = vpop.f32.mrb[0].mxu0
  %1244 = vmatprep.mubr.f32.mxu0 0.0
  %1245 = vmatmul.mubr.f32.gmra.mrb[0].mxu0 %v900
  %v1246 = vpop.f32.mrb[0].mxu0
  %v1247 = vadd.f32 0.0, %v1246
  %v1248 = vpop.f32.mrb[0].mxu0
  %1249 = vmatprep.mubr.f32.mxu0 0.0
  %1250 = vmatmul.mubr.f32.gmra.mrb[0].mxu0 %v901
  %v1251 = vpop.f32.mrb[0].mxu0
  %v1252 = vadd.f32 0.0, %v1251
  %v1253 = vpop.f32.mrb[0].mxu0
  %1254 = vmatprep.mubr.f32.mxu0 0.0
  %1255 = vmatmul.mubr.f32.gmra.mrb[0].mxu0 %v902
  %v1256 = vpop.f32.mrb[0].mxu0
  %v1257 = vadd.f32 0.0, %v1256
  %v1258 = vpop.f32.mrb[0].mxu0
  %1259 = vmatprep.mubr.f32.mxu0 0.0
  %1260 = vmatmul.mubr.f32.gmra.mrb[0].mxu0 %v903
  %v1261 = vpop.f32.mrb[0].mxu0
  %v1262 = vadd.f32 0.0, %v1261
  %v1263 = vpop.f32.mrb[0].mxu0
  %1264 = vmatprep.mubr.f32.mxu0 0.0
  %1265 = vmatmul.mubr.f32.gmra.mrb[0].mxu0 %v904
  %v1266 = vpop.f32.mrb[0].mxu0
  %v1267 = vadd.f32 0.0, %v1266
  %v1268 = vpop.f32.mrb[0].mxu0
  %1269 = vmatprep.mubr.f32.mxu0 0.0
  %1270 = vmatmul.mubr.f32.gmra.mrb[0].mxu0 %v905
  %v1271 = vpop.f32.mrb[0].mxu0
  %v1272 = vadd.f32 0.0, %v1271
  %v1273 = vpop.f32.mrb[0].mxu0
  %1274 = vmatprep.mubr.f32.mxu0 0.0
  %1275 = vmatmul.mubr.f32.gmra.mrb[0].mxu0 %v906
  %v1276 = vpop.f32.mrb[0].mxu0
  %v1277 = vadd.f32 0.0, %v1276
  %v1278 = vpop.f32.mrb[0].mxu0
  %1279 = vmatprep.mubr.f32.mxu0 0.0
  %1280 = vmatmul.mubr.f32.gmra.mrb[0].mxu0 %v907
  %v1281 = vpop.f32.mrb[0].mxu0
  %v1282 = vadd.f32 0.0, %v1281
  %v1283 = vpop.f32.mrb[0].mxu0
  %1284 = vmatprep.mubr.f32.mxu0 0.0
  %1285 = vmatmul.mubr.f32.gmra.mrb[0].mxu0 %v908
  %v1286 = vpop.f32.mrb[0].mxu0
  %v1287 = vadd.f32 0.0, %v1286
  %v1288 = vpop.f32.mrb[0].mxu0
  %1289 = vmatprep.mubr.f32.mxu0 0.0
  %1290 = vmatmul.mubr.f32.gmra.mrb[0].mxu0 %v909
  %v1291 = vpop.f32.mrb[0].mxu0
  %v1292 = vadd.f32 0.0, %v1291
  %v1293 = vpop.f32.mrb[0].mxu0
  %1294 = vmatprep.mubr.f32.mxu0 0.0
  %1295 = vmatmul.mubr.f32.gmra.mrb[0].mxu0 %v910
  %v1296 = vpop.f32.mrb[0].mxu0
  %v1297 = vadd.f32 0.0, %v1296
  %v1298 = vpop.f32.mrb[0].mxu0
  %1299 = vmatprep.mubr.f32.mxu0 0.0
  %1300 = vmatmul.mubr.f32.gmra.mrb[0].mxu0 %v911
  %v1301 = vpop.f32.mrb[0].mxu0
  %v1302 = vadd.f32 0.0, %v1301
  %v1303 = vpop.f32.mrb[0].mxu0
  %1304 = vmatprep.mubr.f32.mxu0 0.0
  %1305 = vmatmul.mubr.f32.gmra.mrb[0].mxu0 %v912
  %v1306 = vpop.f32.mrb[0].mxu0
  %v1307 = vadd.f32 0.0, %v1306
  %v1308 = vpop.f32.mrb[0].mxu0
  %1309 = vmatprep.mubr.f32.mxu0 0.0
  %1310 = vmatmul.mubr.f32.gmra.mrb[0].mxu0 %v913
  %v1311 = vpop.f32.mrb[0].mxu0
  %v1312 = vadd.f32 0.0, %v1311
  %v1313 = vpop.f32.mrb[0].mxu0
  %1314 = vdwg.mxu0
  %v1315 = vadd.f32 %v997, %v1002
  %v1316 = vadd.f32 %v1315, %v1007
  %v1317 = vadd.f32 %v1316, %v1012
  %v1318 = vadd.f32 %v1317, %v1017
  %v1319 = vadd.f32 %v1318, %v1022
  %v1320 = vadd.f32 %v1319, %v1027
  %v1321 = vadd.f32 %v1320, %v1032
  %v1322 = vrot.slane %v1321, 4
  %v1323 = vadd.f32 %v1321, %v1322
  %v1324 = vrot.slane %v1323, 2
  %v1325 = vadd.f32 %v1323, %v1324
  %v1326 = vrot.slane %v1325, 1
  %v1327 = vadd.f32 %v1325, %v1326
  %v1328 = vadd.f32 %v1037, %v1042
  %v1329 = vadd.f32 %v1328, %v1047
  %v1330 = vadd.f32 %v1329, %v1052
  %v1331 = vadd.f32 %v1330, %v1057
  %v1332 = vadd.f32 %v1331, %v1062
  %v1333 = vadd.f32 %v1332, %v1067
  %v1334 = vadd.f32 %v1333, %v1072
  %v1335 = vrot.slane %v1334, 4
  %v1336 = vadd.f32 %v1334, %v1335
  %v1337 = vrot.slane %v1336, 2
  %v1338 = vadd.f32 %v1336, %v1337
  %v1339 = vrot.slane %v1338, 1
  %v1340 = vadd.f32 %v1338, %v1339
  %v1341 = vadd.f32 %v1077, %v1082
  %v1342 = vadd.f32 %v1341, %v1087
  %v1343 = vadd.f32 %v1342, %v1092
  %v1344 = vadd.f32 %v1343, %v1097
  %v1345 = vadd.f32 %v1344, %v1102
  %v1346 = vadd.f32 %v1345, %v1107
  %v1347 = vadd.f32 %v1346, %v1112
  %v1348 = vrot.slane %v1347, 4
  %v1349 = vadd.f32 %v1347, %v1348
  %v1350 = vrot.slane %v1349, 2
  %v1351 = vadd.f32 %v1349, %v1350
  %v1352 = vrot.slane %v1351, 1
  %v1353 = vadd.f32 %v1351, %v1352
  %v1354 = vadd.f32 %v1117, %v1122
  %v1355 = vadd.f32 %v1354, %v1127
  %v1356 = vadd.f32 %v1355, %v1132
  %v1357 = vadd.f32 %v1356, %v1137
  %v1358 = vadd.f32 %v1357, %v1142
  %v1359 = vadd.f32 %v1358, %v1147
  %v1360 = vadd.f32 %v1359, %v1152
  %v1361 = vrot.slane %v1360, 4
  %v1362 = vadd.f32 %v1360, %v1361
  %v1363 = vrot.slane %v1362, 2
  %v1364 = vadd.f32 %v1362, %v1363
  %v1365 = vrot.slane %v1364, 1
  %v1366 = vadd.f32 %v1364, %v1365
  %v1367 = vadd.f32 %v1157, %v1162
  %v1368 = vadd.f32 %v1367, %v1167
  %v1369 = vadd.f32 %v1368, %v1172
  %v1370 = vadd.f32 %v1369, %v1177
  %v1371 = vadd.f32 %v1370, %v1182
  %v1372 = vadd.f32 %v1371, %v1187
  %v1373 = vadd.f32 %v1372, %v1192
  %v1374 = vrot.slane %v1373, 4
  %v1375 = vadd.f32 %v1373, %v1374
  %v1376 = vrot.slane %v1375, 2
  %v1377 = vadd.f32 %v1375, %v1376
  %v1378 = vrot.slane %v1377, 1
  %v1379 = vadd.f32 %v1377, %v1378
  %v1380 = vadd.f32 %v1197, %v1202
  %v1381 = vadd.f32 %v1380, %v1207
  %v1382 = vadd.f32 %v1381, %v1212
  %v1383 = vadd.f32 %v1382, %v1217
  %v1384 = vadd.f32 %v1383, %v1222
  %v1385 = vadd.f32 %v1384, %v1227
  %v1386 = vadd.f32 %v1385, %v1232
  %v1387 = vrot.slane %v1386, 4
  %v1388 = vadd.f32 %v1386, %v1387
  %v1389 = vrot.slane %v1388, 2
  %v1390 = vadd.f32 %v1388, %v1389
  %v1391 = vrot.slane %v1390, 1
  %v1392 = vadd.f32 %v1390, %v1391
  %v1393 = vadd.f32 %v1237, %v1242
  %v1394 = vadd.f32 %v1393, %v1247
  %v1395 = vadd.f32 %v1394, %v1252
  %v1396 = vadd.f32 %v1395, %v1257
  %v1397 = vadd.f32 %v1396, %v1262
  %v1398 = vadd.f32 %v1397, %v1267
  %v1399 = vadd.f32 %v1398, %v1272
  %v1400 = vrot.slane %v1399, 4
  %v1401 = vadd.f32 %v1399, %v1400
  %v1402 = vrot.slane %v1401, 2
  %v1403 = vadd.f32 %v1401, %v1402
  %v1404 = vrot.slane %v1403, 1
  %v1405 = vadd.f32 %v1403, %v1404
  %v1406 = vadd.f32 %v1277, %v1282
  %v1407 = vadd.f32 %v1406, %v1287
  %v1408 = vadd.f32 %v1407, %v1292
  %v1409 = vadd.f32 %v1408, %v1297
  %v1410 = vadd.f32 %v1409, %v1302
  %v1411 = vadd.f32 %v1410, %v1307
  %v1412 = vadd.f32 %v1411, %v1312
  %v1413 = vrot.slane %v1412, 4
  %v1414 = vadd.f32 %v1412, %v1413
  %v1415 = vrot.slane %v1414, 2
  %v1416 = vadd.f32 %v1414, %v1415
  %v1417 = vrot.slane %v1416, 1
  %v1418 = vadd.f32 %v1416, %v1417
  %v1419 = vmul.f32 %v997, %v997
  %v1420 = vmul.f32 %v1002, %v1002
  %v1421 = vmul.f32 %v1007, %v1007
  %v1422 = vmul.f32 %v1012, %v1012
  %v1423 = vmul.f32 %v1017, %v1017
  %v1424 = vmul.f32 %v1022, %v1022
  %v1425 = vmul.f32 %v1027, %v1027
  %v1426 = vmul.f32 %v1032, %v1032
  %v1427 = vmul.f32 %v1037, %v1037
  %v1428 = vmul.f32 %v1042, %v1042
  %v1429 = vmul.f32 %v1047, %v1047
  %v1430 = vmul.f32 %v1052, %v1052
  %v1431 = vmul.f32 %v1057, %v1057
  %v1432 = vmul.f32 %v1062, %v1062
  %v1433 = vmul.f32 %v1067, %v1067
  %v1434 = vmul.f32 %v1072, %v1072
  %v1435 = vmul.f32 %v1077, %v1077
  %v1436 = vmul.f32 %v1082, %v1082
  %v1437 = vmul.f32 %v1087, %v1087
  %v1438 = vmul.f32 %v1092, %v1092
  %v1439 = vmul.f32 %v1097, %v1097
  %v1440 = vmul.f32 %v1102, %v1102
  %v1441 = vmul.f32 %v1107, %v1107
  %v1442 = vmul.f32 %v1112, %v1112
  %v1443 = vmul.f32 %v1117, %v1117
  %v1444 = vmul.f32 %v1122, %v1122
  %v1445 = vmul.f32 %v1127, %v1127
  %v1446 = vmul.f32 %v1132, %v1132
  %v1447 = vmul.f32 %v1137, %v1137
  %v1448 = vmul.f32 %v1142, %v1142
  %v1449 = vmul.f32 %v1147, %v1147
  %v1450 = vmul.f32 %v1152, %v1152
  %v1451 = vmul.f32 %v1157, %v1157
  %v1452 = vmul.f32 %v1162, %v1162
  %v1453 = vmul.f32 %v1167, %v1167
  %v1454 = vmul.f32 %v1172, %v1172
  %v1455 = vmul.f32 %v1177, %v1177
  %v1456 = vmul.f32 %v1182, %v1182
  %v1457 = vmul.f32 %v1187, %v1187
  %v1458 = vmul.f32 %v1192, %v1192
  %v1459 = vmul.f32 %v1197, %v1197
  %v1460 = vmul.f32 %v1202, %v1202
  %v1461 = vmul.f32 %v1207, %v1207
  %v1462 = vmul.f32 %v1212, %v1212
  %v1463 = vmul.f32 %v1217, %v1217
  %v1464 = vmul.f32 %v1222, %v1222
  %v1465 = vmul.f32 %v1227, %v1227
  %v1466 = vmul.f32 %v1232, %v1232
  %v1467 = vmul.f32 %v1237, %v1237
  %v1468 = vmul.f32 %v1242, %v1242
  %v1469 = vmul.f32 %v1247, %v1247
  %v1470 = vmul.f32 %v1252, %v1252
  %v1471 = vmul.f32 %v1257, %v1257
  %v1472 = vmul.f32 %v1262, %v1262
  %v1473 = vmul.f32 %v1267, %v1267
  %v1474 = vmul.f32 %v1272, %v1272
  %v1475 = vmul.f32 %v1277, %v1277
  %v1476 = vmul.f32 %v1282, %v1282
  %v1477 = vmul.f32 %v1287, %v1287
  %v1478 = vmul.f32 %v1292, %v1292
  %v1479 = vmul.f32 %v1297, %v1297
  %v1480 = vmul.f32 %v1302, %v1302
  %v1481 = vmul.f32 %v1307, %v1307
  %v1482 = vmul.f32 %v1312, %v1312
  %v1483 = vadd.f32 %v1419, %v1420
  %v1484 = vadd.f32 %v1483, %v1421
  %v1485 = vadd.f32 %v1484, %v1422
  %v1486 = vadd.f32 %v1485, %v1423
  %v1487 = vadd.f32 %v1486, %v1424
  %v1488 = vadd.f32 %v1487, %v1425
  %v1489 = vadd.f32 %v1488, %v1426
  %v1490 = vrot.slane %v1489, 4
  %v1491 = vadd.f32 %v1489, %v1490
  %v1492 = vrot.slane %v1491, 2
  %v1493 = vadd.f32 %v1491, %v1492
  %v1494 = vrot.slane %v1493, 1
  %v1495 = vadd.f32 %v1493, %v1494
  %v1496 = vadd.f32 %v1427, %v1428
  %v1497 = vadd.f32 %v1496, %v1429
  %v1498 = vadd.f32 %v1497, %v1430
  %v1499 = vadd.f32 %v1498, %v1431
  %v1500 = vadd.f32 %v1499, %v1432
  %v1501 = vadd.f32 %v1500, %v1433
  %v1502 = vadd.f32 %v1501, %v1434
  %v1503 = vrot.slane %v1502, 4
  %v1504 = vadd.f32 %v1502, %v1503
  %v1505 = vrot.slane %v1504, 2
  %v1506 = vadd.f32 %v1504, %v1505
  %v1507 = vrot.slane %v1506, 1
  %v1508 = vadd.f32 %v1506, %v1507
  %v1509 = vadd.f32 %v1435, %v1436
  %v1510 = vadd.f32 %v1509, %v1437
  %v1511 = vadd.f32 %v1510, %v1438
  %v1512 = vadd.f32 %v1511, %v1439
  %v1513 = vadd.f32 %v1512, %v1440
  %v1514 = vadd.f32 %v1513, %v1441
  %v1515 = vadd.f32 %v1514, %v1442
  %v1516 = vrot.slane %v1515, 4
  %v1517 = vadd.f32 %v1515, %v1516
  %v1518 = vrot.slane %v1517, 2
  %v1519 = vadd.f32 %v1517, %v1518
  %v1520 = vrot.slane %v1519, 1
  %v1521 = vadd.f32 %v1519, %v1520
  %v1522 = vadd.f32 %v1443, %v1444
  %v1523 = vadd.f32 %v1522, %v1445
  %v1524 = vadd.f32 %v1523, %v1446
  %v1525 = vadd.f32 %v1524, %v1447
  %v1526 = vadd.f32 %v1525, %v1448
  %v1527 = vadd.f32 %v1526, %v1449
  %v1528 = vadd.f32 %v1527, %v1450
  %v1529 = vrot.slane %v1528, 4
  %v1530 = vadd.f32 %v1528, %v1529
  %v1531 = vrot.slane %v1530, 2
  %v1532 = vadd.f32 %v1530, %v1531
  %v1533 = vrot.slane %v1532, 1
  %v1534 = vadd.f32 %v1532, %v1533
  %v1535 = vadd.f32 %v1451, %v1452
  %v1536 = vadd.f32 %v1535, %v1453
  %v1537 = vadd.f32 %v1536, %v1454
  %v1538 = vadd.f32 %v1537, %v1455
  %v1539 = vadd.f32 %v1538, %v1456
  %v1540 = vadd.f32 %v1539, %v1457
  %v1541 = vadd.f32 %v1540, %v1458
  %v1542 = vrot.slane %v1541, 4
  %v1543 = vadd.f32 %v1541, %v1542
  %v1544 = vrot.slane %v1543, 2
  %v1545 = vadd.f32 %v1543, %v1544
  %v1546 = vrot.slane %v1545, 1
  %v1547 = vadd.f32 %v1545, %v1546
  %v1548 = vadd.f32 %v1459, %v1460
  %v1549 = vadd.f32 %v1548, %v1461
  %v1550 = vadd.f32 %v1549, %v1462
  %v1551 = vadd.f32 %v1550, %v1463
  %v1552 = vadd.f32 %v1551, %v1464
  %v1553 = vadd.f32 %v1552, %v1465
  %v1554 = vadd.f32 %v1553, %v1466
  %v1555 = vrot.slane %v1554, 4
  %v1556 = vadd.f32 %v1554, %v1555
  %v1557 = vrot.slane %v1556, 2
  %v1558 = vadd.f32 %v1556, %v1557
  %v1559 = vrot.slane %v1558, 1
  %v1560 = vadd.f32 %v1558, %v1559
  %v1561 = vadd.f32 %v1467, %v1468
  %v1562 = vadd.f32 %v1561, %v1469
  %v1563 = vadd.f32 %v1562, %v1470
  %v1564 = vadd.f32 %v1563, %v1471
  %v1565 = vadd.f32 %v1564, %v1472
  %v1566 = vadd.f32 %v1565, %v1473
  %v1567 = vadd.f32 %v1566, %v1474
  %v1568 = vrot.slane %v1567, 4
  %v1569 = vadd.f32 %v1567, %v1568
  %v1570 = vrot.slane %v1569, 2
  %v1571 = vadd.f32 %v1569, %v1570
  %v1572 = vrot.slane %v1571, 1
  %v1573 = vadd.f32 %v1571, %v1572
  %v1574 = vadd.f32 %v1475, %v1476
  %v1575 = vadd.f32 %v1574, %v1477
  %v1576 = vadd.f32 %v1575, %v1478
  %v1577 = vadd.f32 %v1576, %v1479
  %v1578 = vadd.f32 %v1577, %v1480
  %v1579 = vadd.f32 %v1578, %v1481
  %v1580 = vadd.f32 %v1579, %v1482
  %v1581 = vrot.slane %v1580, 4
  %v1582 = vadd.f32 %v1580, %v1581
  %v1583 = vrot.slane %v1582, 2
  %v1584 = vadd.f32 %v1582, %v1583
  %v1585 = vrot.slane %v1584, 1
  %v1586 = vadd.f32 %v1584, %v1585
  %v1587 = vmul.f32 %v1327, 0.015625
  %v1588 = vmul.f32 %v1340, 0.015625
  %v1589 = vmul.f32 %v1353, 0.015625
  %v1590 = vmul.f32 %v1366, 0.015625
  %v1591 = vmul.f32 %v1379, 0.015625
  %v1592 = vmul.f32 %v1392, 0.015625
  %v1593 = vmul.f32 %v1405, 0.015625
  %v1594 = vmul.f32 %v1418, 0.015625
  %v1595 = vmul.f32 %v1495, 0.015625
  %v1596 = vmul.f32 %v1508, 0.015625
  %v1597 = vmul.f32 %v1521, 0.015625
  %v1598 = vmul.f32 %v1534, 0.015625
  %v1599 = vmul.f32 %v1547, 0.015625
  %v1600 = vmul.f32 %v1560, 0.015625
  %v1601 = vmul.f32 %v1573, 0.015625
  %v1602 = vmul.f32 %v1586, 0.015625
  %v1603 = vmul.f32 %v1587, %v1587
  %v1604 = vmul.f32 %v1588, %v1588
  %v1605 = vmul.f32 %v1589, %v1589
  %v1606 = vmul.f32 %v1590, %v1590
  %v1607 = vmul.f32 %v1591, %v1591
  %v1608 = vmul.f32 %v1592, %v1592
  %v1609 = vmul.f32 %v1593, %v1593
  %v1610 = vmul.f32 %v1594, %v1594
  %v1611 = vsub.f32 %v1595, %v1603
  %v1612 = vsub.f32 %v1596, %v1604
  %v1613 = vsub.f32 %v1597, %v1605
  %v1614 = vsub.f32 %v1598, %v1606
  %v1615 = vsub.f32 %v1599, %v1607
  %v1616 = vsub.f32 %v1600, %v1608
  %v1617 = vsub.f32 %v1601, %v1609
  %v1618 = vsub.f32 %v1602, %v1610
  %v1619 = vmax.f32 %v1611, 0.0
  %v1620 = vmax.f32 %v1612, 0.0
  %v1621 = vmax.f32 %v1613, 0.0
  %v1622 = vmax.f32 %v1614, 0.0
  %v1623 = vmax.f32 %v1615, 0.0
  %v1624 = vmax.f32 %v1616, 0.0
  %v1625 = vmax.f32 %v1617, 0.0
  %v1626 = vmax.f32 %v1618, 0.0
  %v1627 = vsub.f32 %v997, %v1587
  %v1628 = vsub.f32 %v1002, %v1587
  %v1629 = vsub.f32 %v1007, %v1587
  %v1630 = vsub.f32 %v1012, %v1587
  %v1631 = vsub.f32 %v1017, %v1587
  %v1632 = vsub.f32 %v1022, %v1587
  %v1633 = vsub.f32 %v1027, %v1587
  %v1634 = vsub.f32 %v1032, %v1587
  %v1635 = vsub.f32 %v1037, %v1588
  %v1636 = vsub.f32 %v1042, %v1588
  %v1637 = vsub.f32 %v1047, %v1588
  %v1638 = vsub.f32 %v1052, %v1588
  %v1639 = vsub.f32 %v1057, %v1588
  %v1640 = vsub.f32 %v1062, %v1588
  %v1641 = vsub.f32 %v1067, %v1588
  %v1642 = vsub.f32 %v1072, %v1588
  %v1643 = vsub.f32 %v1077, %v1589
  %v1644 = vsub.f32 %v1082, %v1589
  %v1645 = vsub.f32 %v1087, %v1589
  %v1646 = vsub.f32 %v1092, %v1589
  %v1647 = vsub.f32 %v1097, %v1589
  %v1648 = vsub.f32 %v1102, %v1589
  %v1649 = vsub.f32 %v1107, %v1589
  %v1650 = vsub.f32 %v1112, %v1589
  %v1651 = vsub.f32 %v1117, %v1590
  %v1652 = vsub.f32 %v1122, %v1590
  %v1653 = vsub.f32 %v1127, %v1590
  %v1654 = vsub.f32 %v1132, %v1590
  %v1655 = vsub.f32 %v1137, %v1590
  %v1656 = vsub.f32 %v1142, %v1590
  %v1657 = vsub.f32 %v1147, %v1590
  %v1658 = vsub.f32 %v1152, %v1590
  %v1659 = vsub.f32 %v1157, %v1591
  %v1660 = vsub.f32 %v1162, %v1591
  %v1661 = vsub.f32 %v1167, %v1591
  %v1662 = vsub.f32 %v1172, %v1591
  %v1663 = vsub.f32 %v1177, %v1591
  %v1664 = vsub.f32 %v1182, %v1591
  %v1665 = vsub.f32 %v1187, %v1591
  %v1666 = vsub.f32 %v1192, %v1591
  %v1667 = vsub.f32 %v1197, %v1592
  %v1668 = vsub.f32 %v1202, %v1592
  %v1669 = vsub.f32 %v1207, %v1592
  %v1670 = vsub.f32 %v1212, %v1592
  %v1671 = vsub.f32 %v1217, %v1592
  %v1672 = vsub.f32 %v1222, %v1592
  %v1673 = vsub.f32 %v1227, %v1592
  %v1674 = vsub.f32 %v1232, %v1592
  %v1675 = vsub.f32 %v1237, %v1593
  %v1676 = vsub.f32 %v1242, %v1593
  %v1677 = vsub.f32 %v1247, %v1593
  %v1678 = vsub.f32 %v1252, %v1593
  %v1679 = vsub.f32 %v1257, %v1593
  %v1680 = vsub.f32 %v1262, %v1593
  %v1681 = vsub.f32 %v1267, %v1593
  %v1682 = vsub.f32 %v1272, %v1593
  %v1683 = vsub.f32 %v1277, %v1594
  %v1684 = vsub.f32 %v1282, %v1594
  %v1685 = vsub.f32 %v1287, %v1594
  %v1686 = vsub.f32 %v1292, %v1594
  %v1687 = vsub.f32 %v1297, %v1594
  %v1688 = vsub.f32 %v1302, %v1594
  %v1689 = vsub.f32 %v1307, %v1594
  %v1690 = vsub.f32 %v1312, %v1594
  %v1691 = vadd.f32 %v1619, 1e-05
  %v1692 = vadd.f32 %v1620, 1e-05
  %v1693 = vadd.f32 %v1621, 1e-05
  %v1694 = vadd.f32 %v1622, 1e-05
  %v1695 = vadd.f32 %v1623, 1e-05
  %v1696 = vadd.f32 %v1624, 1e-05
  %v1697 = vadd.f32 %v1625, 1e-05
  %v1698 = vadd.f32 %v1626, 1e-05
  %v1699 = vrsqrt.pop %v1691
  %v1700 = vrsqrt.pop %v1692
  %v1701 = vrsqrt.pop %v1693
  %v1702 = vrsqrt.pop %v1694
  %v1703 = vrsqrt.pop %v1695
  %v1704 = vrsqrt.pop %v1696
  %v1705 = vrsqrt.pop %v1697
  %v1706 = vrsqrt.pop %v1698
  %v1707 = vmul.f32 %v1627, %v1699
  %v1708 = vmul.f32 %v1628, %v1699
  %v1709 = vmul.f32 %v1629, %v1699
  %v1710 = vmul.f32 %v1630, %v1699
  %v1711 = vmul.f32 %v1631, %v1699
  %v1712 = vmul.f32 %v1632, %v1699
  %v1713 = vmul.f32 %v1633, %v1699
  %v1714 = vmul.f32 %v1634, %v1699
  %v1715 = vmul.f32 %v1635, %v1700
  %v1716 = vmul.f32 %v1636, %v1700
  %v1717 = vmul.f32 %v1637, %v1700
  %v1718 = vmul.f32 %v1638, %v1700
  %v1719 = vmul.f32 %v1639, %v1700
  %v1720 = vmul.f32 %v1640, %v1700
  %v1721 = vmul.f32 %v1641, %v1700
  %v1722 = vmul.f32 %v1642, %v1700
  %v1723 = vmul.f32 %v1643, %v1701
  %v1724 = vmul.f32 %v1644, %v1701
  %v1725 = vmul.f32 %v1645, %v1701
  %v1726 = vmul.f32 %v1646, %v1701
  %v1727 = vmul.f32 %v1647, %v1701
  %v1728 = vmul.f32 %v1648, %v1701
  %v1729 = vmul.f32 %v1649, %v1701
  %v1730 = vmul.f32 %v1650, %v1701
  %v1731 = vmul.f32 %v1651, %v1702
  %v1732 = vmul.f32 %v1652, %v1702
  %v1733 = vmul.f32 %v1653, %v1702
  %v1734 = vmul.f32 %v1654, %v1702
  %v1735 = vmul.f32 %v1655, %v1702
  %v1736 = vmul.f32 %v1656, %v1702
  %v1737 = vmul.f32 %v1657, %v1702
  %v1738 = vmul.f32 %v1658, %v1702
  %v1739 = vmul.f32 %v1659, %v1703
  %v1740 = vmul.f32 %v1660, %v1703
  %v1741 = vmul.f32 %v1661, %v1703
  %v1742 = vmul.f32 %v1662, %v1703
  %v1743 = vmul.f32 %v1663, %v1703
  %v1744 = vmul.f32 %v1664, %v1703
  %v1745 = vmul.f32 %v1665, %v1703
  %v1746 = vmul.f32 %v1666, %v1703
  %v1747 = vmul.f32 %v1667, %v1704
  %v1748 = vmul.f32 %v1668, %v1704
  %v1749 = vmul.f32 %v1669, %v1704
  %v1750 = vmul.f32 %v1670, %v1704
  %v1751 = vmul.f32 %v1671, %v1704
  %v1752 = vmul.f32 %v1672, %v1704
  %v1753 = vmul.f32 %v1673, %v1704
  %v1754 = vmul.f32 %v1674, %v1704
  %v1755 = vmul.f32 %v1675, %v1705
  %v1756 = vmul.f32 %v1676, %v1705
  %v1757 = vmul.f32 %v1677, %v1705
  %v1758 = vmul.f32 %v1678, %v1705
  %v1759 = vmul.f32 %v1679, %v1705
  %v1760 = vmul.f32 %v1680, %v1705
  %v1761 = vmul.f32 %v1681, %v1705
  %v1762 = vmul.f32 %v1682, %v1705
  %v1763 = vmul.f32 %v1683, %v1706
  %v1764 = vmul.f32 %v1684, %v1706
  %v1765 = vmul.f32 %v1685, %v1706
  %v1766 = vmul.f32 %v1686, %v1706
  %v1767 = vmul.f32 %v1687, %v1706
  %v1768 = vmul.f32 %v1688, %v1706
  %v1769 = vmul.f32 %v1689, %v1706
  %v1770 = vmul.f32 %v1690, %v1706
  %v1771 = vmax.f32 %v1707, 0.0
  %v1772 = vmax.f32 %v1708, 0.0
  %v1773 = vmax.f32 %v1709, 0.0
  %v1774 = vmax.f32 %v1710, 0.0
  %v1775 = vmax.f32 %v1711, 0.0
  %v1776 = vmax.f32 %v1712, 0.0
  %v1777 = vmax.f32 %v1713, 0.0
  %v1778 = vmax.f32 %v1714, 0.0
  %v1779 = vmax.f32 %v1715, 0.0
  %v1780 = vmax.f32 %v1716, 0.0
  %v1781 = vmax.f32 %v1717, 0.0
  %v1782 = vmax.f32 %v1718, 0.0
  %v1783 = vmax.f32 %v1719, 0.0
  %v1784 = vmax.f32 %v1720, 0.0
  %v1785 = vmax.f32 %v1721, 0.0
  %v1786 = vmax.f32 %v1722, 0.0
  %v1787 = vmax.f32 %v1723, 0.0
  %v1788 = vmax.f32 %v1724, 0.0
  %v1789 = vmax.f32 %v1725, 0.0
  %v1790 = vmax.f32 %v1726, 0.0
  %v1791 = vmax.f32 %v1727, 0.0
  %v1792 = vmax.f32 %v1728, 0.0
  %v1793 = vmax.f32 %v1729, 0.0
  %v1794 = vmax.f32 %v1730, 0.0
  %v1795 = vmax.f32 %v1731, 0.0
  %v1796 = vmax.f32 %v1732, 0.0
  %v1797 = vmax.f32 %v1733, 0.0
  %v1798 = vmax.f32 %v1734, 0.0
  %v1799 = vmax.f32 %v1735, 0.0
  %v1800 = vmax.f32 %v1736, 0.0
  %v1801 = vmax.f32 %v1737, 0.0
  %v1802 = vmax.f32 %v1738, 0.0
  %v1803 = vmax.f32 %v1739, 0.0
  %v1804 = vmax.f32 %v1740, 0.0
  %v1805 = vmax.f32 %v1741, 0.0
  %v1806 = vmax.f32 %v1742, 0.0
  %v1807 = vmax.f32 %v1743, 0.0
  %v1808 = vmax.f32 %v1744, 0.0
  %v1809 = vmax.f32 %v1745, 0.0
  %v1810 = vmax.f32 %v1746, 0.0
  %v1811 = vmax.f32 %v1747, 0.0
  %v1812 = vmax.f32 %v1748, 0.0
  %v1813 = vmax.f32 %v1749, 0.0
  %v1814 = vmax.f32 %v1750, 0.0
  %v1815 = vmax.f32 %v1751, 0.0
  %v1816 = vmax.f32 %v1752, 0.0
  %v1817 = vmax.f32 %v1753, 0.0
  %v1818 = vmax.f32 %v1754, 0.0
  %v1819 = vmax.f32 %v1755, 0.0
  %v1820 = vmax.f32 %v1756, 0.0
  %v1821 = vmax.f32 %v1757, 0.0
  %v1822 = vmax.f32 %v1758, 0.0
  %v1823 = vmax.f32 %v1759, 0.0
  %v1824 = vmax.f32 %v1760, 0.0
  %v1825 = vmax.f32 %v1761, 0.0
  %v1826 = vmax.f32 %v1762, 0.0
  %v1827 = vmax.f32 %v1763, 0.0
  %v1828 = vmax.f32 %v1764, 0.0
  %v1829 = vmax.f32 %v1765, 0.0
  %v1830 = vmax.f32 %v1766, 0.0
  %v1831 = vmax.f32 %v1767, 0.0
  %v1832 = vmax.f32 %v1768, 0.0
  %v1833 = vmax.f32 %v1769, 0.0
  %v1834 = vmax.f32 %v1770, 0.0
  %v1835 = vrot.slane %v1771, 6
  %v1836 = vrot.slane %v1772, 6
  %v1837 = vrot.slane %v1773, 6
  %v1838 = vrot.slane %v1774, 6
  %v1839 = vrot.slane %v1775, 6
  %v1840 = vrot.slane %v1776, 6
  %v1841 = vrot.slane %v1777, 6
  %v1842 = vrot.slane %v1778, 6
  %v1843 = vrot.slane %v1779, 6
  %v1844 = vrot.slane %v1780, 6
  %v1845 = vrot.slane %v1781, 6
  %v1846 = vrot.slane %v1782, 6
  %v1847 = vrot.slane %v1783, 6
  %v1848 = vrot.slane %v1784, 6
  %v1849 = vrot.slane %v1785, 6
  %v1850 = vrot.slane %v1786, 6
  %v1851 = vrot.slane %v1787, 6
  %v1852 = vrot.slane %v1788, 6
  %v1853 = vrot.slane %v1789, 6
  %v1854 = vrot.slane %v1790, 6
  %v1855 = vrot.slane %v1791, 6
  %v1856 = vrot.slane %v1792, 6
  %v1857 = vrot.slane %v1793, 6
  %v1858 = vrot.slane %v1794, 6
  %v1859 = vrot.slane %v1795, 6
  %v1860 = vrot.slane %v1796, 6
  %v1861 = vrot.slane %v1797, 6
  %v1862 = vrot.slane %v1798, 6
  %v1863 = vrot.slane %v1799, 6
  %v1864 = vrot.slane %v1800, 6
  %v1865 = vrot.slane %v1801, 6
  %v1866 = vrot.slane %v1802, 6
  %v1867 = vrot.slane %v1803, 6
  %v1868 = vrot.slane %v1804, 6
  %v1869 = vrot.slane %v1805, 6
  %v1870 = vrot.slane %v1806, 6
  %v1871 = vrot.slane %v1807, 6
  %v1872 = vrot.slane %v1808, 6
  %v1873 = vrot.slane %v1809, 6
  %v1874 = vrot.slane %v1810, 6
  %v1875 = vrot.slane %v1811, 6
  %v1876 = vrot.slane %v1812, 6
  %v1877 = vrot.slane %v1813, 6
  %v1878 = vrot.slane %v1814, 6
  %v1879 = vrot.slane %v1815, 6
  %v1880 = vrot.slane %v1816, 6
  %v1881 = vrot.slane %v1817, 6
  %v1882 = vrot.slane %v1818, 6
  %v1883 = vrot.slane %v1819, 6
  %v1884 = vrot.slane %v1820, 6
  %v1885 = vrot.slane %v1821, 6
  %v1886 = vrot.slane %v1822, 6
  %v1887 = vrot.slane %v1823, 6
  %v1888 = vrot.slane %v1824, 6
  %v1889 = vrot.slane %v1825, 6
  %v1890 = vrot.slane %v1826, 6
  %v1891 = vrot.slane %v1827, 6
  %v1892 = vrot.slane %v1828, 6
  %v1893 = vrot.slane %v1829, 6
  %v1894 = vrot.slane %v1830, 6
  %v1895 = vrot.slane %v1831, 6
  %v1896 = vrot.slane %v1832, 6
  %v1897 = vrot.slane %v1833, 6
  %v1898 = vrot.slane %v1834, 6
  %vm1899 = vcmp.lt.s32.totalorder %v18, 2
  %v1900 = vsel %vm1899, %v1897, %v1898
  %v1901 = vsel %vm1899, %v1896, %v1897
  %v1902 = vsel %vm1899, %v1895, %v1896
  %v1903 = vsel %vm1899, %v1894, %v1895
  %v1904 = vsel %vm1899, %v1893, %v1894
  %v1905 = vsel %vm1899, %v1892, %v1893
  %v1906 = vsel %vm1899, %v1891, %v1892
  %v1907 = vsel %vm1899, %v1890, %v1891
  %v1908 = vsel %vm1899, %v1889, %v1890
  %v1909 = vsel %vm1899, %v1888, %v1889
  %v1910 = vsel %vm1899, %v1887, %v1888
  %v1911 = vsel %vm1899, %v1886, %v1887
  %v1912 = vsel %vm1899, %v1885, %v1886
  %v1913 = vsel %vm1899, %v1884, %v1885
  %v1914 = vsel %vm1899, %v1883, %v1884
  %v1915 = vsel %vm1899, %v1882, %v1883
  %v1916 = vsel %vm1899, %v1881, %v1882
  %v1917 = vsel %vm1899, %v1880, %v1881
  %v1918 = vsel %vm1899, %v1879, %v1880
  %v1919 = vsel %vm1899, %v1878, %v1879
  %v1920 = vsel %vm1899, %v1877, %v1878
  %v1921 = vsel %vm1899, %v1876, %v1877
  %v1922 = vsel %vm1899, %v1875, %v1876
  %v1923 = vsel %vm1899, %v1874, %v1875
  %v1924 = vsel %vm1899, %v1873, %v1874
  %v1925 = vsel %vm1899, %v1872, %v1873
  %v1926 = vsel %vm1899, %v1871, %v1872
  %v1927 = vsel %vm1899, %v1870, %v1871
  %v1928 = vsel %vm1899, %v1869, %v1870
  %v1929 = vsel %vm1899, %v1868, %v1869
  %v1930 = vsel %vm1899, %v1867, %v1868
  %v1931 = vsel %vm1899, %v1866, %v1867
  %v1932 = vsel %vm1899, %v1865, %v1866
  %v1933 = vsel %vm1899, %v1864, %v1865
  %v1934 = vsel %vm1899, %v1863, %v1864
  %v1935 = vsel %vm1899, %v1862, %v1863
  %v1936 = vsel %vm1899, %v1861, %v1862
  %v1937 = vsel %vm1899, %v1860, %v1861
  %v1938 = vsel %vm1899, %v1859, %v1860
  %v1939 = vsel %vm1899, %v1858, %v1859
  %v1940 = vsel %vm1899, %v1857, %v1858
  %v1941 = vsel %vm1899, %v1856, %v1857
  %v1942 = vsel %vm1899, %v1855, %v1856
  %v1943 = vsel %vm1899, %v1854, %v1855
  %v1944 = vsel %vm1899, %v1853, %v1854
  %v1945 = vsel %vm1899, %v1852, %v1853
  %v1946 = vsel %vm1899, %v1851, %v1852
  %v1947 = vsel %vm1899, %v1850, %v1851
  %v1948 = vsel %vm1899, %v1849, %v1850
  %v1949 = vsel %vm1899, %v1848, %v1849
  %v1950 = vsel %vm1899, %v1847, %v1848
  %v1951 = vsel %vm1899, %v1846, %v1847
  %v1952 = vsel %vm1899, %v1845, %v1846
  %v1953 = vsel %vm1899, %v1844, %v1845
  %v1954 = vsel %vm1899, %v1843, %v1844
  %v1955 = vsel %vm1899, %v1842, %v1843
  %v1956 = vsel %vm1899, %v1841, %v1842
  %v1957 = vsel %vm1899, %v1840, %v1841
  %v1958 = vsel %vm1899, %v1839, %v1840
  %v1959 = vsel %vm1899, %v1838, %v1839
  %v1960 = vsel %vm1899, %v1837, %v1838
  %v1961 = vsel %vm1899, %v1836, %v1837
  %v1962 = vsel %vm1899, %v1835, %v1836
  %v1963 = vsel %vm1899, %v1898, %v1835
  %v1964 = vadd.s32 %v786, 4294967294
  %v1965 = vadd.s32 %v787, 4294967294
  %v1966 = vadd.s32 %v788, 4294967294
  %v1967 = vadd.s32 %v789, 4294967294
  %v1968 = vadd.s32 %v790, 4294967294
  %v1969 = vadd.s32 %v791, 4294967294
  %v1970 = vadd.s32 %v792, 4294967294
  %v1971 = vadd.s32 %v793, 4294967294
  %v1972 = vadd.s32 %v794, 4294967294
  %v1973 = vadd.s32 %v795, 4294967294
  %v1974 = vadd.s32 %v796, 4294967294
  %v1975 = vadd.s32 %v797, 4294967294
  %v1976 = vadd.s32 %v798, 4294967294
  %v1977 = vadd.s32 %v799, 4294967294
  %v1978 = vadd.s32 %v800, 4294967294
  %v1979 = vadd.s32 %v801, 4294967294
  %v1980 = vadd.s32 %v802, 4294967294
  %v1981 = vadd.s32 %v803, 4294967294
  %v1982 = vadd.s32 %v804, 4294967294
  %v1983 = vadd.s32 %v805, 4294967294
  %v1984 = vadd.s32 %v806, 4294967294
  %v1985 = vadd.s32 %v807, 4294967294
  %v1986 = vadd.s32 %v808, 4294967294
  %v1987 = vadd.s32 %v809, 4294967294
  %v1988 = vadd.s32 %v810, 4294967294
  %v1989 = vadd.s32 %v811, 4294967294
  %v1990 = vadd.s32 %v812, 4294967294
  %v1991 = vadd.s32 %v813, 4294967294
  %v1992 = vadd.s32 %v814, 4294967294
  %v1993 = vadd.s32 %v815, 4294967294
  %v1994 = vadd.s32 %v816, 4294967294
  %v1995 = vadd.s32 %v817, 4294967294
  %v1996 = vadd.s32 %v818, 4294967294
  %v1997 = vadd.s32 %v819, 4294967294
  %v1998 = vadd.s32 %v820, 4294967294
  %v1999 = vadd.s32 %v821, 4294967294
  %v2000 = vadd.s32 %v822, 4294967294
  %v2001 = vadd.s32 %v823, 4294967294
  %v2002 = vadd.s32 %v824, 4294967294
  %v2003 = vadd.s32 %v825, 4294967294
  %v2004 = vadd.s32 %v826, 4294967294
  %v2005 = vadd.s32 %v827, 4294967294
  %v2006 = vadd.s32 %v828, 4294967294
  %v2007 = vadd.s32 %v829, 4294967294
  %v2008 = vadd.s32 %v830, 4294967294
  %v2009 = vadd.s32 %v831, 4294967294
  %v2010 = vadd.s32 %v832, 4294967294
  %v2011 = vadd.s32 %v833, 4294967294
  %v2012 = vadd.s32 %v834, 4294967294
  %v2013 = vadd.s32 %v835, 4294967294
  %v2014 = vadd.s32 %v836, 4294967294
  %v2015 = vadd.s32 %v837, 4294967294
  %v2016 = vadd.s32 %v838, 4294967294
  %v2017 = vadd.s32 %v839, 4294967294
  %v2018 = vadd.s32 %v840, 4294967294
  %v2019 = vadd.s32 %v841, 4294967294
  %v2020 = vadd.s32 %v842, 4294967294
  %v2021 = vadd.s32 %v843, 4294967294
  %v2022 = vadd.s32 %v844, 4294967294
  %v2023 = vadd.s32 %v845, 4294967294
  %v2024 = vadd.s32 %v846, 4294967294
  %v2025 = vadd.s32 %v847, 4294967294
  %v2026 = vadd.s32 %v848, 4294967294
  %v2027 = vadd.s32 %v849, 4294967294
  %vm2028 = vcmp.ge.s32.totalorder %v1964, 0
  %vm2029 = vcmp.ge.s32.totalorder %v1965, 0
  %vm2030 = vcmp.ge.s32.totalorder %v1966, 0
  %vm2031 = vcmp.ge.s32.totalorder %v1967, 0
  %vm2032 = vcmp.ge.s32.totalorder %v1968, 0
  %vm2033 = vcmp.ge.s32.totalorder %v1969, 0
  %vm2034 = vcmp.ge.s32.totalorder %v1970, 0
  %vm2035 = vcmp.ge.s32.totalorder %v1971, 0
  %vm2036 = vcmp.ge.s32.totalorder %v1972, 0
  %vm2037 = vcmp.ge.s32.totalorder %v1973, 0
  %vm2038 = vcmp.ge.s32.totalorder %v1974, 0
  %vm2039 = vcmp.ge.s32.totalorder %v1975, 0
  %vm2040 = vcmp.ge.s32.totalorder %v1976, 0
  %vm2041 = vcmp.ge.s32.totalorder %v1977, 0
  %vm2042 = vcmp.ge.s32.totalorder %v1978, 0
  %vm2043 = vcmp.ge.s32.totalorder %v1979, 0
  %vm2044 = vcmp.ge.s32.totalorder %v1980, 0
  %vm2045 = vcmp.ge.s32.totalorder %v1981, 0
  %vm2046 = vcmp.ge.s32.totalorder %v1982, 0
  %vm2047 = vcmp.ge.s32.totalorder %v1983, 0
  %vm2048 = vcmp.ge.s32.totalorder %v1984, 0
  %vm2049 = vcmp.ge.s32.totalorder %v1985, 0
  %vm2050 = vcmp.ge.s32.totalorder %v1986, 0
  %vm2051 = vcmp.ge.s32.totalorder %v1987, 0
  %vm2052 = vcmp.ge.s32.totalorder %v1988, 0
  %vm2053 = vcmp.ge.s32.totalorder %v1989, 0
  %vm2054 = vcmp.ge.s32.totalorder %v1990, 0
  %vm2055 = vcmp.ge.s32.totalorder %v1991, 0
  %vm2056 = vcmp.ge.s32.totalorder %v1992, 0
  %vm2057 = vcmp.ge.s32.totalorder %v1993, 0
  %vm2058 = vcmp.ge.s32.totalorder %v1994, 0
  %vm2059 = vcmp.ge.s32.totalorder %v1995, 0
  %vm2060 = vcmp.ge.s32.totalorder %v1996, 0
  %vm2061 = vcmp.ge.s32.totalorder %v1997, 0
  %vm2062 = vcmp.ge.s32.totalorder %v1998, 0
  %vm2063 = vcmp.ge.s32.totalorder %v1999, 0
  %vm2064 = vcmp.ge.s32.totalorder %v2000, 0
  %vm2065 = vcmp.ge.s32.totalorder %v2001, 0
  %vm2066 = vcmp.ge.s32.totalorder %v2002, 0
  %vm2067 = vcmp.ge.s32.totalorder %v2003, 0
  %vm2068 = vcmp.ge.s32.totalorder %v2004, 0
  %vm2069 = vcmp.ge.s32.totalorder %v2005, 0
  %vm2070 = vcmp.ge.s32.totalorder %v2006, 0
  %vm2071 = vcmp.ge.s32.totalorder %v2007, 0
  %vm2072 = vcmp.ge.s32.totalorder %v2008, 0
  %vm2073 = vcmp.ge.s32.totalorder %v2009, 0
  %vm2074 = vcmp.ge.s32.totalorder %v2010, 0
  %vm2075 = vcmp.ge.s32.totalorder %v2011, 0
  %vm2076 = vcmp.ge.s32.totalorder %v2012, 0
  %vm2077 = vcmp.ge.s32.totalorder %v2013, 0
  %vm2078 = vcmp.ge.s32.totalorder %v2014, 0
  %vm2079 = vcmp.ge.s32.totalorder %v2015, 0
  %vm2080 = vcmp.ge.s32.totalorder %v2016, 0
  %vm2081 = vcmp.ge.s32.totalorder %v2017, 0
  %vm2082 = vcmp.ge.s32.totalorder %v2018, 0
  %vm2083 = vcmp.ge.s32.totalorder %v2019, 0
  %vm2084 = vcmp.ge.s32.totalorder %v2020, 0
  %vm2085 = vcmp.ge.s32.totalorder %v2021, 0
  %vm2086 = vcmp.ge.s32.totalorder %v2022, 0
  %vm2087 = vcmp.ge.s32.totalorder %v2023, 0
  %vm2088 = vcmp.ge.s32.totalorder %v2024, 0
  %vm2089 = vcmp.ge.s32.totalorder %v2025, 0
  %vm2090 = vcmp.ge.s32.totalorder %v2026, 0
  %vm2091 = vcmp.ge.s32.totalorder %v2027, 0
  %vm2092 = vcmp.lt.s32.totalorder %v1964, 64
  %vm2093 = vcmp.lt.s32.totalorder %v1965, 64
  %vm2094 = vcmp.lt.s32.totalorder %v1966, 64
  %vm2095 = vcmp.lt.s32.totalorder %v1967, 64
  %vm2096 = vcmp.lt.s32.totalorder %v1968, 64
  %vm2097 = vcmp.lt.s32.totalorder %v1969, 64
  %vm2098 = vcmp.lt.s32.totalorder %v1970, 64
  %vm2099 = vcmp.lt.s32.totalorder %v1971, 64
  %vm2100 = vcmp.lt.s32.totalorder %v1972, 64
  %vm2101 = vcmp.lt.s32.totalorder %v1973, 64
  %vm2102 = vcmp.lt.s32.totalorder %v1974, 64
  %vm2103 = vcmp.lt.s32.totalorder %v1975, 64
  %vm2104 = vcmp.lt.s32.totalorder %v1976, 64
  %vm2105 = vcmp.lt.s32.totalorder %v1977, 64
  %vm2106 = vcmp.lt.s32.totalorder %v1978, 64
  %vm2107 = vcmp.lt.s32.totalorder %v1979, 64
  %vm2108 = vcmp.lt.s32.totalorder %v1980, 64
  %vm2109 = vcmp.lt.s32.totalorder %v1981, 64
  %vm2110 = vcmp.lt.s32.totalorder %v1982, 64
  %vm2111 = vcmp.lt.s32.totalorder %v1983, 64
  %vm2112 = vcmp.lt.s32.totalorder %v1984, 64
  %vm2113 = vcmp.lt.s32.totalorder %v1985, 64
  %vm2114 = vcmp.lt.s32.totalorder %v1986, 64
  %vm2115 = vcmp.lt.s32.totalorder %v1987, 64
  %vm2116 = vcmp.lt.s32.totalorder %v1988, 64
  %vm2117 = vcmp.lt.s32.totalorder %v1989, 64
  %vm2118 = vcmp.lt.s32.totalorder %v1990, 64
  %vm2119 = vcmp.lt.s32.totalorder %v1991, 64
  %vm2120 = vcmp.lt.s32.totalorder %v1992, 64
  %vm2121 = vcmp.lt.s32.totalorder %v1993, 64
  %vm2122 = vcmp.lt.s32.totalorder %v1994, 64
  %vm2123 = vcmp.lt.s32.totalorder %v1995, 64
  %vm2124 = vcmp.lt.s32.totalorder %v1996, 64
  %vm2125 = vcmp.lt.s32.totalorder %v1997, 64
  %vm2126 = vcmp.lt.s32.totalorder %v1998, 64
  %vm2127 = vcmp.lt.s32.totalorder %v1999, 64
  %vm2128 = vcmp.lt.s32.totalorder %v2000, 64
  %vm2129 = vcmp.lt.s32.totalorder %v2001, 64
  %vm2130 = vcmp.lt.s32.totalorder %v2002, 64
  %vm2131 = vcmp.lt.s32.totalorder %v2003, 64
  %vm2132 = vcmp.lt.s32.totalorder %v2004, 64
  %vm2133 = vcmp.lt.s32.totalorder %v2005, 64
  %vm2134 = vcmp.lt.s32.totalorder %v2006, 64
  %vm2135 = vcmp.lt.s32.totalorder %v2007, 64
  %vm2136 = vcmp.lt.s32.totalorder %v2008, 64
  %vm2137 = vcmp.lt.s32.totalorder %v2009, 64
  %vm2138 = vcmp.lt.s32.totalorder %v2010, 64
  %vm2139 = vcmp.lt.s32.totalorder %v2011, 64
  %vm2140 = vcmp.lt.s32.totalorder %v2012, 64
  %vm2141 = vcmp.lt.s32.totalorder %v2013, 64
  %vm2142 = vcmp.lt.s32.totalorder %v2014, 64
  %vm2143 = vcmp.lt.s32.totalorder %v2015, 64
  %vm2144 = vcmp.lt.s32.totalorder %v2016, 64
  %vm2145 = vcmp.lt.s32.totalorder %v2017, 64
  %vm2146 = vcmp.lt.s32.totalorder %v2018, 64
  %vm2147 = vcmp.lt.s32.totalorder %v2019, 64
  %vm2148 = vcmp.lt.s32.totalorder %v2020, 64
  %vm2149 = vcmp.lt.s32.totalorder %v2021, 64
  %vm2150 = vcmp.lt.s32.totalorder %v2022, 64
  %vm2151 = vcmp.lt.s32.totalorder %v2023, 64
  %vm2152 = vcmp.lt.s32.totalorder %v2024, 64
  %vm2153 = vcmp.lt.s32.totalorder %v2025, 64
  %vm2154 = vcmp.lt.s32.totalorder %v2026, 64
  %vm2155 = vcmp.lt.s32.totalorder %v2027, 64
  %vm2156 = vmand %vm2028, %vm2092
  %vm2157 = vmand %vm2029, %vm2093
  %vm2158 = vmand %vm2030, %vm2094
  %vm2159 = vmand %vm2031, %vm2095
  %vm2160 = vmand %vm2032, %vm2096
  %vm2161 = vmand %vm2033, %vm2097
  %vm2162 = vmand %vm2034, %vm2098
  %vm2163 = vmand %vm2035, %vm2099
  %vm2164 = vmand %vm2036, %vm2100
  %vm2165 = vmand %vm2037, %vm2101
  %vm2166 = vmand %vm2038, %vm2102
  %vm2167 = vmand %vm2039, %vm2103
  %vm2168 = vmand %vm2040, %vm2104
  %vm2169 = vmand %vm2041, %vm2105
  %vm2170 = vmand %vm2042, %vm2106
  %vm2171 = vmand %vm2043, %vm2107
  %vm2172 = vmand %vm2044, %vm2108
  %vm2173 = vmand %vm2045, %vm2109
  %vm2174 = vmand %vm2046, %vm2110
  %vm2175 = vmand %vm2047, %vm2111
  %vm2176 = vmand %vm2048, %vm2112
  %vm2177 = vmand %vm2049, %vm2113
  %vm2178 = vmand %vm2050, %vm2114
  %vm2179 = vmand %vm2051, %vm2115
  %vm2180 = vmand %vm2052, %vm2116
  %vm2181 = vmand %vm2053, %vm2117
  %vm2182 = vmand %vm2054, %vm2118
  %vm2183 = vmand %vm2055, %vm2119
  %vm2184 = vmand %vm2056, %vm2120
  %vm2185 = vmand %vm2057, %vm2121
  %vm2186 = vmand %vm2058, %vm2122
  %vm2187 = vmand %vm2059, %vm2123
  %vm2188 = vmand %vm2060, %vm2124
  %vm2189 = vmand %vm2061, %vm2125
  %vm2190 = vmand %vm2062, %vm2126
  %vm2191 = vmand %vm2063, %vm2127
  %vm2192 = vmand %vm2064, %vm2128
  %vm2193 = vmand %vm2065, %vm2129
  %vm2194 = vmand %vm2066, %vm2130
  %vm2195 = vmand %vm2067, %vm2131
  %vm2196 = vmand %vm2068, %vm2132
  %vm2197 = vmand %vm2069, %vm2133
  %vm2198 = vmand %vm2070, %vm2134
  %vm2199 = vmand %vm2071, %vm2135
  %vm2200 = vmand %vm2072, %vm2136
  %vm2201 = vmand %vm2073, %vm2137
  %vm2202 = vmand %vm2074, %vm2138
  %vm2203 = vmand %vm2075, %vm2139
  %vm2204 = vmand %vm2076, %vm2140
  %vm2205 = vmand %vm2077, %vm2141
  %vm2206 = vmand %vm2078, %vm2142
  %vm2207 = vmand %vm2079, %vm2143
  %vm2208 = vmand %vm2080, %vm2144
  %vm2209 = vmand %vm2081, %vm2145
  %vm2210 = vmand %vm2082, %vm2146
  %vm2211 = vmand %vm2083, %vm2147
  %vm2212 = vmand %vm2084, %vm2148
  %vm2213 = vmand %vm2085, %vm2149
  %vm2214 = vmand %vm2086, %vm2150
  %vm2215 = vmand %vm2087, %vm2151
  %vm2216 = vmand %vm2088, %vm2152
  %vm2217 = vmand %vm2089, %vm2153
  %vm2218 = vmand %vm2090, %vm2154
  %vm2219 = vmand %vm2091, %vm2155
  %v2220 = vsel %vm2156, 1, 0
  %v2221 = vsel %vm2157, 1, 0
  %v2222 = vsel %vm2158, 1, 0
  %v2223 = vsel %vm2159, 1, 0
  %v2224 = vsel %vm2160, 1, 0
  %v2225 = vsel %vm2161, 1, 0
  %v2226 = vsel %vm2162, 1, 0
  %v2227 = vsel %vm2163, 1, 0
  %v2228 = vsel %vm2164, 1, 0
  %v2229 = vsel %vm2165, 1, 0
  %v2230 = vsel %vm2166, 1, 0
  %v2231 = vsel %vm2167, 1, 0
  %v2232 = vsel %vm2168, 1, 0
  %v2233 = vsel %vm2169, 1, 0
  %v2234 = vsel %vm2170, 1, 0
  %v2235 = vsel %vm2171, 1, 0
  %v2236 = vsel %vm2172, 1, 0
  %v2237 = vsel %vm2173, 1, 0
  %v2238 = vsel %vm2174, 1, 0
  %v2239 = vsel %vm2175, 1, 0
  %v2240 = vsel %vm2176, 1, 0
  %v2241 = vsel %vm2177, 1, 0
  %v2242 = vsel %vm2178, 1, 0
  %v2243 = vsel %vm2179, 1, 0
  %v2244 = vsel %vm2180, 1, 0
  %v2245 = vsel %vm2181, 1, 0
  %v2246 = vsel %vm2182, 1, 0
  %v2247 = vsel %vm2183, 1, 0
  %v2248 = vsel %vm2184, 1, 0
  %v2249 = vsel %vm2185, 1, 0
  %v2250 = vsel %vm2186, 1, 0
  %v2251 = vsel %vm2187, 1, 0
  %v2252 = vsel %vm2188, 1, 0
  %v2253 = vsel %vm2189, 1, 0
  %v2254 = vsel %vm2190, 1, 0
  %v2255 = vsel %vm2191, 1, 0
  %v2256 = vsel %vm2192, 1, 0
  %v2257 = vsel %vm2193, 1, 0
  %v2258 = vsel %vm2194, 1, 0
  %v2259 = vsel %vm2195, 1, 0
  %v2260 = vsel %vm2196, 1, 0
  %v2261 = vsel %vm2197, 1, 0
  %v2262 = vsel %vm2198, 1, 0
  %v2263 = vsel %vm2199, 1, 0
  %v2264 = vsel %vm2200, 1, 0
  %v2265 = vsel %vm2201, 1, 0
  %v2266 = vsel %vm2202, 1, 0
  %v2267 = vsel %vm2203, 1, 0
  %v2268 = vsel %vm2204, 1, 0
  %v2269 = vsel %vm2205, 1, 0
  %v2270 = vsel %vm2206, 1, 0
  %v2271 = vsel %vm2207, 1, 0
  %v2272 = vsel %vm2208, 1, 0
  %v2273 = vsel %vm2209, 1, 0
  %v2274 = vsel %vm2210, 1, 0
  %v2275 = vsel %vm2211, 1, 0
  %v2276 = vsel %vm2212, 1, 0
  %v2277 = vsel %vm2213, 1, 0
  %v2278 = vsel %vm2214, 1, 0
  %v2279 = vsel %vm2215, 1, 0
  %v2280 = vsel %vm2216, 1, 0
  %v2281 = vsel %vm2217, 1, 0
  %v2282 = vsel %vm2218, 1, 0
  %v2283 = vsel %vm2219, 1, 0
  %vm2284 = vcmp.eq.s32.totalorder %v2220, 1
  %vm2285 = vcmp.eq.s32.totalorder %v2221, 1
  %vm2286 = vcmp.eq.s32.totalorder %v2222, 1
  %vm2287 = vcmp.eq.s32.totalorder %v2223, 1
  %vm2288 = vcmp.eq.s32.totalorder %v2224, 1
  %vm2289 = vcmp.eq.s32.totalorder %v2225, 1
  %vm2290 = vcmp.eq.s32.totalorder %v2226, 1
  %vm2291 = vcmp.eq.s32.totalorder %v2227, 1
  %vm2292 = vcmp.eq.s32.totalorder %v2228, 1
  %vm2293 = vcmp.eq.s32.totalorder %v2229, 1
  %vm2294 = vcmp.eq.s32.totalorder %v2230, 1
  %vm2295 = vcmp.eq.s32.totalorder %v2231, 1
  %vm2296 = vcmp.eq.s32.totalorder %v2232, 1
  %vm2297 = vcmp.eq.s32.totalorder %v2233, 1
  %vm2298 = vcmp.eq.s32.totalorder %v2234, 1
  %vm2299 = vcmp.eq.s32.totalorder %v2235, 1
  %vm2300 = vcmp.eq.s32.totalorder %v2236, 1
  %vm2301 = vcmp.eq.s32.totalorder %v2237, 1
  %vm2302 = vcmp.eq.s32.totalorder %v2238, 1
  %vm2303 = vcmp.eq.s32.totalorder %v2239, 1
  %vm2304 = vcmp.eq.s32.totalorder %v2240, 1
  %vm2305 = vcmp.eq.s32.totalorder %v2241, 1
  %vm2306 = vcmp.eq.s32.totalorder %v2242, 1
  %vm2307 = vcmp.eq.s32.totalorder %v2243, 1
  %vm2308 = vcmp.eq.s32.totalorder %v2244, 1
  %vm2309 = vcmp.eq.s32.totalorder %v2245, 1
  %vm2310 = vcmp.eq.s32.totalorder %v2246, 1
  %vm2311 = vcmp.eq.s32.totalorder %v2247, 1
  %vm2312 = vcmp.eq.s32.totalorder %v2248, 1
  %vm2313 = vcmp.eq.s32.totalorder %v2249, 1
  %vm2314 = vcmp.eq.s32.totalorder %v2250, 1
  %vm2315 = vcmp.eq.s32.totalorder %v2251, 1
  %vm2316 = vcmp.eq.s32.totalorder %v2252, 1
  %vm2317 = vcmp.eq.s32.totalorder %v2253, 1
  %vm2318 = vcmp.eq.s32.totalorder %v2254, 1
  %vm2319 = vcmp.eq.s32.totalorder %v2255, 1
  %vm2320 = vcmp.eq.s32.totalorder %v2256, 1
  %vm2321 = vcmp.eq.s32.totalorder %v2257, 1
  %vm2322 = vcmp.eq.s32.totalorder %v2258, 1
  %vm2323 = vcmp.eq.s32.totalorder %v2259, 1
  %vm2324 = vcmp.eq.s32.totalorder %v2260, 1
  %vm2325 = vcmp.eq.s32.totalorder %v2261, 1
  %vm2326 = vcmp.eq.s32.totalorder %v2262, 1
  %vm2327 = vcmp.eq.s32.totalorder %v2263, 1
  %vm2328 = vcmp.eq.s32.totalorder %v2264, 1
  %vm2329 = vcmp.eq.s32.totalorder %v2265, 1
  %vm2330 = vcmp.eq.s32.totalorder %v2266, 1
  %vm2331 = vcmp.eq.s32.totalorder %v2267, 1
  %vm2332 = vcmp.eq.s32.totalorder %v2268, 1
  %vm2333 = vcmp.eq.s32.totalorder %v2269, 1
  %vm2334 = vcmp.eq.s32.totalorder %v2270, 1
  %vm2335 = vcmp.eq.s32.totalorder %v2271, 1
  %vm2336 = vcmp.eq.s32.totalorder %v2272, 1
  %vm2337 = vcmp.eq.s32.totalorder %v2273, 1
  %vm2338 = vcmp.eq.s32.totalorder %v2274, 1
  %vm2339 = vcmp.eq.s32.totalorder %v2275, 1
  %vm2340 = vcmp.eq.s32.totalorder %v2276, 1
  %vm2341 = vcmp.eq.s32.totalorder %v2277, 1
  %vm2342 = vcmp.eq.s32.totalorder %v2278, 1
  %vm2343 = vcmp.eq.s32.totalorder %v2279, 1
  %vm2344 = vcmp.eq.s32.totalorder %v2280, 1
  %vm2345 = vcmp.eq.s32.totalorder %v2281, 1
  %vm2346 = vcmp.eq.s32.totalorder %v2282, 1
  %vm2347 = vcmp.eq.s32.totalorder %v2283, 1
  %v2348 = vsel %vm2284, %v1963, 0.0
  %v2349 = vsel %vm2285, %v1962, 0.0
  %v2350 = vsel %vm2286, %v1961, 0.0
  %v2351 = vsel %vm2287, %v1960, 0.0
  %v2352 = vsel %vm2288, %v1959, 0.0
  %v2353 = vsel %vm2289, %v1958, 0.0
  %v2354 = vsel %vm2290, %v1957, 0.0
  %v2355 = vsel %vm2291, %v1956, 0.0
  %v2356 = vsel %vm2292, %v1955, 0.0
  %v2357 = vsel %vm2293, %v1954, 0.0
  %v2358 = vsel %vm2294, %v1953, 0.0
  %v2359 = vsel %vm2295, %v1952, 0.0
  %v2360 = vsel %vm2296, %v1951, 0.0
  %v2361 = vsel %vm2297, %v1950, 0.0
  %v2362 = vsel %vm2298, %v1949, 0.0
  %v2363 = vsel %vm2299, %v1948, 0.0
  %v2364 = vsel %vm2300, %v1947, 0.0
  %v2365 = vsel %vm2301, %v1946, 0.0
  %v2366 = vsel %vm2302, %v1945, 0.0
  %v2367 = vsel %vm2303, %v1944, 0.0
  %v2368 = vsel %vm2304, %v1943, 0.0
  %v2369 = vsel %vm2305, %v1942, 0.0
  %v2370 = vsel %vm2306, %v1941, 0.0
  %v2371 = vsel %vm2307, %v1940, 0.0
  %v2372 = vsel %vm2308, %v1939, 0.0
  %v2373 = vsel %vm2309, %v1938, 0.0
  %v2374 = vsel %vm2310, %v1937, 0.0
  %v2375 = vsel %vm2311, %v1936, 0.0
  %v2376 = vsel %vm2312, %v1935, 0.0
  %v2377 = vsel %vm2313, %v1934, 0.0
  %v2378 = vsel %vm2314, %v1933, 0.0
  %v2379 = vsel %vm2315, %v1932, 0.0
  %v2380 = vsel %vm2316, %v1931, 0.0
  %v2381 = vsel %vm2317, %v1930, 0.0
  %v2382 = vsel %vm2318, %v1929, 0.0
  %v2383 = vsel %vm2319, %v1928, 0.0
  %v2384 = vsel %vm2320, %v1927, 0.0
  %v2385 = vsel %vm2321, %v1926, 0.0
  %v2386 = vsel %vm2322, %v1925, 0.0
  %v2387 = vsel %vm2323, %v1924, 0.0
  %v2388 = vsel %vm2324, %v1923, 0.0
  %v2389 = vsel %vm2325, %v1922, 0.0
  %v2390 = vsel %vm2326, %v1921, 0.0
  %v2391 = vsel %vm2327, %v1920, 0.0
  %v2392 = vsel %vm2328, %v1919, 0.0
  %v2393 = vsel %vm2329, %v1918, 0.0
  %v2394 = vsel %vm2330, %v1917, 0.0
  %v2395 = vsel %vm2331, %v1916, 0.0
  %v2396 = vsel %vm2332, %v1915, 0.0
  %v2397 = vsel %vm2333, %v1914, 0.0
  %v2398 = vsel %vm2334, %v1913, 0.0
  %v2399 = vsel %vm2335, %v1912, 0.0
  %v2400 = vsel %vm2336, %v1911, 0.0
  %v2401 = vsel %vm2337, %v1910, 0.0
  %v2402 = vsel %vm2338, %v1909, 0.0
  %v2403 = vsel %vm2339, %v1908, 0.0
  %v2404 = vsel %vm2340, %v1907, 0.0
  %v2405 = vsel %vm2341, %v1906, 0.0
  %v2406 = vsel %vm2342, %v1905, 0.0
  %v2407 = vsel %vm2343, %v1904, 0.0
  %v2408 = vsel %vm2344, %v1903, 0.0
  %v2409 = vsel %vm2345, %v1902, 0.0
  %v2410 = vsel %vm2346, %v1901, 0.0
  %v2411 = vsel %vm2347, %v1900, 0.0
  %v2412 = vld [vmem:[%s2] sm:$0xff]
  %v2413 = vld [vmem:[%s2 + $0x8] sm:$0xff]
  %v2414 = vld [vmem:[%s2 + $0x10] sm:$0xff]
  %v2415 = vld [vmem:[%s2 + $0x18] sm:$0xff]
  %v2416 = vld [vmem:[%s2 + $0x20] sm:$0xff]
  %v2417 = vld [vmem:[%s2 + $0x28] sm:$0xff]
  %v2418 = vld [vmem:[%s2 + $0x30] sm:$0xff]
  %v2419 = vld [vmem:[%s2 + $0x38] sm:$0xff]
  %v2420 = vld [vmem:[%s2 + $0x40] sm:$0xff]
  %v2421 = vld [vmem:[%s2 + $0x48] sm:$0xff]
  %v2422 = vld [vmem:[%s2 + $0x50] sm:$0xff]
  %v2423 = vld [vmem:[%s2 + $0x58] sm:$0xff]
  %v2424 = vld [vmem:[%s2 + $0x60] sm:$0xff]
  %v2425 = vld [vmem:[%s2 + $0x68] sm:$0xff]
  %v2426 = vld [vmem:[%s2 + $0x70] sm:$0xff]
  %v2427 = vld [vmem:[%s2 + $0x78] sm:$0xff]
  %v2428 = vld [vmem:[%s2 + $0x80] sm:$0xff]
  %v2429 = vld [vmem:[%s2 + $0x88] sm:$0xff]
  %v2430 = vld [vmem:[%s2 + $0x90] sm:$0xff]
  %v2431 = vld [vmem:[%s2 + $0x98] sm:$0xff]
  %v2432 = vld [vmem:[%s2 + $0xa0] sm:$0xff]
  %v2433 = vld [vmem:[%s2 + $0xa8] sm:$0xff]
  %v2434 = vld [vmem:[%s2 + $0xb0] sm:$0xff]
  %v2435 = vld [vmem:[%s2 + $0xb8] sm:$0xff]
  %v2436 = vld [vmem:[%s2 + $0xc0] sm:$0xff]
  %v2437 = vld [vmem:[%s2 + $0xc8] sm:$0xff]
  %v2438 = vld [vmem:[%s2 + $0xd0] sm:$0xff]
  %v2439 = vld [vmem:[%s2 + $0xd8] sm:$0xff]
  %v2440 = vld [vmem:[%s2 + $0xe0] sm:$0xff]
  %v2441 = vld [vmem:[%s2 + $0xe8] sm:$0xff]
  %v2442 = vld [vmem:[%s2 + $0xf0] sm:$0xff]
  %v2443 = vld [vmem:[%s2 + $0xf8] sm:$0xff]
  %v2444 = vrot.slane %v1771, 7
  %v2445 = vrot.slane %v1772, 7
  %v2446 = vrot.slane %v1773, 7
  %v2447 = vrot.slane %v1774, 7
  %v2448 = vrot.slane %v1775, 7
  %v2449 = vrot.slane %v1776, 7
  %v2450 = vrot.slane %v1777, 7
  %v2451 = vrot.slane %v1778, 7
  %v2452 = vrot.slane %v1779, 7
  %v2453 = vrot.slane %v1780, 7
  %v2454 = vrot.slane %v1781, 7
  %v2455 = vrot.slane %v1782, 7
  %v2456 = vrot.slane %v1783, 7
  %v2457 = vrot.slane %v1784, 7
  %v2458 = vrot.slane %v1785, 7
  %v2459 = vrot.slane %v1786, 7
  %v2460 = vrot.slane %v1787, 7
  %v2461 = vrot.slane %v1788, 7
  %v2462 = vrot.slane %v1789, 7
  %v2463 = vrot.slane %v1790, 7
  %v2464 = vrot.slane %v1791, 7
  %v2465 = vrot.slane %v1792, 7
  %v2466 = vrot.slane %v1793, 7
  %v2467 = vrot.slane %v1794, 7
  %v2468 = vrot.slane %v1795, 7
  %v2469 = vrot.slane %v1796, 7
  %v2470 = vrot.slane %v1797, 7
  %v2471 = vrot.slane %v1798, 7
  %v2472 = vrot.slane %v1799, 7
  %v2473 = vrot.slane %v1800, 7
  %v2474 = vrot.slane %v1801, 7
  %v2475 = vrot.slane %v1802, 7
  %v2476 = vrot.slane %v1803, 7
  %v2477 = vrot.slane %v1804, 7
  %v2478 = vrot.slane %v1805, 7
  %v2479 = vrot.slane %v1806, 7
  %v2480 = vrot.slane %v1807, 7
  %v2481 = vrot.slane %v1808, 7
  %v2482 = vrot.slane %v1809, 7
  %v2483 = vrot.slane %v1810, 7
  %v2484 = vrot.slane %v1811, 7
  %v2485 = vrot.slane %v1812, 7
  %v2486 = vrot.slane %v1813, 7
  %v2487 = vrot.slane %v1814, 7
  %v2488 = vrot.slane %v1815, 7
  %v2489 = vrot.slane %v1816, 7
  %v2490 = vrot.slane %v1817, 7
  %v2491 = vrot.slane %v1818, 7
  %v2492 = vrot.slane %v1819, 7
  %v2493 = vrot.slane %v1820, 7
  %v2494 = vrot.slane %v1821, 7
  %v2495 = vrot.slane %v1822, 7
  %v2496 = vrot.slane %v1823, 7
  %v2497 = vrot.slane %v1824, 7
  %v2498 = vrot.slane %v1825, 7
  %v2499 = vrot.slane %v1826, 7
  %v2500 = vrot.slane %v1827, 7
  %v2501 = vrot.slane %v1828, 7
  %v2502 = vrot.slane %v1829, 7
  %v2503 = vrot.slane %v1830, 7
  %v2504 = vrot.slane %v1831, 7
  %v2505 = vrot.slane %v1832, 7
  %v2506 = vrot.slane %v1833, 7
  %v2507 = vrot.slane %v1834, 7
  %vm2508 = vcmp.lt.s32.totalorder %v18, 1
  %v2509 = vsel %vm2508, %v2506, %v2507
  %v2510 = vsel %vm2508, %v2505, %v2506
  %v2511 = vsel %vm2508, %v2504, %v2505
  %v2512 = vsel %vm2508, %v2503, %v2504
  %v2513 = vsel %vm2508, %v2502, %v2503
  %v2514 = vsel %vm2508, %v2501, %v2502
  %v2515 = vsel %vm2508, %v2500, %v2501
  %v2516 = vsel %vm2508, %v2499, %v2500
  %v2517 = vsel %vm2508, %v2498, %v2499
  %v2518 = vsel %vm2508, %v2497, %v2498
  %v2519 = vsel %vm2508, %v2496, %v2497
  %v2520 = vsel %vm2508, %v2495, %v2496
  %v2521 = vsel %vm2508, %v2494, %v2495
  %v2522 = vsel %vm2508, %v2493, %v2494
  %v2523 = vsel %vm2508, %v2492, %v2493
  %v2524 = vsel %vm2508, %v2491, %v2492
  %v2525 = vsel %vm2508, %v2490, %v2491
  %v2526 = vsel %vm2508, %v2489, %v2490
  %v2527 = vsel %vm2508, %v2488, %v2489
  %v2528 = vsel %vm2508, %v2487, %v2488
  %v2529 = vsel %vm2508, %v2486, %v2487
  %v2530 = vsel %vm2508, %v2485, %v2486
  %v2531 = vsel %vm2508, %v2484, %v2485
  %v2532 = vsel %vm2508, %v2483, %v2484
  %v2533 = vsel %vm2508, %v2482, %v2483
  %v2534 = vsel %vm2508, %v2481, %v2482
  %v2535 = vsel %vm2508, %v2480, %v2481
  %v2536 = vsel %vm2508, %v2479, %v2480
  %v2537 = vsel %vm2508, %v2478, %v2479
  %v2538 = vsel %vm2508, %v2477, %v2478
  %v2539 = vsel %vm2508, %v2476, %v2477
  %v2540 = vsel %vm2508, %v2475, %v2476
  %v2541 = vsel %vm2508, %v2474, %v2475
  %v2542 = vsel %vm2508, %v2473, %v2474
  %v2543 = vsel %vm2508, %v2472, %v2473
  %v2544 = vsel %vm2508, %v2471, %v2472
  %v2545 = vsel %vm2508, %v2470, %v2471
  %v2546 = vsel %vm2508, %v2469, %v2470
  %v2547 = vsel %vm2508, %v2468, %v2469
  %v2548 = vsel %vm2508, %v2467, %v2468
  %v2549 = vsel %vm2508, %v2466, %v2467
  %v2550 = vsel %vm2508, %v2465, %v2466
  %v2551 = vsel %vm2508, %v2464, %v2465
  %v2552 = vsel %vm2508, %v2463, %v2464
  %v2553 = vsel %vm2508, %v2462, %v2463
  %v2554 = vsel %vm2508, %v2461, %v2462
  %v2555 = vsel %vm2508, %v2460, %v2461
  %v2556 = vsel %vm2508, %v2459, %v2460
  %v2557 = vsel %vm2508, %v2458, %v2459
  %v2558 = vsel %vm2508, %v2457, %v2458
  %v2559 = vsel %vm2508, %v2456, %v2457
  %v2560 = vsel %vm2508, %v2455, %v2456
  %v2561 = vsel %vm2508, %v2454, %v2455
  %v2562 = vsel %vm2508, %v2453, %v2454
  %v2563 = vsel %vm2508, %v2452, %v2453
  %v2564 = vsel %vm2508, %v2451, %v2452
  %v2565 = vsel %vm2508, %v2450, %v2451
  %v2566 = vsel %vm2508, %v2449, %v2450
  %v2567 = vsel %vm2508, %v2448, %v2449
  %v2568 = vsel %vm2508, %v2447, %v2448
  %v2569 = vsel %vm2508, %v2446, %v2447
  %v2570 = vsel %vm2508, %v2445, %v2446
  %v2571 = vsel %vm2508, %v2444, %v2445
  %v2572 = vsel %vm2508, %v2507, %v2444
  %v2573 = vadd.s32 %v786, 4294967295
  %v2574 = vadd.s32 %v787, 4294967295
  %v2575 = vadd.s32 %v788, 4294967295
  %v2576 = vadd.s32 %v789, 4294967295
  %v2577 = vadd.s32 %v790, 4294967295
  %v2578 = vadd.s32 %v791, 4294967295
  %v2579 = vadd.s32 %v792, 4294967295
  %v2580 = vadd.s32 %v793, 4294967295
  %v2581 = vadd.s32 %v794, 4294967295
  %v2582 = vadd.s32 %v795, 4294967295
  %v2583 = vadd.s32 %v796, 4294967295
  %v2584 = vadd.s32 %v797, 4294967295
  %v2585 = vadd.s32 %v798, 4294967295
  %v2586 = vadd.s32 %v799, 4294967295
  %v2587 = vadd.s32 %v800, 4294967295
  %v2588 = vadd.s32 %v801, 4294967295
  %v2589 = vadd.s32 %v802, 4294967295
  %v2590 = vadd.s32 %v803, 4294967295
  %v2591 = vadd.s32 %v804, 4294967295
  %v2592 = vadd.s32 %v805, 4294967295
  %v2593 = vadd.s32 %v806, 4294967295
  %v2594 = vadd.s32 %v807, 4294967295
  %v2595 = vadd.s32 %v808, 4294967295
  %v2596 = vadd.s32 %v809, 4294967295
  %v2597 = vadd.s32 %v810, 4294967295
  %v2598 = vadd.s32 %v811, 4294967295
  %v2599 = vadd.s32 %v812, 4294967295
  %v2600 = vadd.s32 %v813, 4294967295
  %v2601 = vadd.s32 %v814, 4294967295
  %v2602 = vadd.s32 %v815, 4294967295
  %v2603 = vadd.s32 %v816, 4294967295
  %v2604 = vadd.s32 %v817, 4294967295
  %v2605 = vadd.s32 %v818, 4294967295
  %v2606 = vadd.s32 %v819, 4294967295
  %v2607 = vadd.s32 %v820, 4294967295
  %v2608 = vadd.s32 %v821, 4294967295
  %v2609 = vadd.s32 %v822, 4294967295
  %v2610 = vadd.s32 %v823, 4294967295
  %v2611 = vadd.s32 %v824, 4294967295
  %v2612 = vadd.s32 %v825, 4294967295
  %v2613 = vadd.s32 %v826, 4294967295
  %v2614 = vadd.s32 %v827, 4294967295
  %v2615 = vadd.s32 %v828, 4294967295
  %v2616 = vadd.s32 %v829, 4294967295
  %v2617 = vadd.s32 %v830, 4294967295
  %v2618 = vadd.s32 %v831, 4294967295
  %v2619 = vadd.s32 %v832, 4294967295
  %v2620 = vadd.s32 %v833, 4294967295
  %v2621 = vadd.s32 %v834, 4294967295
  %v2622 = vadd.s32 %v835, 4294967295
  %v2623 = vadd.s32 %v836, 4294967295
  %v2624 = vadd.s32 %v837, 4294967295
  %v2625 = vadd.s32 %v838, 4294967295
  %v2626 = vadd.s32 %v839, 4294967295
  %v2627 = vadd.s32 %v840, 4294967295
  %v2628 = vadd.s32 %v841, 4294967295
  %v2629 = vadd.s32 %v842, 4294967295
  %v2630 = vadd.s32 %v843, 4294967295
  %v2631 = vadd.s32 %v844, 4294967295
  %v2632 = vadd.s32 %v845, 4294967295
  %v2633 = vadd.s32 %v846, 4294967295
  %v2634 = vadd.s32 %v847, 4294967295
  %v2635 = vadd.s32 %v848, 4294967295
  %v2636 = vadd.s32 %v849, 4294967295
  %vm2637 = vcmp.ge.s32.totalorder %v2573, 0
  %vm2638 = vcmp.ge.s32.totalorder %v2574, 0
  %vm2639 = vcmp.ge.s32.totalorder %v2575, 0
  %vm2640 = vcmp.ge.s32.totalorder %v2576, 0
  %vm2641 = vcmp.ge.s32.totalorder %v2577, 0
  %vm2642 = vcmp.ge.s32.totalorder %v2578, 0
  %vm2643 = vcmp.ge.s32.totalorder %v2579, 0
  %vm2644 = vcmp.ge.s32.totalorder %v2580, 0
  %vm2645 = vcmp.ge.s32.totalorder %v2581, 0
  %vm2646 = vcmp.ge.s32.totalorder %v2582, 0
  %vm2647 = vcmp.ge.s32.totalorder %v2583, 0
  %vm2648 = vcmp.ge.s32.totalorder %v2584, 0
  %vm2649 = vcmp.ge.s32.totalorder %v2585, 0
  %vm2650 = vcmp.ge.s32.totalorder %v2586, 0
  %vm2651 = vcmp.ge.s32.totalorder %v2587, 0
  %vm2652 = vcmp.ge.s32.totalorder %v2588, 0
  %vm2653 = vcmp.ge.s32.totalorder %v2589, 0
  %vm2654 = vcmp.ge.s32.totalorder %v2590, 0
  %vm2655 = vcmp.ge.s32.totalorder %v2591, 0
  %vm2656 = vcmp.ge.s32.totalorder %v2592, 0
  %vm2657 = vcmp.ge.s32.totalorder %v2593, 0
  %vm2658 = vcmp.ge.s32.totalorder %v2594, 0
  %vm2659 = vcmp.ge.s32.totalorder %v2595, 0
  %vm2660 = vcmp.ge.s32.totalorder %v2596, 0
  %vm2661 = vcmp.ge.s32.totalorder %v2597, 0
  %vm2662 = vcmp.ge.s32.totalorder %v2598, 0
  %vm2663 = vcmp.ge.s32.totalorder %v2599, 0
  %vm2664 = vcmp.ge.s32.totalorder %v2600, 0
  %vm2665 = vcmp.ge.s32.totalorder %v2601, 0
  %vm2666 = vcmp.ge.s32.totalorder %v2602, 0
  %vm2667 = vcmp.ge.s32.totalorder %v2603, 0
  %vm2668 = vcmp.ge.s32.totalorder %v2604, 0
  %vm2669 = vcmp.ge.s32.totalorder %v2605, 0
  %vm2670 = vcmp.ge.s32.totalorder %v2606, 0
  %vm2671 = vcmp.ge.s32.totalorder %v2607, 0
  %vm2672 = vcmp.ge.s32.totalorder %v2608, 0
  %vm2673 = vcmp.ge.s32.totalorder %v2609, 0
  %vm2674 = vcmp.ge.s32.totalorder %v2610, 0
  %vm2675 = vcmp.ge.s32.totalorder %v2611, 0
  %vm2676 = vcmp.ge.s32.totalorder %v2612, 0
  %vm2677 = vcmp.ge.s32.totalorder %v2613, 0
  %vm2678 = vcmp.ge.s32.totalorder %v2614, 0
  %vm2679 = vcmp.ge.s32.totalorder %v2615, 0
  %vm2680 = vcmp.ge.s32.totalorder %v2616, 0
  %vm2681 = vcmp.ge.s32.totalorder %v2617, 0
  %vm2682 = vcmp.ge.s32.totalorder %v2618, 0
  %vm2683 = vcmp.ge.s32.totalorder %v2619, 0
  %vm2684 = vcmp.ge.s32.totalorder %v2620, 0
  %vm2685 = vcmp.ge.s32.totalorder %v2621, 0
  %vm2686 = vcmp.ge.s32.totalorder %v2622, 0
  %vm2687 = vcmp.ge.s32.totalorder %v2623, 0
  %vm2688 = vcmp.ge.s32.totalorder %v2624, 0
  %vm2689 = vcmp.ge.s32.totalorder %v2625, 0
  %vm2690 = vcmp.ge.s32.totalorder %v2626, 0
  %vm2691 = vcmp.ge.s32.totalorder %v2627, 0
  %vm2692 = vcmp.ge.s32.totalorder %v2628, 0
  %vm2693 = vcmp.ge.s32.totalorder %v2629, 0
  %vm2694 = vcmp.ge.s32.totalorder %v2630, 0
  %vm2695 = vcmp.ge.s32.totalorder %v2631, 0
  %vm2696 = vcmp.ge.s32.totalorder %v2632, 0
  %vm2697 = vcmp.ge.s32.totalorder %v2633, 0
  %vm2698 = vcmp.ge.s32.totalorder %v2634, 0
  %vm2699 = vcmp.ge.s32.totalorder %v2635, 0
  %vm2700 = vcmp.ge.s32.totalorder %v2636, 0
  %vm2701 = vcmp.lt.s32.totalorder %v2573, 64
  %vm2702 = vcmp.lt.s32.totalorder %v2574, 64
  %vm2703 = vcmp.lt.s32.totalorder %v2575, 64
  %vm2704 = vcmp.lt.s32.totalorder %v2576, 64
  %vm2705 = vcmp.lt.s32.totalorder %v2577, 64
  %vm2706 = vcmp.lt.s32.totalorder %v2578, 64
  %vm2707 = vcmp.lt.s32.totalorder %v2579, 64
  %vm2708 = vcmp.lt.s32.totalorder %v2580, 64
  %vm2709 = vcmp.lt.s32.totalorder %v2581, 64
  %vm2710 = vcmp.lt.s32.totalorder %v2582, 64
  %vm2711 = vcmp.lt.s32.totalorder %v2583, 64
  %vm2712 = vcmp.lt.s32.totalorder %v2584, 64
  %vm2713 = vcmp.lt.s32.totalorder %v2585, 64
  %vm2714 = vcmp.lt.s32.totalorder %v2586, 64
  %vm2715 = vcmp.lt.s32.totalorder %v2587, 64
  %vm2716 = vcmp.lt.s32.totalorder %v2588, 64
  %vm2717 = vcmp.lt.s32.totalorder %v2589, 64
  %vm2718 = vcmp.lt.s32.totalorder %v2590, 64
  %vm2719 = vcmp.lt.s32.totalorder %v2591, 64
  %vm2720 = vcmp.lt.s32.totalorder %v2592, 64
  %vm2721 = vcmp.lt.s32.totalorder %v2593, 64
  %vm2722 = vcmp.lt.s32.totalorder %v2594, 64
  %vm2723 = vcmp.lt.s32.totalorder %v2595, 64
  %vm2724 = vcmp.lt.s32.totalorder %v2596, 64
  %vm2725 = vcmp.lt.s32.totalorder %v2597, 64
  %vm2726 = vcmp.lt.s32.totalorder %v2598, 64
  %vm2727 = vcmp.lt.s32.totalorder %v2599, 64
  %vm2728 = vcmp.lt.s32.totalorder %v2600, 64
  %vm2729 = vcmp.lt.s32.totalorder %v2601, 64
  %vm2730 = vcmp.lt.s32.totalorder %v2602, 64
  %vm2731 = vcmp.lt.s32.totalorder %v2603, 64
  %vm2732 = vcmp.lt.s32.totalorder %v2604, 64
  %vm2733 = vcmp.lt.s32.totalorder %v2605, 64
  %vm2734 = vcmp.lt.s32.totalorder %v2606, 64
  %vm2735 = vcmp.lt.s32.totalorder %v2607, 64
  %vm2736 = vcmp.lt.s32.totalorder %v2608, 64
  %vm2737 = vcmp.lt.s32.totalorder %v2609, 64
  %vm2738 = vcmp.lt.s32.totalorder %v2610, 64
  %vm2739 = vcmp.lt.s32.totalorder %v2611, 64
  %vm2740 = vcmp.lt.s32.totalorder %v2612, 64
  %vm2741 = vcmp.lt.s32.totalorder %v2613, 64
  %vm2742 = vcmp.lt.s32.totalorder %v2614, 64
  %vm2743 = vcmp.lt.s32.totalorder %v2615, 64
  %vm2744 = vcmp.lt.s32.totalorder %v2616, 64
  %vm2745 = vcmp.lt.s32.totalorder %v2617, 64
  %vm2746 = vcmp.lt.s32.totalorder %v2618, 64
  %vm2747 = vcmp.lt.s32.totalorder %v2619, 64
  %vm2748 = vcmp.lt.s32.totalorder %v2620, 64
  %vm2749 = vcmp.lt.s32.totalorder %v2621, 64
  %vm2750 = vcmp.lt.s32.totalorder %v2622, 64
  %vm2751 = vcmp.lt.s32.totalorder %v2623, 64
  %vm2752 = vcmp.lt.s32.totalorder %v2624, 64
  %vm2753 = vcmp.lt.s32.totalorder %v2625, 64
  %vm2754 = vcmp.lt.s32.totalorder %v2626, 64
  %vm2755 = vcmp.lt.s32.totalorder %v2627, 64
  %vm2756 = vcmp.lt.s32.totalorder %v2628, 64
  %vm2757 = vcmp.lt.s32.totalorder %v2629, 64
  %vm2758 = vcmp.lt.s32.totalorder %v2630, 64
  %vm2759 = vcmp.lt.s32.totalorder %v2631, 64
  %vm2760 = vcmp.lt.s32.totalorder %v2632, 64
  %vm2761 = vcmp.lt.s32.totalorder %v2633, 64
  %vm2762 = vcmp.lt.s32.totalorder %v2634, 64
  %vm2763 = vcmp.lt.s32.totalorder %v2635, 64
  %vm2764 = vcmp.lt.s32.totalorder %v2636, 64
  %vm2765 = vmand %vm2637, %vm2701
  %vm2766 = vmand %vm2638, %vm2702
  %vm2767 = vmand %vm2639, %vm2703
  %vm2768 = vmand %vm2640, %vm2704
  %vm2769 = vmand %vm2641, %vm2705
  %vm2770 = vmand %vm2642, %vm2706
  %vm2771 = vmand %vm2643, %vm2707
  %vm2772 = vmand %vm2644, %vm2708
  %vm2773 = vmand %vm2645, %vm2709
  %vm2774 = vmand %vm2646, %vm2710
  %vm2775 = vmand %vm2647, %vm2711
  %vm2776 = vmand %vm2648, %vm2712
  %vm2777 = vmand %vm2649, %vm2713
  %vm2778 = vmand %vm2650, %vm2714
  %vm2779 = vmand %vm2651, %vm2715
  %vm2780 = vmand %vm2652, %vm2716
  %vm2781 = vmand %vm2653, %vm2717
  %vm2782 = vmand %vm2654, %vm2718
  %vm2783 = vmand %vm2655, %vm2719
  %vm2784 = vmand %vm2656, %vm2720
  %vm2785 = vmand %vm2657, %vm2721
  %vm2786 = vmand %vm2658, %vm2722
  %vm2787 = vmand %vm2659, %vm2723
  %vm2788 = vmand %vm2660, %vm2724
  %vm2789 = vmand %vm2661, %vm2725
  %vm2790 = vmand %vm2662, %vm2726
  %vm2791 = vmand %vm2663, %vm2727
  %vm2792 = vmand %vm2664, %vm2728
  %vm2793 = vmand %vm2665, %vm2729
  %vm2794 = vmand %vm2666, %vm2730
  %vm2795 = vmand %vm2667, %vm2731
  %vm2796 = vmand %vm2668, %vm2732
  %vm2797 = vmand %vm2669, %vm2733
  %vm2798 = vmand %vm2670, %vm2734
  %vm2799 = vmand %vm2671, %vm2735
  %vm2800 = vmand %vm2672, %vm2736
  %vm2801 = vmand %vm2673, %vm2737
  %vm2802 = vmand %vm2674, %vm2738
  %vm2803 = vmand %vm2675, %vm2739
  %vm2804 = vmand %vm2676, %vm2740
  %vm2805 = vmand %vm2677, %vm2741
  %vm2806 = vmand %vm2678, %vm2742
  %vm2807 = vmand %vm2679, %vm2743
  %vm2808 = vmand %vm2680, %vm2744
  %vm2809 = vmand %vm2681, %vm2745
  %vm2810 = vmand %vm2682, %vm2746
  %vm2811 = vmand %vm2683, %vm2747
  %vm2812 = vmand %vm2684, %vm2748
  %vm2813 = vmand %vm2685, %vm2749
  %vm2814 = vmand %vm2686, %vm2750
  %vm2815 = vmand %vm2687, %vm2751
  %vm2816 = vmand %vm2688, %vm2752
  %vm2817 = vmand %vm2689, %vm2753
  %vm2818 = vmand %vm2690, %vm2754
  %vm2819 = vmand %vm2691, %vm2755
  %vm2820 = vmand %vm2692, %vm2756
  %vm2821 = vmand %vm2693, %vm2757
  %vm2822 = vmand %vm2694, %vm2758
  %vm2823 = vmand %vm2695, %vm2759
  %vm2824 = vmand %vm2696, %vm2760
  %vm2825 = vmand %vm2697, %vm2761
  %vm2826 = vmand %vm2698, %vm2762
  %vm2827 = vmand %vm2699, %vm2763
  %vm2828 = vmand %vm2700, %vm2764
  %v2829 = vsel %vm2765, 1, 0
  %v2830 = vsel %vm2766, 1, 0
  %v2831 = vsel %vm2767, 1, 0
  %v2832 = vsel %vm2768, 1, 0
  %v2833 = vsel %vm2769, 1, 0
  %v2834 = vsel %vm2770, 1, 0
  %v2835 = vsel %vm2771, 1, 0
  %v2836 = vsel %vm2772, 1, 0
  %v2837 = vsel %vm2773, 1, 0
  %v2838 = vsel %vm2774, 1, 0
  %v2839 = vsel %vm2775, 1, 0
  %v2840 = vsel %vm2776, 1, 0
  %v2841 = vsel %vm2777, 1, 0
  %v2842 = vsel %vm2778, 1, 0
  %v2843 = vsel %vm2779, 1, 0
  %v2844 = vsel %vm2780, 1, 0
  %v2845 = vsel %vm2781, 1, 0
  %v2846 = vsel %vm2782, 1, 0
  %v2847 = vsel %vm2783, 1, 0
  %v2848 = vsel %vm2784, 1, 0
  %v2849 = vsel %vm2785, 1, 0
  %v2850 = vsel %vm2786, 1, 0
  %v2851 = vsel %vm2787, 1, 0
  %v2852 = vsel %vm2788, 1, 0
  %v2853 = vsel %vm2789, 1, 0
  %v2854 = vsel %vm2790, 1, 0
  %v2855 = vsel %vm2791, 1, 0
  %v2856 = vsel %vm2792, 1, 0
  %v2857 = vsel %vm2793, 1, 0
  %v2858 = vsel %vm2794, 1, 0
  %v2859 = vsel %vm2795, 1, 0
  %v2860 = vsel %vm2796, 1, 0
  %v2861 = vsel %vm2797, 1, 0
  %v2862 = vsel %vm2798, 1, 0
  %v2863 = vsel %vm2799, 1, 0
  %v2864 = vsel %vm2800, 1, 0
  %v2865 = vsel %vm2801, 1, 0
  %v2866 = vsel %vm2802, 1, 0
  %v2867 = vsel %vm2803, 1, 0
  %v2868 = vsel %vm2804, 1, 0
  %v2869 = vsel %vm2805, 1, 0
  %v2870 = vsel %vm2806, 1, 0
  %v2871 = vsel %vm2807, 1, 0
  %v2872 = vsel %vm2808, 1, 0
  %v2873 = vsel %vm2809, 1, 0
  %v2874 = vsel %vm2810, 1, 0
  %v2875 = vsel %vm2811, 1, 0
  %v2876 = vsel %vm2812, 1, 0
  %v2877 = vsel %vm2813, 1, 0
  %v2878 = vsel %vm2814, 1, 0
  %v2879 = vsel %vm2815, 1, 0
  %v2880 = vsel %vm2816, 1, 0
  %v2881 = vsel %vm2817, 1, 0
  %v2882 = vsel %vm2818, 1, 0
  %v2883 = vsel %vm2819, 1, 0
  %v2884 = vsel %vm2820, 1, 0
  %v2885 = vsel %vm2821, 1, 0
  %v2886 = vsel %vm2822, 1, 0
  %v2887 = vsel %vm2823, 1, 0
  %v2888 = vsel %vm2824, 1, 0
  %v2889 = vsel %vm2825, 1, 0
  %v2890 = vsel %vm2826, 1, 0
  %v2891 = vsel %vm2827, 1, 0
  %v2892 = vsel %vm2828, 1, 0
  %vm2893 = vcmp.eq.s32.totalorder %v2829, 1
  %vm2894 = vcmp.eq.s32.totalorder %v2830, 1
  %vm2895 = vcmp.eq.s32.totalorder %v2831, 1
  %vm2896 = vcmp.eq.s32.totalorder %v2832, 1
  %vm2897 = vcmp.eq.s32.totalorder %v2833, 1
  %vm2898 = vcmp.eq.s32.totalorder %v2834, 1
  %vm2899 = vcmp.eq.s32.totalorder %v2835, 1
  %vm2900 = vcmp.eq.s32.totalorder %v2836, 1
  %vm2901 = vcmp.eq.s32.totalorder %v2837, 1
  %vm2902 = vcmp.eq.s32.totalorder %v2838, 1
  %vm2903 = vcmp.eq.s32.totalorder %v2839, 1
  %vm2904 = vcmp.eq.s32.totalorder %v2840, 1
  %vm2905 = vcmp.eq.s32.totalorder %v2841, 1
  %vm2906 = vcmp.eq.s32.totalorder %v2842, 1
  %vm2907 = vcmp.eq.s32.totalorder %v2843, 1
  %vm2908 = vcmp.eq.s32.totalorder %v2844, 1
  %vm2909 = vcmp.eq.s32.totalorder %v2845, 1
  %vm2910 = vcmp.eq.s32.totalorder %v2846, 1
  %vm2911 = vcmp.eq.s32.totalorder %v2847, 1
  %vm2912 = vcmp.eq.s32.totalorder %v2848, 1
  %vm2913 = vcmp.eq.s32.totalorder %v2849, 1
  %vm2914 = vcmp.eq.s32.totalorder %v2850, 1
  %vm2915 = vcmp.eq.s32.totalorder %v2851, 1
  %vm2916 = vcmp.eq.s32.totalorder %v2852, 1
  %vm2917 = vcmp.eq.s32.totalorder %v2853, 1
  %vm2918 = vcmp.eq.s32.totalorder %v2854, 1
  %vm2919 = vcmp.eq.s32.totalorder %v2855, 1
  %vm2920 = vcmp.eq.s32.totalorder %v2856, 1
  %vm2921 = vcmp.eq.s32.totalorder %v2857, 1
  %vm2922 = vcmp.eq.s32.totalorder %v2858, 1
  %vm2923 = vcmp.eq.s32.totalorder %v2859, 1
  %vm2924 = vcmp.eq.s32.totalorder %v2860, 1
  %vm2925 = vcmp.eq.s32.totalorder %v2861, 1
  %vm2926 = vcmp.eq.s32.totalorder %v2862, 1
  %vm2927 = vcmp.eq.s32.totalorder %v2863, 1
  %vm2928 = vcmp.eq.s32.totalorder %v2864, 1
  %vm2929 = vcmp.eq.s32.totalorder %v2865, 1
  %vm2930 = vcmp.eq.s32.totalorder %v2866, 1
  %vm2931 = vcmp.eq.s32.totalorder %v2867, 1
  %vm2932 = vcmp.eq.s32.totalorder %v2868, 1
  %vm2933 = vcmp.eq.s32.totalorder %v2869, 1
  %vm2934 = vcmp.eq.s32.totalorder %v2870, 1
  %vm2935 = vcmp.eq.s32.totalorder %v2871, 1
  %vm2936 = vcmp.eq.s32.totalorder %v2872, 1
  %vm2937 = vcmp.eq.s32.totalorder %v2873, 1
  %vm2938 = vcmp.eq.s32.totalorder %v2874, 1
  %vm2939 = vcmp.eq.s32.totalorder %v2875, 1
  %vm2940 = vcmp.eq.s32.totalorder %v2876, 1
  %vm2941 = vcmp.eq.s32.totalorder %v2877, 1
  %vm2942 = vcmp.eq.s32.totalorder %v2878, 1
  %vm2943 = vcmp.eq.s32.totalorder %v2879, 1
  %vm2944 = vcmp.eq.s32.totalorder %v2880, 1
  %vm2945 = vcmp.eq.s32.totalorder %v2881, 1
  %vm2946 = vcmp.eq.s32.totalorder %v2882, 1
  %vm2947 = vcmp.eq.s32.totalorder %v2883, 1
  %vm2948 = vcmp.eq.s32.totalorder %v2884, 1
  %vm2949 = vcmp.eq.s32.totalorder %v2885, 1
  %vm2950 = vcmp.eq.s32.totalorder %v2886, 1
  %vm2951 = vcmp.eq.s32.totalorder %v2887, 1
  %vm2952 = vcmp.eq.s32.totalorder %v2888, 1
  %vm2953 = vcmp.eq.s32.totalorder %v2889, 1
  %vm2954 = vcmp.eq.s32.totalorder %v2890, 1
  %vm2955 = vcmp.eq.s32.totalorder %v2891, 1
  %vm2956 = vcmp.eq.s32.totalorder %v2892, 1
  %v2957 = vsel %vm2893, %v2572, 0.0
  %v2958 = vsel %vm2894, %v2571, 0.0
  %v2959 = vsel %vm2895, %v2570, 0.0
  %v2960 = vsel %vm2896, %v2569, 0.0
  %v2961 = vsel %vm2897, %v2568, 0.0
  %v2962 = vsel %vm2898, %v2567, 0.0
  %v2963 = vsel %vm2899, %v2566, 0.0
  %v2964 = vsel %vm2900, %v2565, 0.0
  %v2965 = vsel %vm2901, %v2564, 0.0
  %v2966 = vsel %vm2902, %v2563, 0.0
  %v2967 = vsel %vm2903, %v2562, 0.0
  %v2968 = vsel %vm2904, %v2561, 0.0
  %v2969 = vsel %vm2905, %v2560, 0.0
  %v2970 = vsel %vm2906, %v2559, 0.0
  %v2971 = vsel %vm2907, %v2558, 0.0
  %v2972 = vsel %vm2908, %v2557, 0.0
  %v2973 = vsel %vm2909, %v2556, 0.0
  %v2974 = vsel %vm2910, %v2555, 0.0
  %v2975 = vsel %vm2911, %v2554, 0.0
  %v2976 = vsel %vm2912, %v2553, 0.0
  %v2977 = vsel %vm2913, %v2552, 0.0
  %v2978 = vsel %vm2914, %v2551, 0.0
  %v2979 = vsel %vm2915, %v2550, 0.0
  %v2980 = vsel %vm2916, %v2549, 0.0
  %v2981 = vsel %vm2917, %v2548, 0.0
  %v2982 = vsel %vm2918, %v2547, 0.0
  %v2983 = vsel %vm2919, %v2546, 0.0
  %v2984 = vsel %vm2920, %v2545, 0.0
  %v2985 = vsel %vm2921, %v2544, 0.0
  %v2986 = vsel %vm2922, %v2543, 0.0
  %v2987 = vsel %vm2923, %v2542, 0.0
  %v2988 = vsel %vm2924, %v2541, 0.0
  %v2989 = vsel %vm2925, %v2540, 0.0
  %v2990 = vsel %vm2926, %v2539, 0.0
  %v2991 = vsel %vm2927, %v2538, 0.0
  %v2992 = vsel %vm2928, %v2537, 0.0
  %v2993 = vsel %vm2929, %v2536, 0.0
  %v2994 = vsel %vm2930, %v2535, 0.0
  %v2995 = vsel %vm2931, %v2534, 0.0
  %v2996 = vsel %vm2932, %v2533, 0.0
  %v2997 = vsel %vm2933, %v2532, 0.0
  %v2998 = vsel %vm2934, %v2531, 0.0
  %v2999 = vsel %vm2935, %v2530, 0.0
  %v3000 = vsel %vm2936, %v2529, 0.0
  %v3001 = vsel %vm2937, %v2528, 0.0
  %v3002 = vsel %vm2938, %v2527, 0.0
  %v3003 = vsel %vm2939, %v2526, 0.0
  %v3004 = vsel %vm2940, %v2525, 0.0
  %v3005 = vsel %vm2941, %v2524, 0.0
  %v3006 = vsel %vm2942, %v2523, 0.0
  %v3007 = vsel %vm2943, %v2522, 0.0
  %v3008 = vsel %vm2944, %v2521, 0.0
  %v3009 = vsel %vm2945, %v2520, 0.0
  %v3010 = vsel %vm2946, %v2519, 0.0
  %v3011 = vsel %vm2947, %v2518, 0.0
  %v3012 = vsel %vm2948, %v2517, 0.0
  %v3013 = vsel %vm2949, %v2516, 0.0
  %v3014 = vsel %vm2950, %v2515, 0.0
  %v3015 = vsel %vm2951, %v2514, 0.0
  %v3016 = vsel %vm2952, %v2513, 0.0
  %v3017 = vsel %vm2953, %v2512, 0.0
  %v3018 = vsel %vm2954, %v2511, 0.0
  %v3019 = vsel %vm2955, %v2510, 0.0
  %v3020 = vsel %vm2956, %v2509, 0.0
  %s3021 = scalar_lea.vmem %s2, 256
  %v3022 = vld [vmem:[%s3021] sm:$0xff]
  %v3023 = vld [vmem:[%s3021 + $0x8] sm:$0xff]
  %v3024 = vld [vmem:[%s3021 + $0x10] sm:$0xff]
  %v3025 = vld [vmem:[%s3021 + $0x18] sm:$0xff]
  %v3026 = vld [vmem:[%s3021 + $0x20] sm:$0xff]
  %v3027 = vld [vmem:[%s3021 + $0x28] sm:$0xff]
  %v3028 = vld [vmem:[%s3021 + $0x30] sm:$0xff]
  %v3029 = vld [vmem:[%s3021 + $0x38] sm:$0xff]
  %v3030 = vld [vmem:[%s3021 + $0x40] sm:$0xff]
  %v3031 = vld [vmem:[%s3021 + $0x48] sm:$0xff]
  %v3032 = vld [vmem:[%s3021 + $0x50] sm:$0xff]
  %v3033 = vld [vmem:[%s3021 + $0x58] sm:$0xff]
  %v3034 = vld [vmem:[%s3021 + $0x60] sm:$0xff]
  %v3035 = vld [vmem:[%s3021 + $0x68] sm:$0xff]
  %v3036 = vld [vmem:[%s3021 + $0x70] sm:$0xff]
  %v3037 = vld [vmem:[%s3021 + $0x78] sm:$0xff]
  %v3038 = vld [vmem:[%s3021 + $0x80] sm:$0xff]
  %v3039 = vld [vmem:[%s3021 + $0x88] sm:$0xff]
  %v3040 = vld [vmem:[%s3021 + $0x90] sm:$0xff]
  %v3041 = vld [vmem:[%s3021 + $0x98] sm:$0xff]
  %v3042 = vld [vmem:[%s3021 + $0xa0] sm:$0xff]
  %v3043 = vld [vmem:[%s3021 + $0xa8] sm:$0xff]
  %v3044 = vld [vmem:[%s3021 + $0xb0] sm:$0xff]
  %v3045 = vld [vmem:[%s3021 + $0xb8] sm:$0xff]
  %v3046 = vld [vmem:[%s3021 + $0xc0] sm:$0xff]
  %v3047 = vld [vmem:[%s3021 + $0xc8] sm:$0xff]
  %v3048 = vld [vmem:[%s3021 + $0xd0] sm:$0xff]
  %v3049 = vld [vmem:[%s3021 + $0xd8] sm:$0xff]
  %v3050 = vld [vmem:[%s3021 + $0xe0] sm:$0xff]
  %v3051 = vld [vmem:[%s3021 + $0xe8] sm:$0xff]
  %v3052 = vld [vmem:[%s3021 + $0xf0] sm:$0xff]
  %v3053 = vld [vmem:[%s3021 + $0xf8] sm:$0xff]
  %3054 = vmatprep.subr.mxu0 %v3023
  %3055 = vmatpush1.msra.mxu0 %v3022
  %3056 = vmatprep.subr.mxu0 %v3025
  %3057 = vmatpush1.msra.mxu0 %v3024
  %3058 = vmatprep.subr.mxu0 %v3027
  %3059 = vmatpush1.msra.mxu0 %v3026
  %3060 = vmatprep.subr.mxu0 %v3029
  %3061 = vmatpush1.msra.mxu0 %v3028
  %3062 = vmatprep.subr.mxu0 %v3031
  %3063 = vmatpush1.msra.mxu0 %v3030
  %3064 = vmatprep.subr.mxu0 %v3033
  %3065 = vmatpush1.msra.mxu0 %v3032
  %3066 = vmatprep.subr.mxu0 %v3035
  %3067 = vmatpush1.msra.mxu0 %v3034
  %3068 = vmatprep.subr.mxu0 %v3037
  %3069 = vmatpush1.msra.mxu0 %v3036
  %3070 = vmatprep.subr.mxu0 %v3039
  %3071 = vmatpush1.msra.mxu0 %v3038
  %3072 = vmatprep.subr.mxu0 %v3041
  %3073 = vmatpush1.msra.mxu0 %v3040
  %3074 = vmatprep.subr.mxu0 %v3043
  %3075 = vmatpush1.msra.mxu0 %v3042
  %3076 = vmatprep.subr.mxu0 %v3045
  %3077 = vmatpush1.msra.mxu0 %v3044
  %3078 = vmatprep.subr.mxu0 %v3047
  %3079 = vmatpush1.msra.mxu0 %v3046
  %3080 = vmatprep.subr.mxu0 %v3049
  %3081 = vmatpush1.msra.mxu0 %v3048
  %3082 = vmatprep.subr.mxu0 %v3051
  %3083 = vmatpush1.msra.mxu0 %v3050
  %3084 = vmatprep.subr.mxu0 %v3053
  %3085 = vmatpush1.msra.mxu0 %v3052
  %3086 = vmatprep.subr.mxu0 0.0
  %3087 = vmatpush1.msra.mxu0 0.0
  %3088 = vmatprep.subr.mxu0 0.0
  %3089 = vmatpush1.msra.mxu0 0.0
  %3090 = vmatprep.subr.mxu0 0.0
  %3091 = vmatpush1.msra.mxu0 0.0
  %3092 = vmatprep.subr.mxu0 0.0
  %3093 = vmatpush1.msra.mxu0 0.0
  %3094 = vmatprep.subr.mxu0 0.0
  %3095 = vmatpush1.msra.mxu0 0.0
  %3096 = vmatprep.subr.mxu0 0.0
  %3097 = vmatpush1.msra.mxu0 0.0
  %3098 = vmatprep.subr.mxu0 0.0
  %3099 = vmatpush1.msra.mxu0 0.0
  %3100 = vmatprep.subr.mxu0 0.0
  %3101 = vmatpush1.msra.mxu0 0.0
  %3102 = vmatprep.subr.mxu0 0.0
  %3103 = vmatpush1.msra.mxu0 0.0
  %3104 = vmatprep.subr.mxu0 0.0
  %3105 = vmatpush1.msra.mxu0 0.0
  %3106 = vmatprep.subr.mxu0 0.0
  %3107 = vmatpush1.msra.mxu0 0.0
  %3108 = vmatprep.subr.mxu0 0.0
  %3109 = vmatpush1.msra.mxu0 0.0
  %3110 = vmatprep.subr.mxu0 0.0
  %3111 = vmatpush1.msra.mxu0 0.0
  %3112 = vmatprep.subr.mxu0 0.0
  %3113 = vmatpush1.msra.mxu0 0.0
  %3114 = vmatprep.subr.mxu0 0.0
  %3115 = vmatpush1.msra.mxu0 0.0
  %3116 = vmatprep.subr.mxu0 0.0
  %3117 = vmatpush1.msra.mxu0 0.0
  %3118 = vmatprep.mubr.f32.mxu0 0.0
  %3119 = vmatmul.mubr.f32.gmra.mrb[0].mxu0 %v2957
  %v3120 = vpop.f32.mrb[0].mxu0
  %v3121 = vadd.f32 0.0, %v3120
  %v3122 = vpop.f32.mrb[0].mxu0
  %v3123 = vadd.f32 0.0, %v3122
  %3124 = vmatprep.mubr.f32.mxu0 0.0
  %3125 = vmatmul.mubr.f32.gmra.mrb[0].mxu0 %v2958
  %v3126 = vpop.f32.mrb[0].mxu0
  %v3127 = vadd.f32 0.0, %v3126
  %v3128 = vpop.f32.mrb[0].mxu0
  %v3129 = vadd.f32 0.0, %v3128
  %3130 = vmatprep.mubr.f32.mxu0 0.0
  %3131 = vmatmul.mubr.f32.gmra.mrb[0].mxu0 %v2959
  %v3132 = vpop.f32.mrb[0].mxu0
  %v3133 = vadd.f32 0.0, %v3132
  %v3134 = vpop.f32.mrb[0].mxu0
  %v3135 = vadd.f32 0.0, %v3134
  %3136 = vmatprep.mubr.f32.mxu0 0.0
  %3137 = vmatmul.mubr.f32.gmra.mrb[0].mxu0 %v2960
  %v3138 = vpop.f32.mrb[0].mxu0
  %v3139 = vadd.f32 0.0, %v3138
  %v3140 = vpop.f32.mrb[0].mxu0
  %v3141 = vadd.f32 0.0, %v3140
  %3142 = vmatprep.mubr.f32.mxu0 0.0
  %3143 = vmatmul.mubr.f32.gmra.mrb[0].mxu0 %v2961
  %v3144 = vpop.f32.mrb[0].mxu0
  %v3145 = vadd.f32 0.0, %v3144
  %v3146 = vpop.f32.mrb[0].mxu0
  %v3147 = vadd.f32 0.0, %v3146
  %3148 = vmatprep.mubr.f32.mxu0 0.0
  %3149 = vmatmul.mubr.f32.gmra.mrb[0].mxu0 %v2962
  %v3150 = vpop.f32.mrb[0].mxu0
  %v3151 = vadd.f32 0.0, %v3150
  %v3152 = vpop.f32.mrb[0].mxu0
  %v3153 = vadd.f32 0.0, %v3152
  %3154 = vmatprep.mubr.f32.mxu0 0.0
  %3155 = vmatmul.mubr.f32.gmra.mrb[0].mxu0 %v2963
  %v3156 = vpop.f32.mrb[0].mxu0
  %v3157 = vadd.f32 0.0, %v3156
  %v3158 = vpop.f32.mrb[0].mxu0
  %v3159 = vadd.f32 0.0, %v3158
  %3160 = vmatprep.mubr.f32.mxu0 0.0
  %3161 = vmatmul.mubr.f32.gmra.mrb[0].mxu0 %v2964
  %v3162 = vpop.f32.mrb[0].mxu0
  %v3163 = vadd.f32 0.0, %v3162
  %v3164 = vpop.f32.mrb[0].mxu0
  %v3165 = vadd.f32 0.0, %v3164
  %3166 = vmatprep.mubr.f32.mxu0 0.0
  %3167 = vmatmul.mubr.f32.gmra.mrb[0].mxu0 %v2965
  %v3168 = vpop.f32.mrb[0].mxu0
  %v3169 = vadd.f32 0.0, %v3168
  %v3170 = vpop.f32.mrb[0].mxu0
  %v3171 = vadd.f32 0.0, %v3170
  %3172 = vmatprep.mubr.f32.mxu0 0.0
  %3173 = vmatmul.mubr.f32.gmra.mrb[0].mxu0 %v2966
  %v3174 = vpop.f32.mrb[0].mxu0
  %v3175 = vadd.f32 0.0, %v3174
  %v3176 = vpop.f32.mrb[0].mxu0
  %v3177 = vadd.f32 0.0, %v3176
  %3178 = vmatprep.mubr.f32.mxu0 0.0
  %3179 = vmatmul.mubr.f32.gmra.mrb[0].mxu0 %v2967
  %v3180 = vpop.f32.mrb[0].mxu0
  %v3181 = vadd.f32 0.0, %v3180
  %v3182 = vpop.f32.mrb[0].mxu0
  %v3183 = vadd.f32 0.0, %v3182
  %3184 = vmatprep.mubr.f32.mxu0 0.0
  %3185 = vmatmul.mubr.f32.gmra.mrb[0].mxu0 %v2968
  %v3186 = vpop.f32.mrb[0].mxu0
  %v3187 = vadd.f32 0.0, %v3186
  %v3188 = vpop.f32.mrb[0].mxu0
  %v3189 = vadd.f32 0.0, %v3188
  %3190 = vmatprep.mubr.f32.mxu0 0.0
  %3191 = vmatmul.mubr.f32.gmra.mrb[0].mxu0 %v2969
  %v3192 = vpop.f32.mrb[0].mxu0
  %v3193 = vadd.f32 0.0, %v3192
  %v3194 = vpop.f32.mrb[0].mxu0
  %v3195 = vadd.f32 0.0, %v3194
  %3196 = vmatprep.mubr.f32.mxu0 0.0
  %3197 = vmatmul.mubr.f32.gmra.mrb[0].mxu0 %v2970
  %v3198 = vpop.f32.mrb[0].mxu0
  %v3199 = vadd.f32 0.0, %v3198
  %v3200 = vpop.f32.mrb[0].mxu0
  %v3201 = vadd.f32 0.0, %v3200
  %3202 = vmatprep.mubr.f32.mxu0 0.0
  %3203 = vmatmul.mubr.f32.gmra.mrb[0].mxu0 %v2971
  %v3204 = vpop.f32.mrb[0].mxu0
  %v3205 = vadd.f32 0.0, %v3204
  %v3206 = vpop.f32.mrb[0].mxu0
  %v3207 = vadd.f32 0.0, %v3206
  %3208 = vmatprep.mubr.f32.mxu0 0.0
  %3209 = vmatmul.mubr.f32.gmra.mrb[0].mxu0 %v2972
  %v3210 = vpop.f32.mrb[0].mxu0
  %v3211 = vadd.f32 0.0, %v3210
  %v3212 = vpop.f32.mrb[0].mxu0
  %v3213 = vadd.f32 0.0, %v3212
  %3214 = vmatprep.mubr.f32.mxu0 0.0
  %3215 = vmatmul.mubr.f32.gmra.mrb[0].mxu0 %v2973
  %v3216 = vpop.f32.mrb[0].mxu0
  %v3217 = vadd.f32 0.0, %v3216
  %v3218 = vpop.f32.mrb[0].mxu0
  %v3219 = vadd.f32 0.0, %v3218
  %3220 = vmatprep.mubr.f32.mxu0 0.0
  %3221 = vmatmul.mubr.f32.gmra.mrb[0].mxu0 %v2974
  %v3222 = vpop.f32.mrb[0].mxu0
  %v3223 = vadd.f32 0.0, %v3222
  %v3224 = vpop.f32.mrb[0].mxu0
  %v3225 = vadd.f32 0.0, %v3224
  %3226 = vmatprep.mubr.f32.mxu0 0.0
  %3227 = vmatmul.mubr.f32.gmra.mrb[0].mxu0 %v2975
  %v3228 = vpop.f32.mrb[0].mxu0
  %v3229 = vadd.f32 0.0, %v3228
  %v3230 = vpop.f32.mrb[0].mxu0
  %v3231 = vadd.f32 0.0, %v3230
  %3232 = vmatprep.mubr.f32.mxu0 0.0
  %3233 = vmatmul.mubr.f32.gmra.mrb[0].mxu0 %v2976
  %v3234 = vpop.f32.mrb[0].mxu0
  %v3235 = vadd.f32 0.0, %v3234
  %v3236 = vpop.f32.mrb[0].mxu0
  %v3237 = vadd.f32 0.0, %v3236
  %3238 = vmatprep.mubr.f32.mxu0 0.0
  %3239 = vmatmul.mubr.f32.gmra.mrb[0].mxu0 %v2977
  %v3240 = vpop.f32.mrb[0].mxu0
  %v3241 = vadd.f32 0.0, %v3240
  %v3242 = vpop.f32.mrb[0].mxu0
  %v3243 = vadd.f32 0.0, %v3242
  %3244 = vmatprep.mubr.f32.mxu0 0.0
  %3245 = vmatmul.mubr.f32.gmra.mrb[0].mxu0 %v2978
  %v3246 = vpop.f32.mrb[0].mxu0
  %v3247 = vadd.f32 0.0, %v3246
  %v3248 = vpop.f32.mrb[0].mxu0
  %v3249 = vadd.f32 0.0, %v3248
  %3250 = vmatprep.mubr.f32.mxu0 0.0
  %3251 = vmatmul.mubr.f32.gmra.mrb[0].mxu0 %v2979
  %v3252 = vpop.f32.mrb[0].mxu0
  %v3253 = vadd.f32 0.0, %v3252
  %v3254 = vpop.f32.mrb[0].mxu0
  %v3255 = vadd.f32 0.0, %v3254
  %3256 = vmatprep.mubr.f32.mxu0 0.0
  %3257 = vmatmul.mubr.f32.gmra.mrb[0].mxu0 %v2980
  %v3258 = vpop.f32.mrb[0].mxu0
  %v3259 = vadd.f32 0.0, %v3258
  %v3260 = vpop.f32.mrb[0].mxu0
  %v3261 = vadd.f32 0.0, %v3260
  %3262 = vmatprep.mubr.f32.mxu0 0.0
  %3263 = vmatmul.mubr.f32.gmra.mrb[0].mxu0 %v2981
  %v3264 = vpop.f32.mrb[0].mxu0
  %v3265 = vadd.f32 0.0, %v3264
  %v3266 = vpop.f32.mrb[0].mxu0
  %v3267 = vadd.f32 0.0, %v3266
  %3268 = vmatprep.mubr.f32.mxu0 0.0
  %3269 = vmatmul.mubr.f32.gmra.mrb[0].mxu0 %v2982
  %v3270 = vpop.f32.mrb[0].mxu0
  %v3271 = vadd.f32 0.0, %v3270
  %v3272 = vpop.f32.mrb[0].mxu0
  %v3273 = vadd.f32 0.0, %v3272
  %3274 = vmatprep.mubr.f32.mxu0 0.0
  %3275 = vmatmul.mubr.f32.gmra.mrb[0].mxu0 %v2983
  %v3276 = vpop.f32.mrb[0].mxu0
  %v3277 = vadd.f32 0.0, %v3276
  %v3278 = vpop.f32.mrb[0].mxu0
  %v3279 = vadd.f32 0.0, %v3278
  %3280 = vmatprep.mubr.f32.mxu0 0.0
  %3281 = vmatmul.mubr.f32.gmra.mrb[0].mxu0 %v2984
  %v3282 = vpop.f32.mrb[0].mxu0
  %v3283 = vadd.f32 0.0, %v3282
  %v3284 = vpop.f32.mrb[0].mxu0
  %v3285 = vadd.f32 0.0, %v3284
  %3286 = vmatprep.mubr.f32.mxu0 0.0
  %3287 = vmatmul.mubr.f32.gmra.mrb[0].mxu0 %v2985
  %v3288 = vpop.f32.mrb[0].mxu0
  %v3289 = vadd.f32 0.0, %v3288
  %v3290 = vpop.f32.mrb[0].mxu0
  %v3291 = vadd.f32 0.0, %v3290
  %3292 = vmatprep.mubr.f32.mxu0 0.0
  %3293 = vmatmul.mubr.f32.gmra.mrb[0].mxu0 %v2986
  %v3294 = vpop.f32.mrb[0].mxu0
  %v3295 = vadd.f32 0.0, %v3294
  %v3296 = vpop.f32.mrb[0].mxu0
  %v3297 = vadd.f32 0.0, %v3296
  %3298 = vmatprep.mubr.f32.mxu0 0.0
  %3299 = vmatmul.mubr.f32.gmra.mrb[0].mxu0 %v2987
  %v3300 = vpop.f32.mrb[0].mxu0
  %v3301 = vadd.f32 0.0, %v3300
  %v3302 = vpop.f32.mrb[0].mxu0
  %v3303 = vadd.f32 0.0, %v3302
  %3304 = vmatprep.mubr.f32.mxu0 0.0
  %3305 = vmatmul.mubr.f32.gmra.mrb[0].mxu0 %v2988
  %v3306 = vpop.f32.mrb[0].mxu0
  %v3307 = vadd.f32 0.0, %v3306
  %v3308 = vpop.f32.mrb[0].mxu0
  %v3309 = vadd.f32 0.0, %v3308
  %3310 = vmatprep.mubr.f32.mxu0 0.0
  %3311 = vmatmul.mubr.f32.gmra.mrb[0].mxu0 %v2989
  %v3312 = vpop.f32.mrb[0].mxu0
  %v3313 = vadd.f32 0.0, %v3312
  %v3314 = vpop.f32.mrb[0].mxu0
  %v3315 = vadd.f32 0.0, %v3314
  %3316 = vmatprep.mubr.f32.mxu0 0.0
  %3317 = vmatmul.mubr.f32.gmra.mrb[0].mxu0 %v2990
  %v3318 = vpop.f32.mrb[0].mxu0
  %v3319 = vadd.f32 0.0, %v3318
  %v3320 = vpop.f32.mrb[0].mxu0
  %v3321 = vadd.f32 0.0, %v3320
  %3322 = vmatprep.mubr.f32.mxu0 0.0
  %3323 = vmatmul.mubr.f32.gmra.mrb[0].mxu0 %v2991
  %v3324 = vpop.f32.mrb[0].mxu0
  %v3325 = vadd.f32 0.0, %v3324
  %v3326 = vpop.f32.mrb[0].mxu0
  %v3327 = vadd.f32 0.0, %v3326
  %3328 = vmatprep.mubr.f32.mxu0 0.0
  %3329 = vmatmul.mubr.f32.gmra.mrb[0].mxu0 %v2992
  %v3330 = vpop.f32.mrb[0].mxu0
  %v3331 = vadd.f32 0.0, %v3330
  %v3332 = vpop.f32.mrb[0].mxu0
  %v3333 = vadd.f32 0.0, %v3332
  %3334 = vmatprep.mubr.f32.mxu0 0.0
  %3335 = vmatmul.mubr.f32.gmra.mrb[0].mxu0 %v2993
  %v3336 = vpop.f32.mrb[0].mxu0
  %v3337 = vadd.f32 0.0, %v3336
  %v3338 = vpop.f32.mrb[0].mxu0
  %v3339 = vadd.f32 0.0, %v3338
  %3340 = vmatprep.mubr.f32.mxu0 0.0
  %3341 = vmatmul.mubr.f32.gmra.mrb[0].mxu0 %v2994
  %v3342 = vpop.f32.mrb[0].mxu0
  %v3343 = vadd.f32 0.0, %v3342
  %v3344 = vpop.f32.mrb[0].mxu0
  %v3345 = vadd.f32 0.0, %v3344
  %3346 = vmatprep.mubr.f32.mxu0 0.0
  %3347 = vmatmul.mubr.f32.gmra.mrb[0].mxu0 %v2995
  %v3348 = vpop.f32.mrb[0].mxu0
  %v3349 = vadd.f32 0.0, %v3348
  %v3350 = vpop.f32.mrb[0].mxu0
  %v3351 = vadd.f32 0.0, %v3350
  %3352 = vmatprep.mubr.f32.mxu0 0.0
  %3353 = vmatmul.mubr.f32.gmra.mrb[0].mxu0 %v2996
  %v3354 = vpop.f32.mrb[0].mxu0
  %v3355 = vadd.f32 0.0, %v3354
  %v3356 = vpop.f32.mrb[0].mxu0
  %v3357 = vadd.f32 0.0, %v3356
  %3358 = vmatprep.mubr.f32.mxu0 0.0
  %3359 = vmatmul.mubr.f32.gmra.mrb[0].mxu0 %v2997
  %v3360 = vpop.f32.mrb[0].mxu0
  %v3361 = vadd.f32 0.0, %v3360
  %v3362 = vpop.f32.mrb[0].mxu0
  %v3363 = vadd.f32 0.0, %v3362
  %3364 = vmatprep.mubr.f32.mxu0 0.0
  %3365 = vmatmul.mubr.f32.gmra.mrb[0].mxu0 %v2998
  %v3366 = vpop.f32.mrb[0].mxu0
  %v3367 = vadd.f32 0.0, %v3366
  %v3368 = vpop.f32.mrb[0].mxu0
  %v3369 = vadd.f32 0.0, %v3368
  %3370 = vmatprep.mubr.f32.mxu0 0.0
  %3371 = vmatmul.mubr.f32.gmra.mrb[0].mxu0 %v2999
  %v3372 = vpop.f32.mrb[0].mxu0
  %v3373 = vadd.f32 0.0, %v3372
  %v3374 = vpop.f32.mrb[0].mxu0
  %v3375 = vadd.f32 0.0, %v3374
  %3376 = vmatprep.mubr.f32.mxu0 0.0
  %3377 = vmatmul.mubr.f32.gmra.mrb[0].mxu0 %v3000
  %v3378 = vpop.f32.mrb[0].mxu0
  %v3379 = vadd.f32 0.0, %v3378
  %v3380 = vpop.f32.mrb[0].mxu0
  %v3381 = vadd.f32 0.0, %v3380
  %3382 = vmatprep.mubr.f32.mxu0 0.0
  %3383 = vmatmul.mubr.f32.gmra.mrb[0].mxu0 %v3001
  %v3384 = vpop.f32.mrb[0].mxu0
  %v3385 = vadd.f32 0.0, %v3384
  %v3386 = vpop.f32.mrb[0].mxu0
  %v3387 = vadd.f32 0.0, %v3386
  %3388 = vmatprep.mubr.f32.mxu0 0.0
  %3389 = vmatmul.mubr.f32.gmra.mrb[0].mxu0 %v3002
  %v3390 = vpop.f32.mrb[0].mxu0
  %v3391 = vadd.f32 0.0, %v3390
  %v3392 = vpop.f32.mrb[0].mxu0
  %v3393 = vadd.f32 0.0, %v3392
  %3394 = vmatprep.mubr.f32.mxu0 0.0
  %3395 = vmatmul.mubr.f32.gmra.mrb[0].mxu0 %v3003
  %v3396 = vpop.f32.mrb[0].mxu0
  %v3397 = vadd.f32 0.0, %v3396
  %v3398 = vpop.f32.mrb[0].mxu0
  %v3399 = vadd.f32 0.0, %v3398
  %3400 = vmatprep.mubr.f32.mxu0 0.0
  %3401 = vmatmul.mubr.f32.gmra.mrb[0].mxu0 %v3004
  %v3402 = vpop.f32.mrb[0].mxu0
  %v3403 = vadd.f32 0.0, %v3402
  %v3404 = vpop.f32.mrb[0].mxu0
  %v3405 = vadd.f32 0.0, %v3404
  %3406 = vmatprep.mubr.f32.mxu0 0.0
  %3407 = vmatmul.mubr.f32.gmra.mrb[0].mxu0 %v3005
  %v3408 = vpop.f32.mrb[0].mxu0
  %v3409 = vadd.f32 0.0, %v3408
  %v3410 = vpop.f32.mrb[0].mxu0
  %v3411 = vadd.f32 0.0, %v3410
  %3412 = vmatprep.mubr.f32.mxu0 0.0
  %3413 = vmatmul.mubr.f32.gmra.mrb[0].mxu0 %v3006
  %v3414 = vpop.f32.mrb[0].mxu0
  %v3415 = vadd.f32 0.0, %v3414
  %v3416 = vpop.f32.mrb[0].mxu0
  %v3417 = vadd.f32 0.0, %v3416
  %3418 = vmatprep.mubr.f32.mxu0 0.0
  %3419 = vmatmul.mubr.f32.gmra.mrb[0].mxu0 %v3007
  %v3420 = vpop.f32.mrb[0].mxu0
  %v3421 = vadd.f32 0.0, %v3420
  %v3422 = vpop.f32.mrb[0].mxu0
  %v3423 = vadd.f32 0.0, %v3422
  %3424 = vmatprep.mubr.f32.mxu0 0.0
  %3425 = vmatmul.mubr.f32.gmra.mrb[0].mxu0 %v3008
  %v3426 = vpop.f32.mrb[0].mxu0
  %v3427 = vadd.f32 0.0, %v3426
  %v3428 = vpop.f32.mrb[0].mxu0
  %v3429 = vadd.f32 0.0, %v3428
  %3430 = vmatprep.mubr.f32.mxu0 0.0
  %3431 = vmatmul.mubr.f32.gmra.mrb[0].mxu0 %v3009
  %v3432 = vpop.f32.mrb[0].mxu0
  %v3433 = vadd.f32 0.0, %v3432
  %v3434 = vpop.f32.mrb[0].mxu0
  %v3435 = vadd.f32 0.0, %v3434
  %3436 = vmatprep.mubr.f32.mxu0 0.0
  %3437 = vmatmul.mubr.f32.gmra.mrb[0].mxu0 %v3010
  %v3438 = vpop.f32.mrb[0].mxu0
  %v3439 = vadd.f32 0.0, %v3438
  %v3440 = vpop.f32.mrb[0].mxu0
  %v3441 = vadd.f32 0.0, %v3440
  %3442 = vmatprep.mubr.f32.mxu0 0.0
  %3443 = vmatmul.mubr.f32.gmra.mrb[0].mxu0 %v3011
  %v3444 = vpop.f32.mrb[0].mxu0
  %v3445 = vadd.f32 0.0, %v3444
  %v3446 = vpop.f32.mrb[0].mxu0
  %v3447 = vadd.f32 0.0, %v3446
  %3448 = vmatprep.mubr.f32.mxu0 0.0
  %3449 = vmatmul.mubr.f32.gmra.mrb[0].mxu0 %v3012
  %v3450 = vpop.f32.mrb[0].mxu0
  %v3451 = vadd.f32 0.0, %v3450
  %v3452 = vpop.f32.mrb[0].mxu0
  %v3453 = vadd.f32 0.0, %v3452
  %3454 = vmatprep.mubr.f32.mxu0 0.0
  %3455 = vmatmul.mubr.f32.gmra.mrb[0].mxu0 %v3013
  %v3456 = vpop.f32.mrb[0].mxu0
  %v3457 = vadd.f32 0.0, %v3456
  %v3458 = vpop.f32.mrb[0].mxu0
  %v3459 = vadd.f32 0.0, %v3458
  %3460 = vmatprep.mubr.f32.mxu0 0.0
  %3461 = vmatmul.mubr.f32.gmra.mrb[0].mxu0 %v3014
  %v3462 = vpop.f32.mrb[0].mxu0
  %v3463 = vadd.f32 0.0, %v3462
  %v3464 = vpop.f32.mrb[0].mxu0
  %v3465 = vadd.f32 0.0, %v3464
  %3466 = vmatprep.mubr.f32.mxu0 0.0
  %3467 = vmatmul.mubr.f32.gmra.mrb[0].mxu0 %v3015
  %v3468 = vpop.f32.mrb[0].mxu0
  %v3469 = vadd.f32 0.0, %v3468
  %v3470 = vpop.f32.mrb[0].mxu0
  %v3471 = vadd.f32 0.0, %v3470
  %3472 = vmatprep.mubr.f32.mxu0 0.0
  %3473 = vmatmul.mubr.f32.gmra.mrb[0].mxu0 %v3016
  %v3474 = vpop.f32.mrb[0].mxu0
  %v3475 = vadd.f32 0.0, %v3474
  %v3476 = vpop.f32.mrb[0].mxu0
  %v3477 = vadd.f32 0.0, %v3476
  %3478 = vmatprep.mubr.f32.mxu0 0.0
  %3479 = vmatmul.mubr.f32.gmra.mrb[0].mxu0 %v3017
  %v3480 = vpop.f32.mrb[0].mxu0
  %v3481 = vadd.f32 0.0, %v3480
  %v3482 = vpop.f32.mrb[0].mxu0
  %v3483 = vadd.f32 0.0, %v3482
  %3484 = vmatprep.mubr.f32.mxu0 0.0
  %3485 = vmatmul.mubr.f32.gmra.mrb[0].mxu0 %v3018
  %v3486 = vpop.f32.mrb[0].mxu0
  %v3487 = vadd.f32 0.0, %v3486
  %v3488 = vpop.f32.mrb[0].mxu0
  %v3489 = vadd.f32 0.0, %v3488
  %3490 = vmatprep.mubr.f32.mxu0 0.0
  %3491 = vmatmul.mubr.f32.gmra.mrb[0].mxu0 %v3019
  %v3492 = vpop.f32.mrb[0].mxu0
  %v3493 = vadd.f32 0.0, %v3492
  %v3494 = vpop.f32.mrb[0].mxu0
  %v3495 = vadd.f32 0.0, %v3494
  %3496 = vmatprep.mubr.f32.mxu0 0.0
  %3497 = vmatmul.mubr.f32.gmra.mrb[0].mxu0 %v3020
  %v3498 = vpop.f32.mrb[0].mxu0
  %v3499 = vadd.f32 0.0, %v3498
  %v3500 = vpop.f32.mrb[0].mxu0
  %v3501 = vadd.f32 0.0, %v3500
  %3502 = vdwg.mxu0
  %3503 = vmatprep.subr.mxu0 %v2413
  %3504 = vmatpush1.msra.mxu0 %v2412
  %3505 = vmatprep.subr.mxu0 %v2415
  %3506 = vmatpush1.msra.mxu0 %v2414
  %3507 = vmatprep.subr.mxu0 %v2417
  %3508 = vmatpush1.msra.mxu0 %v2416
  %3509 = vmatprep.subr.mxu0 %v2419
  %3510 = vmatpush1.msra.mxu0 %v2418
  %3511 = vmatprep.subr.mxu0 %v2421
  %3512 = vmatpush1.msra.mxu0 %v2420
  %3513 = vmatprep.subr.mxu0 %v2423
  %3514 = vmatpush1.msra.mxu0 %v2422
  %3515 = vmatprep.subr.mxu0 %v2425
  %3516 = vmatpush1.msra.mxu0 %v2424
  %3517 = vmatprep.subr.mxu0 %v2427
  %3518 = vmatpush1.msra.mxu0 %v2426
  %3519 = vmatprep.subr.mxu0 %v2429
  %3520 = vmatpush1.msra.mxu0 %v2428
  %3521 = vmatprep.subr.mxu0 %v2431
  %3522 = vmatpush1.msra.mxu0 %v2430
  %3523 = vmatprep.subr.mxu0 %v2433
  %3524 = vmatpush1.msra.mxu0 %v2432
  %3525 = vmatprep.subr.mxu0 %v2435
  %3526 = vmatpush1.msra.mxu0 %v2434
  %3527 = vmatprep.subr.mxu0 %v2437
  %3528 = vmatpush1.msra.mxu0 %v2436
  %3529 = vmatprep.subr.mxu0 %v2439
  %3530 = vmatpush1.msra.mxu0 %v2438
  %3531 = vmatprep.subr.mxu0 %v2441
  %3532 = vmatpush1.msra.mxu0 %v2440
  %3533 = vmatprep.subr.mxu0 %v2443
  %3534 = vmatpush1.msra.mxu0 %v2442
  %3535 = vmatprep.subr.mxu0 0.0
  %3536 = vmatpush1.msra.mxu0 0.0
  %3537 = vmatprep.subr.mxu0 0.0
  %3538 = vmatpush1.msra.mxu0 0.0
  %3539 = vmatprep.subr.mxu0 0.0
  %3540 = vmatpush1.msra.mxu0 0.0
  %3541 = vmatprep.subr.mxu0 0.0
  %3542 = vmatpush1.msra.mxu0 0.0
  %3543 = vmatprep.subr.mxu0 0.0
  %3544 = vmatpush1.msra.mxu0 0.0
  %3545 = vmatprep.subr.mxu0 0.0
  %3546 = vmatpush1.msra.mxu0 0.0
  %3547 = vmatprep.subr.mxu0 0.0
  %3548 = vmatpush1.msra.mxu0 0.0
  %3549 = vmatprep.subr.mxu0 0.0
  %3550 = vmatpush1.msra.mxu0 0.0
  %3551 = vmatprep.subr.mxu0 0.0
  %3552 = vmatpush1.msra.mxu0 0.0
  %3553 = vmatprep.subr.mxu0 0.0
  %3554 = vmatpush1.msra.mxu0 0.0
  %3555 = vmatprep.subr.mxu0 0.0
  %3556 = vmatpush1.msra.mxu0 0.0
  %3557 = vmatprep.subr.mxu0 0.0
  %3558 = vmatpush1.msra.mxu0 0.0
  %3559 = vmatprep.subr.mxu0 0.0
  %3560 = vmatpush1.msra.mxu0 0.0
  %3561 = vmatprep.subr.mxu0 0.0
  %3562 = vmatpush1.msra.mxu0 0.0
  %3563 = vmatprep.subr.mxu0 0.0
  %3564 = vmatpush1.msra.mxu0 0.0
  %3565 = vmatprep.subr.mxu0 0.0
  %3566 = vmatpush1.msra.mxu0 0.0
  %3567 = vmatprep.mubr.f32.mxu0 0.0
  %3568 = vmatmul.mubr.f32.gmra.mrb[0].mxu0 %v2348
  %v3569 = vpop.f32.mrb[0].mxu0
  %v3570 = vadd.f32 %v3121, %v3569
  %v3571 = vpop.f32.mrb[0].mxu0
  %v3572 = vadd.f32 %v3123, %v3571
  %3573 = vmatprep.mubr.f32.mxu0 0.0
  %3574 = vmatmul.mubr.f32.gmra.mrb[0].mxu0 %v2349
  %v3575 = vpop.f32.mrb[0].mxu0
  %v3576 = vadd.f32 %v3127, %v3575
  %v3577 = vpop.f32.mrb[0].mxu0
  %v3578 = vadd.f32 %v3129, %v3577
  %3579 = vmatprep.mubr.f32.mxu0 0.0
  %3580 = vmatmul.mubr.f32.gmra.mrb[0].mxu0 %v2350
  %v3581 = vpop.f32.mrb[0].mxu0
  %v3582 = vadd.f32 %v3133, %v3581
  %v3583 = vpop.f32.mrb[0].mxu0
  %v3584 = vadd.f32 %v3135, %v3583
  %3585 = vmatprep.mubr.f32.mxu0 0.0
  %3586 = vmatmul.mubr.f32.gmra.mrb[0].mxu0 %v2351
  %v3587 = vpop.f32.mrb[0].mxu0
  %v3588 = vadd.f32 %v3139, %v3587
  %v3589 = vpop.f32.mrb[0].mxu0
  %v3590 = vadd.f32 %v3141, %v3589
  %3591 = vmatprep.mubr.f32.mxu0 0.0
  %3592 = vmatmul.mubr.f32.gmra.mrb[0].mxu0 %v2352
  %v3593 = vpop.f32.mrb[0].mxu0
  %v3594 = vadd.f32 %v3145, %v3593
  %v3595 = vpop.f32.mrb[0].mxu0
  %v3596 = vadd.f32 %v3147, %v3595
  %3597 = vmatprep.mubr.f32.mxu0 0.0
  %3598 = vmatmul.mubr.f32.gmra.mrb[0].mxu0 %v2353
  %v3599 = vpop.f32.mrb[0].mxu0
  %v3600 = vadd.f32 %v3151, %v3599
  %v3601 = vpop.f32.mrb[0].mxu0
  %v3602 = vadd.f32 %v3153, %v3601
  %3603 = vmatprep.mubr.f32.mxu0 0.0
  %3604 = vmatmul.mubr.f32.gmra.mrb[0].mxu0 %v2354
  %v3605 = vpop.f32.mrb[0].mxu0
  %v3606 = vadd.f32 %v3157, %v3605
  %v3607 = vpop.f32.mrb[0].mxu0
  %v3608 = vadd.f32 %v3159, %v3607
  %3609 = vmatprep.mubr.f32.mxu0 0.0
  %3610 = vmatmul.mubr.f32.gmra.mrb[0].mxu0 %v2355
  %v3611 = vpop.f32.mrb[0].mxu0
  %v3612 = vadd.f32 %v3163, %v3611
  %v3613 = vpop.f32.mrb[0].mxu0
  %v3614 = vadd.f32 %v3165, %v3613
  %3615 = vmatprep.mubr.f32.mxu0 0.0
  %3616 = vmatmul.mubr.f32.gmra.mrb[0].mxu0 %v2356
  %v3617 = vpop.f32.mrb[0].mxu0
  %v3618 = vadd.f32 %v3169, %v3617
  %v3619 = vpop.f32.mrb[0].mxu0
  %v3620 = vadd.f32 %v3171, %v3619
  %3621 = vmatprep.mubr.f32.mxu0 0.0
  %3622 = vmatmul.mubr.f32.gmra.mrb[0].mxu0 %v2357
  %v3623 = vpop.f32.mrb[0].mxu0
  %v3624 = vadd.f32 %v3175, %v3623
  %v3625 = vpop.f32.mrb[0].mxu0
  %v3626 = vadd.f32 %v3177, %v3625
  %3627 = vmatprep.mubr.f32.mxu0 0.0
  %3628 = vmatmul.mubr.f32.gmra.mrb[0].mxu0 %v2358
  %v3629 = vpop.f32.mrb[0].mxu0
  %v3630 = vadd.f32 %v3181, %v3629
  %v3631 = vpop.f32.mrb[0].mxu0
  %v3632 = vadd.f32 %v3183, %v3631
  %3633 = vmatprep.mubr.f32.mxu0 0.0
  %3634 = vmatmul.mubr.f32.gmra.mrb[0].mxu0 %v2359
  %v3635 = vpop.f32.mrb[0].mxu0
  %v3636 = vadd.f32 %v3187, %v3635
  %v3637 = vpop.f32.mrb[0].mxu0
  %v3638 = vadd.f32 %v3189, %v3637
  %3639 = vmatprep.mubr.f32.mxu0 0.0
  %3640 = vmatmul.mubr.f32.gmra.mrb[0].mxu0 %v2360
  %v3641 = vpop.f32.mrb[0].mxu0
  %v3642 = vadd.f32 %v3193, %v3641
  %v3643 = vpop.f32.mrb[0].mxu0
  %v3644 = vadd.f32 %v3195, %v3643
  %3645 = vmatprep.mubr.f32.mxu0 0.0
  %3646 = vmatmul.mubr.f32.gmra.mrb[0].mxu0 %v2361
  %v3647 = vpop.f32.mrb[0].mxu0
  %v3648 = vadd.f32 %v3199, %v3647
  %v3649 = vpop.f32.mrb[0].mxu0
  %v3650 = vadd.f32 %v3201, %v3649
  %3651 = vmatprep.mubr.f32.mxu0 0.0
  %3652 = vmatmul.mubr.f32.gmra.mrb[0].mxu0 %v2362
  %v3653 = vpop.f32.mrb[0].mxu0
  %v3654 = vadd.f32 %v3205, %v3653
  %v3655 = vpop.f32.mrb[0].mxu0
  %v3656 = vadd.f32 %v3207, %v3655
  %3657 = vmatprep.mubr.f32.mxu0 0.0
  %3658 = vmatmul.mubr.f32.gmra.mrb[0].mxu0 %v2363
  %v3659 = vpop.f32.mrb[0].mxu0
  %v3660 = vadd.f32 %v3211, %v3659
  %v3661 = vpop.f32.mrb[0].mxu0
  %v3662 = vadd.f32 %v3213, %v3661
  %3663 = vmatprep.mubr.f32.mxu0 0.0
  %3664 = vmatmul.mubr.f32.gmra.mrb[0].mxu0 %v2364
  %v3665 = vpop.f32.mrb[0].mxu0
  %v3666 = vadd.f32 %v3217, %v3665
  %v3667 = vpop.f32.mrb[0].mxu0
  %v3668 = vadd.f32 %v3219, %v3667
  %3669 = vmatprep.mubr.f32.mxu0 0.0
  %3670 = vmatmul.mubr.f32.gmra.mrb[0].mxu0 %v2365
  %v3671 = vpop.f32.mrb[0].mxu0
  %v3672 = vadd.f32 %v3223, %v3671
  %v3673 = vpop.f32.mrb[0].mxu0
  %v3674 = vadd.f32 %v3225, %v3673
  %3675 = vmatprep.mubr.f32.mxu0 0.0
  %3676 = vmatmul.mubr.f32.gmra.mrb[0].mxu0 %v2366
  %v3677 = vpop.f32.mrb[0].mxu0
  %v3678 = vadd.f32 %v3229, %v3677
  %v3679 = vpop.f32.mrb[0].mxu0
  %v3680 = vadd.f32 %v3231, %v3679
  %3681 = vmatprep.mubr.f32.mxu0 0.0
  %3682 = vmatmul.mubr.f32.gmra.mrb[0].mxu0 %v2367
  %v3683 = vpop.f32.mrb[0].mxu0
  %v3684 = vadd.f32 %v3235, %v3683
  %v3685 = vpop.f32.mrb[0].mxu0
  %v3686 = vadd.f32 %v3237, %v3685
  %3687 = vmatprep.mubr.f32.mxu0 0.0
  %3688 = vmatmul.mubr.f32.gmra.mrb[0].mxu0 %v2368
  %v3689 = vpop.f32.mrb[0].mxu0
  %v3690 = vadd.f32 %v3241, %v3689
  %v3691 = vpop.f32.mrb[0].mxu0
  %v3692 = vadd.f32 %v3243, %v3691
  %3693 = vmatprep.mubr.f32.mxu0 0.0
  %3694 = vmatmul.mubr.f32.gmra.mrb[0].mxu0 %v2369
  %v3695 = vpop.f32.mrb[0].mxu0
  %v3696 = vadd.f32 %v3247, %v3695
  %v3697 = vpop.f32.mrb[0].mxu0
  %v3698 = vadd.f32 %v3249, %v3697
  %3699 = vmatprep.mubr.f32.mxu0 0.0
  %3700 = vmatmul.mubr.f32.gmra.mrb[0].mxu0 %v2370
  %v3701 = vpop.f32.mrb[0].mxu0
  %v3702 = vadd.f32 %v3253, %v3701
  %v3703 = vpop.f32.mrb[0].mxu0
  %v3704 = vadd.f32 %v3255, %v3703
  %3705 = vmatprep.mubr.f32.mxu0 0.0
  %3706 = vmatmul.mubr.f32.gmra.mrb[0].mxu0 %v2371
  %v3707 = vpop.f32.mrb[0].mxu0
  %v3708 = vadd.f32 %v3259, %v3707
  %v3709 = vpop.f32.mrb[0].mxu0
  %v3710 = vadd.f32 %v3261, %v3709
  %3711 = vmatprep.mubr.f32.mxu0 0.0
  %3712 = vmatmul.mubr.f32.gmra.mrb[0].mxu0 %v2372
  %v3713 = vpop.f32.mrb[0].mxu0
  %v3714 = vadd.f32 %v3265, %v3713
  %v3715 = vpop.f32.mrb[0].mxu0
  %v3716 = vadd.f32 %v3267, %v3715
  %3717 = vmatprep.mubr.f32.mxu0 0.0
  %3718 = vmatmul.mubr.f32.gmra.mrb[0].mxu0 %v2373
  %v3719 = vpop.f32.mrb[0].mxu0
  %v3720 = vadd.f32 %v3271, %v3719
  %v3721 = vpop.f32.mrb[0].mxu0
  %v3722 = vadd.f32 %v3273, %v3721
  %3723 = vmatprep.mubr.f32.mxu0 0.0
  %3724 = vmatmul.mubr.f32.gmra.mrb[0].mxu0 %v2374
  %v3725 = vpop.f32.mrb[0].mxu0
  %v3726 = vadd.f32 %v3277, %v3725
  %v3727 = vpop.f32.mrb[0].mxu0
  %v3728 = vadd.f32 %v3279, %v3727
  %3729 = vmatprep.mubr.f32.mxu0 0.0
  %3730 = vmatmul.mubr.f32.gmra.mrb[0].mxu0 %v2375
  %v3731 = vpop.f32.mrb[0].mxu0
  %v3732 = vadd.f32 %v3283, %v3731
  %v3733 = vpop.f32.mrb[0].mxu0
  %v3734 = vadd.f32 %v3285, %v3733
  %3735 = vmatprep.mubr.f32.mxu0 0.0
  %3736 = vmatmul.mubr.f32.gmra.mrb[0].mxu0 %v2376
  %v3737 = vpop.f32.mrb[0].mxu0
  %v3738 = vadd.f32 %v3289, %v3737
  %v3739 = vpop.f32.mrb[0].mxu0
  %v3740 = vadd.f32 %v3291, %v3739
  %3741 = vmatprep.mubr.f32.mxu0 0.0
  %3742 = vmatmul.mubr.f32.gmra.mrb[0].mxu0 %v2377
  %v3743 = vpop.f32.mrb[0].mxu0
  %v3744 = vadd.f32 %v3295, %v3743
  %v3745 = vpop.f32.mrb[0].mxu0
  %v3746 = vadd.f32 %v3297, %v3745
  %3747 = vmatprep.mubr.f32.mxu0 0.0
  %3748 = vmatmul.mubr.f32.gmra.mrb[0].mxu0 %v2378
  %v3749 = vpop.f32.mrb[0].mxu0
  %v3750 = vadd.f32 %v3301, %v3749
  %v3751 = vpop.f32.mrb[0].mxu0
  %v3752 = vadd.f32 %v3303, %v3751
  %3753 = vmatprep.mubr.f32.mxu0 0.0
  %3754 = vmatmul.mubr.f32.gmra.mrb[0].mxu0 %v2379
  %v3755 = vpop.f32.mrb[0].mxu0
  %v3756 = vadd.f32 %v3307, %v3755
  %v3757 = vpop.f32.mrb[0].mxu0
  %v3758 = vadd.f32 %v3309, %v3757
  %3759 = vmatprep.mubr.f32.mxu0 0.0
  %3760 = vmatmul.mubr.f32.gmra.mrb[0].mxu0 %v2380
  %v3761 = vpop.f32.mrb[0].mxu0
  %v3762 = vadd.f32 %v3313, %v3761
  %v3763 = vpop.f32.mrb[0].mxu0
  %v3764 = vadd.f32 %v3315, %v3763
  %3765 = vmatprep.mubr.f32.mxu0 0.0
  %3766 = vmatmul.mubr.f32.gmra.mrb[0].mxu0 %v2381
  %v3767 = vpop.f32.mrb[0].mxu0
  %v3768 = vadd.f32 %v3319, %v3767
  %v3769 = vpop.f32.mrb[0].mxu0
  %v3770 = vadd.f32 %v3321, %v3769
  %3771 = vmatprep.mubr.f32.mxu0 0.0
  %3772 = vmatmul.mubr.f32.gmra.mrb[0].mxu0 %v2382
  %v3773 = vpop.f32.mrb[0].mxu0
  %v3774 = vadd.f32 %v3325, %v3773
  %v3775 = vpop.f32.mrb[0].mxu0
  %v3776 = vadd.f32 %v3327, %v3775
  %3777 = vmatprep.mubr.f32.mxu0 0.0
  %3778 = vmatmul.mubr.f32.gmra.mrb[0].mxu0 %v2383
  %v3779 = vpop.f32.mrb[0].mxu0
  %v3780 = vadd.f32 %v3331, %v3779
  %v3781 = vpop.f32.mrb[0].mxu0
  %v3782 = vadd.f32 %v3333, %v3781
  %3783 = vmatprep.mubr.f32.mxu0 0.0
  %3784 = vmatmul.mubr.f32.gmra.mrb[0].mxu0 %v2384
  %v3785 = vpop.f32.mrb[0].mxu0
  %v3786 = vadd.f32 %v3337, %v3785
  %v3787 = vpop.f32.mrb[0].mxu0
  %v3788 = vadd.f32 %v3339, %v3787
  %3789 = vmatprep.mubr.f32.mxu0 0.0
  %3790 = vmatmul.mubr.f32.gmra.mrb[0].mxu0 %v2385
  %v3791 = vpop.f32.mrb[0].mxu0
  %v3792 = vadd.f32 %v3343, %v3791
  %v3793 = vpop.f32.mrb[0].mxu0
  %v3794 = vadd.f32 %v3345, %v3793
  %3795 = vmatprep.mubr.f32.mxu0 0.0
  %3796 = vmatmul.mubr.f32.gmra.mrb[0].mxu0 %v2386
  %v3797 = vpop.f32.mrb[0].mxu0
  %v3798 = vadd.f32 %v3349, %v3797
  %v3799 = vpop.f32.mrb[0].mxu0
  %v3800 = vadd.f32 %v3351, %v3799
  %3801 = vmatprep.mubr.f32.mxu0 0.0
  %3802 = vmatmul.mubr.f32.gmra.mrb[0].mxu0 %v2387
  %v3803 = vpop.f32.mrb[0].mxu0
  %v3804 = vadd.f32 %v3355, %v3803
  %v3805 = vpop.f32.mrb[0].mxu0
  %v3806 = vadd.f32 %v3357, %v3805
  %3807 = vmatprep.mubr.f32.mxu0 0.0
  %3808 = vmatmul.mubr.f32.gmra.mrb[0].mxu0 %v2388
  %v3809 = vpop.f32.mrb[0].mxu0
  %v3810 = vadd.f32 %v3361, %v3809
  %v3811 = vpop.f32.mrb[0].mxu0
  %v3812 = vadd.f32 %v3363, %v3811
  %3813 = vmatprep.mubr.f32.mxu0 0.0
  %3814 = vmatmul.mubr.f32.gmra.mrb[0].mxu0 %v2389
  %v3815 = vpop.f32.mrb[0].mxu0
  %v3816 = vadd.f32 %v3367, %v3815
  %v3817 = vpop.f32.mrb[0].mxu0
  %v3818 = vadd.f32 %v3369, %v3817
  %3819 = vmatprep.mubr.f32.mxu0 0.0
  %3820 = vmatmul.mubr.f32.gmra.mrb[0].mxu0 %v2390
  %v3821 = vpop.f32.mrb[0].mxu0
  %v3822 = vadd.f32 %v3373, %v3821
  %v3823 = vpop.f32.mrb[0].mxu0
  %v3824 = vadd.f32 %v3375, %v3823
  %3825 = vmatprep.mubr.f32.mxu0 0.0
  %3826 = vmatmul.mubr.f32.gmra.mrb[0].mxu0 %v2391
  %v3827 = vpop.f32.mrb[0].mxu0
  %v3828 = vadd.f32 %v3379, %v3827
  %v3829 = vpop.f32.mrb[0].mxu0
  %v3830 = vadd.f32 %v3381, %v3829
  %3831 = vmatprep.mubr.f32.mxu0 0.0
  %3832 = vmatmul.mubr.f32.gmra.mrb[0].mxu0 %v2392
  %v3833 = vpop.f32.mrb[0].mxu0
  %v3834 = vadd.f32 %v3385, %v3833
  %v3835 = vpop.f32.mrb[0].mxu0
  %v3836 = vadd.f32 %v3387, %v3835
  %3837 = vmatprep.mubr.f32.mxu0 0.0
  %3838 = vmatmul.mubr.f32.gmra.mrb[0].mxu0 %v2393
  %v3839 = vpop.f32.mrb[0].mxu0
  %v3840 = vadd.f32 %v3391, %v3839
  %v3841 = vpop.f32.mrb[0].mxu0
  %v3842 = vadd.f32 %v3393, %v3841
  %3843 = vmatprep.mubr.f32.mxu0 0.0
  %3844 = vmatmul.mubr.f32.gmra.mrb[0].mxu0 %v2394
  %v3845 = vpop.f32.mrb[0].mxu0
  %v3846 = vadd.f32 %v3397, %v3845
  %v3847 = vpop.f32.mrb[0].mxu0
  %v3848 = vadd.f32 %v3399, %v3847
  %3849 = vmatprep.mubr.f32.mxu0 0.0
  %3850 = vmatmul.mubr.f32.gmra.mrb[0].mxu0 %v2395
  %v3851 = vpop.f32.mrb[0].mxu0
  %v3852 = vadd.f32 %v3403, %v3851
  %v3853 = vpop.f32.mrb[0].mxu0
  %v3854 = vadd.f32 %v3405, %v3853
  %3855 = vmatprep.mubr.f32.mxu0 0.0
  %3856 = vmatmul.mubr.f32.gmra.mrb[0].mxu0 %v2396
  %v3857 = vpop.f32.mrb[0].mxu0
  %v3858 = vadd.f32 %v3409, %v3857
  %v3859 = vpop.f32.mrb[0].mxu0
  %v3860 = vadd.f32 %v3411, %v3859
  %3861 = vmatprep.mubr.f32.mxu0 0.0
  %3862 = vmatmul.mubr.f32.gmra.mrb[0].mxu0 %v2397
  %v3863 = vpop.f32.mrb[0].mxu0
  %v3864 = vadd.f32 %v3415, %v3863
  %v3865 = vpop.f32.mrb[0].mxu0
  %v3866 = vadd.f32 %v3417, %v3865
  %3867 = vmatprep.mubr.f32.mxu0 0.0
  %3868 = vmatmul.mubr.f32.gmra.mrb[0].mxu0 %v2398
  %v3869 = vpop.f32.mrb[0].mxu0
  %v3870 = vadd.f32 %v3421, %v3869
  %v3871 = vpop.f32.mrb[0].mxu0
  %v3872 = vadd.f32 %v3423, %v3871
  %3873 = vmatprep.mubr.f32.mxu0 0.0
  %3874 = vmatmul.mubr.f32.gmra.mrb[0].mxu0 %v2399
  %v3875 = vpop.f32.mrb[0].mxu0
  %v3876 = vadd.f32 %v3427, %v3875
  %v3877 = vpop.f32.mrb[0].mxu0
  %v3878 = vadd.f32 %v3429, %v3877
  %3879 = vmatprep.mubr.f32.mxu0 0.0
  %3880 = vmatmul.mubr.f32.gmra.mrb[0].mxu0 %v2400
  %v3881 = vpop.f32.mrb[0].mxu0
  %v3882 = vadd.f32 %v3433, %v3881
  %v3883 = vpop.f32.mrb[0].mxu0
  %v3884 = vadd.f32 %v3435, %v3883
  %3885 = vmatprep.mubr.f32.mxu0 0.0
  %3886 = vmatmul.mubr.f32.gmra.mrb[0].mxu0 %v2401
  %v3887 = vpop.f32.mrb[0].mxu0
  %v3888 = vadd.f32 %v3439, %v3887
  %v3889 = vpop.f32.mrb[0].mxu0
  %v3890 = vadd.f32 %v3441, %v3889
  %3891 = vmatprep.mubr.f32.mxu0 0.0
  %3892 = vmatmul.mubr.f32.gmra.mrb[0].mxu0 %v2402
  %v3893 = vpop.f32.mrb[0].mxu0
  %v3894 = vadd.f32 %v3445, %v3893
  %v3895 = vpop.f32.mrb[0].mxu0
  %v3896 = vadd.f32 %v3447, %v3895
  %3897 = vmatprep.mubr.f32.mxu0 0.0
  %3898 = vmatmul.mubr.f32.gmra.mrb[0].mxu0 %v2403
  %v3899 = vpop.f32.mrb[0].mxu0
  %v3900 = vadd.f32 %v3451, %v3899
  %v3901 = vpop.f32.mrb[0].mxu0
  %v3902 = vadd.f32 %v3453, %v3901
  %3903 = vmatprep.mubr.f32.mxu0 0.0
  %3904 = vmatmul.mubr.f32.gmra.mrb[0].mxu0 %v2404
  %v3905 = vpop.f32.mrb[0].mxu0
  %v3906 = vadd.f32 %v3457, %v3905
  %v3907 = vpop.f32.mrb[0].mxu0
  %v3908 = vadd.f32 %v3459, %v3907
  %3909 = vmatprep.mubr.f32.mxu0 0.0
  %3910 = vmatmul.mubr.f32.gmra.mrb[0].mxu0 %v2405
  %v3911 = vpop.f32.mrb[0].mxu0
  %v3912 = vadd.f32 %v3463, %v3911
  %v3913 = vpop.f32.mrb[0].mxu0
  %v3914 = vadd.f32 %v3465, %v3913
  %3915 = vmatprep.mubr.f32.mxu0 0.0
  %3916 = vmatmul.mubr.f32.gmra.mrb[0].mxu0 %v2406
  %v3917 = vpop.f32.mrb[0].mxu0
  %v3918 = vadd.f32 %v3469, %v3917
  %v3919 = vpop.f32.mrb[0].mxu0
  %v3920 = vadd.f32 %v3471, %v3919
  %3921 = vmatprep.mubr.f32.mxu0 0.0
  %3922 = vmatmul.mubr.f32.gmra.mrb[0].mxu0 %v2407
  %v3923 = vpop.f32.mrb[0].mxu0
  %v3924 = vadd.f32 %v3475, %v3923
  %v3925 = vpop.f32.mrb[0].mxu0
  %v3926 = vadd.f32 %v3477, %v3925
  %3927 = vmatprep.mubr.f32.mxu0 0.0
  %3928 = vmatmul.mubr.f32.gmra.mrb[0].mxu0 %v2408
  %v3929 = vpop.f32.mrb[0].mxu0
  %v3930 = vadd.f32 %v3481, %v3929
  %v3931 = vpop.f32.mrb[0].mxu0
  %v3932 = vadd.f32 %v3483, %v3931
  %3933 = vmatprep.mubr.f32.mxu0 0.0
  %3934 = vmatmul.mubr.f32.gmra.mrb[0].mxu0 %v2409
  %v3935 = vpop.f32.mrb[0].mxu0
  %v3936 = vadd.f32 %v3487, %v3935
  %v3937 = vpop.f32.mrb[0].mxu0
  %v3938 = vadd.f32 %v3489, %v3937
  %3939 = vmatprep.mubr.f32.mxu0 0.0
  %3940 = vmatmul.mubr.f32.gmra.mrb[0].mxu0 %v2410
  %v3941 = vpop.f32.mrb[0].mxu0
  %v3942 = vadd.f32 %v3493, %v3941
  %v3943 = vpop.f32.mrb[0].mxu0
  %v3944 = vadd.f32 %v3495, %v3943
  %3945 = vmatprep.mubr.f32.mxu0 0.0
  %3946 = vmatmul.mubr.f32.gmra.mrb[0].mxu0 %v2411
  %v3947 = vpop.f32.mrb[0].mxu0
  %v3948 = vadd.f32 %v3499, %v3947
  %v3949 = vpop.f32.mrb[0].mxu0
  %v3950 = vadd.f32 %v3501, %v3949
  %3951 = vdwg.mxu0
  %s3952 = scalar_lea.vmem %s2, 512
  %v3953 = vld [vmem:[%s3952] sm:$0xff]
  %v3954 = vld [vmem:[%s3952 + $0x8] sm:$0xff]
  %v3955 = vld [vmem:[%s3952 + $0x10] sm:$0xff]
  %v3956 = vld [vmem:[%s3952 + $0x18] sm:$0xff]
  %v3957 = vld [vmem:[%s3952 + $0x20] sm:$0xff]
  %v3958 = vld [vmem:[%s3952 + $0x28] sm:$0xff]
  %v3959 = vld [vmem:[%s3952 + $0x30] sm:$0xff]
  %v3960 = vld [vmem:[%s3952 + $0x38] sm:$0xff]
  %v3961 = vld [vmem:[%s3952 + $0x40] sm:$0xff]
  %v3962 = vld [vmem:[%s3952 + $0x48] sm:$0xff]
  %v3963 = vld [vmem:[%s3952 + $0x50] sm:$0xff]
  %v3964 = vld [vmem:[%s3952 + $0x58] sm:$0xff]
  %v3965 = vld [vmem:[%s3952 + $0x60] sm:$0xff]
  %v3966 = vld [vmem:[%s3952 + $0x68] sm:$0xff]
  %v3967 = vld [vmem:[%s3952 + $0x70] sm:$0xff]
  %v3968 = vld [vmem:[%s3952 + $0x78] sm:$0xff]
  %v3969 = vld [vmem:[%s3952 + $0x80] sm:$0xff]
  %v3970 = vld [vmem:[%s3952 + $0x88] sm:$0xff]
  %v3971 = vld [vmem:[%s3952 + $0x90] sm:$0xff]
  %v3972 = vld [vmem:[%s3952 + $0x98] sm:$0xff]
  %v3973 = vld [vmem:[%s3952 + $0xa0] sm:$0xff]
  %v3974 = vld [vmem:[%s3952 + $0xa8] sm:$0xff]
  %v3975 = vld [vmem:[%s3952 + $0xb0] sm:$0xff]
  %v3976 = vld [vmem:[%s3952 + $0xb8] sm:$0xff]
  %v3977 = vld [vmem:[%s3952 + $0xc0] sm:$0xff]
  %v3978 = vld [vmem:[%s3952 + $0xc8] sm:$0xff]
  %v3979 = vld [vmem:[%s3952 + $0xd0] sm:$0xff]
  %v3980 = vld [vmem:[%s3952 + $0xd8] sm:$0xff]
  %v3981 = vld [vmem:[%s3952 + $0xe0] sm:$0xff]
  %v3982 = vld [vmem:[%s3952 + $0xe8] sm:$0xff]
  %v3983 = vld [vmem:[%s3952 + $0xf0] sm:$0xff]
  %v3984 = vld [vmem:[%s3952 + $0xf8] sm:$0xff]
  %3985 = vmatprep.subr.mxu0 %v3954
  %3986 = vmatpush1.msra.mxu0 %v3953
  %3987 = vmatprep.subr.mxu0 %v3956
  %3988 = vmatpush1.msra.mxu0 %v3955
  %3989 = vmatprep.subr.mxu0 %v3958
  %3990 = vmatpush1.msra.mxu0 %v3957
  %3991 = vmatprep.subr.mxu0 %v3960
  %3992 = vmatpush1.msra.mxu0 %v3959
  %3993 = vmatprep.subr.mxu0 %v3962
  %3994 = vmatpush1.msra.mxu0 %v3961
  %3995 = vmatprep.subr.mxu0 %v3964
  %3996 = vmatpush1.msra.mxu0 %v3963
  %3997 = vmatprep.subr.mxu0 %v3966
  %3998 = vmatpush1.msra.mxu0 %v3965
  %3999 = vmatprep.subr.mxu0 %v3968
  %4000 = vmatpush1.msra.mxu0 %v3967
  %4001 = vmatprep.subr.mxu0 %v3970
  %4002 = vmatpush1.msra.mxu0 %v3969
  %4003 = vmatprep.subr.mxu0 %v3972
  %4004 = vmatpush1.msra.mxu0 %v3971
  %4005 = vmatprep.subr.mxu0 %v3974
  %4006 = vmatpush1.msra.mxu0 %v3973
  %4007 = vmatprep.subr.mxu0 %v3976
  %4008 = vmatpush1.msra.mxu0 %v3975
  %4009 = vmatprep.subr.mxu0 %v3978
  %4010 = vmatpush1.msra.mxu0 %v3977
  %4011 = vmatprep.subr.mxu0 %v3980
  %4012 = vmatpush1.msra.mxu0 %v3979
  %4013 = vmatprep.subr.mxu0 %v3982
  %4014 = vmatpush1.msra.mxu0 %v3981
  %4015 = vmatprep.subr.mxu0 %v3984
  %4016 = vmatpush1.msra.mxu0 %v3983
  %4017 = vmatprep.subr.mxu0 0.0
  %4018 = vmatpush1.msra.mxu0 0.0
  %4019 = vmatprep.subr.mxu0 0.0
  %4020 = vmatpush1.msra.mxu0 0.0
  %4021 = vmatprep.subr.mxu0 0.0
  %4022 = vmatpush1.msra.mxu0 0.0
  %4023 = vmatprep.subr.mxu0 0.0
  %4024 = vmatpush1.msra.mxu0 0.0
  %4025 = vmatprep.subr.mxu0 0.0
  %4026 = vmatpush1.msra.mxu0 0.0
  %4027 = vmatprep.subr.mxu0 0.0
  %4028 = vmatpush1.msra.mxu0 0.0
  %4029 = vmatprep.subr.mxu0 0.0
  %4030 = vmatpush1.msra.mxu0 0.0
  %4031 = vmatprep.subr.mxu0 0.0
  %4032 = vmatpush1.msra.mxu0 0.0
  %4033 = vmatprep.subr.mxu0 0.0
  %4034 = vmatpush1.msra.mxu0 0.0
  %4035 = vmatprep.subr.mxu0 0.0
  %4036 = vmatpush1.msra.mxu0 0.0
  %4037 = vmatprep.subr.mxu0 0.0
  %4038 = vmatpush1.msra.mxu0 0.0
  %4039 = vmatprep.subr.mxu0 0.0
  %4040 = vmatpush1.msra.mxu0 0.0
  %4041 = vmatprep.subr.mxu0 0.0
  %4042 = vmatpush1.msra.mxu0 0.0
  %4043 = vmatprep.subr.mxu0 0.0
  %4044 = vmatpush1.msra.mxu0 0.0
  %4045 = vmatprep.subr.mxu0 0.0
  %4046 = vmatpush1.msra.mxu0 0.0
  %4047 = vmatprep.subr.mxu0 0.0
  %4048 = vmatpush1.msra.mxu0 0.0
  %4049 = vmatprep.mubr.f32.mxu0 0.0
  %4050 = vmatmul.mubr.f32.gmra.mrb[0].mxu0 %v1771
  %v4051 = vpop.f32.mrb[0].mxu0
  %v4052 = vadd.f32 0.0, %v4051
  %v4053 = vpop.f32.mrb[0].mxu0
  %v4054 = vadd.f32 0.0, %v4053
  %4055 = vmatprep.mubr.f32.mxu0 0.0
  %4056 = vmatmul.mubr.f32.gmra.mrb[0].mxu0 %v1772
  %v4057 = vpop.f32.mrb[0].mxu0
  %v4058 = vadd.f32 0.0, %v4057
  %v4059 = vpop.f32.mrb[0].mxu0
  %v4060 = vadd.f32 0.0, %v4059
  %4061 = vmatprep.mubr.f32.mxu0 0.0
  %4062 = vmatmul.mubr.f32.gmra.mrb[0].mxu0 %v1773
  %v4063 = vpop.f32.mrb[0].mxu0
  %v4064 = vadd.f32 0.0, %v4063
  %v4065 = vpop.f32.mrb[0].mxu0
  %v4066 = vadd.f32 0.0, %v4065
  %4067 = vmatprep.mubr.f32.mxu0 0.0
  %4068 = vmatmul.mubr.f32.gmra.mrb[0].mxu0 %v1774
  %v4069 = vpop.f32.mrb[0].mxu0
  %v4070 = vadd.f32 0.0, %v4069
  %v4071 = vpop.f32.mrb[0].mxu0
  %v4072 = vadd.f32 0.0, %v4071
  %4073 = vmatprep.mubr.f32.mxu0 0.0
  %4074 = vmatmul.mubr.f32.gmra.mrb[0].mxu0 %v1775
  %v4075 = vpop.f32.mrb[0].mxu0
  %v4076 = vadd.f32 0.0, %v4075
  %v4077 = vpop.f32.mrb[0].mxu0
  %v4078 = vadd.f32 0.0, %v4077
  %4079 = vmatprep.mubr.f32.mxu0 0.0
  %4080 = vmatmul.mubr.f32.gmra.mrb[0].mxu0 %v1776
  %v4081 = vpop.f32.mrb[0].mxu0
  %v4082 = vadd.f32 0.0, %v4081
  %v4083 = vpop.f32.mrb[0].mxu0
  %v4084 = vadd.f32 0.0, %v4083
  %4085 = vmatprep.mubr.f32.mxu0 0.0
  %4086 = vmatmul.mubr.f32.gmra.mrb[0].mxu0 %v1777
  %v4087 = vpop.f32.mrb[0].mxu0
  %v4088 = vadd.f32 0.0, %v4087
  %v4089 = vpop.f32.mrb[0].mxu0
  %v4090 = vadd.f32 0.0, %v4089
  %4091 = vmatprep.mubr.f32.mxu0 0.0
  %4092 = vmatmul.mubr.f32.gmra.mrb[0].mxu0 %v1778
  %v4093 = vpop.f32.mrb[0].mxu0
  %v4094 = vadd.f32 0.0, %v4093
  %v4095 = vpop.f32.mrb[0].mxu0
  %v4096 = vadd.f32 0.0, %v4095
  %4097 = vmatprep.mubr.f32.mxu0 0.0
  %4098 = vmatmul.mubr.f32.gmra.mrb[0].mxu0 %v1779
  %v4099 = vpop.f32.mrb[0].mxu0
  %v4100 = vadd.f32 0.0, %v4099
  %v4101 = vpop.f32.mrb[0].mxu0
  %v4102 = vadd.f32 0.0, %v4101
  %4103 = vmatprep.mubr.f32.mxu0 0.0
  %4104 = vmatmul.mubr.f32.gmra.mrb[0].mxu0 %v1780
  %v4105 = vpop.f32.mrb[0].mxu0
  %v4106 = vadd.f32 0.0, %v4105
  %v4107 = vpop.f32.mrb[0].mxu0
  %v4108 = vadd.f32 0.0, %v4107
  %4109 = vmatprep.mubr.f32.mxu0 0.0
  %4110 = vmatmul.mubr.f32.gmra.mrb[0].mxu0 %v1781
  %v4111 = vpop.f32.mrb[0].mxu0
  %v4112 = vadd.f32 0.0, %v4111
  %v4113 = vpop.f32.mrb[0].mxu0
  %v4114 = vadd.f32 0.0, %v4113
  %4115 = vmatprep.mubr.f32.mxu0 0.0
  %4116 = vmatmul.mubr.f32.gmra.mrb[0].mxu0 %v1782
  %v4117 = vpop.f32.mrb[0].mxu0
  %v4118 = vadd.f32 0.0, %v4117
  %v4119 = vpop.f32.mrb[0].mxu0
  %v4120 = vadd.f32 0.0, %v4119
  %4121 = vmatprep.mubr.f32.mxu0 0.0
  %4122 = vmatmul.mubr.f32.gmra.mrb[0].mxu0 %v1783
  %v4123 = vpop.f32.mrb[0].mxu0
  %v4124 = vadd.f32 0.0, %v4123
  %v4125 = vpop.f32.mrb[0].mxu0
  %v4126 = vadd.f32 0.0, %v4125
  %4127 = vmatprep.mubr.f32.mxu0 0.0
  %4128 = vmatmul.mubr.f32.gmra.mrb[0].mxu0 %v1784
  %v4129 = vpop.f32.mrb[0].mxu0
  %v4130 = vadd.f32 0.0, %v4129
  %v4131 = vpop.f32.mrb[0].mxu0
  %v4132 = vadd.f32 0.0, %v4131
  %4133 = vmatprep.mubr.f32.mxu0 0.0
  %4134 = vmatmul.mubr.f32.gmra.mrb[0].mxu0 %v1785
  %v4135 = vpop.f32.mrb[0].mxu0
  %v4136 = vadd.f32 0.0, %v4135
  %v4137 = vpop.f32.mrb[0].mxu0
  %v4138 = vadd.f32 0.0, %v4137
  %4139 = vmatprep.mubr.f32.mxu0 0.0
  %4140 = vmatmul.mubr.f32.gmra.mrb[0].mxu0 %v1786
  %v4141 = vpop.f32.mrb[0].mxu0
  %v4142 = vadd.f32 0.0, %v4141
  %v4143 = vpop.f32.mrb[0].mxu0
  %v4144 = vadd.f32 0.0, %v4143
  %4145 = vmatprep.mubr.f32.mxu0 0.0
  %4146 = vmatmul.mubr.f32.gmra.mrb[0].mxu0 %v1787
  %v4147 = vpop.f32.mrb[0].mxu0
  %v4148 = vadd.f32 0.0, %v4147
  %v4149 = vpop.f32.mrb[0].mxu0
  %v4150 = vadd.f32 0.0, %v4149
  %4151 = vmatprep.mubr.f32.mxu0 0.0
  %4152 = vmatmul.mubr.f32.gmra.mrb[0].mxu0 %v1788
  %v4153 = vpop.f32.mrb[0].mxu0
  %v4154 = vadd.f32 0.0, %v4153
  %v4155 = vpop.f32.mrb[0].mxu0
  %v4156 = vadd.f32 0.0, %v4155
  %4157 = vmatprep.mubr.f32.mxu0 0.0
  %4158 = vmatmul.mubr.f32.gmra.mrb[0].mxu0 %v1789
  %v4159 = vpop.f32.mrb[0].mxu0
  %v4160 = vadd.f32 0.0, %v4159
  %v4161 = vpop.f32.mrb[0].mxu0
  %v4162 = vadd.f32 0.0, %v4161
  %4163 = vmatprep.mubr.f32.mxu0 0.0
  %4164 = vmatmul.mubr.f32.gmra.mrb[0].mxu0 %v1790
  %v4165 = vpop.f32.mrb[0].mxu0
  %v4166 = vadd.f32 0.0, %v4165
  %v4167 = vpop.f32.mrb[0].mxu0
  %v4168 = vadd.f32 0.0, %v4167
  %4169 = vmatprep.mubr.f32.mxu0 0.0
  %4170 = vmatmul.mubr.f32.gmra.mrb[0].mxu0 %v1791
  %v4171 = vpop.f32.mrb[0].mxu0
  %v4172 = vadd.f32 0.0, %v4171
  %v4173 = vpop.f32.mrb[0].mxu0
  %v4174 = vadd.f32 0.0, %v4173
  %4175 = vmatprep.mubr.f32.mxu0 0.0
  %4176 = vmatmul.mubr.f32.gmra.mrb[0].mxu0 %v1792
  %v4177 = vpop.f32.mrb[0].mxu0
  %v4178 = vadd.f32 0.0, %v4177
  %v4179 = vpop.f32.mrb[0].mxu0
  %v4180 = vadd.f32 0.0, %v4179
  %4181 = vmatprep.mubr.f32.mxu0 0.0
  %4182 = vmatmul.mubr.f32.gmra.mrb[0].mxu0 %v1793
  %v4183 = vpop.f32.mrb[0].mxu0
  %v4184 = vadd.f32 0.0, %v4183
  %v4185 = vpop.f32.mrb[0].mxu0
  %v4186 = vadd.f32 0.0, %v4185
  %4187 = vmatprep.mubr.f32.mxu0 0.0
  %4188 = vmatmul.mubr.f32.gmra.mrb[0].mxu0 %v1794
  %v4189 = vpop.f32.mrb[0].mxu0
  %v4190 = vadd.f32 0.0, %v4189
  %v4191 = vpop.f32.mrb[0].mxu0
  %v4192 = vadd.f32 0.0, %v4191
  %4193 = vmatprep.mubr.f32.mxu0 0.0
  %4194 = vmatmul.mubr.f32.gmra.mrb[0].mxu0 %v1795
  %v4195 = vpop.f32.mrb[0].mxu0
  %v4196 = vadd.f32 0.0, %v4195
  %v4197 = vpop.f32.mrb[0].mxu0
  %v4198 = vadd.f32 0.0, %v4197
  %4199 = vmatprep.mubr.f32.mxu0 0.0
  %4200 = vmatmul.mubr.f32.gmra.mrb[0].mxu0 %v1796
  %v4201 = vpop.f32.mrb[0].mxu0
  %v4202 = vadd.f32 0.0, %v4201
  %v4203 = vpop.f32.mrb[0].mxu0
  %v4204 = vadd.f32 0.0, %v4203
  %4205 = vmatprep.mubr.f32.mxu0 0.0
  %4206 = vmatmul.mubr.f32.gmra.mrb[0].mxu0 %v1797
  %v4207 = vpop.f32.mrb[0].mxu0
  %v4208 = vadd.f32 0.0, %v4207
  %v4209 = vpop.f32.mrb[0].mxu0
  %v4210 = vadd.f32 0.0, %v4209
  %4211 = vmatprep.mubr.f32.mxu0 0.0
  %4212 = vmatmul.mubr.f32.gmra.mrb[0].mxu0 %v1798
  %v4213 = vpop.f32.mrb[0].mxu0
  %v4214 = vadd.f32 0.0, %v4213
  %v4215 = vpop.f32.mrb[0].mxu0
  %v4216 = vadd.f32 0.0, %v4215
  %4217 = vmatprep.mubr.f32.mxu0 0.0
  %4218 = vmatmul.mubr.f32.gmra.mrb[0].mxu0 %v1799
  %v4219 = vpop.f32.mrb[0].mxu0
  %v4220 = vadd.f32 0.0, %v4219
  %v4221 = vpop.f32.mrb[0].mxu0
  %v4222 = vadd.f32 0.0, %v4221
  %4223 = vmatprep.mubr.f32.mxu0 0.0
  %4224 = vmatmul.mubr.f32.gmra.mrb[0].mxu0 %v1800
  %v4225 = vpop.f32.mrb[0].mxu0
  %v4226 = vadd.f32 0.0, %v4225
  %v4227 = vpop.f32.mrb[0].mxu0
  %v4228 = vadd.f32 0.0, %v4227
  %4229 = vmatprep.mubr.f32.mxu0 0.0
  %4230 = vmatmul.mubr.f32.gmra.mrb[0].mxu0 %v1801
  %v4231 = vpop.f32.mrb[0].mxu0
  %v4232 = vadd.f32 0.0, %v4231
  %v4233 = vpop.f32.mrb[0].mxu0
  %v4234 = vadd.f32 0.0, %v4233
  %4235 = vmatprep.mubr.f32.mxu0 0.0
  %4236 = vmatmul.mubr.f32.gmra.mrb[0].mxu0 %v1802
  %v4237 = vpop.f32.mrb[0].mxu0
  %v4238 = vadd.f32 0.0, %v4237
  %v4239 = vpop.f32.mrb[0].mxu0
  %v4240 = vadd.f32 0.0, %v4239
  %4241 = vmatprep.mubr.f32.mxu0 0.0
  %4242 = vmatmul.mubr.f32.gmra.mrb[0].mxu0 %v1803
  %v4243 = vpop.f32.mrb[0].mxu0
  %v4244 = vadd.f32 0.0, %v4243
  %v4245 = vpop.f32.mrb[0].mxu0
  %v4246 = vadd.f32 0.0, %v4245
  %4247 = vmatprep.mubr.f32.mxu0 0.0
  %4248 = vmatmul.mubr.f32.gmra.mrb[0].mxu0 %v1804
  %v4249 = vpop.f32.mrb[0].mxu0
  %v4250 = vadd.f32 0.0, %v4249
  %v4251 = vpop.f32.mrb[0].mxu0
  %v4252 = vadd.f32 0.0, %v4251
  %4253 = vmatprep.mubr.f32.mxu0 0.0
  %4254 = vmatmul.mubr.f32.gmra.mrb[0].mxu0 %v1805
  %v4255 = vpop.f32.mrb[0].mxu0
  %v4256 = vadd.f32 0.0, %v4255
  %v4257 = vpop.f32.mrb[0].mxu0
  %v4258 = vadd.f32 0.0, %v4257
  %4259 = vmatprep.mubr.f32.mxu0 0.0
  %4260 = vmatmul.mubr.f32.gmra.mrb[0].mxu0 %v1806
  %v4261 = vpop.f32.mrb[0].mxu0
  %v4262 = vadd.f32 0.0, %v4261
  %v4263 = vpop.f32.mrb[0].mxu0
  %v4264 = vadd.f32 0.0, %v4263
  %4265 = vmatprep.mubr.f32.mxu0 0.0
  %4266 = vmatmul.mubr.f32.gmra.mrb[0].mxu0 %v1807
  %v4267 = vpop.f32.mrb[0].mxu0
  %v4268 = vadd.f32 0.0, %v4267
  %v4269 = vpop.f32.mrb[0].mxu0
  %v4270 = vadd.f32 0.0, %v4269
  %4271 = vmatprep.mubr.f32.mxu0 0.0
  %4272 = vmatmul.mubr.f32.gmra.mrb[0].mxu0 %v1808
  %v4273 = vpop.f32.mrb[0].mxu0
  %v4274 = vadd.f32 0.0, %v4273
  %v4275 = vpop.f32.mrb[0].mxu0
  %v4276 = vadd.f32 0.0, %v4275
  %4277 = vmatprep.mubr.f32.mxu0 0.0
  %4278 = vmatmul.mubr.f32.gmra.mrb[0].mxu0 %v1809
  %v4279 = vpop.f32.mrb[0].mxu0
  %v4280 = vadd.f32 0.0, %v4279
  %v4281 = vpop.f32.mrb[0].mxu0
  %v4282 = vadd.f32 0.0, %v4281
  %4283 = vmatprep.mubr.f32.mxu0 0.0
  %4284 = vmatmul.mubr.f32.gmra.mrb[0].mxu0 %v1810
  %v4285 = vpop.f32.mrb[0].mxu0
  %v4286 = vadd.f32 0.0, %v4285
  %v4287 = vpop.f32.mrb[0].mxu0
  %v4288 = vadd.f32 0.0, %v4287
  %4289 = vmatprep.mubr.f32.mxu0 0.0
  %4290 = vmatmul.mubr.f32.gmra.mrb[0].mxu0 %v1811
  %v4291 = vpop.f32.mrb[0].mxu0
  %v4292 = vadd.f32 0.0, %v4291
  %v4293 = vpop.f32.mrb[0].mxu0
  %v4294 = vadd.f32 0.0, %v4293
  %4295 = vmatprep.mubr.f32.mxu0 0.0
  %4296 = vmatmul.mubr.f32.gmra.mrb[0].mxu0 %v1812
  %v4297 = vpop.f32.mrb[0].mxu0
  %v4298 = vadd.f32 0.0, %v4297
  %v4299 = vpop.f32.mrb[0].mxu0
  %v4300 = vadd.f32 0.0, %v4299
  %4301 = vmatprep.mubr.f32.mxu0 0.0
  %4302 = vmatmul.mubr.f32.gmra.mrb[0].mxu0 %v1813
  %v4303 = vpop.f32.mrb[0].mxu0
  %v4304 = vadd.f32 0.0, %v4303
  %v4305 = vpop.f32.mrb[0].mxu0
  %v4306 = vadd.f32 0.0, %v4305
  %4307 = vmatprep.mubr.f32.mxu0 0.0
  %4308 = vmatmul.mubr.f32.gmra.mrb[0].mxu0 %v1814
  %v4309 = vpop.f32.mrb[0].mxu0
  %v4310 = vadd.f32 0.0, %v4309
  %v4311 = vpop.f32.mrb[0].mxu0
  %v4312 = vadd.f32 0.0, %v4311
  %4313 = vmatprep.mubr.f32.mxu0 0.0
  %4314 = vmatmul.mubr.f32.gmra.mrb[0].mxu0 %v1815
  %v4315 = vpop.f32.mrb[0].mxu0
  %v4316 = vadd.f32 0.0, %v4315
  %v4317 = vpop.f32.mrb[0].mxu0
  %v4318 = vadd.f32 0.0, %v4317
  %4319 = vmatprep.mubr.f32.mxu0 0.0
  %4320 = vmatmul.mubr.f32.gmra.mrb[0].mxu0 %v1816
  %v4321 = vpop.f32.mrb[0].mxu0
  %v4322 = vadd.f32 0.0, %v4321
  %v4323 = vpop.f32.mrb[0].mxu0
  %v4324 = vadd.f32 0.0, %v4323
  %4325 = vmatprep.mubr.f32.mxu0 0.0
  %4326 = vmatmul.mubr.f32.gmra.mrb[0].mxu0 %v1817
  %v4327 = vpop.f32.mrb[0].mxu0
  %v4328 = vadd.f32 0.0, %v4327
  %v4329 = vpop.f32.mrb[0].mxu0
  %v4330 = vadd.f32 0.0, %v4329
  %4331 = vmatprep.mubr.f32.mxu0 0.0
  %4332 = vmatmul.mubr.f32.gmra.mrb[0].mxu0 %v1818
  %v4333 = vpop.f32.mrb[0].mxu0
  %v4334 = vadd.f32 0.0, %v4333
  %v4335 = vpop.f32.mrb[0].mxu0
  %v4336 = vadd.f32 0.0, %v4335
  %4337 = vmatprep.mubr.f32.mxu0 0.0
  %4338 = vmatmul.mubr.f32.gmra.mrb[0].mxu0 %v1819
  %v4339 = vpop.f32.mrb[0].mxu0
  %v4340 = vadd.f32 0.0, %v4339
  %v4341 = vpop.f32.mrb[0].mxu0
  %v4342 = vadd.f32 0.0, %v4341
  %4343 = vmatprep.mubr.f32.mxu0 0.0
  %4344 = vmatmul.mubr.f32.gmra.mrb[0].mxu0 %v1820
  %v4345 = vpop.f32.mrb[0].mxu0
  %v4346 = vadd.f32 0.0, %v4345
  %v4347 = vpop.f32.mrb[0].mxu0
  %v4348 = vadd.f32 0.0, %v4347
  %4349 = vmatprep.mubr.f32.mxu0 0.0
  %4350 = vmatmul.mubr.f32.gmra.mrb[0].mxu0 %v1821
  %v4351 = vpop.f32.mrb[0].mxu0
  %v4352 = vadd.f32 0.0, %v4351
  %v4353 = vpop.f32.mrb[0].mxu0
  %v4354 = vadd.f32 0.0, %v4353
  %4355 = vmatprep.mubr.f32.mxu0 0.0
  %4356 = vmatmul.mubr.f32.gmra.mrb[0].mxu0 %v1822
  %v4357 = vpop.f32.mrb[0].mxu0
  %v4358 = vadd.f32 0.0, %v4357
  %v4359 = vpop.f32.mrb[0].mxu0
  %v4360 = vadd.f32 0.0, %v4359
  %4361 = vmatprep.mubr.f32.mxu0 0.0
  %4362 = vmatmul.mubr.f32.gmra.mrb[0].mxu0 %v1823
  %v4363 = vpop.f32.mrb[0].mxu0
  %v4364 = vadd.f32 0.0, %v4363
  %v4365 = vpop.f32.mrb[0].mxu0
  %v4366 = vadd.f32 0.0, %v4365
  %4367 = vmatprep.mubr.f32.mxu0 0.0
  %4368 = vmatmul.mubr.f32.gmra.mrb[0].mxu0 %v1824
  %v4369 = vpop.f32.mrb[0].mxu0
  %v4370 = vadd.f32 0.0, %v4369
  %v4371 = vpop.f32.mrb[0].mxu0
  %v4372 = vadd.f32 0.0, %v4371
  %4373 = vmatprep.mubr.f32.mxu0 0.0
  %4374 = vmatmul.mubr.f32.gmra.mrb[0].mxu0 %v1825
  %v4375 = vpop.f32.mrb[0].mxu0
  %v4376 = vadd.f32 0.0, %v4375
  %v4377 = vpop.f32.mrb[0].mxu0
  %v4378 = vadd.f32 0.0, %v4377
  %4379 = vmatprep.mubr.f32.mxu0 0.0
  %4380 = vmatmul.mubr.f32.gmra.mrb[0].mxu0 %v1826
  %v4381 = vpop.f32.mrb[0].mxu0
  %v4382 = vadd.f32 0.0, %v4381
  %v4383 = vpop.f32.mrb[0].mxu0
  %v4384 = vadd.f32 0.0, %v4383
  %4385 = vmatprep.mubr.f32.mxu0 0.0
  %4386 = vmatmul.mubr.f32.gmra.mrb[0].mxu0 %v1827
  %v4387 = vpop.f32.mrb[0].mxu0
  %v4388 = vadd.f32 0.0, %v4387
  %v4389 = vpop.f32.mrb[0].mxu0
  %v4390 = vadd.f32 0.0, %v4389
  %4391 = vmatprep.mubr.f32.mxu0 0.0
  %4392 = vmatmul.mubr.f32.gmra.mrb[0].mxu0 %v1828
  %v4393 = vpop.f32.mrb[0].mxu0
  %v4394 = vadd.f32 0.0, %v4393
  %v4395 = vpop.f32.mrb[0].mxu0
  %v4396 = vadd.f32 0.0, %v4395
  %4397 = vmatprep.mubr.f32.mxu0 0.0
  %4398 = vmatmul.mubr.f32.gmra.mrb[0].mxu0 %v1829
  %v4399 = vpop.f32.mrb[0].mxu0
  %v4400 = vadd.f32 0.0, %v4399
  %v4401 = vpop.f32.mrb[0].mxu0
  %v4402 = vadd.f32 0.0, %v4401
  %4403 = vmatprep.mubr.f32.mxu0 0.0
  %4404 = vmatmul.mubr.f32.gmra.mrb[0].mxu0 %v1830
  %v4405 = vpop.f32.mrb[0].mxu0
  %v4406 = vadd.f32 0.0, %v4405
  %v4407 = vpop.f32.mrb[0].mxu0
  %v4408 = vadd.f32 0.0, %v4407
  %4409 = vmatprep.mubr.f32.mxu0 0.0
  %4410 = vmatmul.mubr.f32.gmra.mrb[0].mxu0 %v1831
  %v4411 = vpop.f32.mrb[0].mxu0
  %v4412 = vadd.f32 0.0, %v4411
  %v4413 = vpop.f32.mrb[0].mxu0
  %v4414 = vadd.f32 0.0, %v4413
  %4415 = vmatprep.mubr.f32.mxu0 0.0
  %4416 = vmatmul.mubr.f32.gmra.mrb[0].mxu0 %v1832
  %v4417 = vpop.f32.mrb[0].mxu0
  %v4418 = vadd.f32 0.0, %v4417
  %v4419 = vpop.f32.mrb[0].mxu0
  %v4420 = vadd.f32 0.0, %v4419
  %4421 = vmatprep.mubr.f32.mxu0 0.0
  %4422 = vmatmul.mubr.f32.gmra.mrb[0].mxu0 %v1833
  %v4423 = vpop.f32.mrb[0].mxu0
  %v4424 = vadd.f32 0.0, %v4423
  %v4425 = vpop.f32.mrb[0].mxu0
  %v4426 = vadd.f32 0.0, %v4425
  %4427 = vmatprep.mubr.f32.mxu0 0.0
  %4428 = vmatmul.mubr.f32.gmra.mrb[0].mxu0 %v1834
  %v4429 = vpop.f32.mrb[0].mxu0
  %v4430 = vadd.f32 0.0, %v4429
  %v4431 = vpop.f32.mrb[0].mxu0
  %v4432 = vadd.f32 0.0, %v4431
  %4433 = vdwg.mxu0
  %v4434 = vadd.f32 %v3570, %v4052
  %v4435 = vadd.f32 %v3572, %v4054
  %v4436 = vadd.f32 %v3576, %v4058
  %v4437 = vadd.f32 %v3578, %v4060
  %v4438 = vadd.f32 %v3582, %v4064
  %v4439 = vadd.f32 %v3584, %v4066
  %v4440 = vadd.f32 %v3588, %v4070
  %v4441 = vadd.f32 %v3590, %v4072
  %v4442 = vadd.f32 %v3594, %v4076
  %v4443 = vadd.f32 %v3596, %v4078
  %v4444 = vadd.f32 %v3600, %v4082
  %v4445 = vadd.f32 %v3602, %v4084
  %v4446 = vadd.f32 %v3606, %v4088
  %v4447 = vadd.f32 %v3608, %v4090
  %v4448 = vadd.f32 %v3612, %v4094
  %v4449 = vadd.f32 %v3614, %v4096
  %v4450 = vadd.f32 %v3618, %v4100
  %v4451 = vadd.f32 %v3620, %v4102
  %v4452 = vadd.f32 %v3624, %v4106
  %v4453 = vadd.f32 %v3626, %v4108
  %v4454 = vadd.f32 %v3630, %v4112
  %v4455 = vadd.f32 %v3632, %v4114
  %v4456 = vadd.f32 %v3636, %v4118
  %v4457 = vadd.f32 %v3638, %v4120
  %v4458 = vadd.f32 %v3642, %v4124
  %v4459 = vadd.f32 %v3644, %v4126
  %v4460 = vadd.f32 %v3648, %v4130
  %v4461 = vadd.f32 %v3650, %v4132
  %v4462 = vadd.f32 %v3654, %v4136
  %v4463 = vadd.f32 %v3656, %v4138
  %v4464 = vadd.f32 %v3660, %v4142
  %v4465 = vadd.f32 %v3662, %v4144
  %v4466 = vadd.f32 %v3666, %v4148
  %v4467 = vadd.f32 %v3668, %v4150
  %v4468 = vadd.f32 %v3672, %v4154
  %v4469 = vadd.f32 %v3674, %v4156
  %v4470 = vadd.f32 %v3678, %v4160
  %v4471 = vadd.f32 %v3680, %v4162
  %v4472 = vadd.f32 %v3684, %v4166
  %v4473 = vadd.f32 %v3686, %v4168
  %v4474 = vadd.f32 %v3690, %v4172
  %v4475 = vadd.f32 %v3692, %v4174
  %v4476 = vadd.f32 %v3696, %v4178
  %v4477 = vadd.f32 %v3698, %v4180
  %v4478 = vadd.f32 %v3702, %v4184
  %v4479 = vadd.f32 %v3704, %v4186
  %v4480 = vadd.f32 %v3708, %v4190
  %v4481 = vadd.f32 %v3710, %v4192
  %v4482 = vadd.f32 %v3714, %v4196
  %v4483 = vadd.f32 %v3716, %v4198
  %v4484 = vadd.f32 %v3720, %v4202
  %v4485 = vadd.f32 %v3722, %v4204
  %v4486 = vadd.f32 %v3726, %v4208
  %v4487 = vadd.f32 %v3728, %v4210
  %v4488 = vadd.f32 %v3732, %v4214
  %v4489 = vadd.f32 %v3734, %v4216
  %v4490 = vadd.f32 %v3738, %v4220
  %v4491 = vadd.f32 %v3740, %v4222
  %v4492 = vadd.f32 %v3744, %v4226
  %v4493 = vadd.f32 %v3746, %v4228
  %v4494 = vadd.f32 %v3750, %v4232
  %v4495 = vadd.f32 %v3752, %v4234
  %v4496 = vadd.f32 %v3756, %v4238
  %v4497 = vadd.f32 %v3758, %v4240
  %v4498 = vadd.f32 %v3762, %v4244
  %v4499 = vadd.f32 %v3764, %v4246
  %v4500 = vadd.f32 %v3768, %v4250
  %v4501 = vadd.f32 %v3770, %v4252
  %v4502 = vadd.f32 %v3774, %v4256
  %v4503 = vadd.f32 %v3776, %v4258
  %v4504 = vadd.f32 %v3780, %v4262
  %v4505 = vadd.f32 %v3782, %v4264
  %v4506 = vadd.f32 %v3786, %v4268
  %v4507 = vadd.f32 %v3788, %v4270
  %v4508 = vadd.f32 %v3792, %v4274
  %v4509 = vadd.f32 %v3794, %v4276
  %v4510 = vadd.f32 %v3798, %v4280
  %v4511 = vadd.f32 %v3800, %v4282
  %v4512 = vadd.f32 %v3804, %v4286
  %v4513 = vadd.f32 %v3806, %v4288
  %v4514 = vadd.f32 %v3810, %v4292
  %v4515 = vadd.f32 %v3812, %v4294
  %v4516 = vadd.f32 %v3816, %v4298
  %v4517 = vadd.f32 %v3818, %v4300
  %v4518 = vadd.f32 %v3822, %v4304
  %v4519 = vadd.f32 %v3824, %v4306
  %v4520 = vadd.f32 %v3828, %v4310
  %v4521 = vadd.f32 %v3830, %v4312
  %v4522 = vadd.f32 %v3834, %v4316
  %v4523 = vadd.f32 %v3836, %v4318
  %v4524 = vadd.f32 %v3840, %v4322
  %v4525 = vadd.f32 %v3842, %v4324
  %v4526 = vadd.f32 %v3846, %v4328
  %v4527 = vadd.f32 %v3848, %v4330
  %v4528 = vadd.f32 %v3852, %v4334
  %v4529 = vadd.f32 %v3854, %v4336
  %v4530 = vadd.f32 %v3858, %v4340
  %v4531 = vadd.f32 %v3860, %v4342
  %v4532 = vadd.f32 %v3864, %v4346
  %v4533 = vadd.f32 %v3866, %v4348
  %v4534 = vadd.f32 %v3870, %v4352
  %v4535 = vadd.f32 %v3872, %v4354
  %v4536 = vadd.f32 %v3876, %v4358
  %v4537 = vadd.f32 %v3878, %v4360
  %v4538 = vadd.f32 %v3882, %v4364
  %v4539 = vadd.f32 %v3884, %v4366
  %v4540 = vadd.f32 %v3888, %v4370
  %v4541 = vadd.f32 %v3890, %v4372
  %v4542 = vadd.f32 %v3894, %v4376
  %v4543 = vadd.f32 %v3896, %v4378
  %v4544 = vadd.f32 %v3900, %v4382
  %v4545 = vadd.f32 %v3902, %v4384
  %v4546 = vadd.f32 %v3906, %v4388
  %v4547 = vadd.f32 %v3908, %v4390
  %v4548 = vadd.f32 %v3912, %v4394
  %v4549 = vadd.f32 %v3914, %v4396
  %v4550 = vadd.f32 %v3918, %v4400
  %v4551 = vadd.f32 %v3920, %v4402
  %v4552 = vadd.f32 %v3924, %v4406
  %v4553 = vadd.f32 %v3926, %v4408
  %v4554 = vadd.f32 %v3930, %v4412
  %v4555 = vadd.f32 %v3932, %v4414
  %v4556 = vadd.f32 %v3936, %v4418
  %v4557 = vadd.f32 %v3938, %v4420
  %v4558 = vadd.f32 %v3942, %v4424
  %v4559 = vadd.f32 %v3944, %v4426
  %v4560 = vadd.f32 %v3948, %v4430
  %v4561 = vadd.f32 %v3950, %v4432
  %v4562 = vrot.slane %v1771, 1
  %v4563 = vrot.slane %v1772, 1
  %v4564 = vrot.slane %v1773, 1
  %v4565 = vrot.slane %v1774, 1
  %v4566 = vrot.slane %v1775, 1
  %v4567 = vrot.slane %v1776, 1
  %v4568 = vrot.slane %v1777, 1
  %v4569 = vrot.slane %v1778, 1
  %v4570 = vrot.slane %v1779, 1
  %v4571 = vrot.slane %v1780, 1
  %v4572 = vrot.slane %v1781, 1
  %v4573 = vrot.slane %v1782, 1
  %v4574 = vrot.slane %v1783, 1
  %v4575 = vrot.slane %v1784, 1
  %v4576 = vrot.slane %v1785, 1
  %v4577 = vrot.slane %v1786, 1
  %v4578 = vrot.slane %v1787, 1
  %v4579 = vrot.slane %v1788, 1
  %v4580 = vrot.slane %v1789, 1
  %v4581 = vrot.slane %v1790, 1
  %v4582 = vrot.slane %v1791, 1
  %v4583 = vrot.slane %v1792, 1
  %v4584 = vrot.slane %v1793, 1
  %v4585 = vrot.slane %v1794, 1
  %v4586 = vrot.slane %v1795, 1
  %v4587 = vrot.slane %v1796, 1
  %v4588 = vrot.slane %v1797, 1
  %v4589 = vrot.slane %v1798, 1
  %v4590 = vrot.slane %v1799, 1
  %v4591 = vrot.slane %v1800, 1
  %v4592 = vrot.slane %v1801, 1
  %v4593 = vrot.slane %v1802, 1
  %v4594 = vrot.slane %v1803, 1
  %v4595 = vrot.slane %v1804, 1
  %v4596 = vrot.slane %v1805, 1
  %v4597 = vrot.slane %v1806, 1
  %v4598 = vrot.slane %v1807, 1
  %v4599 = vrot.slane %v1808, 1
  %v4600 = vrot.slane %v1809, 1
  %v4601 = vrot.slane %v1810, 1
  %v4602 = vrot.slane %v1811, 1
  %v4603 = vrot.slane %v1812, 1
  %v4604 = vrot.slane %v1813, 1
  %v4605 = vrot.slane %v1814, 1
  %v4606 = vrot.slane %v1815, 1
  %v4607 = vrot.slane %v1816, 1
  %v4608 = vrot.slane %v1817, 1
  %v4609 = vrot.slane %v1818, 1
  %v4610 = vrot.slane %v1819, 1
  %v4611 = vrot.slane %v1820, 1
  %v4612 = vrot.slane %v1821, 1
  %v4613 = vrot.slane %v1822, 1
  %v4614 = vrot.slane %v1823, 1
  %v4615 = vrot.slane %v1824, 1
  %v4616 = vrot.slane %v1825, 1
  %v4617 = vrot.slane %v1826, 1
  %v4618 = vrot.slane %v1827, 1
  %v4619 = vrot.slane %v1828, 1
  %v4620 = vrot.slane %v1829, 1
  %v4621 = vrot.slane %v1830, 1
  %v4622 = vrot.slane %v1831, 1
  %v4623 = vrot.slane %v1832, 1
  %v4624 = vrot.slane %v1833, 1
  %v4625 = vrot.slane %v1834, 1
  %vm4626 = vcmp.lt.s32.totalorder %v18, 7
  %v4627 = vsel %vm4626, %v4624, %v4625
  %v4628 = vsel %vm4626, %v4623, %v4624
  %v4629 = vsel %vm4626, %v4622, %v4623
  %v4630 = vsel %vm4626, %v4621, %v4622
  %v4631 = vsel %vm4626, %v4620, %v4621
  %v4632 = vsel %vm4626, %v4619, %v4620
  %v4633 = vsel %vm4626, %v4618, %v4619
  %v4634 = vsel %vm4626, %v4617, %v4618
  %v4635 = vsel %vm4626, %v4616, %v4617
  %v4636 = vsel %vm4626, %v4615, %v4616
  %v4637 = vsel %vm4626, %v4614, %v4615
  %v4638 = vsel %vm4626, %v4613, %v4614
  %v4639 = vsel %vm4626, %v4612, %v4613
  %v4640 = vsel %vm4626, %v4611, %v4612
  %v4641 = vsel %vm4626, %v4610, %v4611
  %v4642 = vsel %vm4626, %v4609, %v4610
  %v4643 = vsel %vm4626, %v4608, %v4609
  %v4644 = vsel %vm4626, %v4607, %v4608
  %v4645 = vsel %vm4626, %v4606, %v4607
  %v4646 = vsel %vm4626, %v4605, %v4606
  %v4647 = vsel %vm4626, %v4604, %v4605
  %v4648 = vsel %vm4626, %v4603, %v4604
  %v4649 = vsel %vm4626, %v4602, %v4603
  %v4650 = vsel %vm4626, %v4601, %v4602
  %v4651 = vsel %vm4626, %v4600, %v4601
  %v4652 = vsel %vm4626, %v4599, %v4600
  %v4653 = vsel %vm4626, %v4598, %v4599
  %v4654 = vsel %vm4626, %v4597, %v4598
  %v4655 = vsel %vm4626, %v4596, %v4597
  %v4656 = vsel %vm4626, %v4595, %v4596
  %v4657 = vsel %vm4626, %v4594, %v4595
  %v4658 = vsel %vm4626, %v4593, %v4594
  %v4659 = vsel %vm4626, %v4592, %v4593
  %v4660 = vsel %vm4626, %v4591, %v4592
  %v4661 = vsel %vm4626, %v4590, %v4591
  %v4662 = vsel %vm4626, %v4589, %v4590
  %v4663 = vsel %vm4626, %v4588, %v4589
  %v4664 = vsel %vm4626, %v4587, %v4588
  %v4665 = vsel %vm4626, %v4586, %v4587
  %v4666 = vsel %vm4626, %v4585, %v4586
  %v4667 = vsel %vm4626, %v4584, %v4585
  %v4668 = vsel %vm4626, %v4583, %v4584
  %v4669 = vsel %vm4626, %v4582, %v4583
  %v4670 = vsel %vm4626, %v4581, %v4582
  %v4671 = vsel %vm4626, %v4580, %v4581
  %v4672 = vsel %vm4626, %v4579, %v4580
  %v4673 = vsel %vm4626, %v4578, %v4579
  %v4674 = vsel %vm4626, %v4577, %v4578
  %v4675 = vsel %vm4626, %v4576, %v4577
  %v4676 = vsel %vm4626, %v4575, %v4576
  %v4677 = vsel %vm4626, %v4574, %v4575
  %v4678 = vsel %vm4626, %v4573, %v4574
  %v4679 = vsel %vm4626, %v4572, %v4573
  %v4680 = vsel %vm4626, %v4571, %v4572
  %v4681 = vsel %vm4626, %v4570, %v4571
  %v4682 = vsel %vm4626, %v4569, %v4570
  %v4683 = vsel %vm4626, %v4568, %v4569
  %v4684 = vsel %vm4626, %v4567, %v4568
  %v4685 = vsel %vm4626, %v4566, %v4567
  %v4686 = vsel %vm4626, %v4565, %v4566
  %v4687 = vsel %vm4626, %v4564, %v4565
  %v4688 = vsel %vm4626, %v4563, %v4564
  %v4689 = vsel %vm4626, %v4562, %v4563
  %v4690 = vsel %vm4626, %v4625, %v4562
  %v4691 = vadd.s32 %v786, 1
  %v4692 = vadd.s32 %v787, 1
  %v4693 = vadd.s32 %v788, 1
  %v4694 = vadd.s32 %v789, 1
  %v4695 = vadd.s32 %v790, 1
  %v4696 = vadd.s32 %v791, 1
  %v4697 = vadd.s32 %v792, 1
  %v4698 = vadd.s32 %v793, 1
  %v4699 = vadd.s32 %v794, 1
  %v4700 = vadd.s32 %v795, 1
  %v4701 = vadd.s32 %v796, 1
  %v4702 = vadd.s32 %v797, 1
  %v4703 = vadd.s32 %v798, 1
  %v4704 = vadd.s32 %v799, 1
  %v4705 = vadd.s32 %v800, 1
  %v4706 = vadd.s32 %v801, 1
  %v4707 = vadd.s32 %v802, 1
  %v4708 = vadd.s32 %v803, 1
  %v4709 = vadd.s32 %v804, 1
  %v4710 = vadd.s32 %v805, 1
  %v4711 = vadd.s32 %v806, 1
  %v4712 = vadd.s32 %v807, 1
  %v4713 = vadd.s32 %v808, 1
  %v4714 = vadd.s32 %v809, 1
  %v4715 = vadd.s32 %v810, 1
  %v4716 = vadd.s32 %v811, 1
  %v4717 = vadd.s32 %v812, 1
  %v4718 = vadd.s32 %v813, 1
  %v4719 = vadd.s32 %v814, 1
  %v4720 = vadd.s32 %v815, 1
  %v4721 = vadd.s32 %v816, 1
  %v4722 = vadd.s32 %v817, 1
  %v4723 = vadd.s32 %v818, 1
  %v4724 = vadd.s32 %v819, 1
  %v4725 = vadd.s32 %v820, 1
  %v4726 = vadd.s32 %v821, 1
  %v4727 = vadd.s32 %v822, 1
  %v4728 = vadd.s32 %v823, 1
  %v4729 = vadd.s32 %v824, 1
  %v4730 = vadd.s32 %v825, 1
  %v4731 = vadd.s32 %v826, 1
  %v4732 = vadd.s32 %v827, 1
  %v4733 = vadd.s32 %v828, 1
  %v4734 = vadd.s32 %v829, 1
  %v4735 = vadd.s32 %v830, 1
  %v4736 = vadd.s32 %v831, 1
  %v4737 = vadd.s32 %v832, 1
  %v4738 = vadd.s32 %v833, 1
  %v4739 = vadd.s32 %v834, 1
  %v4740 = vadd.s32 %v835, 1
  %v4741 = vadd.s32 %v836, 1
  %v4742 = vadd.s32 %v837, 1
  %v4743 = vadd.s32 %v838, 1
  %v4744 = vadd.s32 %v839, 1
  %v4745 = vadd.s32 %v840, 1
  %v4746 = vadd.s32 %v841, 1
  %v4747 = vadd.s32 %v842, 1
  %v4748 = vadd.s32 %v843, 1
  %v4749 = vadd.s32 %v844, 1
  %v4750 = vadd.s32 %v845, 1
  %v4751 = vadd.s32 %v846, 1
  %v4752 = vadd.s32 %v847, 1
  %v4753 = vadd.s32 %v848, 1
  %v4754 = vadd.s32 %v849, 1
  %vm4755 = vcmp.ge.s32.totalorder %v4691, 0
  %vm4756 = vcmp.ge.s32.totalorder %v4692, 0
  %vm4757 = vcmp.ge.s32.totalorder %v4693, 0
  %vm4758 = vcmp.ge.s32.totalorder %v4694, 0
  %vm4759 = vcmp.ge.s32.totalorder %v4695, 0
  %vm4760 = vcmp.ge.s32.totalorder %v4696, 0
  %vm4761 = vcmp.ge.s32.totalorder %v4697, 0
  %vm4762 = vcmp.ge.s32.totalorder %v4698, 0
  %vm4763 = vcmp.ge.s32.totalorder %v4699, 0
  %vm4764 = vcmp.ge.s32.totalorder %v4700, 0
  %vm4765 = vcmp.ge.s32.totalorder %v4701, 0
  %vm4766 = vcmp.ge.s32.totalorder %v4702, 0
  %vm4767 = vcmp.ge.s32.totalorder %v4703, 0
  %vm4768 = vcmp.ge.s32.totalorder %v4704, 0
  %vm4769 = vcmp.ge.s32.totalorder %v4705, 0
  %vm4770 = vcmp.ge.s32.totalorder %v4706, 0
  %vm4771 = vcmp.ge.s32.totalorder %v4707, 0
  %vm4772 = vcmp.ge.s32.totalorder %v4708, 0
  %vm4773 = vcmp.ge.s32.totalorder %v4709, 0
  %vm4774 = vcmp.ge.s32.totalorder %v4710, 0
  %vm4775 = vcmp.ge.s32.totalorder %v4711, 0
  %vm4776 = vcmp.ge.s32.totalorder %v4712, 0
  %vm4777 = vcmp.ge.s32.totalorder %v4713, 0
  %vm4778 = vcmp.ge.s32.totalorder %v4714, 0
  %vm4779 = vcmp.ge.s32.totalorder %v4715, 0
  %vm4780 = vcmp.ge.s32.totalorder %v4716, 0
  %vm4781 = vcmp.ge.s32.totalorder %v4717, 0
  %vm4782 = vcmp.ge.s32.totalorder %v4718, 0
  %vm4783 = vcmp.ge.s32.totalorder %v4719, 0
  %vm4784 = vcmp.ge.s32.totalorder %v4720, 0
  %vm4785 = vcmp.ge.s32.totalorder %v4721, 0
  %vm4786 = vcmp.ge.s32.totalorder %v4722, 0
  %vm4787 = vcmp.ge.s32.totalorder %v4723, 0
  %vm4788 = vcmp.ge.s32.totalorder %v4724, 0
  %vm4789 = vcmp.ge.s32.totalorder %v4725, 0
  %vm4790 = vcmp.ge.s32.totalorder %v4726, 0
  %vm4791 = vcmp.ge.s32.totalorder %v4727, 0
  %vm4792 = vcmp.ge.s32.totalorder %v4728, 0
  %vm4793 = vcmp.ge.s32.totalorder %v4729, 0
  %vm4794 = vcmp.ge.s32.totalorder %v4730, 0
  %vm4795 = vcmp.ge.s32.totalorder %v4731, 0
  %vm4796 = vcmp.ge.s32.totalorder %v4732, 0
  %vm4797 = vcmp.ge.s32.totalorder %v4733, 0
  %vm4798 = vcmp.ge.s32.totalorder %v4734, 0
  %vm4799 = vcmp.ge.s32.totalorder %v4735, 0
  %vm4800 = vcmp.ge.s32.totalorder %v4736, 0
  %vm4801 = vcmp.ge.s32.totalorder %v4737, 0
  %vm4802 = vcmp.ge.s32.totalorder %v4738, 0
  %vm4803 = vcmp.ge.s32.totalorder %v4739, 0
  %vm4804 = vcmp.ge.s32.totalorder %v4740, 0
  %vm4805 = vcmp.ge.s32.totalorder %v4741, 0
  %vm4806 = vcmp.ge.s32.totalorder %v4742, 0
  %vm4807 = vcmp.ge.s32.totalorder %v4743, 0
  %vm4808 = vcmp.ge.s32.totalorder %v4744, 0
  %vm4809 = vcmp.ge.s32.totalorder %v4745, 0
  %vm4810 = vcmp.ge.s32.totalorder %v4746, 0
  %vm4811 = vcmp.ge.s32.totalorder %v4747, 0
  %vm4812 = vcmp.ge.s32.totalorder %v4748, 0
  %vm4813 = vcmp.ge.s32.totalorder %v4749, 0
  %vm4814 = vcmp.ge.s32.totalorder %v4750, 0
  %vm4815 = vcmp.ge.s32.totalorder %v4751, 0
  %vm4816 = vcmp.ge.s32.totalorder %v4752, 0
  %vm4817 = vcmp.ge.s32.totalorder %v4753, 0
  %vm4818 = vcmp.ge.s32.totalorder %v4754, 0
  %vm4819 = vcmp.lt.s32.totalorder %v4691, 64
  %vm4820 = vcmp.lt.s32.totalorder %v4692, 64
  %vm4821 = vcmp.lt.s32.totalorder %v4693, 64
  %vm4822 = vcmp.lt.s32.totalorder %v4694, 64
  %vm4823 = vcmp.lt.s32.totalorder %v4695, 64
  %vm4824 = vcmp.lt.s32.totalorder %v4696, 64
  %vm4825 = vcmp.lt.s32.totalorder %v4697, 64
  %vm4826 = vcmp.lt.s32.totalorder %v4698, 64
  %vm4827 = vcmp.lt.s32.totalorder %v4699, 64
  %vm4828 = vcmp.lt.s32.totalorder %v4700, 64
  %vm4829 = vcmp.lt.s32.totalorder %v4701, 64
  %vm4830 = vcmp.lt.s32.totalorder %v4702, 64
  %vm4831 = vcmp.lt.s32.totalorder %v4703, 64
  %vm4832 = vcmp.lt.s32.totalorder %v4704, 64
  %vm4833 = vcmp.lt.s32.totalorder %v4705, 64
  %vm4834 = vcmp.lt.s32.totalorder %v4706, 64
  %vm4835 = vcmp.lt.s32.totalorder %v4707, 64
  %vm4836 = vcmp.lt.s32.totalorder %v4708, 64
  %vm4837 = vcmp.lt.s32.totalorder %v4709, 64
  %vm4838 = vcmp.lt.s32.totalorder %v4710, 64
  %vm4839 = vcmp.lt.s32.totalorder %v4711, 64
  %vm4840 = vcmp.lt.s32.totalorder %v4712, 64
  %vm4841 = vcmp.lt.s32.totalorder %v4713, 64
  %vm4842 = vcmp.lt.s32.totalorder %v4714, 64
  %vm4843 = vcmp.lt.s32.totalorder %v4715, 64
  %vm4844 = vcmp.lt.s32.totalorder %v4716, 64
  %vm4845 = vcmp.lt.s32.totalorder %v4717, 64
  %vm4846 = vcmp.lt.s32.totalorder %v4718, 64
  %vm4847 = vcmp.lt.s32.totalorder %v4719, 64
  %vm4848 = vcmp.lt.s32.totalorder %v4720, 64
  %vm4849 = vcmp.lt.s32.totalorder %v4721, 64
  %vm4850 = vcmp.lt.s32.totalorder %v4722, 64
  %vm4851 = vcmp.lt.s32.totalorder %v4723, 64
  %vm4852 = vcmp.lt.s32.totalorder %v4724, 64
  %vm4853 = vcmp.lt.s32.totalorder %v4725, 64
  %vm4854 = vcmp.lt.s32.totalorder %v4726, 64
  %vm4855 = vcmp.lt.s32.totalorder %v4727, 64
  %vm4856 = vcmp.lt.s32.totalorder %v4728, 64
  %vm4857 = vcmp.lt.s32.totalorder %v4729, 64
  %vm4858 = vcmp.lt.s32.totalorder %v4730, 64
  %vm4859 = vcmp.lt.s32.totalorder %v4731, 64
  %vm4860 = vcmp.lt.s32.totalorder %v4732, 64
  %vm4861 = vcmp.lt.s32.totalorder %v4733, 64
  %vm4862 = vcmp.lt.s32.totalorder %v4734, 64
  %vm4863 = vcmp.lt.s32.totalorder %v4735, 64
  %vm4864 = vcmp.lt.s32.totalorder %v4736, 64
  %vm4865 = vcmp.lt.s32.totalorder %v4737, 64
  %vm4866 = vcmp.lt.s32.totalorder %v4738, 64
  %vm4867 = vcmp.lt.s32.totalorder %v4739, 64
  %vm4868 = vcmp.lt.s32.totalorder %v4740, 64
  %vm4869 = vcmp.lt.s32.totalorder %v4741, 64
  %vm4870 = vcmp.lt.s32.totalorder %v4742, 64
  %vm4871 = vcmp.lt.s32.totalorder %v4743, 64
  %vm4872 = vcmp.lt.s32.totalorder %v4744, 64
  %vm4873 = vcmp.lt.s32.totalorder %v4745, 64
  %vm4874 = vcmp.lt.s32.totalorder %v4746, 64
  %vm4875 = vcmp.lt.s32.totalorder %v4747, 64
  %vm4876 = vcmp.lt.s32.totalorder %v4748, 64
  %vm4877 = vcmp.lt.s32.totalorder %v4749, 64
  %vm4878 = vcmp.lt.s32.totalorder %v4750, 64
  %vm4879 = vcmp.lt.s32.totalorder %v4751, 64
  %vm4880 = vcmp.lt.s32.totalorder %v4752, 64
  %vm4881 = vcmp.lt.s32.totalorder %v4753, 64
  %vm4882 = vcmp.lt.s32.totalorder %v4754, 64
  %vm4883 = vmand %vm4755, %vm4819
  %vm4884 = vmand %vm4756, %vm4820
  %vm4885 = vmand %vm4757, %vm4821
  %vm4886 = vmand %vm4758, %vm4822
  %vm4887 = vmand %vm4759, %vm4823
  %vm4888 = vmand %vm4760, %vm4824
  %vm4889 = vmand %vm4761, %vm4825
  %vm4890 = vmand %vm4762, %vm4826
  %vm4891 = vmand %vm4763, %vm4827
  %vm4892 = vmand %vm4764, %vm4828
  %vm4893 = vmand %vm4765, %vm4829
  %vm4894 = vmand %vm4766, %vm4830
  %vm4895 = vmand %vm4767, %vm4831
  %vm4896 = vmand %vm4768, %vm4832
  %vm4897 = vmand %vm4769, %vm4833
  %vm4898 = vmand %vm4770, %vm4834
  %vm4899 = vmand %vm4771, %vm4835
  %vm4900 = vmand %vm4772, %vm4836
  %vm4901 = vmand %vm4773, %vm4837
  %vm4902 = vmand %vm4774, %vm4838
  %vm4903 = vmand %vm4775, %vm4839
  %vm4904 = vmand %vm4776, %vm4840
  %vm4905 = vmand %vm4777, %vm4841
  %vm4906 = vmand %vm4778, %vm4842
  %vm4907 = vmand %vm4779, %vm4843
  %vm4908 = vmand %vm4780, %vm4844
  %vm4909 = vmand %vm4781, %vm4845
  %vm4910 = vmand %vm4782, %vm4846
  %vm4911 = vmand %vm4783, %vm4847
  %vm4912 = vmand %vm4784, %vm4848
  %vm4913 = vmand %vm4785, %vm4849
  %vm4914 = vmand %vm4786, %vm4850
  %vm4915 = vmand %vm4787, %vm4851
  %vm4916 = vmand %vm4788, %vm4852
  %vm4917 = vmand %vm4789, %vm4853
  %vm4918 = vmand %vm4790, %vm4854
  %vm4919 = vmand %vm4791, %vm4855
  %vm4920 = vmand %vm4792, %vm4856
  %vm4921 = vmand %vm4793, %vm4857
  %vm4922 = vmand %vm4794, %vm4858
  %vm4923 = vmand %vm4795, %vm4859
  %vm4924 = vmand %vm4796, %vm4860
  %vm4925 = vmand %vm4797, %vm4861
  %vm4926 = vmand %vm4798, %vm4862
  %vm4927 = vmand %vm4799, %vm4863
  %vm4928 = vmand %vm4800, %vm4864
  %vm4929 = vmand %vm4801, %vm4865
  %vm4930 = vmand %vm4802, %vm4866
  %vm4931 = vmand %vm4803, %vm4867
  %vm4932 = vmand %vm4804, %vm4868
  %vm4933 = vmand %vm4805, %vm4869
  %vm4934 = vmand %vm4806, %vm4870
  %vm4935 = vmand %vm4807, %vm4871
  %vm4936 = vmand %vm4808, %vm4872
  %vm4937 = vmand %vm4809, %vm4873
  %vm4938 = vmand %vm4810, %vm4874
  %vm4939 = vmand %vm4811, %vm4875
  %vm4940 = vmand %vm4812, %vm4876
  %vm4941 = vmand %vm4813, %vm4877
  %vm4942 = vmand %vm4814, %vm4878
  %vm4943 = vmand %vm4815, %vm4879
  %vm4944 = vmand %vm4816, %vm4880
  %vm4945 = vmand %vm4817, %vm4881
  %vm4946 = vmand %vm4818, %vm4882
  %v4947 = vsel %vm4883, 1, 0
  %v4948 = vsel %vm4884, 1, 0
  %v4949 = vsel %vm4885, 1, 0
  %v4950 = vsel %vm4886, 1, 0
  %v4951 = vsel %vm4887, 1, 0
  %v4952 = vsel %vm4888, 1, 0
  %v4953 = vsel %vm4889, 1, 0
  %v4954 = vsel %vm4890, 1, 0
  %v4955 = vsel %vm4891, 1, 0
  %v4956 = vsel %vm4892, 1, 0
  %v4957 = vsel %vm4893, 1, 0
  %v4958 = vsel %vm4894, 1, 0
  %v4959 = vsel %vm4895, 1, 0
  %v4960 = vsel %vm4896, 1, 0
  %v4961 = vsel %vm4897, 1, 0
  %v4962 = vsel %vm4898, 1, 0
  %v4963 = vsel %vm4899, 1, 0
  %v4964 = vsel %vm4900, 1, 0
  %v4965 = vsel %vm4901, 1, 0
  %v4966 = vsel %vm4902, 1, 0
  %v4967 = vsel %vm4903, 1, 0
  %v4968 = vsel %vm4904, 1, 0
  %v4969 = vsel %vm4905, 1, 0
  %v4970 = vsel %vm4906, 1, 0
  %v4971 = vsel %vm4907, 1, 0
  %v4972 = vsel %vm4908, 1, 0
  %v4973 = vsel %vm4909, 1, 0
  %v4974 = vsel %vm4910, 1, 0
  %v4975 = vsel %vm4911, 1, 0
  %v4976 = vsel %vm4912, 1, 0
  %v4977 = vsel %vm4913, 1, 0
  %v4978 = vsel %vm4914, 1, 0
  %v4979 = vsel %vm4915, 1, 0
  %v4980 = vsel %vm4916, 1, 0
  %v4981 = vsel %vm4917, 1, 0
  %v4982 = vsel %vm4918, 1, 0
  %v4983 = vsel %vm4919, 1, 0
  %v4984 = vsel %vm4920, 1, 0
  %v4985 = vsel %vm4921, 1, 0
  %v4986 = vsel %vm4922, 1, 0
  %v4987 = vsel %vm4923, 1, 0
  %v4988 = vsel %vm4924, 1, 0
  %v4989 = vsel %vm4925, 1, 0
  %v4990 = vsel %vm4926, 1, 0
  %v4991 = vsel %vm4927, 1, 0
  %v4992 = vsel %vm4928, 1, 0
  %v4993 = vsel %vm4929, 1, 0
  %v4994 = vsel %vm4930, 1, 0
  %v4995 = vsel %vm4931, 1, 0
  %v4996 = vsel %vm4932, 1, 0
  %v4997 = vsel %vm4933, 1, 0
  %v4998 = vsel %vm4934, 1, 0
  %v4999 = vsel %vm4935, 1, 0
  %v5000 = vsel %vm4936, 1, 0
  %v5001 = vsel %vm4937, 1, 0
  %v5002 = vsel %vm4938, 1, 0
  %v5003 = vsel %vm4939, 1, 0
  %v5004 = vsel %vm4940, 1, 0
  %v5005 = vsel %vm4941, 1, 0
  %v5006 = vsel %vm4942, 1, 0
  %v5007 = vsel %vm4943, 1, 0
  %v5008 = vsel %vm4944, 1, 0
  %v5009 = vsel %vm4945, 1, 0
  %v5010 = vsel %vm4946, 1, 0
  %vm5011 = vcmp.eq.s32.totalorder %v4947, 1
  %vm5012 = vcmp.eq.s32.totalorder %v4948, 1
  %vm5013 = vcmp.eq.s32.totalorder %v4949, 1
  %vm5014 = vcmp.eq.s32.totalorder %v4950, 1
  %vm5015 = vcmp.eq.s32.totalorder %v4951, 1
  %vm5016 = vcmp.eq.s32.totalorder %v4952, 1
  %vm5017 = vcmp.eq.s32.totalorder %v4953, 1
  %vm5018 = vcmp.eq.s32.totalorder %v4954, 1
  %vm5019 = vcmp.eq.s32.totalorder %v4955, 1
  %vm5020 = vcmp.eq.s32.totalorder %v4956, 1
  %vm5021 = vcmp.eq.s32.totalorder %v4957, 1
  %vm5022 = vcmp.eq.s32.totalorder %v4958, 1
  %vm5023 = vcmp.eq.s32.totalorder %v4959, 1
  %vm5024 = vcmp.eq.s32.totalorder %v4960, 1
  %vm5025 = vcmp.eq.s32.totalorder %v4961, 1
  %vm5026 = vcmp.eq.s32.totalorder %v4962, 1
  %vm5027 = vcmp.eq.s32.totalorder %v4963, 1
  %vm5028 = vcmp.eq.s32.totalorder %v4964, 1
  %vm5029 = vcmp.eq.s32.totalorder %v4965, 1
  %vm5030 = vcmp.eq.s32.totalorder %v4966, 1
  %vm5031 = vcmp.eq.s32.totalorder %v4967, 1
  %vm5032 = vcmp.eq.s32.totalorder %v4968, 1
  %vm5033 = vcmp.eq.s32.totalorder %v4969, 1
  %vm5034 = vcmp.eq.s32.totalorder %v4970, 1
  %vm5035 = vcmp.eq.s32.totalorder %v4971, 1
  %vm5036 = vcmp.eq.s32.totalorder %v4972, 1
  %vm5037 = vcmp.eq.s32.totalorder %v4973, 1
  %vm5038 = vcmp.eq.s32.totalorder %v4974, 1
  %vm5039 = vcmp.eq.s32.totalorder %v4975, 1
  %vm5040 = vcmp.eq.s32.totalorder %v4976, 1
  %vm5041 = vcmp.eq.s32.totalorder %v4977, 1
  %vm5042 = vcmp.eq.s32.totalorder %v4978, 1
  %vm5043 = vcmp.eq.s32.totalorder %v4979, 1
  %vm5044 = vcmp.eq.s32.totalorder %v4980, 1
  %vm5045 = vcmp.eq.s32.totalorder %v4981, 1
  %vm5046 = vcmp.eq.s32.totalorder %v4982, 1
  %vm5047 = vcmp.eq.s32.totalorder %v4983, 1
  %vm5048 = vcmp.eq.s32.totalorder %v4984, 1
  %vm5049 = vcmp.eq.s32.totalorder %v4985, 1
  %vm5050 = vcmp.eq.s32.totalorder %v4986, 1
  %vm5051 = vcmp.eq.s32.totalorder %v4987, 1
  %vm5052 = vcmp.eq.s32.totalorder %v4988, 1
  %vm5053 = vcmp.eq.s32.totalorder %v4989, 1
  %vm5054 = vcmp.eq.s32.totalorder %v4990, 1
  %vm5055 = vcmp.eq.s32.totalorder %v4991, 1
  %vm5056 = vcmp.eq.s32.totalorder %v4992, 1
  %vm5057 = vcmp.eq.s32.totalorder %v4993, 1
  %vm5058 = vcmp.eq.s32.totalorder %v4994, 1
  %vm5059 = vcmp.eq.s32.totalorder %v4995, 1
  %vm5060 = vcmp.eq.s32.totalorder %v4996, 1
  %vm5061 = vcmp.eq.s32.totalorder %v4997, 1
  %vm5062 = vcmp.eq.s32.totalorder %v4998, 1
  %vm5063 = vcmp.eq.s32.totalorder %v4999, 1
  %vm5064 = vcmp.eq.s32.totalorder %v5000, 1
  %vm5065 = vcmp.eq.s32.totalorder %v5001, 1
  %vm5066 = vcmp.eq.s32.totalorder %v5002, 1
  %vm5067 = vcmp.eq.s32.totalorder %v5003, 1
  %vm5068 = vcmp.eq.s32.totalorder %v5004, 1
  %vm5069 = vcmp.eq.s32.totalorder %v5005, 1
  %vm5070 = vcmp.eq.s32.totalorder %v5006, 1
  %vm5071 = vcmp.eq.s32.totalorder %v5007, 1
  %vm5072 = vcmp.eq.s32.totalorder %v5008, 1
  %vm5073 = vcmp.eq.s32.totalorder %v5009, 1
  %vm5074 = vcmp.eq.s32.totalorder %v5010, 1
  %v5075 = vsel %vm5011, %v4689, 0.0
  %v5076 = vsel %vm5012, %v4688, 0.0
  %v5077 = vsel %vm5013, %v4687, 0.0
  %v5078 = vsel %vm5014, %v4686, 0.0
  %v5079 = vsel %vm5015, %v4685, 0.0
  %v5080 = vsel %vm5016, %v4684, 0.0
  %v5081 = vsel %vm5017, %v4683, 0.0
  %v5082 = vsel %vm5018, %v4682, 0.0
  %v5083 = vsel %vm5019, %v4681, 0.0
  %v5084 = vsel %vm5020, %v4680, 0.0
  %v5085 = vsel %vm5021, %v4679, 0.0
  %v5086 = vsel %vm5022, %v4678, 0.0
  %v5087 = vsel %vm5023, %v4677, 0.0
  %v5088 = vsel %vm5024, %v4676, 0.0
  %v5089 = vsel %vm5025, %v4675, 0.0
  %v5090 = vsel %vm5026, %v4674, 0.0
  %v5091 = vsel %vm5027, %v4673, 0.0
  %v5092 = vsel %vm5028, %v4672, 0.0
  %v5093 = vsel %vm5029, %v4671, 0.0
  %v5094 = vsel %vm5030, %v4670, 0.0
  %v5095 = vsel %vm5031, %v4669, 0.0
  %v5096 = vsel %vm5032, %v4668, 0.0
  %v5097 = vsel %vm5033, %v4667, 0.0
  %v5098 = vsel %vm5034, %v4666, 0.0
  %v5099 = vsel %vm5035, %v4665, 0.0
  %v5100 = vsel %vm5036, %v4664, 0.0
  %v5101 = vsel %vm5037, %v4663, 0.0
  %v5102 = vsel %vm5038, %v4662, 0.0
  %v5103 = vsel %vm5039, %v4661, 0.0
  %v5104 = vsel %vm5040, %v4660, 0.0
  %v5105 = vsel %vm5041, %v4659, 0.0
  %v5106 = vsel %vm5042, %v4658, 0.0
  %v5107 = vsel %vm5043, %v4657, 0.0
  %v5108 = vsel %vm5044, %v4656, 0.0
  %v5109 = vsel %vm5045, %v4655, 0.0
  %v5110 = vsel %vm5046, %v4654, 0.0
  %v5111 = vsel %vm5047, %v4653, 0.0
  %v5112 = vsel %vm5048, %v4652, 0.0
  %v5113 = vsel %vm5049, %v4651, 0.0
  %v5114 = vsel %vm5050, %v4650, 0.0
  %v5115 = vsel %vm5051, %v4649, 0.0
  %v5116 = vsel %vm5052, %v4648, 0.0
  %v5117 = vsel %vm5053, %v4647, 0.0
  %v5118 = vsel %vm5054, %v4646, 0.0
  %v5119 = vsel %vm5055, %v4645, 0.0
  %v5120 = vsel %vm5056, %v4644, 0.0
  %v5121 = vsel %vm5057, %v4643, 0.0
  %v5122 = vsel %vm5058, %v4642, 0.0
  %v5123 = vsel %vm5059, %v4641, 0.0
  %v5124 = vsel %vm5060, %v4640, 0.0
  %v5125 = vsel %vm5061, %v4639, 0.0
  %v5126 = vsel %vm5062, %v4638, 0.0
  %v5127 = vsel %vm5063, %v4637, 0.0
  %v5128 = vsel %vm5064, %v4636, 0.0
  %v5129 = vsel %vm5065, %v4635, 0.0
  %v5130 = vsel %vm5066, %v4634, 0.0
  %v5131 = vsel %vm5067, %v4633, 0.0
  %v5132 = vsel %vm5068, %v4632, 0.0
  %v5133 = vsel %vm5069, %v4631, 0.0
  %v5134 = vsel %vm5070, %v4630, 0.0
  %v5135 = vsel %vm5071, %v4629, 0.0
  %v5136 = vsel %vm5072, %v4628, 0.0
  %v5137 = vsel %vm5073, %v4627, 0.0
  %v5138 = vsel %vm5074, %v4690, 0.0
  %s5139 = scalar_lea.vmem %s2, 768
  %v5140 = vld [vmem:[%s5139] sm:$0xff]
  %v5141 = vld [vmem:[%s5139 + $0x8] sm:$0xff]
  %v5142 = vld [vmem:[%s5139 + $0x10] sm:$0xff]
  %v5143 = vld [vmem:[%s5139 + $0x18] sm:$0xff]
  %v5144 = vld [vmem:[%s5139 + $0x20] sm:$0xff]
  %v5145 = vld [vmem:[%s5139 + $0x28] sm:$0xff]
  %v5146 = vld [vmem:[%s5139 + $0x30] sm:$0xff]
  %v5147 = vld [vmem:[%s5139 + $0x38] sm:$0xff]
  %v5148 = vld [vmem:[%s5139 + $0x40] sm:$0xff]
  %v5149 = vld [vmem:[%s5139 + $0x48] sm:$0xff]
  %v5150 = vld [vmem:[%s5139 + $0x50] sm:$0xff]
  %v5151 = vld [vmem:[%s5139 + $0x58] sm:$0xff]
  %v5152 = vld [vmem:[%s5139 + $0x60] sm:$0xff]
  %v5153 = vld [vmem:[%s5139 + $0x68] sm:$0xff]
  %v5154 = vld [vmem:[%s5139 + $0x70] sm:$0xff]
  %v5155 = vld [vmem:[%s5139 + $0x78] sm:$0xff]
  %v5156 = vld [vmem:[%s5139 + $0x80] sm:$0xff]
  %v5157 = vld [vmem:[%s5139 + $0x88] sm:$0xff]
  %v5158 = vld [vmem:[%s5139 + $0x90] sm:$0xff]
  %v5159 = vld [vmem:[%s5139 + $0x98] sm:$0xff]
  %v5160 = vld [vmem:[%s5139 + $0xa0] sm:$0xff]
  %v5161 = vld [vmem:[%s5139 + $0xa8] sm:$0xff]
  %v5162 = vld [vmem:[%s5139 + $0xb0] sm:$0xff]
  %v5163 = vld [vmem:[%s5139 + $0xb8] sm:$0xff]
  %v5164 = vld [vmem:[%s5139 + $0xc0] sm:$0xff]
  %v5165 = vld [vmem:[%s5139 + $0xc8] sm:$0xff]
  %v5166 = vld [vmem:[%s5139 + $0xd0] sm:$0xff]
  %v5167 = vld [vmem:[%s5139 + $0xd8] sm:$0xff]
  %v5168 = vld [vmem:[%s5139 + $0xe0] sm:$0xff]
  %v5169 = vld [vmem:[%s5139 + $0xe8] sm:$0xff]
  %v5170 = vld [vmem:[%s5139 + $0xf0] sm:$0xff]
  %v5171 = vld [vmem:[%s5139 + $0xf8] sm:$0xff]
  %5172 = vmatprep.subr.mxu0 %v5141
  %5173 = vmatpush1.msra.mxu0 %v5140
  %5174 = vmatprep.subr.mxu0 %v5143
  %5175 = vmatpush1.msra.mxu0 %v5142
  %5176 = vmatprep.subr.mxu0 %v5145
  %5177 = vmatpush1.msra.mxu0 %v5144
  %5178 = vmatprep.subr.mxu0 %v5147
  %5179 = vmatpush1.msra.mxu0 %v5146
  %5180 = vmatprep.subr.mxu0 %v5149
  %5181 = vmatpush1.msra.mxu0 %v5148
  %5182 = vmatprep.subr.mxu0 %v5151
  %5183 = vmatpush1.msra.mxu0 %v5150
  %5184 = vmatprep.subr.mxu0 %v5153
  %5185 = vmatpush1.msra.mxu0 %v5152
  %5186 = vmatprep.subr.mxu0 %v5155
  %5187 = vmatpush1.msra.mxu0 %v5154
  %5188 = vmatprep.subr.mxu0 %v5157
  %5189 = vmatpush1.msra.mxu0 %v5156
  %5190 = vmatprep.subr.mxu0 %v5159
  %5191 = vmatpush1.msra.mxu0 %v5158
  %5192 = vmatprep.subr.mxu0 %v5161
  %5193 = vmatpush1.msra.mxu0 %v5160
  %5194 = vmatprep.subr.mxu0 %v5163
  %5195 = vmatpush1.msra.mxu0 %v5162
  %5196 = vmatprep.subr.mxu0 %v5165
  %5197 = vmatpush1.msra.mxu0 %v5164
  %5198 = vmatprep.subr.mxu0 %v5167
  %5199 = vmatpush1.msra.mxu0 %v5166
  %5200 = vmatprep.subr.mxu0 %v5169
  %5201 = vmatpush1.msra.mxu0 %v5168
  %5202 = vmatprep.subr.mxu0 %v5171
  %5203 = vmatpush1.msra.mxu0 %v5170
  %5204 = vmatprep.subr.mxu0 0.0
  %5205 = vmatpush1.msra.mxu0 0.0
  %5206 = vmatprep.subr.mxu0 0.0
  %5207 = vmatpush1.msra.mxu0 0.0
  %5208 = vmatprep.subr.mxu0 0.0
  %5209 = vmatpush1.msra.mxu0 0.0
  %5210 = vmatprep.subr.mxu0 0.0
  %5211 = vmatpush1.msra.mxu0 0.0
  %5212 = vmatprep.subr.mxu0 0.0
  %5213 = vmatpush1.msra.mxu0 0.0
  %5214 = vmatprep.subr.mxu0 0.0
  %5215 = vmatpush1.msra.mxu0 0.0
  %5216 = vmatprep.subr.mxu0 0.0
  %5217 = vmatpush1.msra.mxu0 0.0
  %5218 = vmatprep.subr.mxu0 0.0
  %5219 = vmatpush1.msra.mxu0 0.0
  %5220 = vmatprep.subr.mxu0 0.0
  %5221 = vmatpush1.msra.mxu0 0.0
  %5222 = vmatprep.subr.mxu0 0.0
  %5223 = vmatpush1.msra.mxu0 0.0
  %5224 = vmatprep.subr.mxu0 0.0
  %5225 = vmatpush1.msra.mxu0 0.0
  %5226 = vmatprep.subr.mxu0 0.0
  %5227 = vmatpush1.msra.mxu0 0.0
  %5228 = vmatprep.subr.mxu0 0.0
  %5229 = vmatpush1.msra.mxu0 0.0
  %5230 = vmatprep.subr.mxu0 0.0
  %5231 = vmatpush1.msra.mxu0 0.0
  %5232 = vmatprep.subr.mxu0 0.0
  %5233 = vmatpush1.msra.mxu0 0.0
  %5234 = vmatprep.subr.mxu0 0.0
  %5235 = vmatpush1.msra.mxu0 0.0
  %5236 = vmatprep.mubr.f32.mxu0 0.0
  %5237 = vmatmul.mubr.f32.gmra.mrb[0].mxu0 %v5075
  %v5238 = vpop.f32.mrb[0].mxu0
  %v5239 = vadd.f32 0.0, %v5238
  %v5240 = vpop.f32.mrb[0].mxu0
  %v5241 = vadd.f32 0.0, %v5240
  %5242 = vmatprep.mubr.f32.mxu0 0.0
  %5243 = vmatmul.mubr.f32.gmra.mrb[0].mxu0 %v5076
  %v5244 = vpop.f32.mrb[0].mxu0
  %v5245 = vadd.f32 0.0, %v5244
  %v5246 = vpop.f32.mrb[0].mxu0
  %v5247 = vadd.f32 0.0, %v5246
  %5248 = vmatprep.mubr.f32.mxu0 0.0
  %5249 = vmatmul.mubr.f32.gmra.mrb[0].mxu0 %v5077
  %v5250 = vpop.f32.mrb[0].mxu0
  %v5251 = vadd.f32 0.0, %v5250
  %v5252 = vpop.f32.mrb[0].mxu0
  %v5253 = vadd.f32 0.0, %v5252
  %5254 = vmatprep.mubr.f32.mxu0 0.0
  %5255 = vmatmul.mubr.f32.gmra.mrb[0].mxu0 %v5078
  %v5256 = vpop.f32.mrb[0].mxu0
  %v5257 = vadd.f32 0.0, %v5256
  %v5258 = vpop.f32.mrb[0].mxu0
  %v5259 = vadd.f32 0.0, %v5258
  %5260 = vmatprep.mubr.f32.mxu0 0.0
  %5261 = vmatmul.mubr.f32.gmra.mrb[0].mxu0 %v5079
  %v5262 = vpop.f32.mrb[0].mxu0
  %v5263 = vadd.f32 0.0, %v5262
  %v5264 = vpop.f32.mrb[0].mxu0
  %v5265 = vadd.f32 0.0, %v5264
  %5266 = vmatprep.mubr.f32.mxu0 0.0
  %5267 = vmatmul.mubr.f32.gmra.mrb[0].mxu0 %v5080
  %v5268 = vpop.f32.mrb[0].mxu0
  %v5269 = vadd.f32 0.0, %v5268
  %v5270 = vpop.f32.mrb[0].mxu0
  %v5271 = vadd.f32 0.0, %v5270
  %5272 = vmatprep.mubr.f32.mxu0 0.0
  %5273 = vmatmul.mubr.f32.gmra.mrb[0].mxu0 %v5081
  %v5274 = vpop.f32.mrb[0].mxu0
  %v5275 = vadd.f32 0.0, %v5274
  %v5276 = vpop.f32.mrb[0].mxu0
  %v5277 = vadd.f32 0.0, %v5276
  %5278 = vmatprep.mubr.f32.mxu0 0.0
  %5279 = vmatmul.mubr.f32.gmra.mrb[0].mxu0 %v5082
  %v5280 = vpop.f32.mrb[0].mxu0
  %v5281 = vadd.f32 0.0, %v5280
  %v5282 = vpop.f32.mrb[0].mxu0
  %v5283 = vadd.f32 0.0, %v5282
  %5284 = vmatprep.mubr.f32.mxu0 0.0
  %5285 = vmatmul.mubr.f32.gmra.mrb[0].mxu0 %v5083
  %v5286 = vpop.f32.mrb[0].mxu0
  %v5287 = vadd.f32 0.0, %v5286
  %v5288 = vpop.f32.mrb[0].mxu0
  %v5289 = vadd.f32 0.0, %v5288
  %5290 = vmatprep.mubr.f32.mxu0 0.0
  %5291 = vmatmul.mubr.f32.gmra.mrb[0].mxu0 %v5084
  %v5292 = vpop.f32.mrb[0].mxu0
  %v5293 = vadd.f32 0.0, %v5292
  %v5294 = vpop.f32.mrb[0].mxu0
  %v5295 = vadd.f32 0.0, %v5294
  %5296 = vmatprep.mubr.f32.mxu0 0.0
  %5297 = vmatmul.mubr.f32.gmra.mrb[0].mxu0 %v5085
  %v5298 = vpop.f32.mrb[0].mxu0
  %v5299 = vadd.f32 0.0, %v5298
  %v5300 = vpop.f32.mrb[0].mxu0
  %v5301 = vadd.f32 0.0, %v5300
  %5302 = vmatprep.mubr.f32.mxu0 0.0
  %5303 = vmatmul.mubr.f32.gmra.mrb[0].mxu0 %v5086
  %v5304 = vpop.f32.mrb[0].mxu0
  %v5305 = vadd.f32 0.0, %v5304
  %v5306 = vpop.f32.mrb[0].mxu0
  %v5307 = vadd.f32 0.0, %v5306
  %5308 = vmatprep.mubr.f32.mxu0 0.0
  %5309 = vmatmul.mubr.f32.gmra.mrb[0].mxu0 %v5087
  %v5310 = vpop.f32.mrb[0].mxu0
  %v5311 = vadd.f32 0.0, %v5310
  %v5312 = vpop.f32.mrb[0].mxu0
  %v5313 = vadd.f32 0.0, %v5312
  %5314 = vmatprep.mubr.f32.mxu0 0.0
  %5315 = vmatmul.mubr.f32.gmra.mrb[0].mxu0 %v5088
  %v5316 = vpop.f32.mrb[0].mxu0
  %v5317 = vadd.f32 0.0, %v5316
  %v5318 = vpop.f32.mrb[0].mxu0
  %v5319 = vadd.f32 0.0, %v5318
  %5320 = vmatprep.mubr.f32.mxu0 0.0
  %5321 = vmatmul.mubr.f32.gmra.mrb[0].mxu0 %v5089
  %v5322 = vpop.f32.mrb[0].mxu0
  %v5323 = vadd.f32 0.0, %v5322
  %v5324 = vpop.f32.mrb[0].mxu0
  %v5325 = vadd.f32 0.0, %v5324
  %5326 = vmatprep.mubr.f32.mxu0 0.0
  %5327 = vmatmul.mubr.f32.gmra.mrb[0].mxu0 %v5090
  %v5328 = vpop.f32.mrb[0].mxu0
  %v5329 = vadd.f32 0.0, %v5328
  %v5330 = vpop.f32.mrb[0].mxu0
  %v5331 = vadd.f32 0.0, %v5330
  %5332 = vmatprep.mubr.f32.mxu0 0.0
  %5333 = vmatmul.mubr.f32.gmra.mrb[0].mxu0 %v5091
  %v5334 = vpop.f32.mrb[0].mxu0
  %v5335 = vadd.f32 0.0, %v5334
  %v5336 = vpop.f32.mrb[0].mxu0
  %v5337 = vadd.f32 0.0, %v5336
  %5338 = vmatprep.mubr.f32.mxu0 0.0
  %5339 = vmatmul.mubr.f32.gmra.mrb[0].mxu0 %v5092
  %v5340 = vpop.f32.mrb[0].mxu0
  %v5341 = vadd.f32 0.0, %v5340
  %v5342 = vpop.f32.mrb[0].mxu0
  %v5343 = vadd.f32 0.0, %v5342
  %5344 = vmatprep.mubr.f32.mxu0 0.0
  %5345 = vmatmul.mubr.f32.gmra.mrb[0].mxu0 %v5093
  %v5346 = vpop.f32.mrb[0].mxu0
  %v5347 = vadd.f32 0.0, %v5346
  %v5348 = vpop.f32.mrb[0].mxu0
  %v5349 = vadd.f32 0.0, %v5348
  %5350 = vmatprep.mubr.f32.mxu0 0.0
  %5351 = vmatmul.mubr.f32.gmra.mrb[0].mxu0 %v5094
  %v5352 = vpop.f32.mrb[0].mxu0
  %v5353 = vadd.f32 0.0, %v5352
  %v5354 = vpop.f32.mrb[0].mxu0
  %v5355 = vadd.f32 0.0, %v5354
  %5356 = vmatprep.mubr.f32.mxu0 0.0
  %5357 = vmatmul.mubr.f32.gmra.mrb[0].mxu0 %v5095
  %v5358 = vpop.f32.mrb[0].mxu0
  %v5359 = vadd.f32 0.0, %v5358
  %v5360 = vpop.f32.mrb[0].mxu0
  %v5361 = vadd.f32 0.0, %v5360
  %5362 = vmatprep.mubr.f32.mxu0 0.0
  %5363 = vmatmul.mubr.f32.gmra.mrb[0].mxu0 %v5096
  %v5364 = vpop.f32.mrb[0].mxu0
  %v5365 = vadd.f32 0.0, %v5364
  %v5366 = vpop.f32.mrb[0].mxu0
  %v5367 = vadd.f32 0.0, %v5366
  %5368 = vmatprep.mubr.f32.mxu0 0.0
  %5369 = vmatmul.mubr.f32.gmra.mrb[0].mxu0 %v5097
  %v5370 = vpop.f32.mrb[0].mxu0
  %v5371 = vadd.f32 0.0, %v5370
  %v5372 = vpop.f32.mrb[0].mxu0
  %v5373 = vadd.f32 0.0, %v5372
  %5374 = vmatprep.mubr.f32.mxu0 0.0
  %5375 = vmatmul.mubr.f32.gmra.mrb[0].mxu0 %v5098
  %v5376 = vpop.f32.mrb[0].mxu0
  %v5377 = vadd.f32 0.0, %v5376
  %v5378 = vpop.f32.mrb[0].mxu0
  %v5379 = vadd.f32 0.0, %v5378
  %5380 = vmatprep.mubr.f32.mxu0 0.0
  %5381 = vmatmul.mubr.f32.gmra.mrb[0].mxu0 %v5099
  %v5382 = vpop.f32.mrb[0].mxu0
  %v5383 = vadd.f32 0.0, %v5382
  %v5384 = vpop.f32.mrb[0].mxu0
  %v5385 = vadd.f32 0.0, %v5384
  %5386 = vmatprep.mubr.f32.mxu0 0.0
  %5387 = vmatmul.mubr.f32.gmra.mrb[0].mxu0 %v5100
  %v5388 = vpop.f32.mrb[0].mxu0
  %v5389 = vadd.f32 0.0, %v5388
  %v5390 = vpop.f32.mrb[0].mxu0
  %v5391 = vadd.f32 0.0, %v5390
  %5392 = vmatprep.mubr.f32.mxu0 0.0
  %5393 = vmatmul.mubr.f32.gmra.mrb[0].mxu0 %v5101
  %v5394 = vpop.f32.mrb[0].mxu0
  %v5395 = vadd.f32 0.0, %v5394
  %v5396 = vpop.f32.mrb[0].mxu0
  %v5397 = vadd.f32 0.0, %v5396
  %5398 = vmatprep.mubr.f32.mxu0 0.0
  %5399 = vmatmul.mubr.f32.gmra.mrb[0].mxu0 %v5102
  %v5400 = vpop.f32.mrb[0].mxu0
  %v5401 = vadd.f32 0.0, %v5400
  %v5402 = vpop.f32.mrb[0].mxu0
  %v5403 = vadd.f32 0.0, %v5402
  %5404 = vmatprep.mubr.f32.mxu0 0.0
  %5405 = vmatmul.mubr.f32.gmra.mrb[0].mxu0 %v5103
  %v5406 = vpop.f32.mrb[0].mxu0
  %v5407 = vadd.f32 0.0, %v5406
  %v5408 = vpop.f32.mrb[0].mxu0
  %v5409 = vadd.f32 0.0, %v5408
  %5410 = vmatprep.mubr.f32.mxu0 0.0
  %5411 = vmatmul.mubr.f32.gmra.mrb[0].mxu0 %v5104
  %v5412 = vpop.f32.mrb[0].mxu0
  %v5413 = vadd.f32 0.0, %v5412
  %v5414 = vpop.f32.mrb[0].mxu0
  %v5415 = vadd.f32 0.0, %v5414
  %5416 = vmatprep.mubr.f32.mxu0 0.0
  %5417 = vmatmul.mubr.f32.gmra.mrb[0].mxu0 %v5105
  %v5418 = vpop.f32.mrb[0].mxu0
  %v5419 = vadd.f32 0.0, %v5418
  %v5420 = vpop.f32.mrb[0].mxu0
  %v5421 = vadd.f32 0.0, %v5420
  %5422 = vmatprep.mubr.f32.mxu0 0.0
  %5423 = vmatmul.mubr.f32.gmra.mrb[0].mxu0 %v5106
  %v5424 = vpop.f32.mrb[0].mxu0
  %v5425 = vadd.f32 0.0, %v5424
  %v5426 = vpop.f32.mrb[0].mxu0
  %v5427 = vadd.f32 0.0, %v5426
  %5428 = vmatprep.mubr.f32.mxu0 0.0
  %5429 = vmatmul.mubr.f32.gmra.mrb[0].mxu0 %v5107
  %v5430 = vpop.f32.mrb[0].mxu0
  %v5431 = vadd.f32 0.0, %v5430
  %v5432 = vpop.f32.mrb[0].mxu0
  %v5433 = vadd.f32 0.0, %v5432
  %5434 = vmatprep.mubr.f32.mxu0 0.0
  %5435 = vmatmul.mubr.f32.gmra.mrb[0].mxu0 %v5108
  %v5436 = vpop.f32.mrb[0].mxu0
  %v5437 = vadd.f32 0.0, %v5436
  %v5438 = vpop.f32.mrb[0].mxu0
  %v5439 = vadd.f32 0.0, %v5438
  %5440 = vmatprep.mubr.f32.mxu0 0.0
  %5441 = vmatmul.mubr.f32.gmra.mrb[0].mxu0 %v5109
  %v5442 = vpop.f32.mrb[0].mxu0
  %v5443 = vadd.f32 0.0, %v5442
  %v5444 = vpop.f32.mrb[0].mxu0
  %v5445 = vadd.f32 0.0, %v5444
  %5446 = vmatprep.mubr.f32.mxu0 0.0
  %5447 = vmatmul.mubr.f32.gmra.mrb[0].mxu0 %v5110
  %v5448 = vpop.f32.mrb[0].mxu0
  %v5449 = vadd.f32 0.0, %v5448
  %v5450 = vpop.f32.mrb[0].mxu0
  %v5451 = vadd.f32 0.0, %v5450
  %5452 = vmatprep.mubr.f32.mxu0 0.0
  %5453 = vmatmul.mubr.f32.gmra.mrb[0].mxu0 %v5111
  %v5454 = vpop.f32.mrb[0].mxu0
  %v5455 = vadd.f32 0.0, %v5454
  %v5456 = vpop.f32.mrb[0].mxu0
  %v5457 = vadd.f32 0.0, %v5456
  %5458 = vmatprep.mubr.f32.mxu0 0.0
  %5459 = vmatmul.mubr.f32.gmra.mrb[0].mxu0 %v5112
  %v5460 = vpop.f32.mrb[0].mxu0
  %v5461 = vadd.f32 0.0, %v5460
  %v5462 = vpop.f32.mrb[0].mxu0
  %v5463 = vadd.f32 0.0, %v5462
  %5464 = vmatprep.mubr.f32.mxu0 0.0
  %5465 = vmatmul.mubr.f32.gmra.mrb[0].mxu0 %v5113
  %v5466 = vpop.f32.mrb[0].mxu0
  %v5467 = vadd.f32 0.0, %v5466
  %v5468 = vpop.f32.mrb[0].mxu0
  %v5469 = vadd.f32 0.0, %v5468
  %5470 = vmatprep.mubr.f32.mxu0 0.0
  %5471 = vmatmul.mubr.f32.gmra.mrb[0].mxu0 %v5114
  %v5472 = vpop.f32.mrb[0].mxu0
  %v5473 = vadd.f32 0.0, %v5472
  %v5474 = vpop.f32.mrb[0].mxu0
  %v5475 = vadd.f32 0.0, %v5474
  %5476 = vmatprep.mubr.f32.mxu0 0.0
  %5477 = vmatmul.mubr.f32.gmra.mrb[0].mxu0 %v5115
  %v5478 = vpop.f32.mrb[0].mxu0
  %v5479 = vadd.f32 0.0, %v5478
  %v5480 = vpop.f32.mrb[0].mxu0
  %v5481 = vadd.f32 0.0, %v5480
  %5482 = vmatprep.mubr.f32.mxu0 0.0
  %5483 = vmatmul.mubr.f32.gmra.mrb[0].mxu0 %v5116
  %v5484 = vpop.f32.mrb[0].mxu0
  %v5485 = vadd.f32 0.0, %v5484
  %v5486 = vpop.f32.mrb[0].mxu0
  %v5487 = vadd.f32 0.0, %v5486
  %5488 = vmatprep.mubr.f32.mxu0 0.0
  %5489 = vmatmul.mubr.f32.gmra.mrb[0].mxu0 %v5117
  %v5490 = vpop.f32.mrb[0].mxu0
  %v5491 = vadd.f32 0.0, %v5490
  %v5492 = vpop.f32.mrb[0].mxu0
  %v5493 = vadd.f32 0.0, %v5492
  %5494 = vmatprep.mubr.f32.mxu0 0.0
  %5495 = vmatmul.mubr.f32.gmra.mrb[0].mxu0 %v5118
  %v5496 = vpop.f32.mrb[0].mxu0
  %v5497 = vadd.f32 0.0, %v5496
  %v5498 = vpop.f32.mrb[0].mxu0
  %v5499 = vadd.f32 0.0, %v5498
  %5500 = vmatprep.mubr.f32.mxu0 0.0
  %5501 = vmatmul.mubr.f32.gmra.mrb[0].mxu0 %v5119
  %v5502 = vpop.f32.mrb[0].mxu0
  %v5503 = vadd.f32 0.0, %v5502
  %v5504 = vpop.f32.mrb[0].mxu0
  %v5505 = vadd.f32 0.0, %v5504
  %5506 = vmatprep.mubr.f32.mxu0 0.0
  %5507 = vmatmul.mubr.f32.gmra.mrb[0].mxu0 %v5120
  %v5508 = vpop.f32.mrb[0].mxu0
  %v5509 = vadd.f32 0.0, %v5508
  %v5510 = vpop.f32.mrb[0].mxu0
  %v5511 = vadd.f32 0.0, %v5510
  %5512 = vmatprep.mubr.f32.mxu0 0.0
  %5513 = vmatmul.mubr.f32.gmra.mrb[0].mxu0 %v5121
  %v5514 = vpop.f32.mrb[0].mxu0
  %v5515 = vadd.f32 0.0, %v5514
  %v5516 = vpop.f32.mrb[0].mxu0
  %v5517 = vadd.f32 0.0, %v5516
  %5518 = vmatprep.mubr.f32.mxu0 0.0
  %5519 = vmatmul.mubr.f32.gmra.mrb[0].mxu0 %v5122
  %v5520 = vpop.f32.mrb[0].mxu0
  %v5521 = vadd.f32 0.0, %v5520
  %v5522 = vpop.f32.mrb[0].mxu0
  %v5523 = vadd.f32 0.0, %v5522
  %5524 = vmatprep.mubr.f32.mxu0 0.0
  %5525 = vmatmul.mubr.f32.gmra.mrb[0].mxu0 %v5123
  %v5526 = vpop.f32.mrb[0].mxu0
  %v5527 = vadd.f32 0.0, %v5526
  %v5528 = vpop.f32.mrb[0].mxu0
  %v5529 = vadd.f32 0.0, %v5528
  %5530 = vmatprep.mubr.f32.mxu0 0.0
  %5531 = vmatmul.mubr.f32.gmra.mrb[0].mxu0 %v5124
  %v5532 = vpop.f32.mrb[0].mxu0
  %v5533 = vadd.f32 0.0, %v5532
  %v5534 = vpop.f32.mrb[0].mxu0
  %v5535 = vadd.f32 0.0, %v5534
  %5536 = vmatprep.mubr.f32.mxu0 0.0
  %5537 = vmatmul.mubr.f32.gmra.mrb[0].mxu0 %v5125
  %v5538 = vpop.f32.mrb[0].mxu0
  %v5539 = vadd.f32 0.0, %v5538
  %v5540 = vpop.f32.mrb[0].mxu0
  %v5541 = vadd.f32 0.0, %v5540
  %5542 = vmatprep.mubr.f32.mxu0 0.0
  %5543 = vmatmul.mubr.f32.gmra.mrb[0].mxu0 %v5126
  %v5544 = vpop.f32.mrb[0].mxu0
  %v5545 = vadd.f32 0.0, %v5544
  %v5546 = vpop.f32.mrb[0].mxu0
  %v5547 = vadd.f32 0.0, %v5546
  %5548 = vmatprep.mubr.f32.mxu0 0.0
  %5549 = vmatmul.mubr.f32.gmra.mrb[0].mxu0 %v5127
  %v5550 = vpop.f32.mrb[0].mxu0
  %v5551 = vadd.f32 0.0, %v5550
  %v5552 = vpop.f32.mrb[0].mxu0
  %v5553 = vadd.f32 0.0, %v5552
  %5554 = vmatprep.mubr.f32.mxu0 0.0
  %5555 = vmatmul.mubr.f32.gmra.mrb[0].mxu0 %v5128
  %v5556 = vpop.f32.mrb[0].mxu0
  %v5557 = vadd.f32 0.0, %v5556
  %v5558 = vpop.f32.mrb[0].mxu0
  %v5559 = vadd.f32 0.0, %v5558
  %5560 = vmatprep.mubr.f32.mxu0 0.0
  %5561 = vmatmul.mubr.f32.gmra.mrb[0].mxu0 %v5129
  %v5562 = vpop.f32.mrb[0].mxu0
  %v5563 = vadd.f32 0.0, %v5562
  %v5564 = vpop.f32.mrb[0].mxu0
  %v5565 = vadd.f32 0.0, %v5564
  %5566 = vmatprep.mubr.f32.mxu0 0.0
  %5567 = vmatmul.mubr.f32.gmra.mrb[0].mxu0 %v5130
  %v5568 = vpop.f32.mrb[0].mxu0
  %v5569 = vadd.f32 0.0, %v5568
  %v5570 = vpop.f32.mrb[0].mxu0
  %v5571 = vadd.f32 0.0, %v5570
  %5572 = vmatprep.mubr.f32.mxu0 0.0
  %5573 = vmatmul.mubr.f32.gmra.mrb[0].mxu0 %v5131
  %v5574 = vpop.f32.mrb[0].mxu0
  %v5575 = vadd.f32 0.0, %v5574
  %v5576 = vpop.f32.mrb[0].mxu0
  %v5577 = vadd.f32 0.0, %v5576
  %5578 = vmatprep.mubr.f32.mxu0 0.0
  %5579 = vmatmul.mubr.f32.gmra.mrb[0].mxu0 %v5132
  %v5580 = vpop.f32.mrb[0].mxu0
  %v5581 = vadd.f32 0.0, %v5580
  %v5582 = vpop.f32.mrb[0].mxu0
  %v5583 = vadd.f32 0.0, %v5582
  %5584 = vmatprep.mubr.f32.mxu0 0.0
  %5585 = vmatmul.mubr.f32.gmra.mrb[0].mxu0 %v5133
  %v5586 = vpop.f32.mrb[0].mxu0
  %v5587 = vadd.f32 0.0, %v5586
  %v5588 = vpop.f32.mrb[0].mxu0
  %v5589 = vadd.f32 0.0, %v5588
  %5590 = vmatprep.mubr.f32.mxu0 0.0
  %5591 = vmatmul.mubr.f32.gmra.mrb[0].mxu0 %v5134
  %v5592 = vpop.f32.mrb[0].mxu0
  %v5593 = vadd.f32 0.0, %v5592
  %v5594 = vpop.f32.mrb[0].mxu0
  %v5595 = vadd.f32 0.0, %v5594
  %5596 = vmatprep.mubr.f32.mxu0 0.0
  %5597 = vmatmul.mubr.f32.gmra.mrb[0].mxu0 %v5135
  %v5598 = vpop.f32.mrb[0].mxu0
  %v5599 = vadd.f32 0.0, %v5598
  %v5600 = vpop.f32.mrb[0].mxu0
  %v5601 = vadd.f32 0.0, %v5600
  %5602 = vmatprep.mubr.f32.mxu0 0.0
  %5603 = vmatmul.mubr.f32.gmra.mrb[0].mxu0 %v5136
  %v5604 = vpop.f32.mrb[0].mxu0
  %v5605 = vadd.f32 0.0, %v5604
  %v5606 = vpop.f32.mrb[0].mxu0
  %v5607 = vadd.f32 0.0, %v5606
  %5608 = vmatprep.mubr.f32.mxu0 0.0
  %5609 = vmatmul.mubr.f32.gmra.mrb[0].mxu0 %v5137
  %v5610 = vpop.f32.mrb[0].mxu0
  %v5611 = vadd.f32 0.0, %v5610
  %v5612 = vpop.f32.mrb[0].mxu0
  %v5613 = vadd.f32 0.0, %v5612
  %5614 = vmatprep.mubr.f32.mxu0 0.0
  %5615 = vmatmul.mubr.f32.gmra.mrb[0].mxu0 %v5138
  %v5616 = vpop.f32.mrb[0].mxu0
  %v5617 = vadd.f32 0.0, %v5616
  %v5618 = vpop.f32.mrb[0].mxu0
  %v5619 = vadd.f32 0.0, %v5618
  %5620 = vdwg.mxu0
  %v5621 = vadd.f32 %v4434, %v5239
  %v5622 = vadd.f32 %v4435, %v5241
  %v5623 = vadd.f32 %v4436, %v5245
  %v5624 = vadd.f32 %v4437, %v5247
  %v5625 = vadd.f32 %v4438, %v5251
  %v5626 = vadd.f32 %v4439, %v5253
  %v5627 = vadd.f32 %v4440, %v5257
  %v5628 = vadd.f32 %v4441, %v5259
  %v5629 = vadd.f32 %v4442, %v5263
  %v5630 = vadd.f32 %v4443, %v5265
  %v5631 = vadd.f32 %v4444, %v5269
  %v5632 = vadd.f32 %v4445, %v5271
  %v5633 = vadd.f32 %v4446, %v5275
  %v5634 = vadd.f32 %v4447, %v5277
  %v5635 = vadd.f32 %v4448, %v5281
  %v5636 = vadd.f32 %v4449, %v5283
  %v5637 = vadd.f32 %v4450, %v5287
  %v5638 = vadd.f32 %v4451, %v5289
  %v5639 = vadd.f32 %v4452, %v5293
  %v5640 = vadd.f32 %v4453, %v5295
  %v5641 = vadd.f32 %v4454, %v5299
  %v5642 = vadd.f32 %v4455, %v5301
  %v5643 = vadd.f32 %v4456, %v5305
  %v5644 = vadd.f32 %v4457, %v5307
  %v5645 = vadd.f32 %v4458, %v5311
  %v5646 = vadd.f32 %v4459, %v5313
  %v5647 = vadd.f32 %v4460, %v5317
  %v5648 = vadd.f32 %v4461, %v5319
  %v5649 = vadd.f32 %v4462, %v5323
  %v5650 = vadd.f32 %v4463, %v5325
  %v5651 = vadd.f32 %v4464, %v5329
  %v5652 = vadd.f32 %v4465, %v5331
  %v5653 = vadd.f32 %v4466, %v5335
  %v5654 = vadd.f32 %v4467, %v5337
  %v5655 = vadd.f32 %v4468, %v5341
  %v5656 = vadd.f32 %v4469, %v5343
  %v5657 = vadd.f32 %v4470, %v5347
  %v5658 = vadd.f32 %v4471, %v5349
  %v5659 = vadd.f32 %v4472, %v5353
  %v5660 = vadd.f32 %v4473, %v5355
  %v5661 = vadd.f32 %v4474, %v5359
  %v5662 = vadd.f32 %v4475, %v5361
  %v5663 = vadd.f32 %v4476, %v5365
  %v5664 = vadd.f32 %v4477, %v5367
  %v5665 = vadd.f32 %v4478, %v5371
  %v5666 = vadd.f32 %v4479, %v5373
  %v5667 = vadd.f32 %v4480, %v5377
  %v5668 = vadd.f32 %v4481, %v5379
  %v5669 = vadd.f32 %v4482, %v5383
  %v5670 = vadd.f32 %v4483, %v5385
  %v5671 = vadd.f32 %v4484, %v5389
  %v5672 = vadd.f32 %v4485, %v5391
  %v5673 = vadd.f32 %v4486, %v5395
  %v5674 = vadd.f32 %v4487, %v5397
  %v5675 = vadd.f32 %v4488, %v5401
  %v5676 = vadd.f32 %v4489, %v5403
  %v5677 = vadd.f32 %v4490, %v5407
  %v5678 = vadd.f32 %v4491, %v5409
  %v5679 = vadd.f32 %v4492, %v5413
  %v5680 = vadd.f32 %v4493, %v5415
  %v5681 = vadd.f32 %v4494, %v5419
  %v5682 = vadd.f32 %v4495, %v5421
  %v5683 = vadd.f32 %v4496, %v5425
  %v5684 = vadd.f32 %v4497, %v5427
  %v5685 = vadd.f32 %v4498, %v5431
  %v5686 = vadd.f32 %v4499, %v5433
  %v5687 = vadd.f32 %v4500, %v5437
  %v5688 = vadd.f32 %v4501, %v5439
  %v5689 = vadd.f32 %v4502, %v5443
  %v5690 = vadd.f32 %v4503, %v5445
  %v5691 = vadd.f32 %v4504, %v5449
  %v5692 = vadd.f32 %v4505, %v5451
  %v5693 = vadd.f32 %v4506, %v5455
  %v5694 = vadd.f32 %v4507, %v5457
  %v5695 = vadd.f32 %v4508, %v5461
  %v5696 = vadd.f32 %v4509, %v5463
  %v5697 = vadd.f32 %v4510, %v5467
  %v5698 = vadd.f32 %v4511, %v5469
  %v5699 = vadd.f32 %v4512, %v5473
  %v5700 = vadd.f32 %v4513, %v5475
  %v5701 = vadd.f32 %v4514, %v5479
  %v5702 = vadd.f32 %v4515, %v5481
  %v5703 = vadd.f32 %v4516, %v5485
  %v5704 = vadd.f32 %v4517, %v5487
  %v5705 = vadd.f32 %v4518, %v5491
  %v5706 = vadd.f32 %v4519, %v5493
  %v5707 = vadd.f32 %v4520, %v5497
  %v5708 = vadd.f32 %v4521, %v5499
  %v5709 = vadd.f32 %v4522, %v5503
  %v5710 = vadd.f32 %v4523, %v5505
  %v5711 = vadd.f32 %v4524, %v5509
  %v5712 = vadd.f32 %v4525, %v5511
  %v5713 = vadd.f32 %v4526, %v5515
  %v5714 = vadd.f32 %v4527, %v5517
  %v5715 = vadd.f32 %v4528, %v5521
  %v5716 = vadd.f32 %v4529, %v5523
  %v5717 = vadd.f32 %v4530, %v5527
  %v5718 = vadd.f32 %v4531, %v5529
  %v5719 = vadd.f32 %v4532, %v5533
  %v5720 = vadd.f32 %v4533, %v5535
  %v5721 = vadd.f32 %v4534, %v5539
  %v5722 = vadd.f32 %v4535, %v5541
  %v5723 = vadd.f32 %v4536, %v5545
  %v5724 = vadd.f32 %v4537, %v5547
  %v5725 = vadd.f32 %v4538, %v5551
  %v5726 = vadd.f32 %v4539, %v5553
  %v5727 = vadd.f32 %v4540, %v5557
  %v5728 = vadd.f32 %v4541, %v5559
  %v5729 = vadd.f32 %v4542, %v5563
  %v5730 = vadd.f32 %v4543, %v5565
  %v5731 = vadd.f32 %v4544, %v5569
  %v5732 = vadd.f32 %v4545, %v5571
  %v5733 = vadd.f32 %v4546, %v5575
  %v5734 = vadd.f32 %v4547, %v5577
  %v5735 = vadd.f32 %v4548, %v5581
  %v5736 = vadd.f32 %v4549, %v5583
  %v5737 = vadd.f32 %v4550, %v5587
  %v5738 = vadd.f32 %v4551, %v5589
  %v5739 = vadd.f32 %v4552, %v5593
  %v5740 = vadd.f32 %v4553, %v5595
  %v5741 = vadd.f32 %v4554, %v5599
  %v5742 = vadd.f32 %v4555, %v5601
  %v5743 = vadd.f32 %v4556, %v5605
  %v5744 = vadd.f32 %v4557, %v5607
  %v5745 = vadd.f32 %v4558, %v5611
  %v5746 = vadd.f32 %v4559, %v5613
  %v5747 = vadd.f32 %v4560, %v5617
  %v5748 = vadd.f32 %v4561, %v5619
  %v5749 = vrot.slane %v1771, 2
  %v5750 = vrot.slane %v1772, 2
  %v5751 = vrot.slane %v1773, 2
  %v5752 = vrot.slane %v1774, 2
  %v5753 = vrot.slane %v1775, 2
  %v5754 = vrot.slane %v1776, 2
  %v5755 = vrot.slane %v1777, 2
  %v5756 = vrot.slane %v1778, 2
  %v5757 = vrot.slane %v1779, 2
  %v5758 = vrot.slane %v1780, 2
  %v5759 = vrot.slane %v1781, 2
  %v5760 = vrot.slane %v1782, 2
  %v5761 = vrot.slane %v1783, 2
  %v5762 = vrot.slane %v1784, 2
  %v5763 = vrot.slane %v1785, 2
  %v5764 = vrot.slane %v1786, 2
  %v5765 = vrot.slane %v1787, 2
  %v5766 = vrot.slane %v1788, 2
  %v5767 = vrot.slane %v1789, 2
  %v5768 = vrot.slane %v1790, 2
  %v5769 = vrot.slane %v1791, 2
  %v5770 = vrot.slane %v1792, 2
  %v5771 = vrot.slane %v1793, 2
  %v5772 = vrot.slane %v1794, 2
  %v5773 = vrot.slane %v1795, 2
  %v5774 = vrot.slane %v1796, 2
  %v5775 = vrot.slane %v1797, 2
  %v5776 = vrot.slane %v1798, 2
  %v5777 = vrot.slane %v1799, 2
  %v5778 = vrot.slane %v1800, 2
  %v5779 = vrot.slane %v1801, 2
  %v5780 = vrot.slane %v1802, 2
  %v5781 = vrot.slane %v1803, 2
  %v5782 = vrot.slane %v1804, 2
  %v5783 = vrot.slane %v1805, 2
  %v5784 = vrot.slane %v1806, 2
  %v5785 = vrot.slane %v1807, 2
  %v5786 = vrot.slane %v1808, 2
  %v5787 = vrot.slane %v1809, 2
  %v5788 = vrot.slane %v1810, 2
  %v5789 = vrot.slane %v1811, 2
  %v5790 = vrot.slane %v1812, 2
  %v5791 = vrot.slane %v1813, 2
  %v5792 = vrot.slane %v1814, 2
  %v5793 = vrot.slane %v1815, 2
  %v5794 = vrot.slane %v1816, 2
  %v5795 = vrot.slane %v1817, 2
  %v5796 = vrot.slane %v1818, 2
  %v5797 = vrot.slane %v1819, 2
  %v5798 = vrot.slane %v1820, 2
  %v5799 = vrot.slane %v1821, 2
  %v5800 = vrot.slane %v1822, 2
  %v5801 = vrot.slane %v1823, 2
  %v5802 = vrot.slane %v1824, 2
  %v5803 = vrot.slane %v1825, 2
  %v5804 = vrot.slane %v1826, 2
  %v5805 = vrot.slane %v1827, 2
  %v5806 = vrot.slane %v1828, 2
  %v5807 = vrot.slane %v1829, 2
  %v5808 = vrot.slane %v1830, 2
  %v5809 = vrot.slane %v1831, 2
  %v5810 = vrot.slane %v1832, 2
  %v5811 = vrot.slane %v1833, 2
  %v5812 = vrot.slane %v1834, 2
  %vm5813 = vcmp.lt.s32.totalorder %v18, 6
  %v5814 = vsel %vm5813, %v5811, %v5812
  %v5815 = vsel %vm5813, %v5810, %v5811
  %v5816 = vsel %vm5813, %v5809, %v5810
  %v5817 = vsel %vm5813, %v5808, %v5809
  %v5818 = vsel %vm5813, %v5807, %v5808
  %v5819 = vsel %vm5813, %v5806, %v5807
  %v5820 = vsel %vm5813, %v5805, %v5806
  %v5821 = vsel %vm5813, %v5804, %v5805
  %v5822 = vsel %vm5813, %v5803, %v5804
  %v5823 = vsel %vm5813, %v5802, %v5803
  %v5824 = vsel %vm5813, %v5801, %v5802
  %v5825 = vsel %vm5813, %v5800, %v5801
  %v5826 = vsel %vm5813, %v5799, %v5800
  %v5827 = vsel %vm5813, %v5798, %v5799
  %v5828 = vsel %vm5813, %v5797, %v5798
  %v5829 = vsel %vm5813, %v5796, %v5797
  %v5830 = vsel %vm5813, %v5795, %v5796
  %v5831 = vsel %vm5813, %v5794, %v5795
  %v5832 = vsel %vm5813, %v5793, %v5794
  %v5833 = vsel %vm5813, %v5792, %v5793
  %v5834 = vsel %vm5813, %v5791, %v5792
  %v5835 = vsel %vm5813, %v5790, %v5791
  %v5836 = vsel %vm5813, %v5789, %v5790
  %v5837 = vsel %vm5813, %v5788, %v5789
  %v5838 = vsel %vm5813, %v5787, %v5788
  %v5839 = vsel %vm5813, %v5786, %v5787
  %v5840 = vsel %vm5813, %v5785, %v5786
  %v5841 = vsel %vm5813, %v5784, %v5785
  %v5842 = vsel %vm5813, %v5783, %v5784
  %v5843 = vsel %vm5813, %v5782, %v5783
  %v5844 = vsel %vm5813, %v5781, %v5782
  %v5845 = vsel %vm5813, %v5780, %v5781
  %v5846 = vsel %vm5813, %v5779, %v5780
  %v5847 = vsel %vm5813, %v5778, %v5779
  %v5848 = vsel %vm5813, %v5777, %v5778
  %v5849 = vsel %vm5813, %v5776, %v5777
  %v5850 = vsel %vm5813, %v5775, %v5776
  %v5851 = vsel %vm5813, %v5774, %v5775
  %v5852 = vsel %vm5813, %v5773, %v5774
  %v5853 = vsel %vm5813, %v5772, %v5773
  %v5854 = vsel %vm5813, %v5771, %v5772
  %v5855 = vsel %vm5813, %v5770, %v5771
  %v5856 = vsel %vm5813, %v5769, %v5770
  %v5857 = vsel %vm5813, %v5768, %v5769
  %v5858 = vsel %vm5813, %v5767, %v5768
  %v5859 = vsel %vm5813, %v5766, %v5767
  %v5860 = vsel %vm5813, %v5765, %v5766
  %v5861 = vsel %vm5813, %v5764, %v5765
  %v5862 = vsel %vm5813, %v5763, %v5764
  %v5863 = vsel %vm5813, %v5762, %v5763
  %v5864 = vsel %vm5813, %v5761, %v5762
  %v5865 = vsel %vm5813, %v5760, %v5761
  %v5866 = vsel %vm5813, %v5759, %v5760
  %v5867 = vsel %vm5813, %v5758, %v5759
  %v5868 = vsel %vm5813, %v5757, %v5758
  %v5869 = vsel %vm5813, %v5756, %v5757
  %v5870 = vsel %vm5813, %v5755, %v5756
  %v5871 = vsel %vm5813, %v5754, %v5755
  %v5872 = vsel %vm5813, %v5753, %v5754
  %v5873 = vsel %vm5813, %v5752, %v5753
  %v5874 = vsel %vm5813, %v5751, %v5752
  %v5875 = vsel %vm5813, %v5750, %v5751
  %v5876 = vsel %vm5813, %v5749, %v5750
  %v5877 = vsel %vm5813, %v5812, %v5749
  %v5878 = vadd.s32 %v786, 2
  %v5879 = vadd.s32 %v787, 2
  %v5880 = vadd.s32 %v788, 2
  %v5881 = vadd.s32 %v789, 2
  %v5882 = vadd.s32 %v790, 2
  %v5883 = vadd.s32 %v791, 2
  %v5884 = vadd.s32 %v792, 2
  %v5885 = vadd.s32 %v793, 2
  %v5886 = vadd.s32 %v794, 2
  %v5887 = vadd.s32 %v795, 2
  %v5888 = vadd.s32 %v796, 2
  %v5889 = vadd.s32 %v797, 2
  %v5890 = vadd.s32 %v798, 2
  %v5891 = vadd.s32 %v799, 2
  %v5892 = vadd.s32 %v800, 2
  %v5893 = vadd.s32 %v801, 2
  %v5894 = vadd.s32 %v802, 2
  %v5895 = vadd.s32 %v803, 2
  %v5896 = vadd.s32 %v804, 2
  %v5897 = vadd.s32 %v805, 2
  %v5898 = vadd.s32 %v806, 2
  %v5899 = vadd.s32 %v807, 2
  %v5900 = vadd.s32 %v808, 2
  %v5901 = vadd.s32 %v809, 2
  %v5902 = vadd.s32 %v810, 2
  %v5903 = vadd.s32 %v811, 2
  %v5904 = vadd.s32 %v812, 2
  %v5905 = vadd.s32 %v813, 2
  %v5906 = vadd.s32 %v814, 2
  %v5907 = vadd.s32 %v815, 2
  %v5908 = vadd.s32 %v816, 2
  %v5909 = vadd.s32 %v817, 2
  %v5910 = vadd.s32 %v818, 2
  %v5911 = vadd.s32 %v819, 2
  %v5912 = vadd.s32 %v820, 2
  %v5913 = vadd.s32 %v821, 2
  %v5914 = vadd.s32 %v822, 2
  %v5915 = vadd.s32 %v823, 2
  %v5916 = vadd.s32 %v824, 2
  %v5917 = vadd.s32 %v825, 2
  %v5918 = vadd.s32 %v826, 2
  %v5919 = vadd.s32 %v827, 2
  %v5920 = vadd.s32 %v828, 2
  %v5921 = vadd.s32 %v829, 2
  %v5922 = vadd.s32 %v830, 2
  %v5923 = vadd.s32 %v831, 2
  %v5924 = vadd.s32 %v832, 2
  %v5925 = vadd.s32 %v833, 2
  %v5926 = vadd.s32 %v834, 2
  %v5927 = vadd.s32 %v835, 2
  %v5928 = vadd.s32 %v836, 2
  %v5929 = vadd.s32 %v837, 2
  %v5930 = vadd.s32 %v838, 2
  %v5931 = vadd.s32 %v839, 2
  %v5932 = vadd.s32 %v840, 2
  %v5933 = vadd.s32 %v841, 2
  %v5934 = vadd.s32 %v842, 2
  %v5935 = vadd.s32 %v843, 2
  %v5936 = vadd.s32 %v844, 2
  %v5937 = vadd.s32 %v845, 2
  %v5938 = vadd.s32 %v846, 2
  %v5939 = vadd.s32 %v847, 2
  %v5940 = vadd.s32 %v848, 2
  %v5941 = vadd.s32 %v849, 2
  %vm5942 = vcmp.ge.s32.totalorder %v5878, 0
  %vm5943 = vcmp.ge.s32.totalorder %v5879, 0
  %vm5944 = vcmp.ge.s32.totalorder %v5880, 0
  %vm5945 = vcmp.ge.s32.totalorder %v5881, 0
  %vm5946 = vcmp.ge.s32.totalorder %v5882, 0
  %vm5947 = vcmp.ge.s32.totalorder %v5883, 0
  %vm5948 = vcmp.ge.s32.totalorder %v5884, 0
  %vm5949 = vcmp.ge.s32.totalorder %v5885, 0
  %vm5950 = vcmp.ge.s32.totalorder %v5886, 0
  %vm5951 = vcmp.ge.s32.totalorder %v5887, 0
  %vm5952 = vcmp.ge.s32.totalorder %v5888, 0
  %vm5953 = vcmp.ge.s32.totalorder %v5889, 0
  %vm5954 = vcmp.ge.s32.totalorder %v5890, 0
  %vm5955 = vcmp.ge.s32.totalorder %v5891, 0
  %vm5956 = vcmp.ge.s32.totalorder %v5892, 0
  %vm5957 = vcmp.ge.s32.totalorder %v5893, 0
  %vm5958 = vcmp.ge.s32.totalorder %v5894, 0
  %vm5959 = vcmp.ge.s32.totalorder %v5895, 0
  %vm5960 = vcmp.ge.s32.totalorder %v5896, 0
  %vm5961 = vcmp.ge.s32.totalorder %v5897, 0
  %vm5962 = vcmp.ge.s32.totalorder %v5898, 0
  %vm5963 = vcmp.ge.s32.totalorder %v5899, 0
  %vm5964 = vcmp.ge.s32.totalorder %v5900, 0
  %vm5965 = vcmp.ge.s32.totalorder %v5901, 0
  %vm5966 = vcmp.ge.s32.totalorder %v5902, 0
  %vm5967 = vcmp.ge.s32.totalorder %v5903, 0
  %vm5968 = vcmp.ge.s32.totalorder %v5904, 0
  %vm5969 = vcmp.ge.s32.totalorder %v5905, 0
  %vm5970 = vcmp.ge.s32.totalorder %v5906, 0
  %vm5971 = vcmp.ge.s32.totalorder %v5907, 0
  %vm5972 = vcmp.ge.s32.totalorder %v5908, 0
  %vm5973 = vcmp.ge.s32.totalorder %v5909, 0
  %vm5974 = vcmp.ge.s32.totalorder %v5910, 0
  %vm5975 = vcmp.ge.s32.totalorder %v5911, 0
  %vm5976 = vcmp.ge.s32.totalorder %v5912, 0
  %vm5977 = vcmp.ge.s32.totalorder %v5913, 0
  %vm5978 = vcmp.ge.s32.totalorder %v5914, 0
  %vm5979 = vcmp.ge.s32.totalorder %v5915, 0
  %vm5980 = vcmp.ge.s32.totalorder %v5916, 0
  %vm5981 = vcmp.ge.s32.totalorder %v5917, 0
  %vm5982 = vcmp.ge.s32.totalorder %v5918, 0
  %vm5983 = vcmp.ge.s32.totalorder %v5919, 0
  %vm5984 = vcmp.ge.s32.totalorder %v5920, 0
  %vm5985 = vcmp.ge.s32.totalorder %v5921, 0
  %vm5986 = vcmp.ge.s32.totalorder %v5922, 0
  %vm5987 = vcmp.ge.s32.totalorder %v5923, 0
  %vm5988 = vcmp.ge.s32.totalorder %v5924, 0
  %vm5989 = vcmp.ge.s32.totalorder %v5925, 0
  %vm5990 = vcmp.ge.s32.totalorder %v5926, 0
  %vm5991 = vcmp.ge.s32.totalorder %v5927, 0
  %vm5992 = vcmp.ge.s32.totalorder %v5928, 0
  %vm5993 = vcmp.ge.s32.totalorder %v5929, 0
  %vm5994 = vcmp.ge.s32.totalorder %v5930, 0
  %vm5995 = vcmp.ge.s32.totalorder %v5931, 0
  %vm5996 = vcmp.ge.s32.totalorder %v5932, 0
  %vm5997 = vcmp.ge.s32.totalorder %v5933, 0
  %vm5998 = vcmp.ge.s32.totalorder %v5934, 0
  %vm5999 = vcmp.ge.s32.totalorder %v5935, 0
  %vm6000 = vcmp.ge.s32.totalorder %v5936, 0
  %vm6001 = vcmp.ge.s32.totalorder %v5937, 0
  %vm6002 = vcmp.ge.s32.totalorder %v5938, 0
  %vm6003 = vcmp.ge.s32.totalorder %v5939, 0
  %vm6004 = vcmp.ge.s32.totalorder %v5940, 0
  %vm6005 = vcmp.ge.s32.totalorder %v5941, 0
  %vm6006 = vcmp.lt.s32.totalorder %v5878, 64
  %vm6007 = vcmp.lt.s32.totalorder %v5879, 64
  %vm6008 = vcmp.lt.s32.totalorder %v5880, 64
  %vm6009 = vcmp.lt.s32.totalorder %v5881, 64
  %vm6010 = vcmp.lt.s32.totalorder %v5882, 64
  %vm6011 = vcmp.lt.s32.totalorder %v5883, 64
  %vm6012 = vcmp.lt.s32.totalorder %v5884, 64
  %vm6013 = vcmp.lt.s32.totalorder %v5885, 64
  %vm6014 = vcmp.lt.s32.totalorder %v5886, 64
  %vm6015 = vcmp.lt.s32.totalorder %v5887, 64
  %vm6016 = vcmp.lt.s32.totalorder %v5888, 64
  %vm6017 = vcmp.lt.s32.totalorder %v5889, 64
  %vm6018 = vcmp.lt.s32.totalorder %v5890, 64
  %vm6019 = vcmp.lt.s32.totalorder %v5891, 64
  %vm6020 = vcmp.lt.s32.totalorder %v5892, 64
  %vm6021 = vcmp.lt.s32.totalorder %v5893, 64
  %vm6022 = vcmp.lt.s32.totalorder %v5894, 64
  %vm6023 = vcmp.lt.s32.totalorder %v5895, 64
  %vm6024 = vcmp.lt.s32.totalorder %v5896, 64
  %vm6025 = vcmp.lt.s32.totalorder %v5897, 64
  %vm6026 = vcmp.lt.s32.totalorder %v5898, 64
  %vm6027 = vcmp.lt.s32.totalorder %v5899, 64
  %vm6028 = vcmp.lt.s32.totalorder %v5900, 64
  %vm6029 = vcmp.lt.s32.totalorder %v5901, 64
  %vm6030 = vcmp.lt.s32.totalorder %v5902, 64
  %vm6031 = vcmp.lt.s32.totalorder %v5903, 64
  %vm6032 = vcmp.lt.s32.totalorder %v5904, 64
  %vm6033 = vcmp.lt.s32.totalorder %v5905, 64
  %vm6034 = vcmp.lt.s32.totalorder %v5906, 64
  %vm6035 = vcmp.lt.s32.totalorder %v5907, 64
  %vm6036 = vcmp.lt.s32.totalorder %v5908, 64
  %vm6037 = vcmp.lt.s32.totalorder %v5909, 64
  %vm6038 = vcmp.lt.s32.totalorder %v5910, 64
  %vm6039 = vcmp.lt.s32.totalorder %v5911, 64
  %vm6040 = vcmp.lt.s32.totalorder %v5912, 64
  %vm6041 = vcmp.lt.s32.totalorder %v5913, 64
  %vm6042 = vcmp.lt.s32.totalorder %v5914, 64
  %vm6043 = vcmp.lt.s32.totalorder %v5915, 64
  %vm6044 = vcmp.lt.s32.totalorder %v5916, 64
  %vm6045 = vcmp.lt.s32.totalorder %v5917, 64
  %vm6046 = vcmp.lt.s32.totalorder %v5918, 64
  %vm6047 = vcmp.lt.s32.totalorder %v5919, 64
  %vm6048 = vcmp.lt.s32.totalorder %v5920, 64
  %vm6049 = vcmp.lt.s32.totalorder %v5921, 64
  %vm6050 = vcmp.lt.s32.totalorder %v5922, 64
  %vm6051 = vcmp.lt.s32.totalorder %v5923, 64
  %vm6052 = vcmp.lt.s32.totalorder %v5924, 64
  %vm6053 = vcmp.lt.s32.totalorder %v5925, 64
  %vm6054 = vcmp.lt.s32.totalorder %v5926, 64
  %vm6055 = vcmp.lt.s32.totalorder %v5927, 64
  %vm6056 = vcmp.lt.s32.totalorder %v5928, 64
  %vm6057 = vcmp.lt.s32.totalorder %v5929, 64
  %vm6058 = vcmp.lt.s32.totalorder %v5930, 64
  %vm6059 = vcmp.lt.s32.totalorder %v5931, 64
  %vm6060 = vcmp.lt.s32.totalorder %v5932, 64
  %vm6061 = vcmp.lt.s32.totalorder %v5933, 64
  %vm6062 = vcmp.lt.s32.totalorder %v5934, 64
  %vm6063 = vcmp.lt.s32.totalorder %v5935, 64
  %vm6064 = vcmp.lt.s32.totalorder %v5936, 64
  %vm6065 = vcmp.lt.s32.totalorder %v5937, 64
  %vm6066 = vcmp.lt.s32.totalorder %v5938, 64
  %vm6067 = vcmp.lt.s32.totalorder %v5939, 64
  %vm6068 = vcmp.lt.s32.totalorder %v5940, 64
  %vm6069 = vcmp.lt.s32.totalorder %v5941, 64
  %vm6070 = vmand %vm5942, %vm6006
  %vm6071 = vmand %vm5943, %vm6007
  %vm6072 = vmand %vm5944, %vm6008
  %vm6073 = vmand %vm5945, %vm6009
  %vm6074 = vmand %vm5946, %vm6010
  %vm6075 = vmand %vm5947, %vm6011
  %vm6076 = vmand %vm5948, %vm6012
  %vm6077 = vmand %vm5949, %vm6013
  %vm6078 = vmand %vm5950, %vm6014
  %vm6079 = vmand %vm5951, %vm6015
  %vm6080 = vmand %vm5952, %vm6016
  %vm6081 = vmand %vm5953, %vm6017
  %vm6082 = vmand %vm5954, %vm6018
  %vm6083 = vmand %vm5955, %vm6019
  %vm6084 = vmand %vm5956, %vm6020
  %vm6085 = vmand %vm5957, %vm6021
  %vm6086 = vmand %vm5958, %vm6022
  %vm6087 = vmand %vm5959, %vm6023
  %vm6088 = vmand %vm5960, %vm6024
  %vm6089 = vmand %vm5961, %vm6025
  %vm6090 = vmand %vm5962, %vm6026
  %vm6091 = vmand %vm5963, %vm6027
  %vm6092 = vmand %vm5964, %vm6028
  %vm6093 = vmand %vm5965, %vm6029
  %vm6094 = vmand %vm5966, %vm6030
  %vm6095 = vmand %vm5967, %vm6031
  %vm6096 = vmand %vm5968, %vm6032
  %vm6097 = vmand %vm5969, %vm6033
  %vm6098 = vmand %vm5970, %vm6034
  %vm6099 = vmand %vm5971, %vm6035
  %vm6100 = vmand %vm5972, %vm6036
  %vm6101 = vmand %vm5973, %vm6037
  %vm6102 = vmand %vm5974, %vm6038
  %vm6103 = vmand %vm5975, %vm6039
  %vm6104 = vmand %vm5976, %vm6040
  %vm6105 = vmand %vm5977, %vm6041
  %vm6106 = vmand %vm5978, %vm6042
  %vm6107 = vmand %vm5979, %vm6043
  %vm6108 = vmand %vm5980, %vm6044
  %vm6109 = vmand %vm5981, %vm6045
  %vm6110 = vmand %vm5982, %vm6046
  %vm6111 = vmand %vm5983, %vm6047
  %vm6112 = vmand %vm5984, %vm6048
  %vm6113 = vmand %vm5985, %vm6049
  %vm6114 = vmand %vm5986, %vm6050
  %vm6115 = vmand %vm5987, %vm6051
  %vm6116 = vmand %vm5988, %vm6052
  %vm6117 = vmand %vm5989, %vm6053
  %vm6118 = vmand %vm5990, %vm6054
  %vm6119 = vmand %vm5991, %vm6055
  %vm6120 = vmand %vm5992, %vm6056
  %vm6121 = vmand %vm5993, %vm6057
  %vm6122 = vmand %vm5994, %vm6058
  %vm6123 = vmand %vm5995, %vm6059
  %vm6124 = vmand %vm5996, %vm6060
  %vm6125 = vmand %vm5997, %vm6061
  %vm6126 = vmand %vm5998, %vm6062
  %vm6127 = vmand %vm5999, %vm6063
  %vm6128 = vmand %vm6000, %vm6064
  %vm6129 = vmand %vm6001, %vm6065
  %vm6130 = vmand %vm6002, %vm6066
  %vm6131 = vmand %vm6003, %vm6067
  %vm6132 = vmand %vm6004, %vm6068
  %vm6133 = vmand %vm6005, %vm6069
  %v6134 = vsel %vm6070, 1, 0
  %v6135 = vsel %vm6071, 1, 0
  %v6136 = vsel %vm6072, 1, 0
  %v6137 = vsel %vm6073, 1, 0
  %v6138 = vsel %vm6074, 1, 0
  %v6139 = vsel %vm6075, 1, 0
  %v6140 = vsel %vm6076, 1, 0
  %v6141 = vsel %vm6077, 1, 0
  %v6142 = vsel %vm6078, 1, 0
  %v6143 = vsel %vm6079, 1, 0
  %v6144 = vsel %vm6080, 1, 0
  %v6145 = vsel %vm6081, 1, 0
  %v6146 = vsel %vm6082, 1, 0
  %v6147 = vsel %vm6083, 1, 0
  %v6148 = vsel %vm6084, 1, 0
  %v6149 = vsel %vm6085, 1, 0
  %v6150 = vsel %vm6086, 1, 0
  %v6151 = vsel %vm6087, 1, 0
  %v6152 = vsel %vm6088, 1, 0
  %v6153 = vsel %vm6089, 1, 0
  %v6154 = vsel %vm6090, 1, 0
  %v6155 = vsel %vm6091, 1, 0
  %v6156 = vsel %vm6092, 1, 0
  %v6157 = vsel %vm6093, 1, 0
  %v6158 = vsel %vm6094, 1, 0
  %v6159 = vsel %vm6095, 1, 0
  %v6160 = vsel %vm6096, 1, 0
  %v6161 = vsel %vm6097, 1, 0
  %v6162 = vsel %vm6098, 1, 0
  %v6163 = vsel %vm6099, 1, 0
  %v6164 = vsel %vm6100, 1, 0
  %v6165 = vsel %vm6101, 1, 0
  %v6166 = vsel %vm6102, 1, 0
  %v6167 = vsel %vm6103, 1, 0
  %v6168 = vsel %vm6104, 1, 0
  %v6169 = vsel %vm6105, 1, 0
  %v6170 = vsel %vm6106, 1, 0
  %v6171 = vsel %vm6107, 1, 0
  %v6172 = vsel %vm6108, 1, 0
  %v6173 = vsel %vm6109, 1, 0
  %v6174 = vsel %vm6110, 1, 0
  %v6175 = vsel %vm6111, 1, 0
  %v6176 = vsel %vm6112, 1, 0
  %v6177 = vsel %vm6113, 1, 0
  %v6178 = vsel %vm6114, 1, 0
  %v6179 = vsel %vm6115, 1, 0
  %v6180 = vsel %vm6116, 1, 0
  %v6181 = vsel %vm6117, 1, 0
  %v6182 = vsel %vm6118, 1, 0
  %v6183 = vsel %vm6119, 1, 0
  %v6184 = vsel %vm6120, 1, 0
  %v6185 = vsel %vm6121, 1, 0
  %v6186 = vsel %vm6122, 1, 0
  %v6187 = vsel %vm6123, 1, 0
  %v6188 = vsel %vm6124, 1, 0
  %v6189 = vsel %vm6125, 1, 0
  %v6190 = vsel %vm6126, 1, 0
  %v6191 = vsel %vm6127, 1, 0
  %v6192 = vsel %vm6128, 1, 0
  %v6193 = vsel %vm6129, 1, 0
  %v6194 = vsel %vm6130, 1, 0
  %v6195 = vsel %vm6131, 1, 0
  %v6196 = vsel %vm6132, 1, 0
  %v6197 = vsel %vm6133, 1, 0
  %vm6198 = vcmp.eq.s32.totalorder %v6134, 1
  %vm6199 = vcmp.eq.s32.totalorder %v6135, 1
  %vm6200 = vcmp.eq.s32.totalorder %v6136, 1
  %vm6201 = vcmp.eq.s32.totalorder %v6137, 1
  %vm6202 = vcmp.eq.s32.totalorder %v6138, 1
  %vm6203 = vcmp.eq.s32.totalorder %v6139, 1
  %vm6204 = vcmp.eq.s32.totalorder %v6140, 1
  %vm6205 = vcmp.eq.s32.totalorder %v6141, 1
  %vm6206 = vcmp.eq.s32.totalorder %v6142, 1
  %vm6207 = vcmp.eq.s32.totalorder %v6143, 1
  %vm6208 = vcmp.eq.s32.totalorder %v6144, 1
  %vm6209 = vcmp.eq.s32.totalorder %v6145, 1
  %vm6210 = vcmp.eq.s32.totalorder %v6146, 1
  %vm6211 = vcmp.eq.s32.totalorder %v6147, 1
  %vm6212 = vcmp.eq.s32.totalorder %v6148, 1
  %vm6213 = vcmp.eq.s32.totalorder %v6149, 1
  %vm6214 = vcmp.eq.s32.totalorder %v6150, 1
  %vm6215 = vcmp.eq.s32.totalorder %v6151, 1
  %vm6216 = vcmp.eq.s32.totalorder %v6152, 1
  %vm6217 = vcmp.eq.s32.totalorder %v6153, 1
  %vm6218 = vcmp.eq.s32.totalorder %v6154, 1
  %vm6219 = vcmp.eq.s32.totalorder %v6155, 1
  %vm6220 = vcmp.eq.s32.totalorder %v6156, 1
  %vm6221 = vcmp.eq.s32.totalorder %v6157, 1
  %vm6222 = vcmp.eq.s32.totalorder %v6158, 1
  %vm6223 = vcmp.eq.s32.totalorder %v6159, 1
  %vm6224 = vcmp.eq.s32.totalorder %v6160, 1
  %vm6225 = vcmp.eq.s32.totalorder %v6161, 1
  %vm6226 = vcmp.eq.s32.totalorder %v6162, 1
  %vm6227 = vcmp.eq.s32.totalorder %v6163, 1
  %vm6228 = vcmp.eq.s32.totalorder %v6164, 1
  %vm6229 = vcmp.eq.s32.totalorder %v6165, 1
  %vm6230 = vcmp.eq.s32.totalorder %v6166, 1
  %vm6231 = vcmp.eq.s32.totalorder %v6167, 1
  %vm6232 = vcmp.eq.s32.totalorder %v6168, 1
  %vm6233 = vcmp.eq.s32.totalorder %v6169, 1
  %vm6234 = vcmp.eq.s32.totalorder %v6170, 1
  %vm6235 = vcmp.eq.s32.totalorder %v6171, 1
  %vm6236 = vcmp.eq.s32.totalorder %v6172, 1
  %vm6237 = vcmp.eq.s32.totalorder %v6173, 1
  %vm6238 = vcmp.eq.s32.totalorder %v6174, 1
  %vm6239 = vcmp.eq.s32.totalorder %v6175, 1
  %vm6240 = vcmp.eq.s32.totalorder %v6176, 1
  %vm6241 = vcmp.eq.s32.totalorder %v6177, 1
  %vm6242 = vcmp.eq.s32.totalorder %v6178, 1
  %vm6243 = vcmp.eq.s32.totalorder %v6179, 1
  %vm6244 = vcmp.eq.s32.totalorder %v6180, 1
  %vm6245 = vcmp.eq.s32.totalorder %v6181, 1
  %vm6246 = vcmp.eq.s32.totalorder %v6182, 1
  %vm6247 = vcmp.eq.s32.totalorder %v6183, 1
  %vm6248 = vcmp.eq.s32.totalorder %v6184, 1
  %vm6249 = vcmp.eq.s32.totalorder %v6185, 1
  %vm6250 = vcmp.eq.s32.totalorder %v6186, 1
  %vm6251 = vcmp.eq.s32.totalorder %v6187, 1
  %vm6252 = vcmp.eq.s32.totalorder %v6188, 1
  %vm6253 = vcmp.eq.s32.totalorder %v6189, 1
  %vm6254 = vcmp.eq.s32.totalorder %v6190, 1
  %vm6255 = vcmp.eq.s32.totalorder %v6191, 1
  %vm6256 = vcmp.eq.s32.totalorder %v6192, 1
  %vm6257 = vcmp.eq.s32.totalorder %v6193, 1
  %vm6258 = vcmp.eq.s32.totalorder %v6194, 1
  %vm6259 = vcmp.eq.s32.totalorder %v6195, 1
  %vm6260 = vcmp.eq.s32.totalorder %v6196, 1
  %vm6261 = vcmp.eq.s32.totalorder %v6197, 1
  %v6262 = vsel %vm6198, %v5876, 0.0
  %v6263 = vsel %vm6199, %v5875, 0.0
  %v6264 = vsel %vm6200, %v5874, 0.0
  %v6265 = vsel %vm6201, %v5873, 0.0
  %v6266 = vsel %vm6202, %v5872, 0.0
  %v6267 = vsel %vm6203, %v5871, 0.0
  %v6268 = vsel %vm6204, %v5870, 0.0
  %v6269 = vsel %vm6205, %v5869, 0.0
  %v6270 = vsel %vm6206, %v5868, 0.0
  %v6271 = vsel %vm6207, %v5867, 0.0
  %v6272 = vsel %vm6208, %v5866, 0.0
  %v6273 = vsel %vm6209, %v5865, 0.0
  %v6274 = vsel %vm6210, %v5864, 0.0
  %v6275 = vsel %vm6211, %v5863, 0.0
  %v6276 = vsel %vm6212, %v5862, 0.0
  %v6277 = vsel %vm6213, %v5861, 0.0
  %v6278 = vsel %vm6214, %v5860, 0.0
  %v6279 = vsel %vm6215, %v5859, 0.0
  %v6280 = vsel %vm6216, %v5858, 0.0
  %v6281 = vsel %vm6217, %v5857, 0.0
  %v6282 = vsel %vm6218, %v5856, 0.0
  %v6283 = vsel %vm6219, %v5855, 0.0
  %v6284 = vsel %vm6220, %v5854, 0.0
  %v6285 = vsel %vm6221, %v5853, 0.0
  %v6286 = vsel %vm6222, %v5852, 0.0
  %v6287 = vsel %vm6223, %v5851, 0.0
  %v6288 = vsel %vm6224, %v5850, 0.0
  %v6289 = vsel %vm6225, %v5849, 0.0
  %v6290 = vsel %vm6226, %v5848, 0.0
  %v6291 = vsel %vm6227, %v5847, 0.0
  %v6292 = vsel %vm6228, %v5846, 0.0
  %v6293 = vsel %vm6229, %v5845, 0.0
  %v6294 = vsel %vm6230, %v5844, 0.0
  %v6295 = vsel %vm6231, %v5843, 0.0
  %v6296 = vsel %vm6232, %v5842, 0.0
  %v6297 = vsel %vm6233, %v5841, 0.0
  %v6298 = vsel %vm6234, %v5840, 0.0
  %v6299 = vsel %vm6235, %v5839, 0.0
  %v6300 = vsel %vm6236, %v5838, 0.0
  %v6301 = vsel %vm6237, %v5837, 0.0
  %v6302 = vsel %vm6238, %v5836, 0.0
  %v6303 = vsel %vm6239, %v5835, 0.0
  %v6304 = vsel %vm6240, %v5834, 0.0
  %v6305 = vsel %vm6241, %v5833, 0.0
  %v6306 = vsel %vm6242, %v5832, 0.0
  %v6307 = vsel %vm6243, %v5831, 0.0
  %v6308 = vsel %vm6244, %v5830, 0.0
  %v6309 = vsel %vm6245, %v5829, 0.0
  %v6310 = vsel %vm6246, %v5828, 0.0
  %v6311 = vsel %vm6247, %v5827, 0.0
  %v6312 = vsel %vm6248, %v5826, 0.0
  %v6313 = vsel %vm6249, %v5825, 0.0
  %v6314 = vsel %vm6250, %v5824, 0.0
  %v6315 = vsel %vm6251, %v5823, 0.0
  %v6316 = vsel %vm6252, %v5822, 0.0
  %v6317 = vsel %vm6253, %v5821, 0.0
  %v6318 = vsel %vm6254, %v5820, 0.0
  %v6319 = vsel %vm6255, %v5819, 0.0
  %v6320 = vsel %vm6256, %v5818, 0.0
  %v6321 = vsel %vm6257, %v5817, 0.0
  %v6322 = vsel %vm6258, %v5816, 0.0
  %v6323 = vsel %vm6259, %v5815, 0.0
  %v6324 = vsel %vm6260, %v5814, 0.0
  %v6325 = vsel %vm6261, %v5877, 0.0
  %s6326 = scalar_lea.vmem %s2, 1024
  %v6327 = vld [vmem:[%s6326] sm:$0xff]
  %v6328 = vld [vmem:[%s6326 + $0x8] sm:$0xff]
  %v6329 = vld [vmem:[%s6326 + $0x10] sm:$0xff]
  %v6330 = vld [vmem:[%s6326 + $0x18] sm:$0xff]
  %v6331 = vld [vmem:[%s6326 + $0x20] sm:$0xff]
  %v6332 = vld [vmem:[%s6326 + $0x28] sm:$0xff]
  %v6333 = vld [vmem:[%s6326 + $0x30] sm:$0xff]
  %v6334 = vld [vmem:[%s6326 + $0x38] sm:$0xff]
  %v6335 = vld [vmem:[%s6326 + $0x40] sm:$0xff]
  %v6336 = vld [vmem:[%s6326 + $0x48] sm:$0xff]
  %v6337 = vld [vmem:[%s6326 + $0x50] sm:$0xff]
  %v6338 = vld [vmem:[%s6326 + $0x58] sm:$0xff]
  %v6339 = vld [vmem:[%s6326 + $0x60] sm:$0xff]
  %v6340 = vld [vmem:[%s6326 + $0x68] sm:$0xff]
  %v6341 = vld [vmem:[%s6326 + $0x70] sm:$0xff]
  %v6342 = vld [vmem:[%s6326 + $0x78] sm:$0xff]
  %v6343 = vld [vmem:[%s6326 + $0x80] sm:$0xff]
  %v6344 = vld [vmem:[%s6326 + $0x88] sm:$0xff]
  %v6345 = vld [vmem:[%s6326 + $0x90] sm:$0xff]
  %v6346 = vld [vmem:[%s6326 + $0x98] sm:$0xff]
  %v6347 = vld [vmem:[%s6326 + $0xa0] sm:$0xff]
  %v6348 = vld [vmem:[%s6326 + $0xa8] sm:$0xff]
  %v6349 = vld [vmem:[%s6326 + $0xb0] sm:$0xff]
  %v6350 = vld [vmem:[%s6326 + $0xb8] sm:$0xff]
  %v6351 = vld [vmem:[%s6326 + $0xc0] sm:$0xff]
  %v6352 = vld [vmem:[%s6326 + $0xc8] sm:$0xff]
  %v6353 = vld [vmem:[%s6326 + $0xd0] sm:$0xff]
  %v6354 = vld [vmem:[%s6326 + $0xd8] sm:$0xff]
  %v6355 = vld [vmem:[%s6326 + $0xe0] sm:$0xff]
  %v6356 = vld [vmem:[%s6326 + $0xe8] sm:$0xff]
  %v6357 = vld [vmem:[%s6326 + $0xf0] sm:$0xff]
  %v6358 = vld [vmem:[%s6326 + $0xf8] sm:$0xff]
  %6359 = vmatprep.subr.mxu0 %v6328
  %6360 = vmatpush1.msra.mxu0 %v6327
  %6361 = vmatprep.subr.mxu0 %v6330
  %6362 = vmatpush1.msra.mxu0 %v6329
  %6363 = vmatprep.subr.mxu0 %v6332
  %6364 = vmatpush1.msra.mxu0 %v6331
  %6365 = vmatprep.subr.mxu0 %v6334
  %6366 = vmatpush1.msra.mxu0 %v6333
  %6367 = vmatprep.subr.mxu0 %v6336
  %6368 = vmatpush1.msra.mxu0 %v6335
  %6369 = vmatprep.subr.mxu0 %v6338
  %6370 = vmatpush1.msra.mxu0 %v6337
  %6371 = vmatprep.subr.mxu0 %v6340
  %6372 = vmatpush1.msra.mxu0 %v6339
  %6373 = vmatprep.subr.mxu0 %v6342
  %6374 = vmatpush1.msra.mxu0 %v6341
  %6375 = vmatprep.subr.mxu0 %v6344
  %6376 = vmatpush1.msra.mxu0 %v6343
  %6377 = vmatprep.subr.mxu0 %v6346
  %6378 = vmatpush1.msra.mxu0 %v6345
  %6379 = vmatprep.subr.mxu0 %v6348
  %6380 = vmatpush1.msra.mxu0 %v6347
  %6381 = vmatprep.subr.mxu0 %v6350
  %6382 = vmatpush1.msra.mxu0 %v6349
  %6383 = vmatprep.subr.mxu0 %v6352
  %6384 = vmatpush1.msra.mxu0 %v6351
  %6385 = vmatprep.subr.mxu0 %v6354
  %6386 = vmatpush1.msra.mxu0 %v6353
  %6387 = vmatprep.subr.mxu0 %v6356
  %6388 = vmatpush1.msra.mxu0 %v6355
  %6389 = vmatprep.subr.mxu0 %v6358
  %6390 = vmatpush1.msra.mxu0 %v6357
  %6391 = vmatprep.subr.mxu0 0.0
  %6392 = vmatpush1.msra.mxu0 0.0
  %6393 = vmatprep.subr.mxu0 0.0
  %6394 = vmatpush1.msra.mxu0 0.0
  %6395 = vmatprep.subr.mxu0 0.0
  %6396 = vmatpush1.msra.mxu0 0.0
  %6397 = vmatprep.subr.mxu0 0.0
  %6398 = vmatpush1.msra.mxu0 0.0
  %6399 = vmatprep.subr.mxu0 0.0
  %6400 = vmatpush1.msra.mxu0 0.0
  %6401 = vmatprep.subr.mxu0 0.0
  %6402 = vmatpush1.msra.mxu0 0.0
  %6403 = vmatprep.subr.mxu0 0.0
  %6404 = vmatpush1.msra.mxu0 0.0
  %6405 = vmatprep.subr.mxu0 0.0
  %6406 = vmatpush1.msra.mxu0 0.0
  %6407 = vmatprep.subr.mxu0 0.0
  %6408 = vmatpush1.msra.mxu0 0.0
  %6409 = vmatprep.subr.mxu0 0.0
  %6410 = vmatpush1.msra.mxu0 0.0
  %6411 = vmatprep.subr.mxu0 0.0
  %6412 = vmatpush1.msra.mxu0 0.0
  %6413 = vmatprep.subr.mxu0 0.0
  %6414 = vmatpush1.msra.mxu0 0.0
  %6415 = vmatprep.subr.mxu0 0.0
  %6416 = vmatpush1.msra.mxu0 0.0
  %6417 = vmatprep.subr.mxu0 0.0
  %6418 = vmatpush1.msra.mxu0 0.0
  %6419 = vmatprep.subr.mxu0 0.0
  %6420 = vmatpush1.msra.mxu0 0.0
  %6421 = vmatprep.subr.mxu0 0.0
  %6422 = vmatpush1.msra.mxu0 0.0
  %6423 = vmatprep.mubr.f32.mxu0 0.0
  %6424 = vmatmul.mubr.f32.gmra.mrb[0].mxu0 %v6262
  %v6425 = vpop.f32.mrb[0].mxu0
  %v6426 = vadd.f32 0.0, %v6425
  %v6427 = vpop.f32.mrb[0].mxu0
  %v6428 = vadd.f32 0.0, %v6427
  %6429 = vmatprep.mubr.f32.mxu0 0.0
  %6430 = vmatmul.mubr.f32.gmra.mrb[0].mxu0 %v6263
  %v6431 = vpop.f32.mrb[0].mxu0
  %v6432 = vadd.f32 0.0, %v6431
  %v6433 = vpop.f32.mrb[0].mxu0
  %v6434 = vadd.f32 0.0, %v6433
  %6435 = vmatprep.mubr.f32.mxu0 0.0
  %6436 = vmatmul.mubr.f32.gmra.mrb[0].mxu0 %v6264
  %v6437 = vpop.f32.mrb[0].mxu0
  %v6438 = vadd.f32 0.0, %v6437
  %v6439 = vpop.f32.mrb[0].mxu0
  %v6440 = vadd.f32 0.0, %v6439
  %6441 = vmatprep.mubr.f32.mxu0 0.0
  %6442 = vmatmul.mubr.f32.gmra.mrb[0].mxu0 %v6265
  %v6443 = vpop.f32.mrb[0].mxu0
  %v6444 = vadd.f32 0.0, %v6443
  %v6445 = vpop.f32.mrb[0].mxu0
  %v6446 = vadd.f32 0.0, %v6445
  %6447 = vmatprep.mubr.f32.mxu0 0.0
  %6448 = vmatmul.mubr.f32.gmra.mrb[0].mxu0 %v6266
  %v6449 = vpop.f32.mrb[0].mxu0
  %v6450 = vadd.f32 0.0, %v6449
  %v6451 = vpop.f32.mrb[0].mxu0
  %v6452 = vadd.f32 0.0, %v6451
  %6453 = vmatprep.mubr.f32.mxu0 0.0
  %6454 = vmatmul.mubr.f32.gmra.mrb[0].mxu0 %v6267
  %v6455 = vpop.f32.mrb[0].mxu0
  %v6456 = vadd.f32 0.0, %v6455
  %v6457 = vpop.f32.mrb[0].mxu0
  %v6458 = vadd.f32 0.0, %v6457
  %6459 = vmatprep.mubr.f32.mxu0 0.0
  %6460 = vmatmul.mubr.f32.gmra.mrb[0].mxu0 %v6268
  %v6461 = vpop.f32.mrb[0].mxu0
  %v6462 = vadd.f32 0.0, %v6461
  %v6463 = vpop.f32.mrb[0].mxu0
  %v6464 = vadd.f32 0.0, %v6463
  %6465 = vmatprep.mubr.f32.mxu0 0.0
  %6466 = vmatmul.mubr.f32.gmra.mrb[0].mxu0 %v6269
  %v6467 = vpop.f32.mrb[0].mxu0
  %v6468 = vadd.f32 0.0, %v6467
  %v6469 = vpop.f32.mrb[0].mxu0
  %v6470 = vadd.f32 0.0, %v6469
  %6471 = vmatprep.mubr.f32.mxu0 0.0
  %6472 = vmatmul.mubr.f32.gmra.mrb[0].mxu0 %v6270
  %v6473 = vpop.f32.mrb[0].mxu0
  %v6474 = vadd.f32 0.0, %v6473
  %v6475 = vpop.f32.mrb[0].mxu0
  %v6476 = vadd.f32 0.0, %v6475
  %6477 = vmatprep.mubr.f32.mxu0 0.0
  %6478 = vmatmul.mubr.f32.gmra.mrb[0].mxu0 %v6271
  %v6479 = vpop.f32.mrb[0].mxu0
  %v6480 = vadd.f32 0.0, %v6479
  %v6481 = vpop.f32.mrb[0].mxu0
  %v6482 = vadd.f32 0.0, %v6481
  %6483 = vmatprep.mubr.f32.mxu0 0.0
  %6484 = vmatmul.mubr.f32.gmra.mrb[0].mxu0 %v6272
  %v6485 = vpop.f32.mrb[0].mxu0
  %v6486 = vadd.f32 0.0, %v6485
  %v6487 = vpop.f32.mrb[0].mxu0
  %v6488 = vadd.f32 0.0, %v6487
  %6489 = vmatprep.mubr.f32.mxu0 0.0
  %6490 = vmatmul.mubr.f32.gmra.mrb[0].mxu0 %v6273
  %v6491 = vpop.f32.mrb[0].mxu0
  %v6492 = vadd.f32 0.0, %v6491
  %v6493 = vpop.f32.mrb[0].mxu0
  %v6494 = vadd.f32 0.0, %v6493
  %6495 = vmatprep.mubr.f32.mxu0 0.0
  %6496 = vmatmul.mubr.f32.gmra.mrb[0].mxu0 %v6274
  %v6497 = vpop.f32.mrb[0].mxu0
  %v6498 = vadd.f32 0.0, %v6497
  %v6499 = vpop.f32.mrb[0].mxu0
  %v6500 = vadd.f32 0.0, %v6499
  %6501 = vmatprep.mubr.f32.mxu0 0.0
  %6502 = vmatmul.mubr.f32.gmra.mrb[0].mxu0 %v6275
  %v6503 = vpop.f32.mrb[0].mxu0
  %v6504 = vadd.f32 0.0, %v6503
  %v6505 = vpop.f32.mrb[0].mxu0
  %v6506 = vadd.f32 0.0, %v6505
  %6507 = vmatprep.mubr.f32.mxu0 0.0
  %6508 = vmatmul.mubr.f32.gmra.mrb[0].mxu0 %v6276
  %v6509 = vpop.f32.mrb[0].mxu0
  %v6510 = vadd.f32 0.0, %v6509
  %v6511 = vpop.f32.mrb[0].mxu0
  %v6512 = vadd.f32 0.0, %v6511
  %6513 = vmatprep.mubr.f32.mxu0 0.0
  %6514 = vmatmul.mubr.f32.gmra.mrb[0].mxu0 %v6277
  %v6515 = vpop.f32.mrb[0].mxu0
  %v6516 = vadd.f32 0.0, %v6515
  %v6517 = vpop.f32.mrb[0].mxu0
  %v6518 = vadd.f32 0.0, %v6517
  %6519 = vmatprep.mubr.f32.mxu0 0.0
  %6520 = vmatmul.mubr.f32.gmra.mrb[0].mxu0 %v6278
  %v6521 = vpop.f32.mrb[0].mxu0
  %v6522 = vadd.f32 0.0, %v6521
  %v6523 = vpop.f32.mrb[0].mxu0
  %v6524 = vadd.f32 0.0, %v6523
  %6525 = vmatprep.mubr.f32.mxu0 0.0
  %6526 = vmatmul.mubr.f32.gmra.mrb[0].mxu0 %v6279
  %v6527 = vpop.f32.mrb[0].mxu0
  %v6528 = vadd.f32 0.0, %v6527
  %v6529 = vpop.f32.mrb[0].mxu0
  %v6530 = vadd.f32 0.0, %v6529
  %6531 = vmatprep.mubr.f32.mxu0 0.0
  %6532 = vmatmul.mubr.f32.gmra.mrb[0].mxu0 %v6280
  %v6533 = vpop.f32.mrb[0].mxu0
  %v6534 = vadd.f32 0.0, %v6533
  %v6535 = vpop.f32.mrb[0].mxu0
  %v6536 = vadd.f32 0.0, %v6535
  %6537 = vmatprep.mubr.f32.mxu0 0.0
  %6538 = vmatmul.mubr.f32.gmra.mrb[0].mxu0 %v6281
  %v6539 = vpop.f32.mrb[0].mxu0
  %v6540 = vadd.f32 0.0, %v6539
  %v6541 = vpop.f32.mrb[0].mxu0
  %v6542 = vadd.f32 0.0, %v6541
  %6543 = vmatprep.mubr.f32.mxu0 0.0
  %6544 = vmatmul.mubr.f32.gmra.mrb[0].mxu0 %v6282
  %v6545 = vpop.f32.mrb[0].mxu0
  %v6546 = vadd.f32 0.0, %v6545
  %v6547 = vpop.f32.mrb[0].mxu0
  %v6548 = vadd.f32 0.0, %v6547
  %6549 = vmatprep.mubr.f32.mxu0 0.0
  %6550 = vmatmul.mubr.f32.gmra.mrb[0].mxu0 %v6283
  %v6551 = vpop.f32.mrb[0].mxu0
  %v6552 = vadd.f32 0.0, %v6551
  %v6553 = vpop.f32.mrb[0].mxu0
  %v6554 = vadd.f32 0.0, %v6553
  %6555 = vmatprep.mubr.f32.mxu0 0.0
  %6556 = vmatmul.mubr.f32.gmra.mrb[0].mxu0 %v6284
  %v6557 = vpop.f32.mrb[0].mxu0
  %v6558 = vadd.f32 0.0, %v6557
  %v6559 = vpop.f32.mrb[0].mxu0
  %v6560 = vadd.f32 0.0, %v6559
  %6561 = vmatprep.mubr.f32.mxu0 0.0
  %6562 = vmatmul.mubr.f32.gmra.mrb[0].mxu0 %v6285
  %v6563 = vpop.f32.mrb[0].mxu0
  %v6564 = vadd.f32 0.0, %v6563
  %v6565 = vpop.f32.mrb[0].mxu0
  %v6566 = vadd.f32 0.0, %v6565
  %6567 = vmatprep.mubr.f32.mxu0 0.0
  %6568 = vmatmul.mubr.f32.gmra.mrb[0].mxu0 %v6286
  %v6569 = vpop.f32.mrb[0].mxu0
  %v6570 = vadd.f32 0.0, %v6569
  %v6571 = vpop.f32.mrb[0].mxu0
  %v6572 = vadd.f32 0.0, %v6571
  %6573 = vmatprep.mubr.f32.mxu0 0.0
  %6574 = vmatmul.mubr.f32.gmra.mrb[0].mxu0 %v6287
  %v6575 = vpop.f32.mrb[0].mxu0
  %v6576 = vadd.f32 0.0, %v6575
  %v6577 = vpop.f32.mrb[0].mxu0
  %v6578 = vadd.f32 0.0, %v6577
  %6579 = vmatprep.mubr.f32.mxu0 0.0
  %6580 = vmatmul.mubr.f32.gmra.mrb[0].mxu0 %v6288
  %v6581 = vpop.f32.mrb[0].mxu0
  %v6582 = vadd.f32 0.0, %v6581
  %v6583 = vpop.f32.mrb[0].mxu0
  %v6584 = vadd.f32 0.0, %v6583
  %6585 = vmatprep.mubr.f32.mxu0 0.0
  %6586 = vmatmul.mubr.f32.gmra.mrb[0].mxu0 %v6289
  %v6587 = vpop.f32.mrb[0].mxu0
  %v6588 = vadd.f32 0.0, %v6587
  %v6589 = vpop.f32.mrb[0].mxu0
  %v6590 = vadd.f32 0.0, %v6589
  %6591 = vmatprep.mubr.f32.mxu0 0.0
  %6592 = vmatmul.mubr.f32.gmra.mrb[0].mxu0 %v6290
  %v6593 = vpop.f32.mrb[0].mxu0
  %v6594 = vadd.f32 0.0, %v6593
  %v6595 = vpop.f32.mrb[0].mxu0
  %v6596 = vadd.f32 0.0, %v6595
  %6597 = vmatprep.mubr.f32.mxu0 0.0
  %6598 = vmatmul.mubr.f32.gmra.mrb[0].mxu0 %v6291
  %v6599 = vpop.f32.mrb[0].mxu0
  %v6600 = vadd.f32 0.0, %v6599
  %v6601 = vpop.f32.mrb[0].mxu0
  %v6602 = vadd.f32 0.0, %v6601
  %6603 = vmatprep.mubr.f32.mxu0 0.0
  %6604 = vmatmul.mubr.f32.gmra.mrb[0].mxu0 %v6292
  %v6605 = vpop.f32.mrb[0].mxu0
  %v6606 = vadd.f32 0.0, %v6605
  %v6607 = vpop.f32.mrb[0].mxu0
  %v6608 = vadd.f32 0.0, %v6607
  %6609 = vmatprep.mubr.f32.mxu0 0.0
  %6610 = vmatmul.mubr.f32.gmra.mrb[0].mxu0 %v6293
  %v6611 = vpop.f32.mrb[0].mxu0
  %v6612 = vadd.f32 0.0, %v6611
  %v6613 = vpop.f32.mrb[0].mxu0
  %v6614 = vadd.f32 0.0, %v6613
  %6615 = vmatprep.mubr.f32.mxu0 0.0
  %6616 = vmatmul.mubr.f32.gmra.mrb[0].mxu0 %v6294
  %v6617 = vpop.f32.mrb[0].mxu0
  %v6618 = vadd.f32 0.0, %v6617
  %v6619 = vpop.f32.mrb[0].mxu0
  %v6620 = vadd.f32 0.0, %v6619
  %6621 = vmatprep.mubr.f32.mxu0 0.0
  %6622 = vmatmul.mubr.f32.gmra.mrb[0].mxu0 %v6295
  %v6623 = vpop.f32.mrb[0].mxu0
  %v6624 = vadd.f32 0.0, %v6623
  %v6625 = vpop.f32.mrb[0].mxu0
  %v6626 = vadd.f32 0.0, %v6625
  %6627 = vmatprep.mubr.f32.mxu0 0.0
  %6628 = vmatmul.mubr.f32.gmra.mrb[0].mxu0 %v6296
  %v6629 = vpop.f32.mrb[0].mxu0
  %v6630 = vadd.f32 0.0, %v6629
  %v6631 = vpop.f32.mrb[0].mxu0
  %v6632 = vadd.f32 0.0, %v6631
  %6633 = vmatprep.mubr.f32.mxu0 0.0
  %6634 = vmatmul.mubr.f32.gmra.mrb[0].mxu0 %v6297
  %v6635 = vpop.f32.mrb[0].mxu0
  %v6636 = vadd.f32 0.0, %v6635
  %v6637 = vpop.f32.mrb[0].mxu0
  %v6638 = vadd.f32 0.0, %v6637
  %6639 = vmatprep.mubr.f32.mxu0 0.0
  %6640 = vmatmul.mubr.f32.gmra.mrb[0].mxu0 %v6298
  %v6641 = vpop.f32.mrb[0].mxu0
  %v6642 = vadd.f32 0.0, %v6641
  %v6643 = vpop.f32.mrb[0].mxu0
  %v6644 = vadd.f32 0.0, %v6643
  %6645 = vmatprep.mubr.f32.mxu0 0.0
  %6646 = vmatmul.mubr.f32.gmra.mrb[0].mxu0 %v6299
  %v6647 = vpop.f32.mrb[0].mxu0
  %v6648 = vadd.f32 0.0, %v6647
  %v6649 = vpop.f32.mrb[0].mxu0
  %v6650 = vadd.f32 0.0, %v6649
  %6651 = vmatprep.mubr.f32.mxu0 0.0
  %6652 = vmatmul.mubr.f32.gmra.mrb[0].mxu0 %v6300
  %v6653 = vpop.f32.mrb[0].mxu0
  %v6654 = vadd.f32 0.0, %v6653
  %v6655 = vpop.f32.mrb[0].mxu0
  %v6656 = vadd.f32 0.0, %v6655
  %6657 = vmatprep.mubr.f32.mxu0 0.0
  %6658 = vmatmul.mubr.f32.gmra.mrb[0].mxu0 %v6301
  %v6659 = vpop.f32.mrb[0].mxu0
  %v6660 = vadd.f32 0.0, %v6659
  %v6661 = vpop.f32.mrb[0].mxu0
  %v6662 = vadd.f32 0.0, %v6661
  %6663 = vmatprep.mubr.f32.mxu0 0.0
  %6664 = vmatmul.mubr.f32.gmra.mrb[0].mxu0 %v6302
  %v6665 = vpop.f32.mrb[0].mxu0
  %v6666 = vadd.f32 0.0, %v6665
  %v6667 = vpop.f32.mrb[0].mxu0
  %v6668 = vadd.f32 0.0, %v6667
  %6669 = vmatprep.mubr.f32.mxu0 0.0
  %6670 = vmatmul.mubr.f32.gmra.mrb[0].mxu0 %v6303
  %v6671 = vpop.f32.mrb[0].mxu0
  %v6672 = vadd.f32 0.0, %v6671
  %v6673 = vpop.f32.mrb[0].mxu0
  %v6674 = vadd.f32 0.0, %v6673
  %6675 = vmatprep.mubr.f32.mxu0 0.0
  %6676 = vmatmul.mubr.f32.gmra.mrb[0].mxu0 %v6304
  %v6677 = vpop.f32.mrb[0].mxu0
  %v6678 = vadd.f32 0.0, %v6677
  %v6679 = vpop.f32.mrb[0].mxu0
  %v6680 = vadd.f32 0.0, %v6679
  %6681 = vmatprep.mubr.f32.mxu0 0.0
  %6682 = vmatmul.mubr.f32.gmra.mrb[0].mxu0 %v6305
  %v6683 = vpop.f32.mrb[0].mxu0
  %v6684 = vadd.f32 0.0, %v6683
  %v6685 = vpop.f32.mrb[0].mxu0
  %v6686 = vadd.f32 0.0, %v6685
  %6687 = vmatprep.mubr.f32.mxu0 0.0
  %6688 = vmatmul.mubr.f32.gmra.mrb[0].mxu0 %v6306
  %v6689 = vpop.f32.mrb[0].mxu0
  %v6690 = vadd.f32 0.0, %v6689
  %v6691 = vpop.f32.mrb[0].mxu0
  %v6692 = vadd.f32 0.0, %v6691
  %6693 = vmatprep.mubr.f32.mxu0 0.0
  %6694 = vmatmul.mubr.f32.gmra.mrb[0].mxu0 %v6307
  %v6695 = vpop.f32.mrb[0].mxu0
  %v6696 = vadd.f32 0.0, %v6695
  %v6697 = vpop.f32.mrb[0].mxu0
  %v6698 = vadd.f32 0.0, %v6697
  %6699 = vmatprep.mubr.f32.mxu0 0.0
  %6700 = vmatmul.mubr.f32.gmra.mrb[0].mxu0 %v6308
  %v6701 = vpop.f32.mrb[0].mxu0
  %v6702 = vadd.f32 0.0, %v6701
  %v6703 = vpop.f32.mrb[0].mxu0
  %v6704 = vadd.f32 0.0, %v6703
  %6705 = vmatprep.mubr.f32.mxu0 0.0
  %6706 = vmatmul.mubr.f32.gmra.mrb[0].mxu0 %v6309
  %v6707 = vpop.f32.mrb[0].mxu0
  %v6708 = vadd.f32 0.0, %v6707
  %v6709 = vpop.f32.mrb[0].mxu0
  %v6710 = vadd.f32 0.0, %v6709
  %6711 = vmatprep.mubr.f32.mxu0 0.0
  %6712 = vmatmul.mubr.f32.gmra.mrb[0].mxu0 %v6310
  %v6713 = vpop.f32.mrb[0].mxu0
  %v6714 = vadd.f32 0.0, %v6713
  %v6715 = vpop.f32.mrb[0].mxu0
  %v6716 = vadd.f32 0.0, %v6715
  %6717 = vmatprep.mubr.f32.mxu0 0.0
  %6718 = vmatmul.mubr.f32.gmra.mrb[0].mxu0 %v6311
  %v6719 = vpop.f32.mrb[0].mxu0
  %v6720 = vadd.f32 0.0, %v6719
  %v6721 = vpop.f32.mrb[0].mxu0
  %v6722 = vadd.f32 0.0, %v6721
  %6723 = vmatprep.mubr.f32.mxu0 0.0
  %6724 = vmatmul.mubr.f32.gmra.mrb[0].mxu0 %v6312
  %v6725 = vpop.f32.mrb[0].mxu0
  %v6726 = vadd.f32 0.0, %v6725
  %v6727 = vpop.f32.mrb[0].mxu0
  %v6728 = vadd.f32 0.0, %v6727
  %6729 = vmatprep.mubr.f32.mxu0 0.0
  %6730 = vmatmul.mubr.f32.gmra.mrb[0].mxu0 %v6313
  %v6731 = vpop.f32.mrb[0].mxu0
  %v6732 = vadd.f32 0.0, %v6731
  %v6733 = vpop.f32.mrb[0].mxu0
  %v6734 = vadd.f32 0.0, %v6733
  %6735 = vmatprep.mubr.f32.mxu0 0.0
  %6736 = vmatmul.mubr.f32.gmra.mrb[0].mxu0 %v6314
  %v6737 = vpop.f32.mrb[0].mxu0
  %v6738 = vadd.f32 0.0, %v6737
  %v6739 = vpop.f32.mrb[0].mxu0
  %v6740 = vadd.f32 0.0, %v6739
  %6741 = vmatprep.mubr.f32.mxu0 0.0
  %6742 = vmatmul.mubr.f32.gmra.mrb[0].mxu0 %v6315
  %v6743 = vpop.f32.mrb[0].mxu0
  %v6744 = vadd.f32 0.0, %v6743
  %v6745 = vpop.f32.mrb[0].mxu0
  %v6746 = vadd.f32 0.0, %v6745
  %6747 = vmatprep.mubr.f32.mxu0 0.0
  %6748 = vmatmul.mubr.f32.gmra.mrb[0].mxu0 %v6316
  %v6749 = vpop.f32.mrb[0].mxu0
  %v6750 = vadd.f32 0.0, %v6749
  %v6751 = vpop.f32.mrb[0].mxu0
  %v6752 = vadd.f32 0.0, %v6751
  %6753 = vmatprep.mubr.f32.mxu0 0.0
  %6754 = vmatmul.mubr.f32.gmra.mrb[0].mxu0 %v6317
  %v6755 = vpop.f32.mrb[0].mxu0
  %v6756 = vadd.f32 0.0, %v6755
  %v6757 = vpop.f32.mrb[0].mxu0
  %v6758 = vadd.f32 0.0, %v6757
  %6759 = vmatprep.mubr.f32.mxu0 0.0
  %6760 = vmatmul.mubr.f32.gmra.mrb[0].mxu0 %v6318
  %v6761 = vpop.f32.mrb[0].mxu0
  %v6762 = vadd.f32 0.0, %v6761
  %v6763 = vpop.f32.mrb[0].mxu0
  %v6764 = vadd.f32 0.0, %v6763
  %6765 = vmatprep.mubr.f32.mxu0 0.0
  %6766 = vmatmul.mubr.f32.gmra.mrb[0].mxu0 %v6319
  %v6767 = vpop.f32.mrb[0].mxu0
  %v6768 = vadd.f32 0.0, %v6767
  %v6769 = vpop.f32.mrb[0].mxu0
  %v6770 = vadd.f32 0.0, %v6769
  %6771 = vmatprep.mubr.f32.mxu0 0.0
  %6772 = vmatmul.mubr.f32.gmra.mrb[0].mxu0 %v6320
  %v6773 = vpop.f32.mrb[0].mxu0
  %v6774 = vadd.f32 0.0, %v6773
  %v6775 = vpop.f32.mrb[0].mxu0
  %v6776 = vadd.f32 0.0, %v6775
  %6777 = vmatprep.mubr.f32.mxu0 0.0
  %6778 = vmatmul.mubr.f32.gmra.mrb[0].mxu0 %v6321
  %v6779 = vpop.f32.mrb[0].mxu0
  %v6780 = vadd.f32 0.0, %v6779
  %v6781 = vpop.f32.mrb[0].mxu0
  %v6782 = vadd.f32 0.0, %v6781
  %6783 = vmatprep.mubr.f32.mxu0 0.0
  %6784 = vmatmul.mubr.f32.gmra.mrb[0].mxu0 %v6322
  %v6785 = vpop.f32.mrb[0].mxu0
  %v6786 = vadd.f32 0.0, %v6785
  %v6787 = vpop.f32.mrb[0].mxu0
  %v6788 = vadd.f32 0.0, %v6787
  %6789 = vmatprep.mubr.f32.mxu0 0.0
  %6790 = vmatmul.mubr.f32.gmra.mrb[0].mxu0 %v6323
  %v6791 = vpop.f32.mrb[0].mxu0
  %v6792 = vadd.f32 0.0, %v6791
  %v6793 = vpop.f32.mrb[0].mxu0
  %v6794 = vadd.f32 0.0, %v6793
  %6795 = vmatprep.mubr.f32.mxu0 0.0
  %6796 = vmatmul.mubr.f32.gmra.mrb[0].mxu0 %v6324
  %v6797 = vpop.f32.mrb[0].mxu0
  %v6798 = vadd.f32 0.0, %v6797
  %v6799 = vpop.f32.mrb[0].mxu0
  %v6800 = vadd.f32 0.0, %v6799
  %6801 = vmatprep.mubr.f32.mxu0 0.0
  %6802 = vmatmul.mubr.f32.gmra.mrb[0].mxu0 %v6325
  %v6803 = vpop.f32.mrb[0].mxu0
  %v6804 = vadd.f32 0.0, %v6803
  %v6805 = vpop.f32.mrb[0].mxu0
  %v6806 = vadd.f32 0.0, %v6805
  %6807 = vdwg.mxu0
  %v6808 = vadd.f32 %v5621, %v6426
  %v6809 = vadd.f32 %v5622, %v6428
  %v6810 = vadd.f32 %v5623, %v6432
  %v6811 = vadd.f32 %v5624, %v6434
  %v6812 = vadd.f32 %v5625, %v6438
  %v6813 = vadd.f32 %v5626, %v6440
  %v6814 = vadd.f32 %v5627, %v6444
  %v6815 = vadd.f32 %v5628, %v6446
  %v6816 = vadd.f32 %v5629, %v6450
  %v6817 = vadd.f32 %v5630, %v6452
  %v6818 = vadd.f32 %v5631, %v6456
  %v6819 = vadd.f32 %v5632, %v6458
  %v6820 = vadd.f32 %v5633, %v6462
  %v6821 = vadd.f32 %v5634, %v6464
  %v6822 = vadd.f32 %v5635, %v6468
  %v6823 = vadd.f32 %v5636, %v6470
  %v6824 = vadd.f32 %v5637, %v6474
  %v6825 = vadd.f32 %v5638, %v6476
  %v6826 = vadd.f32 %v5639, %v6480
  %v6827 = vadd.f32 %v5640, %v6482
  %v6828 = vadd.f32 %v5641, %v6486
  %v6829 = vadd.f32 %v5642, %v6488
  %v6830 = vadd.f32 %v5643, %v6492
  %v6831 = vadd.f32 %v5644, %v6494
  %v6832 = vadd.f32 %v5645, %v6498
  %v6833 = vadd.f32 %v5646, %v6500
  %v6834 = vadd.f32 %v5647, %v6504
  %v6835 = vadd.f32 %v5648, %v6506
  %v6836 = vadd.f32 %v5649, %v6510
  %v6837 = vadd.f32 %v5650, %v6512
  %v6838 = vadd.f32 %v5651, %v6516
  %v6839 = vadd.f32 %v5652, %v6518
  %v6840 = vadd.f32 %v5653, %v6522
  %v6841 = vadd.f32 %v5654, %v6524
  %v6842 = vadd.f32 %v5655, %v6528
  %v6843 = vadd.f32 %v5656, %v6530
  %v6844 = vadd.f32 %v5657, %v6534
  %v6845 = vadd.f32 %v5658, %v6536
  %v6846 = vadd.f32 %v5659, %v6540
  %v6847 = vadd.f32 %v5660, %v6542
  %v6848 = vadd.f32 %v5661, %v6546
  %v6849 = vadd.f32 %v5662, %v6548
  %v6850 = vadd.f32 %v5663, %v6552
  %v6851 = vadd.f32 %v5664, %v6554
  %v6852 = vadd.f32 %v5665, %v6558
  %v6853 = vadd.f32 %v5666, %v6560
  %v6854 = vadd.f32 %v5667, %v6564
  %v6855 = vadd.f32 %v5668, %v6566
  %v6856 = vadd.f32 %v5669, %v6570
  %v6857 = vadd.f32 %v5670, %v6572
  %v6858 = vadd.f32 %v5671, %v6576
  %v6859 = vadd.f32 %v5672, %v6578
  %v6860 = vadd.f32 %v5673, %v6582
  %v6861 = vadd.f32 %v5674, %v6584
  %v6862 = vadd.f32 %v5675, %v6588
  %v6863 = vadd.f32 %v5676, %v6590
  %v6864 = vadd.f32 %v5677, %v6594
  %v6865 = vadd.f32 %v5678, %v6596
  %v6866 = vadd.f32 %v5679, %v6600
  %v6867 = vadd.f32 %v5680, %v6602
  %v6868 = vadd.f32 %v5681, %v6606
  %v6869 = vadd.f32 %v5682, %v6608
  %v6870 = vadd.f32 %v5683, %v6612
  %v6871 = vadd.f32 %v5684, %v6614
  %v6872 = vadd.f32 %v5685, %v6618
  %v6873 = vadd.f32 %v5686, %v6620
  %v6874 = vadd.f32 %v5687, %v6624
  %v6875 = vadd.f32 %v5688, %v6626
  %v6876 = vadd.f32 %v5689, %v6630
  %v6877 = vadd.f32 %v5690, %v6632
  %v6878 = vadd.f32 %v5691, %v6636
  %v6879 = vadd.f32 %v5692, %v6638
  %v6880 = vadd.f32 %v5693, %v6642
  %v6881 = vadd.f32 %v5694, %v6644
  %v6882 = vadd.f32 %v5695, %v6648
  %v6883 = vadd.f32 %v5696, %v6650
  %v6884 = vadd.f32 %v5697, %v6654
  %v6885 = vadd.f32 %v5698, %v6656
  %v6886 = vadd.f32 %v5699, %v6660
  %v6887 = vadd.f32 %v5700, %v6662
  %v6888 = vadd.f32 %v5701, %v6666
  %v6889 = vadd.f32 %v5702, %v6668
  %v6890 = vadd.f32 %v5703, %v6672
  %v6891 = vadd.f32 %v5704, %v6674
  %v6892 = vadd.f32 %v5705, %v6678
  %v6893 = vadd.f32 %v5706, %v6680
  %v6894 = vadd.f32 %v5707, %v6684
  %v6895 = vadd.f32 %v5708, %v6686
  %v6896 = vadd.f32 %v5709, %v6690
  %v6897 = vadd.f32 %v5710, %v6692
  %v6898 = vadd.f32 %v5711, %v6696
  %v6899 = vadd.f32 %v5712, %v6698
  %v6900 = vadd.f32 %v5713, %v6702
  %v6901 = vadd.f32 %v5714, %v6704
  %v6902 = vadd.f32 %v5715, %v6708
  %v6903 = vadd.f32 %v5716, %v6710
  %v6904 = vadd.f32 %v5717, %v6714
  %v6905 = vadd.f32 %v5718, %v6716
  %v6906 = vadd.f32 %v5719, %v6720
  %v6907 = vadd.f32 %v5720, %v6722
  %v6908 = vadd.f32 %v5721, %v6726
  %v6909 = vadd.f32 %v5722, %v6728
  %v6910 = vadd.f32 %v5723, %v6732
  %v6911 = vadd.f32 %v5724, %v6734
  %v6912 = vadd.f32 %v5725, %v6738
  %v6913 = vadd.f32 %v5726, %v6740
  %v6914 = vadd.f32 %v5727, %v6744
  %v6915 = vadd.f32 %v5728, %v6746
  %v6916 = vadd.f32 %v5729, %v6750
  %v6917 = vadd.f32 %v5730, %v6752
  %v6918 = vadd.f32 %v5731, %v6756
  %v6919 = vadd.f32 %v5732, %v6758
  %v6920 = vadd.f32 %v5733, %v6762
  %v6921 = vadd.f32 %v5734, %v6764
  %v6922 = vadd.f32 %v5735, %v6768
  %v6923 = vadd.f32 %v5736, %v6770
  %v6924 = vadd.f32 %v5737, %v6774
  %v6925 = vadd.f32 %v5738, %v6776
  %v6926 = vadd.f32 %v5739, %v6780
  %v6927 = vadd.f32 %v5740, %v6782
  %v6928 = vadd.f32 %v5741, %v6786
  %v6929 = vadd.f32 %v5742, %v6788
  %v6930 = vadd.f32 %v5743, %v6792
  %v6931 = vadd.f32 %v5744, %v6794
  %v6932 = vadd.f32 %v5745, %v6798
  %v6933 = vadd.f32 %v5746, %v6800
  %v6934 = vadd.f32 %v5747, %v6804
  %v6935 = vadd.f32 %v5748, %v6806
  %v6936 = vadd.f32 %v6808, %v6810
  %v6937 = vadd.f32 %v6936, %v6812
  %v6938 = vadd.f32 %v6937, %v6814
  %v6939 = vadd.f32 %v6938, %v6816
  %v6940 = vadd.f32 %v6939, %v6818
  %v6941 = vadd.f32 %v6940, %v6820
  %v6942 = vadd.f32 %v6941, %v6822
  %v6943 = vrot.slane %v6942, 4
  %v6944 = vadd.f32 %v6942, %v6943
  %v6945 = vrot.slane %v6944, 2
  %v6946 = vadd.f32 %v6944, %v6945
  %v6947 = vrot.slane %v6946, 1
  %v6948 = vadd.f32 %v6946, %v6947
  %v6949 = vadd.f32 %v6809, %v6811
  %v6950 = vadd.f32 %v6949, %v6813
  %v6951 = vadd.f32 %v6950, %v6815
  %v6952 = vadd.f32 %v6951, %v6817
  %v6953 = vadd.f32 %v6952, %v6819
  %v6954 = vadd.f32 %v6953, %v6821
  %v6955 = vadd.f32 %v6954, %v6823
  %v6956 = vrot.slane %v6955, 4
  %v6957 = vadd.f32 %v6955, %v6956
  %v6958 = vrot.slane %v6957, 2
  %v6959 = vadd.f32 %v6957, %v6958
  %v6960 = vrot.slane %v6959, 1
  %v6961 = vadd.f32 %v6959, %v6960
  %v6962 = vadd.f32 %v6824, %v6826
  %v6963 = vadd.f32 %v6962, %v6828
  %v6964 = vadd.f32 %v6963, %v6830
  %v6965 = vadd.f32 %v6964, %v6832
  %v6966 = vadd.f32 %v6965, %v6834
  %v6967 = vadd.f32 %v6966, %v6836
  %v6968 = vadd.f32 %v6967, %v6838
  %v6969 = vrot.slane %v6968, 4
  %v6970 = vadd.f32 %v6968, %v6969
  %v6971 = vrot.slane %v6970, 2
  %v6972 = vadd.f32 %v6970, %v6971
  %v6973 = vrot.slane %v6972, 1
  %v6974 = vadd.f32 %v6972, %v6973
  %v6975 = vadd.f32 %v6825, %v6827
  %v6976 = vadd.f32 %v6975, %v6829
  %v6977 = vadd.f32 %v6976, %v6831
  %v6978 = vadd.f32 %v6977, %v6833
  %v6979 = vadd.f32 %v6978, %v6835
  %v6980 = vadd.f32 %v6979, %v6837
  %v6981 = vadd.f32 %v6980, %v6839
  %v6982 = vrot.slane %v6981, 4
  %v6983 = vadd.f32 %v6981, %v6982
  %v6984 = vrot.slane %v6983, 2
  %v6985 = vadd.f32 %v6983, %v6984
  %v6986 = vrot.slane %v6985, 1
  %v6987 = vadd.f32 %v6985, %v6986
  %v6988 = vadd.f32 %v6840, %v6842
  %v6989 = vadd.f32 %v6988, %v6844
  %v6990 = vadd.f32 %v6989, %v6846
  %v6991 = vadd.f32 %v6990, %v6848
  %v6992 = vadd.f32 %v6991, %v6850
  %v6993 = vadd.f32 %v6992, %v6852
  %v6994 = vadd.f32 %v6993, %v6854
  %v6995 = vrot.slane %v6994, 4
  %v6996 = vadd.f32 %v6994, %v6995
  %v6997 = vrot.slane %v6996, 2
  %v6998 = vadd.f32 %v6996, %v6997
  %v6999 = vrot.slane %v6998, 1
  %v7000 = vadd.f32 %v6998, %v6999
  %v7001 = vadd.f32 %v6841, %v6843
  %v7002 = vadd.f32 %v7001, %v6845
  %v7003 = vadd.f32 %v7002, %v6847
  %v7004 = vadd.f32 %v7003, %v6849
  %v7005 = vadd.f32 %v7004, %v6851
  %v7006 = vadd.f32 %v7005, %v6853
  %v7007 = vadd.f32 %v7006, %v6855
  %v7008 = vrot.slane %v7007, 4
  %v7009 = vadd.f32 %v7007, %v7008
  %v7010 = vrot.slane %v7009, 2
  %v7011 = vadd.f32 %v7009, %v7010
  %v7012 = vrot.slane %v7011, 1
  %v7013 = vadd.f32 %v7011, %v7012
  %v7014 = vadd.f32 %v6856, %v6858
  %v7015 = vadd.f32 %v7014, %v6860
  %v7016 = vadd.f32 %v7015, %v6862
  %v7017 = vadd.f32 %v7016, %v6864
  %v7018 = vadd.f32 %v7017, %v6866
  %v7019 = vadd.f32 %v7018, %v6868
  %v7020 = vadd.f32 %v7019, %v6870
  %v7021 = vrot.slane %v7020, 4
  %v7022 = vadd.f32 %v7020, %v7021
  %v7023 = vrot.slane %v7022, 2
  %v7024 = vadd.f32 %v7022, %v7023
  %v7025 = vrot.slane %v7024, 1
  %v7026 = vadd.f32 %v7024, %v7025
  %v7027 = vadd.f32 %v6857, %v6859
  %v7028 = vadd.f32 %v7027, %v6861
  %v7029 = vadd.f32 %v7028, %v6863
  %v7030 = vadd.f32 %v7029, %v6865
  %v7031 = vadd.f32 %v7030, %v6867
  %v7032 = vadd.f32 %v7031, %v6869
  %v7033 = vadd.f32 %v7032, %v6871
  %v7034 = vrot.slane %v7033, 4
  %v7035 = vadd.f32 %v7033, %v7034
  %v7036 = vrot.slane %v7035, 2
  %v7037 = vadd.f32 %v7035, %v7036
  %v7038 = vrot.slane %v7037, 1
  %v7039 = vadd.f32 %v7037, %v7038
  %v7040 = vadd.f32 %v6872, %v6874
  %v7041 = vadd.f32 %v7040, %v6876
  %v7042 = vadd.f32 %v7041, %v6878
  %v7043 = vadd.f32 %v7042, %v6880
  %v7044 = vadd.f32 %v7043, %v6882
  %v7045 = vadd.f32 %v7044, %v6884
  %v7046 = vadd.f32 %v7045, %v6886
  %v7047 = vrot.slane %v7046, 4
  %v7048 = vadd.f32 %v7046, %v7047
  %v7049 = vrot.slane %v7048, 2
  %v7050 = vadd.f32 %v7048, %v7049
  %v7051 = vrot.slane %v7050, 1
  %v7052 = vadd.f32 %v7050, %v7051
  %v7053 = vadd.f32 %v6873, %v6875
  %v7054 = vadd.f32 %v7053, %v6877
  %v7055 = vadd.f32 %v7054, %v6879
  %v7056 = vadd.f32 %v7055, %v6881
  %v7057 = vadd.f32 %v7056, %v6883
  %v7058 = vadd.f32 %v7057, %v6885
  %v7059 = vadd.f32 %v7058, %v6887
  %v7060 = vrot.slane %v7059, 4
  %v7061 = vadd.f32 %v7059, %v7060
  %v7062 = vrot.slane %v7061, 2
  %v7063 = vadd.f32 %v7061, %v7062
  %v7064 = vrot.slane %v7063, 1
  %v7065 = vadd.f32 %v7063, %v7064
  %v7066 = vadd.f32 %v6888, %v6890
  %v7067 = vadd.f32 %v7066, %v6892
  %v7068 = vadd.f32 %v7067, %v6894
  %v7069 = vadd.f32 %v7068, %v6896
  %v7070 = vadd.f32 %v7069, %v6898
  %v7071 = vadd.f32 %v7070, %v6900
  %v7072 = vadd.f32 %v7071, %v6902
  %v7073 = vrot.slane %v7072, 4
  %v7074 = vadd.f32 %v7072, %v7073
  %v7075 = vrot.slane %v7074, 2
  %v7076 = vadd.f32 %v7074, %v7075
  %v7077 = vrot.slane %v7076, 1
  %v7078 = vadd.f32 %v7076, %v7077
  %v7079 = vadd.f32 %v6889, %v6891
  %v7080 = vadd.f32 %v7079, %v6893
  %v7081 = vadd.f32 %v7080, %v6895
  %v7082 = vadd.f32 %v7081, %v6897
  %v7083 = vadd.f32 %v7082, %v6899
  %v7084 = vadd.f32 %v7083, %v6901
  %v7085 = vadd.f32 %v7084, %v6903
  %v7086 = vrot.slane %v7085, 4
  %v7087 = vadd.f32 %v7085, %v7086
  %v7088 = vrot.slane %v7087, 2
  %v7089 = vadd.f32 %v7087, %v7088
  %v7090 = vrot.slane %v7089, 1
  %v7091 = vadd.f32 %v7089, %v7090
  %v7092 = vadd.f32 %v6904, %v6906
  %v7093 = vadd.f32 %v7092, %v6908
  %v7094 = vadd.f32 %v7093, %v6910
  %v7095 = vadd.f32 %v7094, %v6912
  %v7096 = vadd.f32 %v7095, %v6914
  %v7097 = vadd.f32 %v7096, %v6916
  %v7098 = vadd.f32 %v7097, %v6918
  %v7099 = vrot.slane %v7098, 4
  %v7100 = vadd.f32 %v7098, %v7099
  %v7101 = vrot.slane %v7100, 2
  %v7102 = vadd.f32 %v7100, %v7101
  %v7103 = vrot.slane %v7102, 1
  %v7104 = vadd.f32 %v7102, %v7103
  %v7105 = vadd.f32 %v6905, %v6907
  %v7106 = vadd.f32 %v7105, %v6909
  %v7107 = vadd.f32 %v7106, %v6911
  %v7108 = vadd.f32 %v7107, %v6913
  %v7109 = vadd.f32 %v7108, %v6915
  %v7110 = vadd.f32 %v7109, %v6917
  %v7111 = vadd.f32 %v7110, %v6919
  %v7112 = vrot.slane %v7111, 4
  %v7113 = vadd.f32 %v7111, %v7112
  %v7114 = vrot.slane %v7113, 2
  %v7115 = vadd.f32 %v7113, %v7114
  %v7116 = vrot.slane %v7115, 1
  %v7117 = vadd.f32 %v7115, %v7116
  %v7118 = vadd.f32 %v6920, %v6922
  %v7119 = vadd.f32 %v7118, %v6924
  %v7120 = vadd.f32 %v7119, %v6926
  %v7121 = vadd.f32 %v7120, %v6928
  %v7122 = vadd.f32 %v7121, %v6930
  %v7123 = vadd.f32 %v7122, %v6932
  %v7124 = vadd.f32 %v7123, %v6934
  %v7125 = vrot.slane %v7124, 4
  %v7126 = vadd.f32 %v7124, %v7125
  %v7127 = vrot.slane %v7126, 2
  %v7128 = vadd.f32 %v7126, %v7127
  %v7129 = vrot.slane %v7128, 1
  %v7130 = vadd.f32 %v7128, %v7129
  %v7131 = vadd.f32 %v6921, %v6923
  %v7132 = vadd.f32 %v7131, %v6925
  %v7133 = vadd.f32 %v7132, %v6927
  %v7134 = vadd.f32 %v7133, %v6929
  %v7135 = vadd.f32 %v7134, %v6931
  %v7136 = vadd.f32 %v7135, %v6933
  %v7137 = vadd.f32 %v7136, %v6935
  %v7138 = vrot.slane %v7137, 4
  %v7139 = vadd.f32 %v7137, %v7138
  %v7140 = vrot.slane %v7139, 2
  %v7141 = vadd.f32 %v7139, %v7140
  %v7142 = vrot.slane %v7141, 1
  %v7143 = vadd.f32 %v7141, %v7142
  %v7144 = vmul.f32 %v6808, %v6808
  %v7145 = vmul.f32 %v6809, %v6809
  %v7146 = vmul.f32 %v6810, %v6810
  %v7147 = vmul.f32 %v6811, %v6811
  %v7148 = vmul.f32 %v6812, %v6812
  %v7149 = vmul.f32 %v6813, %v6813
  %v7150 = vmul.f32 %v6814, %v6814
  %v7151 = vmul.f32 %v6815, %v6815
  %v7152 = vmul.f32 %v6816, %v6816
  %v7153 = vmul.f32 %v6817, %v6817
  %v7154 = vmul.f32 %v6818, %v6818
  %v7155 = vmul.f32 %v6819, %v6819
  %v7156 = vmul.f32 %v6820, %v6820
  %v7157 = vmul.f32 %v6821, %v6821
  %v7158 = vmul.f32 %v6822, %v6822
  %v7159 = vmul.f32 %v6823, %v6823
  %v7160 = vmul.f32 %v6824, %v6824
  %v7161 = vmul.f32 %v6825, %v6825
  %v7162 = vmul.f32 %v6826, %v6826
  %v7163 = vmul.f32 %v6827, %v6827
  %v7164 = vmul.f32 %v6828, %v6828
  %v7165 = vmul.f32 %v6829, %v6829
  %v7166 = vmul.f32 %v6830, %v6830
  %v7167 = vmul.f32 %v6831, %v6831
  %v7168 = vmul.f32 %v6832, %v6832
  %v7169 = vmul.f32 %v6833, %v6833
  %v7170 = vmul.f32 %v6834, %v6834
  %v7171 = vmul.f32 %v6835, %v6835
  %v7172 = vmul.f32 %v6836, %v6836
  %v7173 = vmul.f32 %v6837, %v6837
  %v7174 = vmul.f32 %v6838, %v6838
  %v7175 = vmul.f32 %v6839, %v6839
  %v7176 = vmul.f32 %v6840, %v6840
  %v7177 = vmul.f32 %v6841, %v6841
  %v7178 = vmul.f32 %v6842, %v6842
  %v7179 = vmul.f32 %v6843, %v6843
  %v7180 = vmul.f32 %v6844, %v6844
  %v7181 = vmul.f32 %v6845, %v6845
  %v7182 = vmul.f32 %v6846, %v6846
  %v7183 = vmul.f32 %v6847, %v6847
  %v7184 = vmul.f32 %v6848, %v6848
  %v7185 = vmul.f32 %v6849, %v6849
  %v7186 = vmul.f32 %v6850, %v6850
  %v7187 = vmul.f32 %v6851, %v6851
  %v7188 = vmul.f32 %v6852, %v6852
  %v7189 = vmul.f32 %v6853, %v6853
  %v7190 = vmul.f32 %v6854, %v6854
  %v7191 = vmul.f32 %v6855, %v6855
  %v7192 = vmul.f32 %v6856, %v6856
  %v7193 = vmul.f32 %v6857, %v6857
  %v7194 = vmul.f32 %v6858, %v6858
  %v7195 = vmul.f32 %v6859, %v6859
  %v7196 = vmul.f32 %v6860, %v6860
  %v7197 = vmul.f32 %v6861, %v6861
  %v7198 = vmul.f32 %v6862, %v6862
  %v7199 = vmul.f32 %v6863, %v6863
  %v7200 = vmul.f32 %v6864, %v6864
  %v7201 = vmul.f32 %v6865, %v6865
  %v7202 = vmul.f32 %v6866, %v6866
  %v7203 = vmul.f32 %v6867, %v6867
  %v7204 = vmul.f32 %v6868, %v6868
  %v7205 = vmul.f32 %v6869, %v6869
  %v7206 = vmul.f32 %v6870, %v6870
  %v7207 = vmul.f32 %v6871, %v6871
  %v7208 = vmul.f32 %v6872, %v6872
  %v7209 = vmul.f32 %v6873, %v6873
  %v7210 = vmul.f32 %v6874, %v6874
  %v7211 = vmul.f32 %v6875, %v6875
  %v7212 = vmul.f32 %v6876, %v6876
  %v7213 = vmul.f32 %v6877, %v6877
  %v7214 = vmul.f32 %v6878, %v6878
  %v7215 = vmul.f32 %v6879, %v6879
  %v7216 = vmul.f32 %v6880, %v6880
  %v7217 = vmul.f32 %v6881, %v6881
  %v7218 = vmul.f32 %v6882, %v6882
  %v7219 = vmul.f32 %v6883, %v6883
  %v7220 = vmul.f32 %v6884, %v6884
  %v7221 = vmul.f32 %v6885, %v6885
  %v7222 = vmul.f32 %v6886, %v6886
  %v7223 = vmul.f32 %v6887, %v6887
  %v7224 = vmul.f32 %v6888, %v6888
  %v7225 = vmul.f32 %v6889, %v6889
  %v7226 = vmul.f32 %v6890, %v6890
  %v7227 = vmul.f32 %v6891, %v6891
  %v7228 = vmul.f32 %v6892, %v6892
  %v7229 = vmul.f32 %v6893, %v6893
  %v7230 = vmul.f32 %v6894, %v6894
  %v7231 = vmul.f32 %v6895, %v6895
  %v7232 = vmul.f32 %v6896, %v6896
  %v7233 = vmul.f32 %v6897, %v6897
  %v7234 = vmul.f32 %v6898, %v6898
  %v7235 = vmul.f32 %v6899, %v6899
  %v7236 = vmul.f32 %v6900, %v6900
  %v7237 = vmul.f32 %v6901, %v6901
  %v7238 = vmul.f32 %v6902, %v6902
  %v7239 = vmul.f32 %v6903, %v6903
  %v7240 = vmul.f32 %v6904, %v6904
  %v7241 = vmul.f32 %v6905, %v6905
  %v7242 = vmul.f32 %v6906, %v6906
  %v7243 = vmul.f32 %v6907, %v6907
  %v7244 = vmul.f32 %v6908, %v6908
  %v7245 = vmul.f32 %v6909, %v6909
  %v7246 = vmul.f32 %v6910, %v6910
  %v7247 = vmul.f32 %v6911, %v6911
  %v7248 = vmul.f32 %v6912, %v6912
  %v7249 = vmul.f32 %v6913, %v6913
  %v7250 = vmul.f32 %v6914, %v6914
  %v7251 = vmul.f32 %v6915, %v6915
  %v7252 = vmul.f32 %v6916, %v6916
  %v7253 = vmul.f32 %v6917, %v6917
  %v7254 = vmul.f32 %v6918, %v6918
  %v7255 = vmul.f32 %v6919, %v6919
  %v7256 = vmul.f32 %v6920, %v6920
  %v7257 = vmul.f32 %v6921, %v6921
  %v7258 = vmul.f32 %v6922, %v6922
  %v7259 = vmul.f32 %v6923, %v6923
  %v7260 = vmul.f32 %v6924, %v6924
  %v7261 = vmul.f32 %v6925, %v6925
  %v7262 = vmul.f32 %v6926, %v6926
  %v7263 = vmul.f32 %v6927, %v6927
  %v7264 = vmul.f32 %v6928, %v6928
  %v7265 = vmul.f32 %v6929, %v6929
  %v7266 = vmul.f32 %v6930, %v6930
  %v7267 = vmul.f32 %v6931, %v6931
  %v7268 = vmul.f32 %v6932, %v6932
  %v7269 = vmul.f32 %v6933, %v6933
  %v7270 = vmul.f32 %v6934, %v6934
  %v7271 = vmul.f32 %v6935, %v6935
  %v7272 = vadd.f32 %v7144, %v7146
  %v7273 = vadd.f32 %v7272, %v7148
  %v7274 = vadd.f32 %v7273, %v7150
  %v7275 = vadd.f32 %v7274, %v7152
  %v7276 = vadd.f32 %v7275, %v7154
  %v7277 = vadd.f32 %v7276, %v7156
  %v7278 = vadd.f32 %v7277, %v7158
  %v7279 = vrot.slane %v7278, 4
  %v7280 = vadd.f32 %v7278, %v7279
  %v7281 = vrot.slane %v7280, 2
  %v7282 = vadd.f32 %v7280, %v7281
  %v7283 = vrot.slane %v7282, 1
  %v7284 = vadd.f32 %v7282, %v7283
  %v7285 = vadd.f32 %v7145, %v7147
  %v7286 = vadd.f32 %v7285, %v7149
  %v7287 = vadd.f32 %v7286, %v7151
  %v7288 = vadd.f32 %v7287, %v7153
  %v7289 = vadd.f32 %v7288, %v7155
  %v7290 = vadd.f32 %v7289, %v7157
  %v7291 = vadd.f32 %v7290, %v7159
  %v7292 = vrot.slane %v7291, 4
  %v7293 = vadd.f32 %v7291, %v7292
  %v7294 = vrot.slane %v7293, 2
  %v7295 = vadd.f32 %v7293, %v7294
  %v7296 = vrot.slane %v7295, 1
  %v7297 = vadd.f32 %v7295, %v7296
  %v7298 = vadd.f32 %v7160, %v7162
  %v7299 = vadd.f32 %v7298, %v7164
  %v7300 = vadd.f32 %v7299, %v7166
  %v7301 = vadd.f32 %v7300, %v7168
  %v7302 = vadd.f32 %v7301, %v7170
  %v7303 = vadd.f32 %v7302, %v7172
  %v7304 = vadd.f32 %v7303, %v7174
  %v7305 = vrot.slane %v7304, 4
  %v7306 = vadd.f32 %v7304, %v7305
  %v7307 = vrot.slane %v7306, 2
  %v7308 = vadd.f32 %v7306, %v7307
  %v7309 = vrot.slane %v7308, 1
  %v7310 = vadd.f32 %v7308, %v7309
  %v7311 = vadd.f32 %v7161, %v7163
  %v7312 = vadd.f32 %v7311, %v7165
  %v7313 = vadd.f32 %v7312, %v7167
  %v7314 = vadd.f32 %v7313, %v7169
  %v7315 = vadd.f32 %v7314, %v7171
  %v7316 = vadd.f32 %v7315, %v7173
  %v7317 = vadd.f32 %v7316, %v7175
  %v7318 = vrot.slane %v7317, 4
  %v7319 = vadd.f32 %v7317, %v7318
  %v7320 = vrot.slane %v7319, 2
  %v7321 = vadd.f32 %v7319, %v7320
  %v7322 = vrot.slane %v7321, 1
  %v7323 = vadd.f32 %v7321, %v7322
  %v7324 = vadd.f32 %v7176, %v7178
  %v7325 = vadd.f32 %v7324, %v7180
  %v7326 = vadd.f32 %v7325, %v7182
  %v7327 = vadd.f32 %v7326, %v7184
  %v7328 = vadd.f32 %v7327, %v7186
  %v7329 = vadd.f32 %v7328, %v7188
  %v7330 = vadd.f32 %v7329, %v7190
  %v7331 = vrot.slane %v7330, 4
  %v7332 = vadd.f32 %v7330, %v7331
  %v7333 = vrot.slane %v7332, 2
  %v7334 = vadd.f32 %v7332, %v7333
  %v7335 = vrot.slane %v7334, 1
  %v7336 = vadd.f32 %v7334, %v7335
  %v7337 = vadd.f32 %v7177, %v7179
  %v7338 = vadd.f32 %v7337, %v7181
  %v7339 = vadd.f32 %v7338, %v7183
  %v7340 = vadd.f32 %v7339, %v7185
  %v7341 = vadd.f32 %v7340, %v7187
  %v7342 = vadd.f32 %v7341, %v7189
  %v7343 = vadd.f32 %v7342, %v7191
  %v7344 = vrot.slane %v7343, 4
  %v7345 = vadd.f32 %v7343, %v7344
  %v7346 = vrot.slane %v7345, 2
  %v7347 = vadd.f32 %v7345, %v7346
  %v7348 = vrot.slane %v7347, 1
  %v7349 = vadd.f32 %v7347, %v7348
  %v7350 = vadd.f32 %v7192, %v7194
  %v7351 = vadd.f32 %v7350, %v7196
  %v7352 = vadd.f32 %v7351, %v7198
  %v7353 = vadd.f32 %v7352, %v7200
  %v7354 = vadd.f32 %v7353, %v7202
  %v7355 = vadd.f32 %v7354, %v7204
  %v7356 = vadd.f32 %v7355, %v7206
  %v7357 = vrot.slane %v7356, 4
  %v7358 = vadd.f32 %v7356, %v7357
  %v7359 = vrot.slane %v7358, 2
  %v7360 = vadd.f32 %v7358, %v7359
  %v7361 = vrot.slane %v7360, 1
  %v7362 = vadd.f32 %v7360, %v7361
  %v7363 = vadd.f32 %v7193, %v7195
  %v7364 = vadd.f32 %v7363, %v7197
  %v7365 = vadd.f32 %v7364, %v7199
  %v7366 = vadd.f32 %v7365, %v7201
  %v7367 = vadd.f32 %v7366, %v7203
  %v7368 = vadd.f32 %v7367, %v7205
  %v7369 = vadd.f32 %v7368, %v7207
  %v7370 = vrot.slane %v7369, 4
  %v7371 = vadd.f32 %v7369, %v7370
  %v7372 = vrot.slane %v7371, 2
  %v7373 = vadd.f32 %v7371, %v7372
  %v7374 = vrot.slane %v7373, 1
  %v7375 = vadd.f32 %v7373, %v7374
  %v7376 = vadd.f32 %v7208, %v7210
  %v7377 = vadd.f32 %v7376, %v7212
  %v7378 = vadd.f32 %v7377, %v7214
  %v7379 = vadd.f32 %v7378, %v7216
  %v7380 = vadd.f32 %v7379, %v7218
  %v7381 = vadd.f32 %v7380, %v7220
  %v7382 = vadd.f32 %v7381, %v7222
  %v7383 = vrot.slane %v7382, 4
  %v7384 = vadd.f32 %v7382, %v7383
  %v7385 = vrot.slane %v7384, 2
  %v7386 = vadd.f32 %v7384, %v7385
  %v7387 = vrot.slane %v7386, 1
  %v7388 = vadd.f32 %v7386, %v7387
  %v7389 = vadd.f32 %v7209, %v7211
  %v7390 = vadd.f32 %v7389, %v7213
  %v7391 = vadd.f32 %v7390, %v7215
  %v7392 = vadd.f32 %v7391, %v7217
  %v7393 = vadd.f32 %v7392, %v7219
  %v7394 = vadd.f32 %v7393, %v7221
  %v7395 = vadd.f32 %v7394, %v7223
  %v7396 = vrot.slane %v7395, 4
  %v7397 = vadd.f32 %v7395, %v7396
  %v7398 = vrot.slane %v7397, 2
  %v7399 = vadd.f32 %v7397, %v7398
  %v7400 = vrot.slane %v7399, 1
  %v7401 = vadd.f32 %v7399, %v7400
  %v7402 = vadd.f32 %v7224, %v7226
  %v7403 = vadd.f32 %v7402, %v7228
  %v7404 = vadd.f32 %v7403, %v7230
  %v7405 = vadd.f32 %v7404, %v7232
  %v7406 = vadd.f32 %v7405, %v7234
  %v7407 = vadd.f32 %v7406, %v7236
  %v7408 = vadd.f32 %v7407, %v7238
  %v7409 = vrot.slane %v7408, 4
  %v7410 = vadd.f32 %v7408, %v7409
  %v7411 = vrot.slane %v7410, 2
  %v7412 = vadd.f32 %v7410, %v7411
  %v7413 = vrot.slane %v7412, 1
  %v7414 = vadd.f32 %v7412, %v7413
  %v7415 = vadd.f32 %v7225, %v7227
  %v7416 = vadd.f32 %v7415, %v7229
  %v7417 = vadd.f32 %v7416, %v7231
  %v7418 = vadd.f32 %v7417, %v7233
  %v7419 = vadd.f32 %v7418, %v7235
  %v7420 = vadd.f32 %v7419, %v7237
  %v7421 = vadd.f32 %v7420, %v7239
  %v7422 = vrot.slane %v7421, 4
  %v7423 = vadd.f32 %v7421, %v7422
  %v7424 = vrot.slane %v7423, 2
  %v7425 = vadd.f32 %v7423, %v7424
  %v7426 = vrot.slane %v7425, 1
  %v7427 = vadd.f32 %v7425, %v7426
  %v7428 = vadd.f32 %v7240, %v7242
  %v7429 = vadd.f32 %v7428, %v7244
  %v7430 = vadd.f32 %v7429, %v7246
  %v7431 = vadd.f32 %v7430, %v7248
  %v7432 = vadd.f32 %v7431, %v7250
  %v7433 = vadd.f32 %v7432, %v7252
  %v7434 = vadd.f32 %v7433, %v7254
  %v7435 = vrot.slane %v7434, 4
  %v7436 = vadd.f32 %v7434, %v7435
  %v7437 = vrot.slane %v7436, 2
  %v7438 = vadd.f32 %v7436, %v7437
  %v7439 = vrot.slane %v7438, 1
  %v7440 = vadd.f32 %v7438, %v7439
  %v7441 = vadd.f32 %v7241, %v7243
  %v7442 = vadd.f32 %v7441, %v7245
  %v7443 = vadd.f32 %v7442, %v7247
  %v7444 = vadd.f32 %v7443, %v7249
  %v7445 = vadd.f32 %v7444, %v7251
  %v7446 = vadd.f32 %v7445, %v7253
  %v7447 = vadd.f32 %v7446, %v7255
  %v7448 = vrot.slane %v7447, 4
  %v7449 = vadd.f32 %v7447, %v7448
  %v7450 = vrot.slane %v7449, 2
  %v7451 = vadd.f32 %v7449, %v7450
  %v7452 = vrot.slane %v7451, 1
  %v7453 = vadd.f32 %v7451, %v7452
  %v7454 = vadd.f32 %v7256, %v7258
  %v7455 = vadd.f32 %v7454, %v7260
  %v7456 = vadd.f32 %v7455, %v7262
  %v7457 = vadd.f32 %v7456, %v7264
  %v7458 = vadd.f32 %v7457, %v7266
  %v7459 = vadd.f32 %v7458, %v7268
  %v7460 = vadd.f32 %v7459, %v7270
  %v7461 = vrot.slane %v7460, 4
  %v7462 = vadd.f32 %v7460, %v7461
  %v7463 = vrot.slane %v7462, 2
  %v7464 = vadd.f32 %v7462, %v7463
  %v7465 = vrot.slane %v7464, 1
  %v7466 = vadd.f32 %v7464, %v7465
  %v7467 = vadd.f32 %v7257, %v7259
  %v7468 = vadd.f32 %v7467, %v7261
  %v7469 = vadd.f32 %v7468, %v7263
  %v7470 = vadd.f32 %v7469, %v7265
  %v7471 = vadd.f32 %v7470, %v7267
  %v7472 = vadd.f32 %v7471, %v7269
  %v7473 = vadd.f32 %v7472, %v7271
  %v7474 = vrot.slane %v7473, 4
  %v7475 = vadd.f32 %v7473, %v7474
  %v7476 = vrot.slane %v7475, 2
  %v7477 = vadd.f32 %v7475, %v7476
  %v7478 = vrot.slane %v7477, 1
  %v7479 = vadd.f32 %v7477, %v7478
  %v7480 = vmul.f32 %v6948, 0.015625
  %v7481 = vmul.f32 %v6961, 0.015625
  %v7482 = vmul.f32 %v6974, 0.015625
  %v7483 = vmul.f32 %v6987, 0.015625
  %v7484 = vmul.f32 %v7000, 0.015625
  %v7485 = vmul.f32 %v7013, 0.015625
  %v7486 = vmul.f32 %v7026, 0.015625
  %v7487 = vmul.f32 %v7039, 0.015625
  %v7488 = vmul.f32 %v7052, 0.015625
  %v7489 = vmul.f32 %v7065, 0.015625
  %v7490 = vmul.f32 %v7078, 0.015625
  %v7491 = vmul.f32 %v7091, 0.015625
  %v7492 = vmul.f32 %v7104, 0.015625
  %v7493 = vmul.f32 %v7117, 0.015625
  %v7494 = vmul.f32 %v7130, 0.015625
  %v7495 = vmul.f32 %v7143, 0.015625
  %v7496 = vmul.f32 %v7284, 0.015625
  %v7497 = vmul.f32 %v7297, 0.015625
  %v7498 = vmul.f32 %v7310, 0.015625
  %v7499 = vmul.f32 %v7323, 0.015625
  %v7500 = vmul.f32 %v7336, 0.015625
  %v7501 = vmul.f32 %v7349, 0.015625
  %v7502 = vmul.f32 %v7362, 0.015625
  %v7503 = vmul.f32 %v7375, 0.015625
  %v7504 = vmul.f32 %v7388, 0.015625
  %v7505 = vmul.f32 %v7401, 0.015625
  %v7506 = vmul.f32 %v7414, 0.015625
  %v7507 = vmul.f32 %v7427, 0.015625
  %v7508 = vmul.f32 %v7440, 0.015625
  %v7509 = vmul.f32 %v7453, 0.015625
  %v7510 = vmul.f32 %v7466, 0.015625
  %v7511 = vmul.f32 %v7479, 0.015625
  %v7512 = vmul.f32 %v7480, %v7480
  %v7513 = vmul.f32 %v7481, %v7481
  %v7514 = vmul.f32 %v7482, %v7482
  %v7515 = vmul.f32 %v7483, %v7483
  %v7516 = vmul.f32 %v7484, %v7484
  %v7517 = vmul.f32 %v7485, %v7485
  %v7518 = vmul.f32 %v7486, %v7486
  %v7519 = vmul.f32 %v7487, %v7487
  %v7520 = vmul.f32 %v7488, %v7488
  %v7521 = vmul.f32 %v7489, %v7489
  %v7522 = vmul.f32 %v7490, %v7490
  %v7523 = vmul.f32 %v7491, %v7491
  %v7524 = vmul.f32 %v7492, %v7492
  %v7525 = vmul.f32 %v7493, %v7493
  %v7526 = vmul.f32 %v7494, %v7494
  %v7527 = vmul.f32 %v7495, %v7495
  %v7528 = vsub.f32 %v7496, %v7512
  %v7529 = vsub.f32 %v7497, %v7513
  %v7530 = vsub.f32 %v7498, %v7514
  %v7531 = vsub.f32 %v7499, %v7515
  %v7532 = vsub.f32 %v7500, %v7516
  %v7533 = vsub.f32 %v7501, %v7517
  %v7534 = vsub.f32 %v7502, %v7518
  %v7535 = vsub.f32 %v7503, %v7519
  %v7536 = vsub.f32 %v7504, %v7520
  %v7537 = vsub.f32 %v7505, %v7521
  %v7538 = vsub.f32 %v7506, %v7522
  %v7539 = vsub.f32 %v7507, %v7523
  %v7540 = vsub.f32 %v7508, %v7524
  %v7541 = vsub.f32 %v7509, %v7525
  %v7542 = vsub.f32 %v7510, %v7526
  %v7543 = vsub.f32 %v7511, %v7527
  %v7544 = vmax.f32 %v7528, 0.0
  %v7545 = vmax.f32 %v7529, 0.0
  %v7546 = vmax.f32 %v7530, 0.0
  %v7547 = vmax.f32 %v7531, 0.0
  %v7548 = vmax.f32 %v7532, 0.0
  %v7549 = vmax.f32 %v7533, 0.0
  %v7550 = vmax.f32 %v7534, 0.0
  %v7551 = vmax.f32 %v7535, 0.0
  %v7552 = vmax.f32 %v7536, 0.0
  %v7553 = vmax.f32 %v7537, 0.0
  %v7554 = vmax.f32 %v7538, 0.0
  %v7555 = vmax.f32 %v7539, 0.0
  %v7556 = vmax.f32 %v7540, 0.0
  %v7557 = vmax.f32 %v7541, 0.0
  %v7558 = vmax.f32 %v7542, 0.0
  %v7559 = vmax.f32 %v7543, 0.0
  %v7560 = vsub.f32 %v6808, %v7480
  %v7561 = vsub.f32 %v6809, %v7481
  %v7562 = vsub.f32 %v6810, %v7480
  %v7563 = vsub.f32 %v6811, %v7481
  %v7564 = vsub.f32 %v6812, %v7480
  %v7565 = vsub.f32 %v6813, %v7481
  %v7566 = vsub.f32 %v6814, %v7480
  %v7567 = vsub.f32 %v6815, %v7481
  %v7568 = vsub.f32 %v6816, %v7480
  %v7569 = vsub.f32 %v6817, %v7481
  %v7570 = vsub.f32 %v6818, %v7480
  %v7571 = vsub.f32 %v6819, %v7481
  %v7572 = vsub.f32 %v6820, %v7480
  %v7573 = vsub.f32 %v6821, %v7481
  %v7574 = vsub.f32 %v6822, %v7480
  %v7575 = vsub.f32 %v6823, %v7481
  %v7576 = vsub.f32 %v6824, %v7482
  %v7577 = vsub.f32 %v6825, %v7483
  %v7578 = vsub.f32 %v6826, %v7482
  %v7579 = vsub.f32 %v6827, %v7483
  %v7580 = vsub.f32 %v6828, %v7482
  %v7581 = vsub.f32 %v6829, %v7483
  %v7582 = vsub.f32 %v6830, %v7482
  %v7583 = vsub.f32 %v6831, %v7483
  %v7584 = vsub.f32 %v6832, %v7482
  %v7585 = vsub.f32 %v6833, %v7483
  %v7586 = vsub.f32 %v6834, %v7482
  %v7587 = vsub.f32 %v6835, %v7483
  %v7588 = vsub.f32 %v6836, %v7482
  %v7589 = vsub.f32 %v6837, %v7483
  %v7590 = vsub.f32 %v6838, %v7482
  %v7591 = vsub.f32 %v6839, %v7483
  %v7592 = vsub.f32 %v6840, %v7484
  %v7593 = vsub.f32 %v6841, %v7485
  %v7594 = vsub.f32 %v6842, %v7484
  %v7595 = vsub.f32 %v6843, %v7485
  %v7596 = vsub.f32 %v6844, %v7484
  %v7597 = vsub.f32 %v6845, %v7485
  %v7598 = vsub.f32 %v6846, %v7484
  %v7599 = vsub.f32 %v6847, %v7485
  %v7600 = vsub.f32 %v6848, %v7484
  %v7601 = vsub.f32 %v6849, %v7485
  %v7602 = vsub.f32 %v6850, %v7484
  %v7603 = vsub.f32 %v6851, %v7485
  %v7604 = vsub.f32 %v6852, %v7484
  %v7605 = vsub.f32 %v6853, %v7485
  %v7606 = vsub.f32 %v6854, %v7484
  %v7607 = vsub.f32 %v6855, %v7485
  %v7608 = vsub.f32 %v6856, %v7486
  %v7609 = vsub.f32 %v6857, %v7487
  %v7610 = vsub.f32 %v6858, %v7486
  %v7611 = vsub.f32 %v6859, %v7487
  %v7612 = vsub.f32 %v6860, %v7486
  %v7613 = vsub.f32 %v6861, %v7487
  %v7614 = vsub.f32 %v6862, %v7486
  %v7615 = vsub.f32 %v6863, %v7487
  %v7616 = vsub.f32 %v6864, %v7486
  %v7617 = vsub.f32 %v6865, %v7487
  %v7618 = vsub.f32 %v6866, %v7486
  %v7619 = vsub.f32 %v6867, %v7487
  %v7620 = vsub.f32 %v6868, %v7486
  %v7621 = vsub.f32 %v6869, %v7487
  %v7622 = vsub.f32 %v6870, %v7486
  %v7623 = vsub.f32 %v6871, %v7487
  %v7624 = vsub.f32 %v6872, %v7488
  %v7625 = vsub.f32 %v6873, %v7489
  %v7626 = vsub.f32 %v6874, %v7488
  %v7627 = vsub.f32 %v6875, %v7489
  %v7628 = vsub.f32 %v6876, %v7488
  %v7629 = vsub.f32 %v6877, %v7489
  %v7630 = vsub.f32 %v6878, %v7488
  %v7631 = vsub.f32 %v6879, %v7489
  %v7632 = vsub.f32 %v6880, %v7488
  %v7633 = vsub.f32 %v6881, %v7489
  %v7634 = vsub.f32 %v6882, %v7488
  %v7635 = vsub.f32 %v6883, %v7489
  %v7636 = vsub.f32 %v6884, %v7488
  %v7637 = vsub.f32 %v6885, %v7489
  %v7638 = vsub.f32 %v6886, %v7488
  %v7639 = vsub.f32 %v6887, %v7489
  %v7640 = vsub.f32 %v6888, %v7490
  %v7641 = vsub.f32 %v6889, %v7491
  %v7642 = vsub.f32 %v6890, %v7490
  %v7643 = vsub.f32 %v6891, %v7491
  %v7644 = vsub.f32 %v6892, %v7490
  %v7645 = vsub.f32 %v6893, %v7491
  %v7646 = vsub.f32 %v6894, %v7490
  %v7647 = vsub.f32 %v6895, %v7491
  %v7648 = vsub.f32 %v6896, %v7490
  %v7649 = vsub.f32 %v6897, %v7491
  %v7650 = vsub.f32 %v6898, %v7490
  %v7651 = vsub.f32 %v6899, %v7491
  %v7652 = vsub.f32 %v6900, %v7490
  %v7653 = vsub.f32 %v6901, %v7491
  %v7654 = vsub.f32 %v6902, %v7490
  %v7655 = vsub.f32 %v6903, %v7491
  %v7656 = vsub.f32 %v6904, %v7492
  %v7657 = vsub.f32 %v6905, %v7493
  %v7658 = vsub.f32 %v6906, %v7492
  %v7659 = vsub.f32 %v6907, %v7493
  %v7660 = vsub.f32 %v6908, %v7492
  %v7661 = vsub.f32 %v6909, %v7493
  %v7662 = vsub.f32 %v6910, %v7492
  %v7663 = vsub.f32 %v6911, %v7493
  %v7664 = vsub.f32 %v6912, %v7492
  %v7665 = vsub.f32 %v6913, %v7493
  %v7666 = vsub.f32 %v6914, %v7492
  %v7667 = vsub.f32 %v6915, %v7493
  %v7668 = vsub.f32 %v6916, %v7492
  %v7669 = vsub.f32 %v6917, %v7493
  %v7670 = vsub.f32 %v6918, %v7492
  %v7671 = vsub.f32 %v6919, %v7493
  %v7672 = vsub.f32 %v6920, %v7494
  %v7673 = vsub.f32 %v6921, %v7495
  %v7674 = vsub.f32 %v6922, %v7494
  %v7675 = vsub.f32 %v6923, %v7495
  %v7676 = vsub.f32 %v6924, %v7494
  %v7677 = vsub.f32 %v6925, %v7495
  %v7678 = vsub.f32 %v6926, %v7494
  %v7679 = vsub.f32 %v6927, %v7495
  %v7680 = vsub.f32 %v6928, %v7494
  %v7681 = vsub.f32 %v6929, %v7495
  %v7682 = vsub.f32 %v6930, %v7494
  %v7683 = vsub.f32 %v6931, %v7495
  %v7684 = vsub.f32 %v6932, %v7494
  %v7685 = vsub.f32 %v6933, %v7495
  %v7686 = vsub.f32 %v6934, %v7494
  %v7687 = vsub.f32 %v6935, %v7495
  %v7688 = vadd.f32 %v7544, 1e-05
  %v7689 = vadd.f32 %v7545, 1e-05
  %v7690 = vadd.f32 %v7546, 1e-05
  %v7691 = vadd.f32 %v7547, 1e-05
  %v7692 = vadd.f32 %v7548, 1e-05
  %v7693 = vadd.f32 %v7549, 1e-05
  %v7694 = vadd.f32 %v7550, 1e-05
  %v7695 = vadd.f32 %v7551, 1e-05
  %v7696 = vadd.f32 %v7552, 1e-05
  %v7697 = vadd.f32 %v7553, 1e-05
  %v7698 = vadd.f32 %v7554, 1e-05
  %v7699 = vadd.f32 %v7555, 1e-05
  %v7700 = vadd.f32 %v7556, 1e-05
  %v7701 = vadd.f32 %v7557, 1e-05
  %v7702 = vadd.f32 %v7558, 1e-05
  %v7703 = vadd.f32 %v7559, 1e-05
  %v7704 = vrsqrt.pop %v7688
  %v7705 = vrsqrt.pop %v7689
  %v7706 = vrsqrt.pop %v7690
  %v7707 = vrsqrt.pop %v7691
  %v7708 = vrsqrt.pop %v7692
  %v7709 = vrsqrt.pop %v7693
  %v7710 = vrsqrt.pop %v7694
  %v7711 = vrsqrt.pop %v7695
  %v7712 = vrsqrt.pop %v7696
  %v7713 = vrsqrt.pop %v7697
  %v7714 = vrsqrt.pop %v7698
  %v7715 = vrsqrt.pop %v7699
  %v7716 = vrsqrt.pop %v7700
  %v7717 = vrsqrt.pop %v7701
  %v7718 = vrsqrt.pop %v7702
  %v7719 = vrsqrt.pop %v7703
  %v7720 = vmul.f32 %v7560, %v7704
  %v7721 = vmul.f32 %v7561, %v7705
  %v7722 = vmul.f32 %v7562, %v7704
  %v7723 = vmul.f32 %v7563, %v7705
  %v7724 = vmul.f32 %v7564, %v7704
  %v7725 = vmul.f32 %v7565, %v7705
  %v7726 = vmul.f32 %v7566, %v7704
  %v7727 = vmul.f32 %v7567, %v7705
  %v7728 = vmul.f32 %v7568, %v7704
  %v7729 = vmul.f32 %v7569, %v7705
  %v7730 = vmul.f32 %v7570, %v7704
  %v7731 = vmul.f32 %v7571, %v7705
  %v7732 = vmul.f32 %v7572, %v7704
  %v7733 = vmul.f32 %v7573, %v7705
  %v7734 = vmul.f32 %v7574, %v7704
  %v7735 = vmul.f32 %v7575, %v7705
  %v7736 = vmul.f32 %v7576, %v7706
  %v7737 = vmul.f32 %v7577, %v7707
  %v7738 = vmul.f32 %v7578, %v7706
  %v7739 = vmul.f32 %v7579, %v7707
  %v7740 = vmul.f32 %v7580, %v7706
  %v7741 = vmul.f32 %v7581, %v7707
  %v7742 = vmul.f32 %v7582, %v7706
  %v7743 = vmul.f32 %v7583, %v7707
  %v7744 = vmul.f32 %v7584, %v7706
  %v7745 = vmul.f32 %v7585, %v7707
  %v7746 = vmul.f32 %v7586, %v7706
  %v7747 = vmul.f32 %v7587, %v7707
  %v7748 = vmul.f32 %v7588, %v7706
  %v7749 = vmul.f32 %v7589, %v7707
  %v7750 = vmul.f32 %v7590, %v7706
  %v7751 = vmul.f32 %v7591, %v7707
  %v7752 = vmul.f32 %v7592, %v7708
  %v7753 = vmul.f32 %v7593, %v7709
  %v7754 = vmul.f32 %v7594, %v7708
  %v7755 = vmul.f32 %v7595, %v7709
  %v7756 = vmul.f32 %v7596, %v7708
  %v7757 = vmul.f32 %v7597, %v7709
  %v7758 = vmul.f32 %v7598, %v7708
  %v7759 = vmul.f32 %v7599, %v7709
  %v7760 = vmul.f32 %v7600, %v7708
  %v7761 = vmul.f32 %v7601, %v7709
  %v7762 = vmul.f32 %v7602, %v7708
  %v7763 = vmul.f32 %v7603, %v7709
  %v7764 = vmul.f32 %v7604, %v7708
  %v7765 = vmul.f32 %v7605, %v7709
  %v7766 = vmul.f32 %v7606, %v7708
  %v7767 = vmul.f32 %v7607, %v7709
  %v7768 = vmul.f32 %v7608, %v7710
  %v7769 = vmul.f32 %v7609, %v7711
  %v7770 = vmul.f32 %v7610, %v7710
  %v7771 = vmul.f32 %v7611, %v7711
  %v7772 = vmul.f32 %v7612, %v7710
  %v7773 = vmul.f32 %v7613, %v7711
  %v7774 = vmul.f32 %v7614, %v7710
  %v7775 = vmul.f32 %v7615, %v7711
  %v7776 = vmul.f32 %v7616, %v7710
  %v7777 = vmul.f32 %v7617, %v7711
  %v7778 = vmul.f32 %v7618, %v7710
  %v7779 = vmul.f32 %v7619, %v7711
  %v7780 = vmul.f32 %v7620, %v7710
  %v7781 = vmul.f32 %v7621, %v7711
  %v7782 = vmul.f32 %v7622, %v7710
  %v7783 = vmul.f32 %v7623, %v7711
  %v7784 = vmul.f32 %v7624, %v7712
  %v7785 = vmul.f32 %v7625, %v7713
  %v7786 = vmul.f32 %v7626, %v7712
  %v7787 = vmul.f32 %v7627, %v7713
  %v7788 = vmul.f32 %v7628, %v7712
  %v7789 = vmul.f32 %v7629, %v7713
  %v7790 = vmul.f32 %v7630, %v7712
  %v7791 = vmul.f32 %v7631, %v7713
  %v7792 = vmul.f32 %v7632, %v7712
  %v7793 = vmul.f32 %v7633, %v7713
  %v7794 = vmul.f32 %v7634, %v7712
  %v7795 = vmul.f32 %v7635, %v7713
  %v7796 = vmul.f32 %v7636, %v7712
  %v7797 = vmul.f32 %v7637, %v7713
  %v7798 = vmul.f32 %v7638, %v7712
  %v7799 = vmul.f32 %v7639, %v7713
  %v7800 = vmul.f32 %v7640, %v7714
  %v7801 = vmul.f32 %v7641, %v7715
  %v7802 = vmul.f32 %v7642, %v7714
  %v7803 = vmul.f32 %v7643, %v7715
  %v7804 = vmul.f32 %v7644, %v7714
  %v7805 = vmul.f32 %v7645, %v7715
  %v7806 = vmul.f32 %v7646, %v7714
  %v7807 = vmul.f32 %v7647, %v7715
  %v7808 = vmul.f32 %v7648, %v7714
  %v7809 = vmul.f32 %v7649, %v7715
  %v7810 = vmul.f32 %v7650, %v7714
  %v7811 = vmul.f32 %v7651, %v7715
  %v7812 = vmul.f32 %v7652, %v7714
  %v7813 = vmul.f32 %v7653, %v7715
  %v7814 = vmul.f32 %v7654, %v7714
  %v7815 = vmul.f32 %v7655, %v7715
  %v7816 = vmul.f32 %v7656, %v7716
  %v7817 = vmul.f32 %v7657, %v7717
  %v7818 = vmul.f32 %v7658, %v7716
  %v7819 = vmul.f32 %v7659, %v7717
  %v7820 = vmul.f32 %v7660, %v7716
  %v7821 = vmul.f32 %v7661, %v7717
  %v7822 = vmul.f32 %v7662, %v7716
  %v7823 = vmul.f32 %v7663, %v7717
  %v7824 = vmul.f32 %v7664, %v7716
  %v7825 = vmul.f32 %v7665, %v7717
  %v7826 = vmul.f32 %v7666, %v7716
  %v7827 = vmul.f32 %v7667, %v7717
  %v7828 = vmul.f32 %v7668, %v7716
  %v7829 = vmul.f32 %v7669, %v7717
  %v7830 = vmul.f32 %v7670, %v7716
  %v7831 = vmul.f32 %v7671, %v7717
  %v7832 = vmul.f32 %v7672, %v7718
  %v7833 = vmul.f32 %v7673, %v7719
  %v7834 = vmul.f32 %v7674, %v7718
  %v7835 = vmul.f32 %v7675, %v7719
  %v7836 = vmul.f32 %v7676, %v7718
  %v7837 = vmul.f32 %v7677, %v7719
  %v7838 = vmul.f32 %v7678, %v7718
  %v7839 = vmul.f32 %v7679, %v7719
  %v7840 = vmul.f32 %v7680, %v7718
  %v7841 = vmul.f32 %v7681, %v7719
  %v7842 = vmul.f32 %v7682, %v7718
  %v7843 = vmul.f32 %v7683, %v7719
  %v7844 = vmul.f32 %v7684, %v7718
  %v7845 = vmul.f32 %v7685, %v7719
  %v7846 = vmul.f32 %v7686, %v7718
  %v7847 = vmul.f32 %v7687, %v7719
  %v7848 = vmax.f32 %v7720, 0.0
  %v7849 = vmax.f32 %v7721, 0.0
  %v7850 = vmax.f32 %v7722, 0.0
  %v7851 = vmax.f32 %v7723, 0.0
  %v7852 = vmax.f32 %v7724, 0.0
  %v7853 = vmax.f32 %v7725, 0.0
  %v7854 = vmax.f32 %v7726, 0.0
  %v7855 = vmax.f32 %v7727, 0.0
  %v7856 = vmax.f32 %v7728, 0.0
  %v7857 = vmax.f32 %v7729, 0.0
  %v7858 = vmax.f32 %v7730, 0.0
  %v7859 = vmax.f32 %v7731, 0.0
  %v7860 = vmax.f32 %v7732, 0.0
  %v7861 = vmax.f32 %v7733, 0.0
  %v7862 = vmax.f32 %v7734, 0.0
  %v7863 = vmax.f32 %v7735, 0.0
  %v7864 = vmax.f32 %v7736, 0.0
  %v7865 = vmax.f32 %v7737, 0.0
  %v7866 = vmax.f32 %v7738, 0.0
  %v7867 = vmax.f32 %v7739, 0.0
  %v7868 = vmax.f32 %v7740, 0.0
  %v7869 = vmax.f32 %v7741, 0.0
  %v7870 = vmax.f32 %v7742, 0.0
  %v7871 = vmax.f32 %v7743, 0.0
  %v7872 = vmax.f32 %v7744, 0.0
  %v7873 = vmax.f32 %v7745, 0.0
  %v7874 = vmax.f32 %v7746, 0.0
  %v7875 = vmax.f32 %v7747, 0.0
  %v7876 = vmax.f32 %v7748, 0.0
  %v7877 = vmax.f32 %v7749, 0.0
  %v7878 = vmax.f32 %v7750, 0.0
  %v7879 = vmax.f32 %v7751, 0.0
  %v7880 = vmax.f32 %v7752, 0.0
  %v7881 = vmax.f32 %v7753, 0.0
  %v7882 = vmax.f32 %v7754, 0.0
  %v7883 = vmax.f32 %v7755, 0.0
  %v7884 = vmax.f32 %v7756, 0.0
  %v7885 = vmax.f32 %v7757, 0.0
  %v7886 = vmax.f32 %v7758, 0.0
  %v7887 = vmax.f32 %v7759, 0.0
  %v7888 = vmax.f32 %v7760, 0.0
  %v7889 = vmax.f32 %v7761, 0.0
  %v7890 = vmax.f32 %v7762, 0.0
  %v7891 = vmax.f32 %v7763, 0.0
  %v7892 = vmax.f32 %v7764, 0.0
  %v7893 = vmax.f32 %v7765, 0.0
  %v7894 = vmax.f32 %v7766, 0.0
  %v7895 = vmax.f32 %v7767, 0.0
  %v7896 = vmax.f32 %v7768, 0.0
  %v7897 = vmax.f32 %v7769, 0.0
  %v7898 = vmax.f32 %v7770, 0.0
  %v7899 = vmax.f32 %v7771, 0.0
  %v7900 = vmax.f32 %v7772, 0.0
  %v7901 = vmax.f32 %v7773, 0.0
  %v7902 = vmax.f32 %v7774, 0.0
  %v7903 = vmax.f32 %v7775, 0.0
  %v7904 = vmax.f32 %v7776, 0.0
  %v7905 = vmax.f32 %v7777, 0.0
  %v7906 = vmax.f32 %v7778, 0.0
  %v7907 = vmax.f32 %v7779, 0.0
  %v7908 = vmax.f32 %v7780, 0.0
  %v7909 = vmax.f32 %v7781, 0.0
  %v7910 = vmax.f32 %v7782, 0.0
  %v7911 = vmax.f32 %v7783, 0.0
  %v7912 = vmax.f32 %v7784, 0.0
  %v7913 = vmax.f32 %v7785, 0.0
  %v7914 = vmax.f32 %v7786, 0.0
  %v7915 = vmax.f32 %v7787, 0.0
  %v7916 = vmax.f32 %v7788, 0.0
  %v7917 = vmax.f32 %v7789, 0.0
  %v7918 = vmax.f32 %v7790, 0.0
  %v7919 = vmax.f32 %v7791, 0.0
  %v7920 = vmax.f32 %v7792, 0.0
  %v7921 = vmax.f32 %v7793, 0.0
  %v7922 = vmax.f32 %v7794, 0.0
  %v7923 = vmax.f32 %v7795, 0.0
  %v7924 = vmax.f32 %v7796, 0.0
  %v7925 = vmax.f32 %v7797, 0.0
  %v7926 = vmax.f32 %v7798, 0.0
  %v7927 = vmax.f32 %v7799, 0.0
  %v7928 = vmax.f32 %v7800, 0.0
  %v7929 = vmax.f32 %v7801, 0.0
  %v7930 = vmax.f32 %v7802, 0.0
  %v7931 = vmax.f32 %v7803, 0.0
  %v7932 = vmax.f32 %v7804, 0.0
  %v7933 = vmax.f32 %v7805, 0.0
  %v7934 = vmax.f32 %v7806, 0.0
  %v7935 = vmax.f32 %v7807, 0.0
  %v7936 = vmax.f32 %v7808, 0.0
  %v7937 = vmax.f32 %v7809, 0.0
  %v7938 = vmax.f32 %v7810, 0.0
  %v7939 = vmax.f32 %v7811, 0.0
  %v7940 = vmax.f32 %v7812, 0.0
  %v7941 = vmax.f32 %v7813, 0.0
  %v7942 = vmax.f32 %v7814, 0.0
  %v7943 = vmax.f32 %v7815, 0.0
  %v7944 = vmax.f32 %v7816, 0.0
  %v7945 = vmax.f32 %v7817, 0.0
  %v7946 = vmax.f32 %v7818, 0.0
  %v7947 = vmax.f32 %v7819, 0.0
  %v7948 = vmax.f32 %v7820, 0.0
  %v7949 = vmax.f32 %v7821, 0.0
  %v7950 = vmax.f32 %v7822, 0.0
  %v7951 = vmax.f32 %v7823, 0.0
  %v7952 = vmax.f32 %v7824, 0.0
  %v7953 = vmax.f32 %v7825, 0.0
  %v7954 = vmax.f32 %v7826, 0.0
  %v7955 = vmax.f32 %v7827, 0.0
  %v7956 = vmax.f32 %v7828, 0.0
  %v7957 = vmax.f32 %v7829, 0.0
  %v7958 = vmax.f32 %v7830, 0.0
  %v7959 = vmax.f32 %v7831, 0.0
  %v7960 = vmax.f32 %v7832, 0.0
  %v7961 = vmax.f32 %v7833, 0.0
  %v7962 = vmax.f32 %v7834, 0.0
  %v7963 = vmax.f32 %v7835, 0.0
  %v7964 = vmax.f32 %v7836, 0.0
  %v7965 = vmax.f32 %v7837, 0.0
  %v7966 = vmax.f32 %v7838, 0.0
  %v7967 = vmax.f32 %v7839, 0.0
  %v7968 = vmax.f32 %v7840, 0.0
  %v7969 = vmax.f32 %v7841, 0.0
  %v7970 = vmax.f32 %v7842, 0.0
  %v7971 = vmax.f32 %v7843, 0.0
  %v7972 = vmax.f32 %v7844, 0.0
  %v7973 = vmax.f32 %v7845, 0.0
  %v7974 = vmax.f32 %v7846, 0.0
  %v7975 = vmax.f32 %v7847, 0.0
  %v7976 = vrot.slane %v7848, 7
  %v7977 = vrot.slane %v7849, 7
  %v7978 = vrot.slane %v7850, 7
  %v7979 = vrot.slane %v7851, 7
  %v7980 = vrot.slane %v7852, 7
  %v7981 = vrot.slane %v7853, 7
  %v7982 = vrot.slane %v7854, 7
  %v7983 = vrot.slane %v7855, 7
  %v7984 = vrot.slane %v7856, 7
  %v7985 = vrot.slane %v7857, 7
  %v7986 = vrot.slane %v7858, 7
  %v7987 = vrot.slane %v7859, 7
  %v7988 = vrot.slane %v7860, 7
  %v7989 = vrot.slane %v7861, 7
  %v7990 = vrot.slane %v7862, 7
  %v7991 = vrot.slane %v7863, 7
  %v7992 = vrot.slane %v7864, 7
  %v7993 = vrot.slane %v7865, 7
  %v7994 = vrot.slane %v7866, 7
  %v7995 = vrot.slane %v7867, 7
  %v7996 = vrot.slane %v7868, 7
  %v7997 = vrot.slane %v7869, 7
  %v7998 = vrot.slane %v7870, 7
  %v7999 = vrot.slane %v7871, 7
  %v8000 = vrot.slane %v7872, 7
  %v8001 = vrot.slane %v7873, 7
  %v8002 = vrot.slane %v7874, 7
  %v8003 = vrot.slane %v7875, 7
  %v8004 = vrot.slane %v7876, 7
  %v8005 = vrot.slane %v7877, 7
  %v8006 = vrot.slane %v7878, 7
  %v8007 = vrot.slane %v7879, 7
  %v8008 = vrot.slane %v7880, 7
  %v8009 = vrot.slane %v7881, 7
  %v8010 = vrot.slane %v7882, 7
  %v8011 = vrot.slane %v7883, 7
  %v8012 = vrot.slane %v7884, 7
  %v8013 = vrot.slane %v7885, 7
  %v8014 = vrot.slane %v7886, 7
  %v8015 = vrot.slane %v7887, 7
  %v8016 = vrot.slane %v7888, 7
  %v8017 = vrot.slane %v7889, 7
  %v8018 = vrot.slane %v7890, 7
  %v8019 = vrot.slane %v7891, 7
  %v8020 = vrot.slane %v7892, 7
  %v8021 = vrot.slane %v7893, 7
  %v8022 = vrot.slane %v7894, 7
  %v8023 = vrot.slane %v7895, 7
  %v8024 = vrot.slane %v7896, 7
  %v8025 = vrot.slane %v7897, 7
  %v8026 = vrot.slane %v7898, 7
  %v8027 = vrot.slane %v7899, 7
  %v8028 = vrot.slane %v7900, 7
  %v8029 = vrot.slane %v7901, 7
  %v8030 = vrot.slane %v7902, 7
  %v8031 = vrot.slane %v7903, 7
  %v8032 = vrot.slane %v7904, 7
  %v8033 = vrot.slane %v7905, 7
  %v8034 = vrot.slane %v7906, 7
  %v8035 = vrot.slane %v7907, 7
  %v8036 = vrot.slane %v7908, 7
  %v8037 = vrot.slane %v7909, 7
  %v8038 = vrot.slane %v7910, 7
  %v8039 = vrot.slane %v7911, 7
  %v8040 = vrot.slane %v7912, 7
  %v8041 = vrot.slane %v7913, 7
  %v8042 = vrot.slane %v7914, 7
  %v8043 = vrot.slane %v7915, 7
  %v8044 = vrot.slane %v7916, 7
  %v8045 = vrot.slane %v7917, 7
  %v8046 = vrot.slane %v7918, 7
  %v8047 = vrot.slane %v7919, 7
  %v8048 = vrot.slane %v7920, 7
  %v8049 = vrot.slane %v7921, 7
  %v8050 = vrot.slane %v7922, 7
  %v8051 = vrot.slane %v7923, 7
  %v8052 = vrot.slane %v7924, 7
  %v8053 = vrot.slane %v7925, 7
  %v8054 = vrot.slane %v7926, 7
  %v8055 = vrot.slane %v7927, 7
  %v8056 = vrot.slane %v7928, 7
  %v8057 = vrot.slane %v7929, 7
  %v8058 = vrot.slane %v7930, 7
  %v8059 = vrot.slane %v7931, 7
  %v8060 = vrot.slane %v7932, 7
  %v8061 = vrot.slane %v7933, 7
  %v8062 = vrot.slane %v7934, 7
  %v8063 = vrot.slane %v7935, 7
  %v8064 = vrot.slane %v7936, 7
  %v8065 = vrot.slane %v7937, 7
  %v8066 = vrot.slane %v7938, 7
  %v8067 = vrot.slane %v7939, 7
  %v8068 = vrot.slane %v7940, 7
  %v8069 = vrot.slane %v7941, 7
  %v8070 = vrot.slane %v7942, 7
  %v8071 = vrot.slane %v7943, 7
  %v8072 = vrot.slane %v7944, 7
  %v8073 = vrot.slane %v7945, 7
  %v8074 = vrot.slane %v7946, 7
  %v8075 = vrot.slane %v7947, 7
  %v8076 = vrot.slane %v7948, 7
  %v8077 = vrot.slane %v7949, 7
  %v8078 = vrot.slane %v7950, 7
  %v8079 = vrot.slane %v7951, 7
  %v8080 = vrot.slane %v7952, 7
  %v8081 = vrot.slane %v7953, 7
  %v8082 = vrot.slane %v7954, 7
  %v8083 = vrot.slane %v7955, 7
  %v8084 = vrot.slane %v7956, 7
  %v8085 = vrot.slane %v7957, 7
  %v8086 = vrot.slane %v7958, 7
  %v8087 = vrot.slane %v7959, 7
  %v8088 = vrot.slane %v7960, 7
  %v8089 = vrot.slane %v7961, 7
  %v8090 = vrot.slane %v7962, 7
  %v8091 = vrot.slane %v7963, 7
  %v8092 = vrot.slane %v7964, 7
  %v8093 = vrot.slane %v7965, 7
  %v8094 = vrot.slane %v7966, 7
  %v8095 = vrot.slane %v7967, 7
  %v8096 = vrot.slane %v7968, 7
  %v8097 = vrot.slane %v7969, 7
  %v8098 = vrot.slane %v7970, 7
  %v8099 = vrot.slane %v7971, 7
  %v8100 = vrot.slane %v7972, 7
  %v8101 = vrot.slane %v7973, 7
  %v8102 = vrot.slane %v7974, 7
  %v8103 = vrot.slane %v7975, 7
  %v8104 = vsel %vm2508, %v8100, %v8102
  %v8105 = vsel %vm2508, %v8101, %v8103
  %v8106 = vsel %vm2508, %v8098, %v8100
  %v8107 = vsel %vm2508, %v8099, %v8101
  %v8108 = vsel %vm2508, %v8096, %v8098
  %v8109 = vsel %vm2508, %v8097, %v8099
  %v8110 = vsel %vm2508, %v8094, %v8096
  %v8111 = vsel %vm2508, %v8095, %v8097
  %v8112 = vsel %vm2508, %v8092, %v8094
  %v8113 = vsel %vm2508, %v8093, %v8095
  %v8114 = vsel %vm2508, %v8090, %v8092
  %v8115 = vsel %vm2508, %v8091, %v8093
  %v8116 = vsel %vm2508, %v8088, %v8090
  %v8117 = vsel %vm2508, %v8089, %v8091
  %v8118 = vsel %vm2508, %v8086, %v8088
  %v8119 = vsel %vm2508, %v8087, %v8089
  %v8120 = vsel %vm2508, %v8084, %v8086
  %v8121 = vsel %vm2508, %v8085, %v8087
  %v8122 = vsel %vm2508, %v8082, %v8084
  %v8123 = vsel %vm2508, %v8083, %v8085
  %v8124 = vsel %vm2508, %v8080, %v8082
  %v8125 = vsel %vm2508, %v8081, %v8083
  %v8126 = vsel %vm2508, %v8078, %v8080
  %v8127 = vsel %vm2508, %v8079, %v8081
  %v8128 = vsel %vm2508, %v8076, %v8078
  %v8129 = vsel %vm2508, %v8077, %v8079
  %v8130 = vsel %vm2508, %v8074, %v8076
  %v8131 = vsel %vm2508, %v8075, %v8077
  %v8132 = vsel %vm2508, %v8072, %v8074
  %v8133 = vsel %vm2508, %v8073, %v8075
  %v8134 = vsel %vm2508, %v8070, %v8072
  %v8135 = vsel %vm2508, %v8071, %v8073
  %v8136 = vsel %vm2508, %v8068, %v8070
  %v8137 = vsel %vm2508, %v8069, %v8071
  %v8138 = vsel %vm2508, %v8066, %v8068
  %v8139 = vsel %vm2508, %v8067, %v8069
  %v8140 = vsel %vm2508, %v8064, %v8066
  %v8141 = vsel %vm2508, %v8065, %v8067
  %v8142 = vsel %vm2508, %v8062, %v8064
  %v8143 = vsel %vm2508, %v8063, %v8065
  %v8144 = vsel %vm2508, %v8060, %v8062
  %v8145 = vsel %vm2508, %v8061, %v8063
  %v8146 = vsel %vm2508, %v8058, %v8060
  %v8147 = vsel %vm2508, %v8059, %v8061
  %v8148 = vsel %vm2508, %v8056, %v8058
  %v8149 = vsel %vm2508, %v8057, %v8059
  %v8150 = vsel %vm2508, %v8054, %v8056
  %v8151 = vsel %vm2508, %v8055, %v8057
  %v8152 = vsel %vm2508, %v8052, %v8054
  %v8153 = vsel %vm2508, %v8053, %v8055
  %v8154 = vsel %vm2508, %v8050, %v8052
  %v8155 = vsel %vm2508, %v8051, %v8053
  %v8156 = vsel %vm2508, %v8048, %v8050
  %v8157 = vsel %vm2508, %v8049, %v8051
  %v8158 = vsel %vm2508, %v8046, %v8048
  %v8159 = vsel %vm2508, %v8047, %v8049
  %v8160 = vsel %vm2508, %v8044, %v8046
  %v8161 = vsel %vm2508, %v8045, %v8047
  %v8162 = vsel %vm2508, %v8042, %v8044
  %v8163 = vsel %vm2508, %v8043, %v8045
  %v8164 = vsel %vm2508, %v8040, %v8042
  %v8165 = vsel %vm2508, %v8041, %v8043
  %v8166 = vsel %vm2508, %v8038, %v8040
  %v8167 = vsel %vm2508, %v8039, %v8041
  %v8168 = vsel %vm2508, %v8036, %v8038
  %v8169 = vsel %vm2508, %v8037, %v8039
  %v8170 = vsel %vm2508, %v8034, %v8036
  %v8171 = vsel %vm2508, %v8035, %v8037
  %v8172 = vsel %vm2508, %v8032, %v8034
  %v8173 = vsel %vm2508, %v8033, %v8035
  %v8174 = vsel %vm2508, %v8030, %v8032
  %v8175 = vsel %vm2508, %v8031, %v8033
  %v8176 = vsel %vm2508, %v8028, %v8030
  %v8177 = vsel %vm2508, %v8029, %v8031
  %v8178 = vsel %vm2508, %v8026, %v8028
  %v8179 = vsel %vm2508, %v8027, %v8029
  %v8180 = vsel %vm2508, %v8024, %v8026
  %v8181 = vsel %vm2508, %v8025, %v8027
  %v8182 = vsel %vm2508, %v8022, %v8024
  %v8183 = vsel %vm2508, %v8023, %v8025
  %v8184 = vsel %vm2508, %v8020, %v8022
  %v8185 = vsel %vm2508, %v8021, %v8023
  %v8186 = vsel %vm2508, %v8018, %v8020
  %v8187 = vsel %vm2508, %v8019, %v8021
  %v8188 = vsel %vm2508, %v8016, %v8018
  %v8189 = vsel %vm2508, %v8017, %v8019
  %v8190 = vsel %vm2508, %v8014, %v8016
  %v8191 = vsel %vm2508, %v8015, %v8017
  %v8192 = vsel %vm2508, %v8012, %v8014
  %v8193 = vsel %vm2508, %v8013, %v8015
  %v8194 = vsel %vm2508, %v8010, %v8012
  %v8195 = vsel %vm2508, %v8011, %v8013
  %v8196 = vsel %vm2508, %v8008, %v8010
  %v8197 = vsel %vm2508, %v8009, %v8011
  %v8198 = vsel %vm2508, %v8006, %v8008
  %v8199 = vsel %vm2508, %v8007, %v8009
  %v8200 = vsel %vm2508, %v8004, %v8006
  %v8201 = vsel %vm2508, %v8005, %v8007
  %v8202 = vsel %vm2508, %v8002, %v8004
  %v8203 = vsel %vm2508, %v8003, %v8005
  %v8204 = vsel %vm2508, %v8000, %v8002
  %v8205 = vsel %vm2508, %v8001, %v8003
  %v8206 = vsel %vm2508, %v7998, %v8000
  %v8207 = vsel %vm2508, %v7999, %v8001
  %v8208 = vsel %vm2508, %v7996, %v7998
  %v8209 = vsel %vm2508, %v7997, %v7999
  %v8210 = vsel %vm2508, %v7994, %v7996
  %v8211 = vsel %vm2508, %v7995, %v7997
  %v8212 = vsel %vm2508, %v7992, %v7994
  %v8213 = vsel %vm2508, %v7993, %v7995
  %v8214 = vsel %vm2508, %v7990, %v7992
  %v8215 = vsel %vm2508, %v7991, %v7993
  %v8216 = vsel %vm2508, %v7988, %v7990
  %v8217 = vsel %vm2508, %v7989, %v7991
  %v8218 = vsel %vm2508, %v7986, %v7988
  %v8219 = vsel %vm2508, %v7987, %v7989
  %v8220 = vsel %vm2508, %v7984, %v7986
  %v8221 = vsel %vm2508, %v7985, %v7987
  %v8222 = vsel %vm2508, %v7982, %v7984
  %v8223 = vsel %vm2508, %v7983, %v7985
  %v8224 = vsel %vm2508, %v7980, %v7982
  %v8225 = vsel %vm2508, %v7981, %v7983
  %v8226 = vsel %vm2508, %v7978, %v7980
  %v8227 = vsel %vm2508, %v7979, %v7981
  %v8228 = vsel %vm2508, %v7976, %v7978
  %v8229 = vsel %vm2508, %v7977, %v7979
  %v8230 = vsel %vm2508, %v8102, %v7976
  %v8231 = vsel %vm2508, %v8103, %v7977
  %v8232 = vsel %vm2893, %v8230, 0.0
  %v8233 = vsel %vm2893, %v8231, 0.0
  %v8234 = vsel %vm2894, %v8228, 0.0
  %v8235 = vsel %vm2894, %v8229, 0.0
  %v8236 = vsel %vm2895, %v8226, 0.0
  %v8237 = vsel %vm2895, %v8227, 0.0
  %v8238 = vsel %vm2896, %v8224, 0.0
  %v8239 = vsel %vm2896, %v8225, 0.0
  %v8240 = vsel %vm2897, %v8222, 0.0
  %v8241 = vsel %vm2897, %v8223, 0.0
  %v8242 = vsel %vm2898, %v8220, 0.0
  %v8243 = vsel %vm2898, %v8221, 0.0
  %v8244 = vsel %vm2899, %v8218, 0.0
  %v8245 = vsel %vm2899, %v8219, 0.0
  %v8246 = vsel %vm2900, %v8216, 0.0
  %v8247 = vsel %vm2900, %v8217, 0.0
  %v8248 = vsel %vm2901, %v8214, 0.0
  %v8249 = vsel %vm2901, %v8215, 0.0
  %v8250 = vsel %vm2902, %v8212, 0.0
  %v8251 = vsel %vm2902, %v8213, 0.0
  %v8252 = vsel %vm2903, %v8210, 0.0
  %v8253 = vsel %vm2903, %v8211, 0.0
  %v8254 = vsel %vm2904, %v8208, 0.0
  %v8255 = vsel %vm2904, %v8209, 0.0
  %v8256 = vsel %vm2905, %v8206, 0.0
  %v8257 = vsel %vm2905, %v8207, 0.0
  %v8258 = vsel %vm2906, %v8204, 0.0
  %v8259 = vsel %vm2906, %v8205, 0.0
  %v8260 = vsel %vm2907, %v8202, 0.0
  %v8261 = vsel %vm2907, %v8203, 0.0
  %v8262 = vsel %vm2908, %v8200, 0.0
  %v8263 = vsel %vm2908, %v8201, 0.0
  %v8264 = vsel %vm2909, %v8198, 0.0
  %v8265 = vsel %vm2909, %v8199, 0.0
  %v8266 = vsel %vm2910, %v8196, 0.0
  %v8267 = vsel %vm2910, %v8197, 0.0
  %v8268 = vsel %vm2911, %v8194, 0.0
  %v8269 = vsel %vm2911, %v8195, 0.0
  %v8270 = vsel %vm2912, %v8192, 0.0
  %v8271 = vsel %vm2912, %v8193, 0.0
  %v8272 = vsel %vm2913, %v8190, 0.0
  %v8273 = vsel %vm2913, %v8191, 0.0
  %v8274 = vsel %vm2914, %v8188, 0.0
  %v8275 = vsel %vm2914, %v8189, 0.0
  %v8276 = vsel %vm2915, %v8186, 0.0
  %v8277 = vsel %vm2915, %v8187, 0.0
  %v8278 = vsel %vm2916, %v8184, 0.0
  %v8279 = vsel %vm2916, %v8185, 0.0
  %v8280 = vsel %vm2917, %v8182, 0.0
  %v8281 = vsel %vm2917, %v8183, 0.0
  %v8282 = vsel %vm2918, %v8180, 0.0
  %v8283 = vsel %vm2918, %v8181, 0.0
  %v8284 = vsel %vm2919, %v8178, 0.0
  %v8285 = vsel %vm2919, %v8179, 0.0
  %v8286 = vsel %vm2920, %v8176, 0.0
  %v8287 = vsel %vm2920, %v8177, 0.0
  %v8288 = vsel %vm2921, %v8174, 0.0
  %v8289 = vsel %vm2921, %v8175, 0.0
  %v8290 = vsel %vm2922, %v8172, 0.0
  %v8291 = vsel %vm2922, %v8173, 0.0
  %v8292 = vsel %vm2923, %v8170, 0.0
  %v8293 = vsel %vm2923, %v8171, 0.0
  %v8294 = vsel %vm2924, %v8168, 0.0
  %v8295 = vsel %vm2924, %v8169, 0.0
  %v8296 = vsel %vm2925, %v8166, 0.0
  %v8297 = vsel %vm2925, %v8167, 0.0
  %v8298 = vsel %vm2926, %v8164, 0.0
  %v8299 = vsel %vm2926, %v8165, 0.0
  %v8300 = vsel %vm2927, %v8162, 0.0
  %v8301 = vsel %vm2927, %v8163, 0.0
  %v8302 = vsel %vm2928, %v8160, 0.0
  %v8303 = vsel %vm2928, %v8161, 0.0
  %v8304 = vsel %vm2929, %v8158, 0.0
  %v8305 = vsel %vm2929, %v8159, 0.0
  %v8306 = vsel %vm2930, %v8156, 0.0
  %v8307 = vsel %vm2930, %v8157, 0.0
  %v8308 = vsel %vm2931, %v8154, 0.0
  %v8309 = vsel %vm2931, %v8155, 0.0
  %v8310 = vsel %vm2932, %v8152, 0.0
  %v8311 = vsel %vm2932, %v8153, 0.0
  %v8312 = vsel %vm2933, %v8150, 0.0
  %v8313 = vsel %vm2933, %v8151, 0.0
  %v8314 = vsel %vm2934, %v8148, 0.0
  %v8315 = vsel %vm2934, %v8149, 0.0
  %v8316 = vsel %vm2935, %v8146, 0.0
  %v8317 = vsel %vm2935, %v8147, 0.0
  %v8318 = vsel %vm2936, %v8144, 0.0
  %v8319 = vsel %vm2936, %v8145, 0.0
  %v8320 = vsel %vm2937, %v8142, 0.0
  %v8321 = vsel %vm2937, %v8143, 0.0
  %v8322 = vsel %vm2938, %v8140, 0.0
  %v8323 = vsel %vm2938, %v8141, 0.0
  %v8324 = vsel %vm2939, %v8138, 0.0
  %v8325 = vsel %vm2939, %v8139, 0.0
  %v8326 = vsel %vm2940, %v8136, 0.0
  %v8327 = vsel %vm2940, %v8137, 0.0
  %v8328 = vsel %vm2941, %v8134, 0.0
  %v8329 = vsel %vm2941, %v8135, 0.0
  %v8330 = vsel %vm2942, %v8132, 0.0
  %v8331 = vsel %vm2942, %v8133, 0.0
  %v8332 = vsel %vm2943, %v8130, 0.0
  %v8333 = vsel %vm2943, %v8131, 0.0
  %v8334 = vsel %vm2944, %v8128, 0.0
  %v8335 = vsel %vm2944, %v8129, 0.0
  %v8336 = vsel %vm2945, %v8126, 0.0
  %v8337 = vsel %vm2945, %v8127, 0.0
  %v8338 = vsel %vm2946, %v8124, 0.0
  %v8339 = vsel %vm2946, %v8125, 0.0
  %v8340 = vsel %vm2947, %v8122, 0.0
  %v8341 = vsel %vm2947, %v8123, 0.0
  %v8342 = vsel %vm2948, %v8120, 0.0
  %v8343 = vsel %vm2948, %v8121, 0.0
  %v8344 = vsel %vm2949, %v8118, 0.0
  %v8345 = vsel %vm2949, %v8119, 0.0
  %v8346 = vsel %vm2950, %v8116, 0.0
  %v8347 = vsel %vm2950, %v8117, 0.0
  %v8348 = vsel %vm2951, %v8114, 0.0
  %v8349 = vsel %vm2951, %v8115, 0.0
  %v8350 = vsel %vm2952, %v8112, 0.0
  %v8351 = vsel %vm2952, %v8113, 0.0
  %v8352 = vsel %vm2953, %v8110, 0.0
  %v8353 = vsel %vm2953, %v8111, 0.0
  %v8354 = vsel %vm2954, %v8108, 0.0
  %v8355 = vsel %vm2954, %v8109, 0.0
  %v8356 = vsel %vm2955, %v8106, 0.0
  %v8357 = vsel %vm2955, %v8107, 0.0
  %v8358 = vsel %vm2956, %v8104, 0.0
  %v8359 = vsel %vm2956, %v8105, 0.0
  %v8360 = vld [vmem:[%s3] sm:$0xff]
  %v8361 = vld [vmem:[%s3 + $0x8] sm:$0xff]
  %v8362 = vld [vmem:[%s3 + $0x10] sm:$0xff]
  %v8363 = vld [vmem:[%s3 + $0x18] sm:$0xff]
  %v8364 = vld [vmem:[%s3 + $0x20] sm:$0xff]
  %v8365 = vld [vmem:[%s3 + $0x28] sm:$0xff]
  %v8366 = vld [vmem:[%s3 + $0x30] sm:$0xff]
  %v8367 = vld [vmem:[%s3 + $0x38] sm:$0xff]
  %v8368 = vld [vmem:[%s3 + $0x40] sm:$0xff]
  %v8369 = vld [vmem:[%s3 + $0x48] sm:$0xff]
  %v8370 = vld [vmem:[%s3 + $0x50] sm:$0xff]
  %v8371 = vld [vmem:[%s3 + $0x58] sm:$0xff]
  %v8372 = vld [vmem:[%s3 + $0x60] sm:$0xff]
  %v8373 = vld [vmem:[%s3 + $0x68] sm:$0xff]
  %v8374 = vld [vmem:[%s3 + $0x70] sm:$0xff]
  %v8375 = vld [vmem:[%s3 + $0x78] sm:$0xff]
  %v8376 = vld [vmem:[%s3 + $0x80] sm:$0xff]
  %v8377 = vld [vmem:[%s3 + $0x88] sm:$0xff]
  %v8378 = vld [vmem:[%s3 + $0x90] sm:$0xff]
  %v8379 = vld [vmem:[%s3 + $0x98] sm:$0xff]
  %v8380 = vld [vmem:[%s3 + $0xa0] sm:$0xff]
  %v8381 = vld [vmem:[%s3 + $0xa8] sm:$0xff]
  %v8382 = vld [vmem:[%s3 + $0xb0] sm:$0xff]
  %v8383 = vld [vmem:[%s3 + $0xb8] sm:$0xff]
  %v8384 = vld [vmem:[%s3 + $0xc0] sm:$0xff]
  %v8385 = vld [vmem:[%s3 + $0xc8] sm:$0xff]
  %v8386 = vld [vmem:[%s3 + $0xd0] sm:$0xff]
  %v8387 = vld [vmem:[%s3 + $0xd8] sm:$0xff]
  %v8388 = vld [vmem:[%s3 + $0xe0] sm:$0xff]
  %v8389 = vld [vmem:[%s3 + $0xe8] sm:$0xff]
  %v8390 = vld [vmem:[%s3 + $0xf0] sm:$0xff]
  %v8391 = vld [vmem:[%s3 + $0xf8] sm:$0xff]
  %s8392 = scalar_lea.vmem %s3, 256
  %v8393 = vld [vmem:[%s8392] sm:$0xff]
  %v8394 = vld [vmem:[%s8392 + $0x8] sm:$0xff]
  %v8395 = vld [vmem:[%s8392 + $0x10] sm:$0xff]
  %v8396 = vld [vmem:[%s8392 + $0x18] sm:$0xff]
  %v8397 = vld [vmem:[%s8392 + $0x20] sm:$0xff]
  %v8398 = vld [vmem:[%s8392 + $0x28] sm:$0xff]
  %v8399 = vld [vmem:[%s8392 + $0x30] sm:$0xff]
  %v8400 = vld [vmem:[%s8392 + $0x38] sm:$0xff]
  %v8401 = vld [vmem:[%s8392 + $0x40] sm:$0xff]
  %v8402 = vld [vmem:[%s8392 + $0x48] sm:$0xff]
  %v8403 = vld [vmem:[%s8392 + $0x50] sm:$0xff]
  %v8404 = vld [vmem:[%s8392 + $0x58] sm:$0xff]
  %v8405 = vld [vmem:[%s8392 + $0x60] sm:$0xff]
  %v8406 = vld [vmem:[%s8392 + $0x68] sm:$0xff]
  %v8407 = vld [vmem:[%s8392 + $0x70] sm:$0xff]
  %v8408 = vld [vmem:[%s8392 + $0x78] sm:$0xff]
  %v8409 = vld [vmem:[%s8392 + $0x80] sm:$0xff]
  %v8410 = vld [vmem:[%s8392 + $0x88] sm:$0xff]
  %v8411 = vld [vmem:[%s8392 + $0x90] sm:$0xff]
  %v8412 = vld [vmem:[%s8392 + $0x98] sm:$0xff]
  %v8413 = vld [vmem:[%s8392 + $0xa0] sm:$0xff]
  %v8414 = vld [vmem:[%s8392 + $0xa8] sm:$0xff]
  %v8415 = vld [vmem:[%s8392 + $0xb0] sm:$0xff]
  %v8416 = vld [vmem:[%s8392 + $0xb8] sm:$0xff]
  %v8417 = vld [vmem:[%s8392 + $0xc0] sm:$0xff]
  %v8418 = vld [vmem:[%s8392 + $0xc8] sm:$0xff]
  %v8419 = vld [vmem:[%s8392 + $0xd0] sm:$0xff]
  %v8420 = vld [vmem:[%s8392 + $0xd8] sm:$0xff]
  %v8421 = vld [vmem:[%s8392 + $0xe0] sm:$0xff]
  %v8422 = vld [vmem:[%s8392 + $0xe8] sm:$0xff]
  %v8423 = vld [vmem:[%s8392 + $0xf0] sm:$0xff]
  %v8424 = vld [vmem:[%s8392 + $0xf8] sm:$0xff]
  %8425 = vmatprep.subr.mxu0 0.0
  %8426 = vmatpush1.msra.mxu0 %v8393
  %8427 = vmatprep.subr.mxu0 0.0
  %8428 = vmatpush1.msra.mxu0 %v8394
  %8429 = vmatprep.subr.mxu0 0.0
  %8430 = vmatpush1.msra.mxu0 %v8395
  %8431 = vmatprep.subr.mxu0 0.0
  %8432 = vmatpush1.msra.mxu0 %v8396
  %8433 = vmatprep.subr.mxu0 0.0
  %8434 = vmatpush1.msra.mxu0 %v8397
  %8435 = vmatprep.subr.mxu0 0.0
  %8436 = vmatpush1.msra.mxu0 %v8398
  %8437 = vmatprep.subr.mxu0 0.0
  %8438 = vmatpush1.msra.mxu0 %v8399
  %8439 = vmatprep.subr.mxu0 0.0
  %8440 = vmatpush1.msra.mxu0 %v8400
  %8441 = vmatprep.subr.mxu0 0.0
  %8442 = vmatpush1.msra.mxu0 %v8401
  %8443 = vmatprep.subr.mxu0 0.0
  %8444 = vmatpush1.msra.mxu0 %v8402
  %8445 = vmatprep.subr.mxu0 0.0
  %8446 = vmatpush1.msra.mxu0 %v8403
  %8447 = vmatprep.subr.mxu0 0.0
  %8448 = vmatpush1.msra.mxu0 %v8404
  %8449 = vmatprep.subr.mxu0 0.0
  %8450 = vmatpush1.msra.mxu0 %v8405
  %8451 = vmatprep.subr.mxu0 0.0
  %8452 = vmatpush1.msra.mxu0 %v8406
  %8453 = vmatprep.subr.mxu0 0.0
  %8454 = vmatpush1.msra.mxu0 %v8407
  %8455 = vmatprep.subr.mxu0 0.0
  %8456 = vmatpush1.msra.mxu0 %v8408
  %8457 = vmatprep.subr.mxu0 0.0
  %8458 = vmatpush1.msra.mxu0 %v8409
  %8459 = vmatprep.subr.mxu0 0.0
  %8460 = vmatpush1.msra.mxu0 %v8410
  %8461 = vmatprep.subr.mxu0 0.0
  %8462 = vmatpush1.msra.mxu0 %v8411
  %8463 = vmatprep.subr.mxu0 0.0
  %8464 = vmatpush1.msra.mxu0 %v8412
  %8465 = vmatprep.subr.mxu0 0.0
  %8466 = vmatpush1.msra.mxu0 %v8413
  %8467 = vmatprep.subr.mxu0 0.0
  %8468 = vmatpush1.msra.mxu0 %v8414
  %8469 = vmatprep.subr.mxu0 0.0
  %8470 = vmatpush1.msra.mxu0 %v8415
  %8471 = vmatprep.subr.mxu0 0.0
  %8472 = vmatpush1.msra.mxu0 %v8416
  %8473 = vmatprep.subr.mxu0 0.0
  %8474 = vmatpush1.msra.mxu0 %v8417
  %8475 = vmatprep.subr.mxu0 0.0
  %8476 = vmatpush1.msra.mxu0 %v8418
  %8477 = vmatprep.subr.mxu0 0.0
  %8478 = vmatpush1.msra.mxu0 %v8419
  %8479 = vmatprep.subr.mxu0 0.0
  %8480 = vmatpush1.msra.mxu0 %v8420
  %8481 = vmatprep.subr.mxu0 0.0
  %8482 = vmatpush1.msra.mxu0 %v8421
  %8483 = vmatprep.subr.mxu0 0.0
  %8484 = vmatpush1.msra.mxu0 %v8422
  %8485 = vmatprep.subr.mxu0 0.0
  %8486 = vmatpush1.msra.mxu0 %v8423
  %8487 = vmatprep.subr.mxu0 0.0
  %8488 = vmatpush1.msra.mxu0 %v8424
  %8489 = vmatprep.mubr.f32.mxu0 %v7849
  %8490 = vmatmul.mubr.f32.gmra.mrb[0].mxu0 %v7848
  %v8491 = vpop.f32.mrb[0].mxu0
  %v8492 = vadd.f32 0.0, %v8491
  %v8493 = vpop.f32.mrb[0].mxu0
  %8494 = vmatprep.mubr.f32.mxu0 %v7851
  %8495 = vmatmul.mubr.f32.gmra.mrb[0].mxu0 %v7850
  %v8496 = vpop.f32.mrb[0].mxu0
  %v8497 = vadd.f32 0.0, %v8496
  %v8498 = vpop.f32.mrb[0].mxu0
  %8499 = vmatprep.mubr.f32.mxu0 %v7853
  %8500 = vmatmul.mubr.f32.gmra.mrb[0].mxu0 %v7852
  %v8501 = vpop.f32.mrb[0].mxu0
  %v8502 = vadd.f32 0.0, %v8501
  %v8503 = vpop.f32.mrb[0].mxu0
  %8504 = vmatprep.mubr.f32.mxu0 %v7855
  %8505 = vmatmul.mubr.f32.gmra.mrb[0].mxu0 %v7854
  %v8506 = vpop.f32.mrb[0].mxu0
  %v8507 = vadd.f32 0.0, %v8506
  %v8508 = vpop.f32.mrb[0].mxu0
  %8509 = vmatprep.mubr.f32.mxu0 %v7857
  %8510 = vmatmul.mubr.f32.gmra.mrb[0].mxu0 %v7856
  %v8511 = vpop.f32.mrb[0].mxu0
  %v8512 = vadd.f32 0.0, %v8511
  %v8513 = vpop.f32.mrb[0].mxu0
  %8514 = vmatprep.mubr.f32.mxu0 %v7859
  %8515 = vmatmul.mubr.f32.gmra.mrb[0].mxu0 %v7858
  %v8516 = vpop.f32.mrb[0].mxu0
  %v8517 = vadd.f32 0.0, %v8516
  %v8518 = vpop.f32.mrb[0].mxu0
  %8519 = vmatprep.mubr.f32.mxu0 %v7861
  %8520 = vmatmul.mubr.f32.gmra.mrb[0].mxu0 %v7860
  %v8521 = vpop.f32.mrb[0].mxu0
  %v8522 = vadd.f32 0.0, %v8521
  %v8523 = vpop.f32.mrb[0].mxu0
  %8524 = vmatprep.mubr.f32.mxu0 %v7863
  %8525 = vmatmul.mubr.f32.gmra.mrb[0].mxu0 %v7862
  %v8526 = vpop.f32.mrb[0].mxu0
  %v8527 = vadd.f32 0.0, %v8526
  %v8528 = vpop.f32.mrb[0].mxu0
  %8529 = vmatprep.mubr.f32.mxu0 %v7865
  %8530 = vmatmul.mubr.f32.gmra.mrb[0].mxu0 %v7864
  %v8531 = vpop.f32.mrb[0].mxu0
  %v8532 = vadd.f32 0.0, %v8531
  %v8533 = vpop.f32.mrb[0].mxu0
  %8534 = vmatprep.mubr.f32.mxu0 %v7867
  %8535 = vmatmul.mubr.f32.gmra.mrb[0].mxu0 %v7866
  %v8536 = vpop.f32.mrb[0].mxu0
  %v8537 = vadd.f32 0.0, %v8536
  %v8538 = vpop.f32.mrb[0].mxu0
  %8539 = vmatprep.mubr.f32.mxu0 %v7869
  %8540 = vmatmul.mubr.f32.gmra.mrb[0].mxu0 %v7868
  %v8541 = vpop.f32.mrb[0].mxu0
  %v8542 = vadd.f32 0.0, %v8541
  %v8543 = vpop.f32.mrb[0].mxu0
  %8544 = vmatprep.mubr.f32.mxu0 %v7871
  %8545 = vmatmul.mubr.f32.gmra.mrb[0].mxu0 %v7870
  %v8546 = vpop.f32.mrb[0].mxu0
  %v8547 = vadd.f32 0.0, %v8546
  %v8548 = vpop.f32.mrb[0].mxu0
  %8549 = vmatprep.mubr.f32.mxu0 %v7873
  %8550 = vmatmul.mubr.f32.gmra.mrb[0].mxu0 %v7872
  %v8551 = vpop.f32.mrb[0].mxu0
  %v8552 = vadd.f32 0.0, %v8551
  %v8553 = vpop.f32.mrb[0].mxu0
  %8554 = vmatprep.mubr.f32.mxu0 %v7875
  %8555 = vmatmul.mubr.f32.gmra.mrb[0].mxu0 %v7874
  %v8556 = vpop.f32.mrb[0].mxu0
  %v8557 = vadd.f32 0.0, %v8556
  %v8558 = vpop.f32.mrb[0].mxu0
  %8559 = vmatprep.mubr.f32.mxu0 %v7877
  %8560 = vmatmul.mubr.f32.gmra.mrb[0].mxu0 %v7876
  %v8561 = vpop.f32.mrb[0].mxu0
  %v8562 = vadd.f32 0.0, %v8561
  %v8563 = vpop.f32.mrb[0].mxu0
  %8564 = vmatprep.mubr.f32.mxu0 %v7879
  %8565 = vmatmul.mubr.f32.gmra.mrb[0].mxu0 %v7878
  %v8566 = vpop.f32.mrb[0].mxu0
  %v8567 = vadd.f32 0.0, %v8566
  %v8568 = vpop.f32.mrb[0].mxu0
  %8569 = vmatprep.mubr.f32.mxu0 %v7881
  %8570 = vmatmul.mubr.f32.gmra.mrb[0].mxu0 %v7880
  %v8571 = vpop.f32.mrb[0].mxu0
  %v8572 = vadd.f32 0.0, %v8571
  %v8573 = vpop.f32.mrb[0].mxu0
  %8574 = vmatprep.mubr.f32.mxu0 %v7883
  %8575 = vmatmul.mubr.f32.gmra.mrb[0].mxu0 %v7882
  %v8576 = vpop.f32.mrb[0].mxu0
  %v8577 = vadd.f32 0.0, %v8576
  %v8578 = vpop.f32.mrb[0].mxu0
  %8579 = vmatprep.mubr.f32.mxu0 %v7885
  %8580 = vmatmul.mubr.f32.gmra.mrb[0].mxu0 %v7884
  %v8581 = vpop.f32.mrb[0].mxu0
  %v8582 = vadd.f32 0.0, %v8581
  %v8583 = vpop.f32.mrb[0].mxu0
  %8584 = vmatprep.mubr.f32.mxu0 %v7887
  %8585 = vmatmul.mubr.f32.gmra.mrb[0].mxu0 %v7886
  %v8586 = vpop.f32.mrb[0].mxu0
  %v8587 = vadd.f32 0.0, %v8586
  %v8588 = vpop.f32.mrb[0].mxu0
  %8589 = vmatprep.mubr.f32.mxu0 %v7889
  %8590 = vmatmul.mubr.f32.gmra.mrb[0].mxu0 %v7888
  %v8591 = vpop.f32.mrb[0].mxu0
  %v8592 = vadd.f32 0.0, %v8591
  %v8593 = vpop.f32.mrb[0].mxu0
  %8594 = vmatprep.mubr.f32.mxu0 %v7891
  %8595 = vmatmul.mubr.f32.gmra.mrb[0].mxu0 %v7890
  %v8596 = vpop.f32.mrb[0].mxu0
  %v8597 = vadd.f32 0.0, %v8596
  %v8598 = vpop.f32.mrb[0].mxu0
  %8599 = vmatprep.mubr.f32.mxu0 %v7893
  %8600 = vmatmul.mubr.f32.gmra.mrb[0].mxu0 %v7892
  %v8601 = vpop.f32.mrb[0].mxu0
  %v8602 = vadd.f32 0.0, %v8601
  %v8603 = vpop.f32.mrb[0].mxu0
  %8604 = vmatprep.mubr.f32.mxu0 %v7895
  %8605 = vmatmul.mubr.f32.gmra.mrb[0].mxu0 %v7894
  %v8606 = vpop.f32.mrb[0].mxu0
  %v8607 = vadd.f32 0.0, %v8606
  %v8608 = vpop.f32.mrb[0].mxu0
  %8609 = vmatprep.mubr.f32.mxu0 %v7897
  %8610 = vmatmul.mubr.f32.gmra.mrb[0].mxu0 %v7896
  %v8611 = vpop.f32.mrb[0].mxu0
  %v8612 = vadd.f32 0.0, %v8611
  %v8613 = vpop.f32.mrb[0].mxu0
  %8614 = vmatprep.mubr.f32.mxu0 %v7899
  %8615 = vmatmul.mubr.f32.gmra.mrb[0].mxu0 %v7898
  %v8616 = vpop.f32.mrb[0].mxu0
  %v8617 = vadd.f32 0.0, %v8616
  %v8618 = vpop.f32.mrb[0].mxu0
  %8619 = vmatprep.mubr.f32.mxu0 %v7901
  %8620 = vmatmul.mubr.f32.gmra.mrb[0].mxu0 %v7900
  %v8621 = vpop.f32.mrb[0].mxu0
  %v8622 = vadd.f32 0.0, %v8621
  %v8623 = vpop.f32.mrb[0].mxu0
  %8624 = vmatprep.mubr.f32.mxu0 %v7903
  %8625 = vmatmul.mubr.f32.gmra.mrb[0].mxu0 %v7902
  %v8626 = vpop.f32.mrb[0].mxu0
  %v8627 = vadd.f32 0.0, %v8626
  %v8628 = vpop.f32.mrb[0].mxu0
  %8629 = vmatprep.mubr.f32.mxu0 %v7905
  %8630 = vmatmul.mubr.f32.gmra.mrb[0].mxu0 %v7904
  %v8631 = vpop.f32.mrb[0].mxu0
  %v8632 = vadd.f32 0.0, %v8631
  %v8633 = vpop.f32.mrb[0].mxu0
  %8634 = vmatprep.mubr.f32.mxu0 %v7907
  %8635 = vmatmul.mubr.f32.gmra.mrb[0].mxu0 %v7906
  %v8636 = vpop.f32.mrb[0].mxu0
  %v8637 = vadd.f32 0.0, %v8636
  %v8638 = vpop.f32.mrb[0].mxu0
  %8639 = vmatprep.mubr.f32.mxu0 %v7909
  %8640 = vmatmul.mubr.f32.gmra.mrb[0].mxu0 %v7908
  %v8641 = vpop.f32.mrb[0].mxu0
  %v8642 = vadd.f32 0.0, %v8641
  %v8643 = vpop.f32.mrb[0].mxu0
  %8644 = vmatprep.mubr.f32.mxu0 %v7911
  %8645 = vmatmul.mubr.f32.gmra.mrb[0].mxu0 %v7910
  %v8646 = vpop.f32.mrb[0].mxu0
  %v8647 = vadd.f32 0.0, %v8646
  %v8648 = vpop.f32.mrb[0].mxu0
  %8649 = vmatprep.mubr.f32.mxu0 %v7913
  %8650 = vmatmul.mubr.f32.gmra.mrb[0].mxu0 %v7912
  %v8651 = vpop.f32.mrb[0].mxu0
  %v8652 = vadd.f32 0.0, %v8651
  %v8653 = vpop.f32.mrb[0].mxu0
  %8654 = vmatprep.mubr.f32.mxu0 %v7915
  %8655 = vmatmul.mubr.f32.gmra.mrb[0].mxu0 %v7914
  %v8656 = vpop.f32.mrb[0].mxu0
  %v8657 = vadd.f32 0.0, %v8656
  %v8658 = vpop.f32.mrb[0].mxu0
  %8659 = vmatprep.mubr.f32.mxu0 %v7917
  %8660 = vmatmul.mubr.f32.gmra.mrb[0].mxu0 %v7916
  %v8661 = vpop.f32.mrb[0].mxu0
  %v8662 = vadd.f32 0.0, %v8661
  %v8663 = vpop.f32.mrb[0].mxu0
  %8664 = vmatprep.mubr.f32.mxu0 %v7919
  %8665 = vmatmul.mubr.f32.gmra.mrb[0].mxu0 %v7918
  %v8666 = vpop.f32.mrb[0].mxu0
  %v8667 = vadd.f32 0.0, %v8666
  %v8668 = vpop.f32.mrb[0].mxu0
  %8669 = vmatprep.mubr.f32.mxu0 %v7921
  %8670 = vmatmul.mubr.f32.gmra.mrb[0].mxu0 %v7920
  %v8671 = vpop.f32.mrb[0].mxu0
  %v8672 = vadd.f32 0.0, %v8671
  %v8673 = vpop.f32.mrb[0].mxu0
  %8674 = vmatprep.mubr.f32.mxu0 %v7923
  %8675 = vmatmul.mubr.f32.gmra.mrb[0].mxu0 %v7922
  %v8676 = vpop.f32.mrb[0].mxu0
  %v8677 = vadd.f32 0.0, %v8676
  %v8678 = vpop.f32.mrb[0].mxu0
  %8679 = vmatprep.mubr.f32.mxu0 %v7925
  %8680 = vmatmul.mubr.f32.gmra.mrb[0].mxu0 %v7924
  %v8681 = vpop.f32.mrb[0].mxu0
  %v8682 = vadd.f32 0.0, %v8681
  %v8683 = vpop.f32.mrb[0].mxu0
  %8684 = vmatprep.mubr.f32.mxu0 %v7927
  %8685 = vmatmul.mubr.f32.gmra.mrb[0].mxu0 %v7926
  %v8686 = vpop.f32.mrb[0].mxu0
  %v8687 = vadd.f32 0.0, %v8686
  %v8688 = vpop.f32.mrb[0].mxu0
  %8689 = vmatprep.mubr.f32.mxu0 %v7929
  %8690 = vmatmul.mubr.f32.gmra.mrb[0].mxu0 %v7928
  %v8691 = vpop.f32.mrb[0].mxu0
  %v8692 = vadd.f32 0.0, %v8691
  %v8693 = vpop.f32.mrb[0].mxu0
  %8694 = vmatprep.mubr.f32.mxu0 %v7931
  %8695 = vmatmul.mubr.f32.gmra.mrb[0].mxu0 %v7930
  %v8696 = vpop.f32.mrb[0].mxu0
  %v8697 = vadd.f32 0.0, %v8696
  %v8698 = vpop.f32.mrb[0].mxu0
  %8699 = vmatprep.mubr.f32.mxu0 %v7933
  %8700 = vmatmul.mubr.f32.gmra.mrb[0].mxu0 %v7932
  %v8701 = vpop.f32.mrb[0].mxu0
  %v8702 = vadd.f32 0.0, %v8701
  %v8703 = vpop.f32.mrb[0].mxu0
  %8704 = vmatprep.mubr.f32.mxu0 %v7935
  %8705 = vmatmul.mubr.f32.gmra.mrb[0].mxu0 %v7934
  %v8706 = vpop.f32.mrb[0].mxu0
  %v8707 = vadd.f32 0.0, %v8706
  %v8708 = vpop.f32.mrb[0].mxu0
  %8709 = vmatprep.mubr.f32.mxu0 %v7937
  %8710 = vmatmul.mubr.f32.gmra.mrb[0].mxu0 %v7936
  %v8711 = vpop.f32.mrb[0].mxu0
  %v8712 = vadd.f32 0.0, %v8711
  %v8713 = vpop.f32.mrb[0].mxu0
  %8714 = vmatprep.mubr.f32.mxu0 %v7939
  %8715 = vmatmul.mubr.f32.gmra.mrb[0].mxu0 %v7938
  %v8716 = vpop.f32.mrb[0].mxu0
  %v8717 = vadd.f32 0.0, %v8716
  %v8718 = vpop.f32.mrb[0].mxu0
  %8719 = vmatprep.mubr.f32.mxu0 %v7941
  %8720 = vmatmul.mubr.f32.gmra.mrb[0].mxu0 %v7940
  %v8721 = vpop.f32.mrb[0].mxu0
  %v8722 = vadd.f32 0.0, %v8721
  %v8723 = vpop.f32.mrb[0].mxu0
  %8724 = vmatprep.mubr.f32.mxu0 %v7943
  %8725 = vmatmul.mubr.f32.gmra.mrb[0].mxu0 %v7942
  %v8726 = vpop.f32.mrb[0].mxu0
  %v8727 = vadd.f32 0.0, %v8726
  %v8728 = vpop.f32.mrb[0].mxu0
  %8729 = vmatprep.mubr.f32.mxu0 %v7945
  %8730 = vmatmul.mubr.f32.gmra.mrb[0].mxu0 %v7944
  %v8731 = vpop.f32.mrb[0].mxu0
  %v8732 = vadd.f32 0.0, %v8731
  %v8733 = vpop.f32.mrb[0].mxu0
  %8734 = vmatprep.mubr.f32.mxu0 %v7947
  %8735 = vmatmul.mubr.f32.gmra.mrb[0].mxu0 %v7946
  %v8736 = vpop.f32.mrb[0].mxu0
  %v8737 = vadd.f32 0.0, %v8736
  %v8738 = vpop.f32.mrb[0].mxu0
  %8739 = vmatprep.mubr.f32.mxu0 %v7949
  %8740 = vmatmul.mubr.f32.gmra.mrb[0].mxu0 %v7948
  %v8741 = vpop.f32.mrb[0].mxu0
  %v8742 = vadd.f32 0.0, %v8741
  %v8743 = vpop.f32.mrb[0].mxu0
  %8744 = vmatprep.mubr.f32.mxu0 %v7951
  %8745 = vmatmul.mubr.f32.gmra.mrb[0].mxu0 %v7950
  %v8746 = vpop.f32.mrb[0].mxu0
  %v8747 = vadd.f32 0.0, %v8746
  %v8748 = vpop.f32.mrb[0].mxu0
  %8749 = vmatprep.mubr.f32.mxu0 %v7953
  %8750 = vmatmul.mubr.f32.gmra.mrb[0].mxu0 %v7952
  %v8751 = vpop.f32.mrb[0].mxu0
  %v8752 = vadd.f32 0.0, %v8751
  %v8753 = vpop.f32.mrb[0].mxu0
  %8754 = vmatprep.mubr.f32.mxu0 %v7955
  %8755 = vmatmul.mubr.f32.gmra.mrb[0].mxu0 %v7954
  %v8756 = vpop.f32.mrb[0].mxu0
  %v8757 = vadd.f32 0.0, %v8756
  %v8758 = vpop.f32.mrb[0].mxu0
  %8759 = vmatprep.mubr.f32.mxu0 %v7957
  %8760 = vmatmul.mubr.f32.gmra.mrb[0].mxu0 %v7956
  %v8761 = vpop.f32.mrb[0].mxu0
  %v8762 = vadd.f32 0.0, %v8761
  %v8763 = vpop.f32.mrb[0].mxu0
  %8764 = vmatprep.mubr.f32.mxu0 %v7959
  %8765 = vmatmul.mubr.f32.gmra.mrb[0].mxu0 %v7958
  %v8766 = vpop.f32.mrb[0].mxu0
  %v8767 = vadd.f32 0.0, %v8766
  %v8768 = vpop.f32.mrb[0].mxu0
  %8769 = vmatprep.mubr.f32.mxu0 %v7961
  %8770 = vmatmul.mubr.f32.gmra.mrb[0].mxu0 %v7960
  %v8771 = vpop.f32.mrb[0].mxu0
  %v8772 = vadd.f32 0.0, %v8771
  %v8773 = vpop.f32.mrb[0].mxu0
  %8774 = vmatprep.mubr.f32.mxu0 %v7963
  %8775 = vmatmul.mubr.f32.gmra.mrb[0].mxu0 %v7962
  %v8776 = vpop.f32.mrb[0].mxu0
  %v8777 = vadd.f32 0.0, %v8776
  %v8778 = vpop.f32.mrb[0].mxu0
  %8779 = vmatprep.mubr.f32.mxu0 %v7965
  %8780 = vmatmul.mubr.f32.gmra.mrb[0].mxu0 %v7964
  %v8781 = vpop.f32.mrb[0].mxu0
  %v8782 = vadd.f32 0.0, %v8781
  %v8783 = vpop.f32.mrb[0].mxu0
  %8784 = vmatprep.mubr.f32.mxu0 %v7967
  %8785 = vmatmul.mubr.f32.gmra.mrb[0].mxu0 %v7966
  %v8786 = vpop.f32.mrb[0].mxu0
  %v8787 = vadd.f32 0.0, %v8786
  %v8788 = vpop.f32.mrb[0].mxu0
  %8789 = vmatprep.mubr.f32.mxu0 %v7969
  %8790 = vmatmul.mubr.f32.gmra.mrb[0].mxu0 %v7968
  %v8791 = vpop.f32.mrb[0].mxu0
  %v8792 = vadd.f32 0.0, %v8791
  %v8793 = vpop.f32.mrb[0].mxu0
  %8794 = vmatprep.mubr.f32.mxu0 %v7971
  %8795 = vmatmul.mubr.f32.gmra.mrb[0].mxu0 %v7970
  %v8796 = vpop.f32.mrb[0].mxu0
  %v8797 = vadd.f32 0.0, %v8796
  %v8798 = vpop.f32.mrb[0].mxu0
  %8799 = vmatprep.mubr.f32.mxu0 %v7973
  %8800 = vmatmul.mubr.f32.gmra.mrb[0].mxu0 %v7972
  %v8801 = vpop.f32.mrb[0].mxu0
  %v8802 = vadd.f32 0.0, %v8801
  %v8803 = vpop.f32.mrb[0].mxu0
  %8804 = vmatprep.mubr.f32.mxu0 %v7975
  %8805 = vmatmul.mubr.f32.gmra.mrb[0].mxu0 %v7974
  %v8806 = vpop.f32.mrb[0].mxu0
  %v8807 = vadd.f32 0.0, %v8806
  %v8808 = vpop.f32.mrb[0].mxu0
  %8809 = vdwg.mxu0
  %8810 = vmatprep.subr.mxu0 0.0
  %8811 = vmatpush1.msra.mxu0 %v8360
  %8812 = vmatprep.subr.mxu0 0.0
  %8813 = vmatpush1.msra.mxu0 %v8361
  %8814 = vmatprep.subr.mxu0 0.0
  %8815 = vmatpush1.msra.mxu0 %v8362
  %8816 = vmatprep.subr.mxu0 0.0
  %8817 = vmatpush1.msra.mxu0 %v8363
  %8818 = vmatprep.subr.mxu0 0.0
  %8819 = vmatpush1.msra.mxu0 %v8364
  %8820 = vmatprep.subr.mxu0 0.0
  %8821 = vmatpush1.msra.mxu0 %v8365
  %8822 = vmatprep.subr.mxu0 0.0
  %8823 = vmatpush1.msra.mxu0 %v8366
  %8824 = vmatprep.subr.mxu0 0.0
  %8825 = vmatpush1.msra.mxu0 %v8367
  %8826 = vmatprep.subr.mxu0 0.0
  %8827 = vmatpush1.msra.mxu0 %v8368
  %8828 = vmatprep.subr.mxu0 0.0
  %8829 = vmatpush1.msra.mxu0 %v8369
  %8830 = vmatprep.subr.mxu0 0.0
  %8831 = vmatpush1.msra.mxu0 %v8370
  %8832 = vmatprep.subr.mxu0 0.0
  %8833 = vmatpush1.msra.mxu0 %v8371
  %8834 = vmatprep.subr.mxu0 0.0
  %8835 = vmatpush1.msra.mxu0 %v8372
  %8836 = vmatprep.subr.mxu0 0.0
  %8837 = vmatpush1.msra.mxu0 %v8373
  %8838 = vmatprep.subr.mxu0 0.0
  %8839 = vmatpush1.msra.mxu0 %v8374
  %8840 = vmatprep.subr.mxu0 0.0
  %8841 = vmatpush1.msra.mxu0 %v8375
  %8842 = vmatprep.subr.mxu0 0.0
  %8843 = vmatpush1.msra.mxu0 %v8376
  %8844 = vmatprep.subr.mxu0 0.0
  %8845 = vmatpush1.msra.mxu0 %v8377
  %8846 = vmatprep.subr.mxu0 0.0
  %8847 = vmatpush1.msra.mxu0 %v8378
  %8848 = vmatprep.subr.mxu0 0.0
  %8849 = vmatpush1.msra.mxu0 %v8379
  %8850 = vmatprep.subr.mxu0 0.0
  %8851 = vmatpush1.msra.mxu0 %v8380
  %8852 = vmatprep.subr.mxu0 0.0
  %8853 = vmatpush1.msra.mxu0 %v8381
  %8854 = vmatprep.subr.mxu0 0.0
  %8855 = vmatpush1.msra.mxu0 %v8382
  %8856 = vmatprep.subr.mxu0 0.0
  %8857 = vmatpush1.msra.mxu0 %v8383
  %8858 = vmatprep.subr.mxu0 0.0
  %8859 = vmatpush1.msra.mxu0 %v8384
  %8860 = vmatprep.subr.mxu0 0.0
  %8861 = vmatpush1.msra.mxu0 %v8385
  %8862 = vmatprep.subr.mxu0 0.0
  %8863 = vmatpush1.msra.mxu0 %v8386
  %8864 = vmatprep.subr.mxu0 0.0
  %8865 = vmatpush1.msra.mxu0 %v8387
  %8866 = vmatprep.subr.mxu0 0.0
  %8867 = vmatpush1.msra.mxu0 %v8388
  %8868 = vmatprep.subr.mxu0 0.0
  %8869 = vmatpush1.msra.mxu0 %v8389
  %8870 = vmatprep.subr.mxu0 0.0
  %8871 = vmatpush1.msra.mxu0 %v8390
  %8872 = vmatprep.subr.mxu0 0.0
  %8873 = vmatpush1.msra.mxu0 %v8391
  %8874 = vmatprep.mubr.f32.mxu0 %v8233
  %8875 = vmatmul.mubr.f32.gmra.mrb[0].mxu0 %v8232
  %v8876 = vpop.f32.mrb[0].mxu0
  %v8877 = vadd.f32 %v8492, %v8876
  %v8878 = vpop.f32.mrb[0].mxu0
  %8879 = vmatprep.mubr.f32.mxu0 %v8235
  %8880 = vmatmul.mubr.f32.gmra.mrb[0].mxu0 %v8234
  %v8881 = vpop.f32.mrb[0].mxu0
  %v8882 = vadd.f32 %v8497, %v8881
  %v8883 = vpop.f32.mrb[0].mxu0
  %8884 = vmatprep.mubr.f32.mxu0 %v8237
  %8885 = vmatmul.mubr.f32.gmra.mrb[0].mxu0 %v8236
  %v8886 = vpop.f32.mrb[0].mxu0
  %v8887 = vadd.f32 %v8502, %v8886
  %v8888 = vpop.f32.mrb[0].mxu0
  %8889 = vmatprep.mubr.f32.mxu0 %v8239
  %8890 = vmatmul.mubr.f32.gmra.mrb[0].mxu0 %v8238
  %v8891 = vpop.f32.mrb[0].mxu0
  %v8892 = vadd.f32 %v8507, %v8891
  %v8893 = vpop.f32.mrb[0].mxu0
  %8894 = vmatprep.mubr.f32.mxu0 %v8241
  %8895 = vmatmul.mubr.f32.gmra.mrb[0].mxu0 %v8240
  %v8896 = vpop.f32.mrb[0].mxu0
  %v8897 = vadd.f32 %v8512, %v8896
  %v8898 = vpop.f32.mrb[0].mxu0
  %8899 = vmatprep.mubr.f32.mxu0 %v8243
  %8900 = vmatmul.mubr.f32.gmra.mrb[0].mxu0 %v8242
  %v8901 = vpop.f32.mrb[0].mxu0
  %v8902 = vadd.f32 %v8517, %v8901
  %v8903 = vpop.f32.mrb[0].mxu0
  %8904 = vmatprep.mubr.f32.mxu0 %v8245
  %8905 = vmatmul.mubr.f32.gmra.mrb[0].mxu0 %v8244
  %v8906 = vpop.f32.mrb[0].mxu0
  %v8907 = vadd.f32 %v8522, %v8906
  %v8908 = vpop.f32.mrb[0].mxu0
  %8909 = vmatprep.mubr.f32.mxu0 %v8247
  %8910 = vmatmul.mubr.f32.gmra.mrb[0].mxu0 %v8246
  %v8911 = vpop.f32.mrb[0].mxu0
  %v8912 = vadd.f32 %v8527, %v8911
  %v8913 = vpop.f32.mrb[0].mxu0
  %8914 = vmatprep.mubr.f32.mxu0 %v8249
  %8915 = vmatmul.mubr.f32.gmra.mrb[0].mxu0 %v8248
  %v8916 = vpop.f32.mrb[0].mxu0
  %v8917 = vadd.f32 %v8532, %v8916
  %v8918 = vpop.f32.mrb[0].mxu0
  %8919 = vmatprep.mubr.f32.mxu0 %v8251
  %8920 = vmatmul.mubr.f32.gmra.mrb[0].mxu0 %v8250
  %v8921 = vpop.f32.mrb[0].mxu0
  %v8922 = vadd.f32 %v8537, %v8921
  %v8923 = vpop.f32.mrb[0].mxu0
  %8924 = vmatprep.mubr.f32.mxu0 %v8253
  %8925 = vmatmul.mubr.f32.gmra.mrb[0].mxu0 %v8252
  %v8926 = vpop.f32.mrb[0].mxu0
  %v8927 = vadd.f32 %v8542, %v8926
  %v8928 = vpop.f32.mrb[0].mxu0
  %8929 = vmatprep.mubr.f32.mxu0 %v8255
  %8930 = vmatmul.mubr.f32.gmra.mrb[0].mxu0 %v8254
  %v8931 = vpop.f32.mrb[0].mxu0
  %v8932 = vadd.f32 %v8547, %v8931
  %v8933 = vpop.f32.mrb[0].mxu0
  %8934 = vmatprep.mubr.f32.mxu0 %v8257
  %8935 = vmatmul.mubr.f32.gmra.mrb[0].mxu0 %v8256
  %v8936 = vpop.f32.mrb[0].mxu0
  %v8937 = vadd.f32 %v8552, %v8936
  %v8938 = vpop.f32.mrb[0].mxu0
  %8939 = vmatprep.mubr.f32.mxu0 %v8259
  %8940 = vmatmul.mubr.f32.gmra.mrb[0].mxu0 %v8258
  %v8941 = vpop.f32.mrb[0].mxu0
  %v8942 = vadd.f32 %v8557, %v8941
  %v8943 = vpop.f32.mrb[0].mxu0
  %8944 = vmatprep.mubr.f32.mxu0 %v8261
  %8945 = vmatmul.mubr.f32.gmra.mrb[0].mxu0 %v8260
  %v8946 = vpop.f32.mrb[0].mxu0
  %v8947 = vadd.f32 %v8562, %v8946
  %v8948 = vpop.f32.mrb[0].mxu0
  %8949 = vmatprep.mubr.f32.mxu0 %v8263
  %8950 = vmatmul.mubr.f32.gmra.mrb[0].mxu0 %v8262
  %v8951 = vpop.f32.mrb[0].mxu0
  %v8952 = vadd.f32 %v8567, %v8951
  %v8953 = vpop.f32.mrb[0].mxu0
  %8954 = vmatprep.mubr.f32.mxu0 %v8265
  %8955 = vmatmul.mubr.f32.gmra.mrb[0].mxu0 %v8264
  %v8956 = vpop.f32.mrb[0].mxu0
  %v8957 = vadd.f32 %v8572, %v8956
  %v8958 = vpop.f32.mrb[0].mxu0
  %8959 = vmatprep.mubr.f32.mxu0 %v8267
  %8960 = vmatmul.mubr.f32.gmra.mrb[0].mxu0 %v8266
  %v8961 = vpop.f32.mrb[0].mxu0
  %v8962 = vadd.f32 %v8577, %v8961
  %v8963 = vpop.f32.mrb[0].mxu0
  %8964 = vmatprep.mubr.f32.mxu0 %v8269
  %8965 = vmatmul.mubr.f32.gmra.mrb[0].mxu0 %v8268
  %v8966 = vpop.f32.mrb[0].mxu0
  %v8967 = vadd.f32 %v8582, %v8966
  %v8968 = vpop.f32.mrb[0].mxu0
  %8969 = vmatprep.mubr.f32.mxu0 %v8271
  %8970 = vmatmul.mubr.f32.gmra.mrb[0].mxu0 %v8270
  %v8971 = vpop.f32.mrb[0].mxu0
  %v8972 = vadd.f32 %v8587, %v8971
  %v8973 = vpop.f32.mrb[0].mxu0
  %8974 = vmatprep.mubr.f32.mxu0 %v8273
  %8975 = vmatmul.mubr.f32.gmra.mrb[0].mxu0 %v8272
  %v8976 = vpop.f32.mrb[0].mxu0
  %v8977 = vadd.f32 %v8592, %v8976
  %v8978 = vpop.f32.mrb[0].mxu0
  %8979 = vmatprep.mubr.f32.mxu0 %v8275
  %8980 = vmatmul.mubr.f32.gmra.mrb[0].mxu0 %v8274
  %v8981 = vpop.f32.mrb[0].mxu0
  %v8982 = vadd.f32 %v8597, %v8981
  %v8983 = vpop.f32.mrb[0].mxu0
  %8984 = vmatprep.mubr.f32.mxu0 %v8277
  %8985 = vmatmul.mubr.f32.gmra.mrb[0].mxu0 %v8276
  %v8986 = vpop.f32.mrb[0].mxu0
  %v8987 = vadd.f32 %v8602, %v8986
  %v8988 = vpop.f32.mrb[0].mxu0
  %8989 = vmatprep.mubr.f32.mxu0 %v8279
  %8990 = vmatmul.mubr.f32.gmra.mrb[0].mxu0 %v8278
  %v8991 = vpop.f32.mrb[0].mxu0
  %v8992 = vadd.f32 %v8607, %v8991
  %v8993 = vpop.f32.mrb[0].mxu0
  %8994 = vmatprep.mubr.f32.mxu0 %v8281
  %8995 = vmatmul.mubr.f32.gmra.mrb[0].mxu0 %v8280
  %v8996 = vpop.f32.mrb[0].mxu0
  %v8997 = vadd.f32 %v8612, %v8996
  %v8998 = vpop.f32.mrb[0].mxu0
  %8999 = vmatprep.mubr.f32.mxu0 %v8283
  %9000 = vmatmul.mubr.f32.gmra.mrb[0].mxu0 %v8282
  %v9001 = vpop.f32.mrb[0].mxu0
  %v9002 = vadd.f32 %v8617, %v9001
  %v9003 = vpop.f32.mrb[0].mxu0
  %9004 = vmatprep.mubr.f32.mxu0 %v8285
  %9005 = vmatmul.mubr.f32.gmra.mrb[0].mxu0 %v8284
  %v9006 = vpop.f32.mrb[0].mxu0
  %v9007 = vadd.f32 %v8622, %v9006
  %v9008 = vpop.f32.mrb[0].mxu0
  %9009 = vmatprep.mubr.f32.mxu0 %v8287
  %9010 = vmatmul.mubr.f32.gmra.mrb[0].mxu0 %v8286
  %v9011 = vpop.f32.mrb[0].mxu0
  %v9012 = vadd.f32 %v8627, %v9011
  %v9013 = vpop.f32.mrb[0].mxu0
  %9014 = vmatprep.mubr.f32.mxu0 %v8289
  %9015 = vmatmul.mubr.f32.gmra.mrb[0].mxu0 %v8288
  %v9016 = vpop.f32.mrb[0].mxu0
  %v9017 = vadd.f32 %v8632, %v9016
  %v9018 = vpop.f32.mrb[0].mxu0
  %9019 = vmatprep.mubr.f32.mxu0 %v8291
  %9020 = vmatmul.mubr.f32.gmra.mrb[0].mxu0 %v8290
  %v9021 = vpop.f32.mrb[0].mxu0
  %v9022 = vadd.f32 %v8637, %v9021
  %v9023 = vpop.f32.mrb[0].mxu0
  %9024 = vmatprep.mubr.f32.mxu0 %v8293
  %9025 = vmatmul.mubr.f32.gmra.mrb[0].mxu0 %v8292
  %v9026 = vpop.f32.mrb[0].mxu0
  %v9027 = vadd.f32 %v8642, %v9026
  %v9028 = vpop.f32.mrb[0].mxu0
  %9029 = vmatprep.mubr.f32.mxu0 %v8295
  %9030 = vmatmul.mubr.f32.gmra.mrb[0].mxu0 %v8294
  %v9031 = vpop.f32.mrb[0].mxu0
  %v9032 = vadd.f32 %v8647, %v9031
  %v9033 = vpop.f32.mrb[0].mxu0
  %9034 = vmatprep.mubr.f32.mxu0 %v8297
  %9035 = vmatmul.mubr.f32.gmra.mrb[0].mxu0 %v8296
  %v9036 = vpop.f32.mrb[0].mxu0
  %v9037 = vadd.f32 %v8652, %v9036
  %v9038 = vpop.f32.mrb[0].mxu0
  %9039 = vmatprep.mubr.f32.mxu0 %v8299
  %9040 = vmatmul.mubr.f32.gmra.mrb[0].mxu0 %v8298
  %v9041 = vpop.f32.mrb[0].mxu0
  %v9042 = vadd.f32 %v8657, %v9041
  %v9043 = vpop.f32.mrb[0].mxu0
  %9044 = vmatprep.mubr.f32.mxu0 %v8301
  %9045 = vmatmul.mubr.f32.gmra.mrb[0].mxu0 %v8300
  %v9046 = vpop.f32.mrb[0].mxu0
  %v9047 = vadd.f32 %v8662, %v9046
  %v9048 = vpop.f32.mrb[0].mxu0
  %9049 = vmatprep.mubr.f32.mxu0 %v8303
  %9050 = vmatmul.mubr.f32.gmra.mrb[0].mxu0 %v8302
  %v9051 = vpop.f32.mrb[0].mxu0
  %v9052 = vadd.f32 %v8667, %v9051
  %v9053 = vpop.f32.mrb[0].mxu0
  %9054 = vmatprep.mubr.f32.mxu0 %v8305
  %9055 = vmatmul.mubr.f32.gmra.mrb[0].mxu0 %v8304
  %v9056 = vpop.f32.mrb[0].mxu0
  %v9057 = vadd.f32 %v8672, %v9056
  %v9058 = vpop.f32.mrb[0].mxu0
  %9059 = vmatprep.mubr.f32.mxu0 %v8307
  %9060 = vmatmul.mubr.f32.gmra.mrb[0].mxu0 %v8306
  %v9061 = vpop.f32.mrb[0].mxu0
  %v9062 = vadd.f32 %v8677, %v9061
  %v9063 = vpop.f32.mrb[0].mxu0
  %9064 = vmatprep.mubr.f32.mxu0 %v8309
  %9065 = vmatmul.mubr.f32.gmra.mrb[0].mxu0 %v8308
  %v9066 = vpop.f32.mrb[0].mxu0
  %v9067 = vadd.f32 %v8682, %v9066
  %v9068 = vpop.f32.mrb[0].mxu0
  %9069 = vmatprep.mubr.f32.mxu0 %v8311
  %9070 = vmatmul.mubr.f32.gmra.mrb[0].mxu0 %v8310
  %v9071 = vpop.f32.mrb[0].mxu0
  %v9072 = vadd.f32 %v8687, %v9071
  %v9073 = vpop.f32.mrb[0].mxu0
  %9074 = vmatprep.mubr.f32.mxu0 %v8313
  %9075 = vmatmul.mubr.f32.gmra.mrb[0].mxu0 %v8312
  %v9076 = vpop.f32.mrb[0].mxu0
  %v9077 = vadd.f32 %v8692, %v9076
  %v9078 = vpop.f32.mrb[0].mxu0
  %9079 = vmatprep.mubr.f32.mxu0 %v8315
  %9080 = vmatmul.mubr.f32.gmra.mrb[0].mxu0 %v8314
  %v9081 = vpop.f32.mrb[0].mxu0
  %v9082 = vadd.f32 %v8697, %v9081
  %v9083 = vpop.f32.mrb[0].mxu0
  %9084 = vmatprep.mubr.f32.mxu0 %v8317
  %9085 = vmatmul.mubr.f32.gmra.mrb[0].mxu0 %v8316
  %v9086 = vpop.f32.mrb[0].mxu0
  %v9087 = vadd.f32 %v8702, %v9086
  %v9088 = vpop.f32.mrb[0].mxu0
  %9089 = vmatprep.mubr.f32.mxu0 %v8319
  %9090 = vmatmul.mubr.f32.gmra.mrb[0].mxu0 %v8318
  %v9091 = vpop.f32.mrb[0].mxu0
  %v9092 = vadd.f32 %v8707, %v9091
  %v9093 = vpop.f32.mrb[0].mxu0
  %9094 = vmatprep.mubr.f32.mxu0 %v8321
  %9095 = vmatmul.mubr.f32.gmra.mrb[0].mxu0 %v8320
  %v9096 = vpop.f32.mrb[0].mxu0
  %v9097 = vadd.f32 %v8712, %v9096
  %v9098 = vpop.f32.mrb[0].mxu0
  %9099 = vmatprep.mubr.f32.mxu0 %v8323
  %9100 = vmatmul.mubr.f32.gmra.mrb[0].mxu0 %v8322
  %v9101 = vpop.f32.mrb[0].mxu0
  %v9102 = vadd.f32 %v8717, %v9101
  %v9103 = vpop.f32.mrb[0].mxu0
  %9104 = vmatprep.mubr.f32.mxu0 %v8325
  %9105 = vmatmul.mubr.f32.gmra.mrb[0].mxu0 %v8324
  %v9106 = vpop.f32.mrb[0].mxu0
  %v9107 = vadd.f32 %v8722, %v9106
  %v9108 = vpop.f32.mrb[0].mxu0
  %9109 = vmatprep.mubr.f32.mxu0 %v8327
  %9110 = vmatmul.mubr.f32.gmra.mrb[0].mxu0 %v8326
  %v9111 = vpop.f32.mrb[0].mxu0
  %v9112 = vadd.f32 %v8727, %v9111
  %v9113 = vpop.f32.mrb[0].mxu0
  %9114 = vmatprep.mubr.f32.mxu0 %v8329
  %9115 = vmatmul.mubr.f32.gmra.mrb[0].mxu0 %v8328
  %v9116 = vpop.f32.mrb[0].mxu0
  %v9117 = vadd.f32 %v8732, %v9116
  %v9118 = vpop.f32.mrb[0].mxu0
  %9119 = vmatprep.mubr.f32.mxu0 %v8331
  %9120 = vmatmul.mubr.f32.gmra.mrb[0].mxu0 %v8330
  %v9121 = vpop.f32.mrb[0].mxu0
  %v9122 = vadd.f32 %v8737, %v9121
  %v9123 = vpop.f32.mrb[0].mxu0
  %9124 = vmatprep.mubr.f32.mxu0 %v8333
  %9125 = vmatmul.mubr.f32.gmra.mrb[0].mxu0 %v8332
  %v9126 = vpop.f32.mrb[0].mxu0
  %v9127 = vadd.f32 %v8742, %v9126
  %v9128 = vpop.f32.mrb[0].mxu0
  %9129 = vmatprep.mubr.f32.mxu0 %v8335
  %9130 = vmatmul.mubr.f32.gmra.mrb[0].mxu0 %v8334
  %v9131 = vpop.f32.mrb[0].mxu0
  %v9132 = vadd.f32 %v8747, %v9131
  %v9133 = vpop.f32.mrb[0].mxu0
  %9134 = vmatprep.mubr.f32.mxu0 %v8337
  %9135 = vmatmul.mubr.f32.gmra.mrb[0].mxu0 %v8336
  %v9136 = vpop.f32.mrb[0].mxu0
  %v9137 = vadd.f32 %v8752, %v9136
  %v9138 = vpop.f32.mrb[0].mxu0
  %9139 = vmatprep.mubr.f32.mxu0 %v8339
  %9140 = vmatmul.mubr.f32.gmra.mrb[0].mxu0 %v8338
  %v9141 = vpop.f32.mrb[0].mxu0
  %v9142 = vadd.f32 %v8757, %v9141
  %v9143 = vpop.f32.mrb[0].mxu0
  %9144 = vmatprep.mubr.f32.mxu0 %v8341
  %9145 = vmatmul.mubr.f32.gmra.mrb[0].mxu0 %v8340
  %v9146 = vpop.f32.mrb[0].mxu0
  %v9147 = vadd.f32 %v8762, %v9146
  %v9148 = vpop.f32.mrb[0].mxu0
  %9149 = vmatprep.mubr.f32.mxu0 %v8343
  %9150 = vmatmul.mubr.f32.gmra.mrb[0].mxu0 %v8342
  %v9151 = vpop.f32.mrb[0].mxu0
  %v9152 = vadd.f32 %v8767, %v9151
  %v9153 = vpop.f32.mrb[0].mxu0
  %9154 = vmatprep.mubr.f32.mxu0 %v8345
  %9155 = vmatmul.mubr.f32.gmra.mrb[0].mxu0 %v8344
  %v9156 = vpop.f32.mrb[0].mxu0
  %v9157 = vadd.f32 %v8772, %v9156
  %v9158 = vpop.f32.mrb[0].mxu0
  %9159 = vmatprep.mubr.f32.mxu0 %v8347
  %9160 = vmatmul.mubr.f32.gmra.mrb[0].mxu0 %v8346
  %v9161 = vpop.f32.mrb[0].mxu0
  %v9162 = vadd.f32 %v8777, %v9161
  %v9163 = vpop.f32.mrb[0].mxu0
  %9164 = vmatprep.mubr.f32.mxu0 %v8349
  %9165 = vmatmul.mubr.f32.gmra.mrb[0].mxu0 %v8348
  %v9166 = vpop.f32.mrb[0].mxu0
  %v9167 = vadd.f32 %v8782, %v9166
  %v9168 = vpop.f32.mrb[0].mxu0
  %9169 = vmatprep.mubr.f32.mxu0 %v8351
  %9170 = vmatmul.mubr.f32.gmra.mrb[0].mxu0 %v8350
  %v9171 = vpop.f32.mrb[0].mxu0
  %v9172 = vadd.f32 %v8787, %v9171
  %v9173 = vpop.f32.mrb[0].mxu0
  %9174 = vmatprep.mubr.f32.mxu0 %v8353
  %9175 = vmatmul.mubr.f32.gmra.mrb[0].mxu0 %v8352
  %v9176 = vpop.f32.mrb[0].mxu0
  %v9177 = vadd.f32 %v8792, %v9176
  %v9178 = vpop.f32.mrb[0].mxu0
  %9179 = vmatprep.mubr.f32.mxu0 %v8355
  %9180 = vmatmul.mubr.f32.gmra.mrb[0].mxu0 %v8354
  %v9181 = vpop.f32.mrb[0].mxu0
  %v9182 = vadd.f32 %v8797, %v9181
  %v9183 = vpop.f32.mrb[0].mxu0
  %9184 = vmatprep.mubr.f32.mxu0 %v8357
  %9185 = vmatmul.mubr.f32.gmra.mrb[0].mxu0 %v8356
  %v9186 = vpop.f32.mrb[0].mxu0
  %v9187 = vadd.f32 %v8802, %v9186
  %v9188 = vpop.f32.mrb[0].mxu0
  %9189 = vmatprep.mubr.f32.mxu0 %v8359
  %9190 = vmatmul.mubr.f32.gmra.mrb[0].mxu0 %v8358
  %v9191 = vpop.f32.mrb[0].mxu0
  %v9192 = vadd.f32 %v8807, %v9191
  %v9193 = vpop.f32.mrb[0].mxu0
  %9194 = vdwg.mxu0
  %v9195 = vrot.slane %v7848, 1
  %v9196 = vrot.slane %v7849, 1
  %v9197 = vrot.slane %v7850, 1
  %v9198 = vrot.slane %v7851, 1
  %v9199 = vrot.slane %v7852, 1
  %v9200 = vrot.slane %v7853, 1
  %v9201 = vrot.slane %v7854, 1
  %v9202 = vrot.slane %v7855, 1
  %v9203 = vrot.slane %v7856, 1
  %v9204 = vrot.slane %v7857, 1
  %v9205 = vrot.slane %v7858, 1
  %v9206 = vrot.slane %v7859, 1
  %v9207 = vrot.slane %v7860, 1
  %v9208 = vrot.slane %v7861, 1
  %v9209 = vrot.slane %v7862, 1
  %v9210 = vrot.slane %v7863, 1
  %v9211 = vrot.slane %v7864, 1
  %v9212 = vrot.slane %v7865, 1
  %v9213 = vrot.slane %v7866, 1
  %v9214 = vrot.slane %v7867, 1
  %v9215 = vrot.slane %v7868, 1
  %v9216 = vrot.slane %v7869, 1
  %v9217 = vrot.slane %v7870, 1
  %v9218 = vrot.slane %v7871, 1
  %v9219 = vrot.slane %v7872, 1
  %v9220 = vrot.slane %v7873, 1
  %v9221 = vrot.slane %v7874, 1
  %v9222 = vrot.slane %v7875, 1
  %v9223 = vrot.slane %v7876, 1
  %v9224 = vrot.slane %v7877, 1
  %v9225 = vrot.slane %v7878, 1
  %v9226 = vrot.slane %v7879, 1
  %v9227 = vrot.slane %v7880, 1
  %v9228 = vrot.slane %v7881, 1
  %v9229 = vrot.slane %v7882, 1
  %v9230 = vrot.slane %v7883, 1
  %v9231 = vrot.slane %v7884, 1
  %v9232 = vrot.slane %v7885, 1
  %v9233 = vrot.slane %v7886, 1
  %v9234 = vrot.slane %v7887, 1
  %v9235 = vrot.slane %v7888, 1
  %v9236 = vrot.slane %v7889, 1
  %v9237 = vrot.slane %v7890, 1
  %v9238 = vrot.slane %v7891, 1
  %v9239 = vrot.slane %v7892, 1
  %v9240 = vrot.slane %v7893, 1
  %v9241 = vrot.slane %v7894, 1
  %v9242 = vrot.slane %v7895, 1
  %v9243 = vrot.slane %v7896, 1
  %v9244 = vrot.slane %v7897, 1
  %v9245 = vrot.slane %v7898, 1
  %v9246 = vrot.slane %v7899, 1
  %v9247 = vrot.slane %v7900, 1
  %v9248 = vrot.slane %v7901, 1
  %v9249 = vrot.slane %v7902, 1
  %v9250 = vrot.slane %v7903, 1
  %v9251 = vrot.slane %v7904, 1
  %v9252 = vrot.slane %v7905, 1
  %v9253 = vrot.slane %v7906, 1
  %v9254 = vrot.slane %v7907, 1
  %v9255 = vrot.slane %v7908, 1
  %v9256 = vrot.slane %v7909, 1
  %v9257 = vrot.slane %v7910, 1
  %v9258 = vrot.slane %v7911, 1
  %v9259 = vrot.slane %v7912, 1
  %v9260 = vrot.slane %v7913, 1
  %v9261 = vrot.slane %v7914, 1
  %v9262 = vrot.slane %v7915, 1
  %v9263 = vrot.slane %v7916, 1
  %v9264 = vrot.slane %v7917, 1
  %v9265 = vrot.slane %v7918, 1
  %v9266 = vrot.slane %v7919, 1
  %v9267 = vrot.slane %v7920, 1
  %v9268 = vrot.slane %v7921, 1
  %v9269 = vrot.slane %v7922, 1
  %v9270 = vrot.slane %v7923, 1
  %v9271 = vrot.slane %v7924, 1
  %v9272 = vrot.slane %v7925, 1
  %v9273 = vrot.slane %v7926, 1
  %v9274 = vrot.slane %v7927, 1
  %v9275 = vrot.slane %v7928, 1
  %v9276 = vrot.slane %v7929, 1
  %v9277 = vrot.slane %v7930, 1
  %v9278 = vrot.slane %v7931, 1
  %v9279 = vrot.slane %v7932, 1
  %v9280 = vrot.slane %v7933, 1
  %v9281 = vrot.slane %v7934, 1
  %v9282 = vrot.slane %v7935, 1
  %v9283 = vrot.slane %v7936, 1
  %v9284 = vrot.slane %v7937, 1
  %v9285 = vrot.slane %v7938, 1
  %v9286 = vrot.slane %v7939, 1
  %v9287 = vrot.slane %v7940, 1
  %v9288 = vrot.slane %v7941, 1
  %v9289 = vrot.slane %v7942, 1
  %v9290 = vrot.slane %v7943, 1
  %v9291 = vrot.slane %v7944, 1
  %v9292 = vrot.slane %v7945, 1
  %v9293 = vrot.slane %v7946, 1
  %v9294 = vrot.slane %v7947, 1
  %v9295 = vrot.slane %v7948, 1
  %v9296 = vrot.slane %v7949, 1
  %v9297 = vrot.slane %v7950, 1
  %v9298 = vrot.slane %v7951, 1
  %v9299 = vrot.slane %v7952, 1
  %v9300 = vrot.slane %v7953, 1
  %v9301 = vrot.slane %v7954, 1
  %v9302 = vrot.slane %v7955, 1
  %v9303 = vrot.slane %v7956, 1
  %v9304 = vrot.slane %v7957, 1
  %v9305 = vrot.slane %v7958, 1
  %v9306 = vrot.slane %v7959, 1
  %v9307 = vrot.slane %v7960, 1
  %v9308 = vrot.slane %v7961, 1
  %v9309 = vrot.slane %v7962, 1
  %v9310 = vrot.slane %v7963, 1
  %v9311 = vrot.slane %v7964, 1
  %v9312 = vrot.slane %v7965, 1
  %v9313 = vrot.slane %v7966, 1
  %v9314 = vrot.slane %v7967, 1
  %v9315 = vrot.slane %v7968, 1
  %v9316 = vrot.slane %v7969, 1
  %v9317 = vrot.slane %v7970, 1
  %v9318 = vrot.slane %v7971, 1
  %v9319 = vrot.slane %v7972, 1
  %v9320 = vrot.slane %v7973, 1
  %v9321 = vrot.slane %v7974, 1
  %v9322 = vrot.slane %v7975, 1
  %v9323 = vsel %vm4626, %v9319, %v9321
  %v9324 = vsel %vm4626, %v9320, %v9322
  %v9325 = vsel %vm4626, %v9317, %v9319
  %v9326 = vsel %vm4626, %v9318, %v9320
  %v9327 = vsel %vm4626, %v9315, %v9317
  %v9328 = vsel %vm4626, %v9316, %v9318
  %v9329 = vsel %vm4626, %v9313, %v9315
  %v9330 = vsel %vm4626, %v9314, %v9316
  %v9331 = vsel %vm4626, %v9311, %v9313
  %v9332 = vsel %vm4626, %v9312, %v9314
  %v9333 = vsel %vm4626, %v9309, %v9311
  %v9334 = vsel %vm4626, %v9310, %v9312
  %v9335 = vsel %vm4626, %v9307, %v9309
  %v9336 = vsel %vm4626, %v9308, %v9310
  %v9337 = vsel %vm4626, %v9305, %v9307
  %v9338 = vsel %vm4626, %v9306, %v9308
  %v9339 = vsel %vm4626, %v9303, %v9305
  %v9340 = vsel %vm4626, %v9304, %v9306
  %v9341 = vsel %vm4626, %v9301, %v9303
  %v9342 = vsel %vm4626, %v9302, %v9304
  %v9343 = vsel %vm4626, %v9299, %v9301
  %v9344 = vsel %vm4626, %v9300, %v9302
  %v9345 = vsel %vm4626, %v9297, %v9299
  %v9346 = vsel %vm4626, %v9298, %v9300
  %v9347 = vsel %vm4626, %v9295, %v9297
  %v9348 = vsel %vm4626, %v9296, %v9298
  %v9349 = vsel %vm4626, %v9293, %v9295
  %v9350 = vsel %vm4626, %v9294, %v9296
  %v9351 = vsel %vm4626, %v9291, %v9293
  %v9352 = vsel %vm4626, %v9292, %v9294
  %v9353 = vsel %vm4626, %v9289, %v9291
  %v9354 = vsel %vm4626, %v9290, %v9292
  %v9355 = vsel %vm4626, %v9287, %v9289
  %v9356 = vsel %vm4626, %v9288, %v9290
  %v9357 = vsel %vm4626, %v9285, %v9287
  %v9358 = vsel %vm4626, %v9286, %v9288
  %v9359 = vsel %vm4626, %v9283, %v9285
  %v9360 = vsel %vm4626, %v9284, %v9286
  %v9361 = vsel %vm4626, %v9281, %v9283
  %v9362 = vsel %vm4626, %v9282, %v9284
  %v9363 = vsel %vm4626, %v9279, %v9281
  %v9364 = vsel %vm4626, %v9280, %v9282
  %v9365 = vsel %vm4626, %v9277, %v9279
  %v9366 = vsel %vm4626, %v9278, %v9280
  %v9367 = vsel %vm4626, %v9275, %v9277
  %v9368 = vsel %vm4626, %v9276, %v9278
  %v9369 = vsel %vm4626, %v9273, %v9275
  %v9370 = vsel %vm4626, %v9274, %v9276
  %v9371 = vsel %vm4626, %v9271, %v9273
  %v9372 = vsel %vm4626, %v9272, %v9274
  %v9373 = vsel %vm4626, %v9269, %v9271
  %v9374 = vsel %vm4626, %v9270, %v9272
  %v9375 = vsel %vm4626, %v9267, %v9269
  %v9376 = vsel %vm4626, %v9268, %v9270
  %v9377 = vsel %vm4626, %v9265, %v9267
  %v9378 = vsel %vm4626, %v9266, %v9268
  %v9379 = vsel %vm4626, %v9263, %v9265
  %v9380 = vsel %vm4626, %v9264, %v9266
  %v9381 = vsel %vm4626, %v9261, %v9263
  %v9382 = vsel %vm4626, %v9262, %v9264
  %v9383 = vsel %vm4626, %v9259, %v9261
  %v9384 = vsel %vm4626, %v9260, %v9262
  %v9385 = vsel %vm4626, %v9257, %v9259
  %v9386 = vsel %vm4626, %v9258, %v9260
  %v9387 = vsel %vm4626, %v9255, %v9257
  %v9388 = vsel %vm4626, %v9256, %v9258
  %v9389 = vsel %vm4626, %v9253, %v9255
  %v9390 = vsel %vm4626, %v9254, %v9256
  %v9391 = vsel %vm4626, %v9251, %v9253
  %v9392 = vsel %vm4626, %v9252, %v9254
  %v9393 = vsel %vm4626, %v9249, %v9251
  %v9394 = vsel %vm4626, %v9250, %v9252
  %v9395 = vsel %vm4626, %v9247, %v9249
  %v9396 = vsel %vm4626, %v9248, %v9250
  %v9397 = vsel %vm4626, %v9245, %v9247
  %v9398 = vsel %vm4626, %v9246, %v9248
  %v9399 = vsel %vm4626, %v9243, %v9245
  %v9400 = vsel %vm4626, %v9244, %v9246
  %v9401 = vsel %vm4626, %v9241, %v9243
  %v9402 = vsel %vm4626, %v9242, %v9244
  %v9403 = vsel %vm4626, %v9239, %v9241
  %v9404 = vsel %vm4626, %v9240, %v9242
  %v9405 = vsel %vm4626, %v9237, %v9239
  %v9406 = vsel %vm4626, %v9238, %v9240
  %v9407 = vsel %vm4626, %v9235, %v9237
  %v9408 = vsel %vm4626, %v9236, %v9238
  %v9409 = vsel %vm4626, %v9233, %v9235
  %v9410 = vsel %vm4626, %v9234, %v9236
  %v9411 = vsel %vm4626, %v9231, %v9233
  %v9412 = vsel %vm4626, %v9232, %v9234
  %v9413 = vsel %vm4626, %v9229, %v9231
  %v9414 = vsel %vm4626, %v9230, %v9232
  %v9415 = vsel %vm4626, %v9227, %v9229
  %v9416 = vsel %vm4626, %v9228, %v9230
  %v9417 = vsel %vm4626, %v9225, %v9227
  %v9418 = vsel %vm4626, %v9226, %v9228
  %v9419 = vsel %vm4626, %v9223, %v9225
  %v9420 = vsel %vm4626, %v9224, %v9226
  %v9421 = vsel %vm4626, %v9221, %v9223
  %v9422 = vsel %vm4626, %v9222, %v9224
  %v9423 = vsel %vm4626, %v9219, %v9221
  %v9424 = vsel %vm4626, %v9220, %v9222
  %v9425 = vsel %vm4626, %v9217, %v9219
  %v9426 = vsel %vm4626, %v9218, %v9220
  %v9427 = vsel %vm4626, %v9215, %v9217
  %v9428 = vsel %vm4626, %v9216, %v9218
  %v9429 = vsel %vm4626, %v9213, %v9215
  %v9430 = vsel %vm4626, %v9214, %v9216
  %v9431 = vsel %vm4626, %v9211, %v9213
  %v9432 = vsel %vm4626, %v9212, %v9214
  %v9433 = vsel %vm4626, %v9209, %v9211
  %v9434 = vsel %vm4626, %v9210, %v9212
  %v9435 = vsel %vm4626, %v9207, %v9209
  %v9436 = vsel %vm4626, %v9208, %v9210
  %v9437 = vsel %vm4626, %v9205, %v9207
  %v9438 = vsel %vm4626, %v9206, %v9208
  %v9439 = vsel %vm4626, %v9203, %v9205
  %v9440 = vsel %vm4626, %v9204, %v9206
  %v9441 = vsel %vm4626, %v9201, %v9203
  %v9442 = vsel %vm4626, %v9202, %v9204
  %v9443 = vsel %vm4626, %v9199, %v9201
  %v9444 = vsel %vm4626, %v9200, %v9202
  %v9445 = vsel %vm4626, %v9197, %v9199
  %v9446 = vsel %vm4626, %v9198, %v9200
  %v9447 = vsel %vm4626, %v9195, %v9197
  %v9448 = vsel %vm4626, %v9196, %v9198
  %v9449 = vsel %vm4626, %v9321, %v9195
  %v9450 = vsel %vm4626, %v9322, %v9196
  %v9451 = vsel %vm5011, %v9447, 0.0
  %v9452 = vsel %vm5011, %v9448, 0.0
  %v9453 = vsel %vm5012, %v9445, 0.0
  %v9454 = vsel %vm5012, %v9446, 0.0
  %v9455 = vsel %vm5013, %v9443, 0.0
  %v9456 = vsel %vm5013, %v9444, 0.0
  %v9457 = vsel %vm5014, %v9441, 0.0
  %v9458 = vsel %vm5014, %v9442, 0.0
  %v9459 = vsel %vm5015, %v9439, 0.0
  %v9460 = vsel %vm5015, %v9440, 0.0
  %v9461 = vsel %vm5016, %v9437, 0.0
  %v9462 = vsel %vm5016, %v9438, 0.0
  %v9463 = vsel %vm5017, %v9435, 0.0
  %v9464 = vsel %vm5017, %v9436, 0.0
  %v9465 = vsel %vm5018, %v9433, 0.0
  %v9466 = vsel %vm5018, %v9434, 0.0
  %v9467 = vsel %vm5019, %v9431, 0.0
  %v9468 = vsel %vm5019, %v9432, 0.0
  %v9469 = vsel %vm5020, %v9429, 0.0
  %v9470 = vsel %vm5020, %v9430, 0.0
  %v9471 = vsel %vm5021, %v9427, 0.0
  %v9472 = vsel %vm5021, %v9428, 0.0
  %v9473 = vsel %vm5022, %v9425, 0.0
  %v9474 = vsel %vm5022, %v9426, 0.0
  %v9475 = vsel %vm5023, %v9423, 0.0
  %v9476 = vsel %vm5023, %v9424, 0.0
  %v9477 = vsel %vm5024, %v9421, 0.0
  %v9478 = vsel %vm5024, %v9422, 0.0
  %v9479 = vsel %vm5025, %v9419, 0.0
  %v9480 = vsel %vm5025, %v9420, 0.0
  %v9481 = vsel %vm5026, %v9417, 0.0
  %v9482 = vsel %vm5026, %v9418, 0.0
  %v9483 = vsel %vm5027, %v9415, 0.0
  %v9484 = vsel %vm5027, %v9416, 0.0
  %v9485 = vsel %vm5028, %v9413, 0.0
  %v9486 = vsel %vm5028, %v9414, 0.0
  %v9487 = vsel %vm5029, %v9411, 0.0
  %v9488 = vsel %vm5029, %v9412, 0.0
  %v9489 = vsel %vm5030, %v9409, 0.0
  %v9490 = vsel %vm5030, %v9410, 0.0
  %v9491 = vsel %vm5031, %v9407, 0.0
  %v9492 = vsel %vm5031, %v9408, 0.0
  %v9493 = vsel %vm5032, %v9405, 0.0
  %v9494 = vsel %vm5032, %v9406, 0.0
  %v9495 = vsel %vm5033, %v9403, 0.0
  %v9496 = vsel %vm5033, %v9404, 0.0
  %v9497 = vsel %vm5034, %v9401, 0.0
  %v9498 = vsel %vm5034, %v9402, 0.0
  %v9499 = vsel %vm5035, %v9399, 0.0
  %v9500 = vsel %vm5035, %v9400, 0.0
  %v9501 = vsel %vm5036, %v9397, 0.0
  %v9502 = vsel %vm5036, %v9398, 0.0
  %v9503 = vsel %vm5037, %v9395, 0.0
  %v9504 = vsel %vm5037, %v9396, 0.0
  %v9505 = vsel %vm5038, %v9393, 0.0
  %v9506 = vsel %vm5038, %v9394, 0.0
  %v9507 = vsel %vm5039, %v9391, 0.0
  %v9508 = vsel %vm5039, %v9392, 0.0
  %v9509 = vsel %vm5040, %v9389, 0.0
  %v9510 = vsel %vm5040, %v9390, 0.0
  %v9511 = vsel %vm5041, %v9387, 0.0
  %v9512 = vsel %vm5041, %v9388, 0.0
  %v9513 = vsel %vm5042, %v9385, 0.0
  %v9514 = vsel %vm5042, %v9386, 0.0
  %v9515 = vsel %vm5043, %v9383, 0.0
  %v9516 = vsel %vm5043, %v9384, 0.0
  %v9517 = vsel %vm5044, %v9381, 0.0
  %v9518 = vsel %vm5044, %v9382, 0.0
  %v9519 = vsel %vm5045, %v9379, 0.0
  %v9520 = vsel %vm5045, %v9380, 0.0
  %v9521 = vsel %vm5046, %v9377, 0.0
  %v9522 = vsel %vm5046, %v9378, 0.0
  %v9523 = vsel %vm5047, %v9375, 0.0
  %v9524 = vsel %vm5047, %v9376, 0.0
  %v9525 = vsel %vm5048, %v9373, 0.0
  %v9526 = vsel %vm5048, %v9374, 0.0
  %v9527 = vsel %vm5049, %v9371, 0.0
  %v9528 = vsel %vm5049, %v9372, 0.0
  %v9529 = vsel %vm5050, %v9369, 0.0
  %v9530 = vsel %vm5050, %v9370, 0.0
  %v9531 = vsel %vm5051, %v9367, 0.0
  %v9532 = vsel %vm5051, %v9368, 0.0
  %v9533 = vsel %vm5052, %v9365, 0.0
  %v9534 = vsel %vm5052, %v9366, 0.0
  %v9535 = vsel %vm5053, %v9363, 0.0
  %v9536 = vsel %vm5053, %v9364, 0.0
  %v9537 = vsel %vm5054, %v9361, 0.0
  %v9538 = vsel %vm5054, %v9362, 0.0
  %v9539 = vsel %vm5055, %v9359, 0.0
  %v9540 = vsel %vm5055, %v9360, 0.0
  %v9541 = vsel %vm5056, %v9357, 0.0
  %v9542 = vsel %vm5056, %v9358, 0.0
  %v9543 = vsel %vm5057, %v9355, 0.0
  %v9544 = vsel %vm5057, %v9356, 0.0
  %v9545 = vsel %vm5058, %v9353, 0.0
  %v9546 = vsel %vm5058, %v9354, 0.0
  %v9547 = vsel %vm5059, %v9351, 0.0
  %v9548 = vsel %vm5059, %v9352, 0.0
  %v9549 = vsel %vm5060, %v9349, 0.0
  %v9550 = vsel %vm5060, %v9350, 0.0
  %v9551 = vsel %vm5061, %v9347, 0.0
  %v9552 = vsel %vm5061, %v9348, 0.0
  %v9553 = vsel %vm5062, %v9345, 0.0
  %v9554 = vsel %vm5062, %v9346, 0.0
  %v9555 = vsel %vm5063, %v9343, 0.0
  %v9556 = vsel %vm5063, %v9344, 0.0
  %v9557 = vsel %vm5064, %v9341, 0.0
  %v9558 = vsel %vm5064, %v9342, 0.0
  %v9559 = vsel %vm5065, %v9339, 0.0
  %v9560 = vsel %vm5065, %v9340, 0.0
  %v9561 = vsel %vm5066, %v9337, 0.0
  %v9562 = vsel %vm5066, %v9338, 0.0
  %v9563 = vsel %vm5067, %v9335, 0.0
  %v9564 = vsel %vm5067, %v9336, 0.0
  %v9565 = vsel %vm5068, %v9333, 0.0
  %v9566 = vsel %vm5068, %v9334, 0.0
  %v9567 = vsel %vm5069, %v9331, 0.0
  %v9568 = vsel %vm5069, %v9332, 0.0
  %v9569 = vsel %vm5070, %v9329, 0.0
  %v9570 = vsel %vm5070, %v9330, 0.0
  %v9571 = vsel %vm5071, %v9327, 0.0
  %v9572 = vsel %vm5071, %v9328, 0.0
  %v9573 = vsel %vm5072, %v9325, 0.0
  %v9574 = vsel %vm5072, %v9326, 0.0
  %v9575 = vsel %vm5073, %v9323, 0.0
  %v9576 = vsel %vm5073, %v9324, 0.0
  %v9577 = vsel %vm5074, %v9449, 0.0
  %v9578 = vsel %vm5074, %v9450, 0.0
  %s9579 = scalar_lea.vmem %s3, 512
  %v9580 = vld [vmem:[%s9579] sm:$0xff]
  %v9581 = vld [vmem:[%s9579 + $0x8] sm:$0xff]
  %v9582 = vld [vmem:[%s9579 + $0x10] sm:$0xff]
  %v9583 = vld [vmem:[%s9579 + $0x18] sm:$0xff]
  %v9584 = vld [vmem:[%s9579 + $0x20] sm:$0xff]
  %v9585 = vld [vmem:[%s9579 + $0x28] sm:$0xff]
  %v9586 = vld [vmem:[%s9579 + $0x30] sm:$0xff]
  %v9587 = vld [vmem:[%s9579 + $0x38] sm:$0xff]
  %v9588 = vld [vmem:[%s9579 + $0x40] sm:$0xff]
  %v9589 = vld [vmem:[%s9579 + $0x48] sm:$0xff]
  %v9590 = vld [vmem:[%s9579 + $0x50] sm:$0xff]
  %v9591 = vld [vmem:[%s9579 + $0x58] sm:$0xff]
  %v9592 = vld [vmem:[%s9579 + $0x60] sm:$0xff]
  %v9593 = vld [vmem:[%s9579 + $0x68] sm:$0xff]
  %v9594 = vld [vmem:[%s9579 + $0x70] sm:$0xff]
  %v9595 = vld [vmem:[%s9579 + $0x78] sm:$0xff]
  %v9596 = vld [vmem:[%s9579 + $0x80] sm:$0xff]
  %v9597 = vld [vmem:[%s9579 + $0x88] sm:$0xff]
  %v9598 = vld [vmem:[%s9579 + $0x90] sm:$0xff]
  %v9599 = vld [vmem:[%s9579 + $0x98] sm:$0xff]
  %v9600 = vld [vmem:[%s9579 + $0xa0] sm:$0xff]
  %v9601 = vld [vmem:[%s9579 + $0xa8] sm:$0xff]
  %v9602 = vld [vmem:[%s9579 + $0xb0] sm:$0xff]
  %v9603 = vld [vmem:[%s9579 + $0xb8] sm:$0xff]
  %v9604 = vld [vmem:[%s9579 + $0xc0] sm:$0xff]
  %v9605 = vld [vmem:[%s9579 + $0xc8] sm:$0xff]
  %v9606 = vld [vmem:[%s9579 + $0xd0] sm:$0xff]
  %v9607 = vld [vmem:[%s9579 + $0xd8] sm:$0xff]
  %v9608 = vld [vmem:[%s9579 + $0xe0] sm:$0xff]
  %v9609 = vld [vmem:[%s9579 + $0xe8] sm:$0xff]
  %v9610 = vld [vmem:[%s9579 + $0xf0] sm:$0xff]
  %v9611 = vld [vmem:[%s9579 + $0xf8] sm:$0xff]
  %9612 = vmatprep.subr.mxu0 0.0
  %9613 = vmatpush1.msra.mxu0 %v9580
  %9614 = vmatprep.subr.mxu0 0.0
  %9615 = vmatpush1.msra.mxu0 %v9581
  %9616 = vmatprep.subr.mxu0 0.0
  %9617 = vmatpush1.msra.mxu0 %v9582
  %9618 = vmatprep.subr.mxu0 0.0
  %9619 = vmatpush1.msra.mxu0 %v9583
  %9620 = vmatprep.subr.mxu0 0.0
  %9621 = vmatpush1.msra.mxu0 %v9584
  %9622 = vmatprep.subr.mxu0 0.0
  %9623 = vmatpush1.msra.mxu0 %v9585
  %9624 = vmatprep.subr.mxu0 0.0
  %9625 = vmatpush1.msra.mxu0 %v9586
  %9626 = vmatprep.subr.mxu0 0.0
  %9627 = vmatpush1.msra.mxu0 %v9587
  %9628 = vmatprep.subr.mxu0 0.0
  %9629 = vmatpush1.msra.mxu0 %v9588
  %9630 = vmatprep.subr.mxu0 0.0
  %9631 = vmatpush1.msra.mxu0 %v9589
  %9632 = vmatprep.subr.mxu0 0.0
  %9633 = vmatpush1.msra.mxu0 %v9590
  %9634 = vmatprep.subr.mxu0 0.0
  %9635 = vmatpush1.msra.mxu0 %v9591
  %9636 = vmatprep.subr.mxu0 0.0
  %9637 = vmatpush1.msra.mxu0 %v9592
  %9638 = vmatprep.subr.mxu0 0.0
  %9639 = vmatpush1.msra.mxu0 %v9593
  %9640 = vmatprep.subr.mxu0 0.0
  %9641 = vmatpush1.msra.mxu0 %v9594
  %9642 = vmatprep.subr.mxu0 0.0
  %9643 = vmatpush1.msra.mxu0 %v9595
  %9644 = vmatprep.subr.mxu0 0.0
  %9645 = vmatpush1.msra.mxu0 %v9596
  %9646 = vmatprep.subr.mxu0 0.0
  %9647 = vmatpush1.msra.mxu0 %v9597
  %9648 = vmatprep.subr.mxu0 0.0
  %9649 = vmatpush1.msra.mxu0 %v9598
  %9650 = vmatprep.subr.mxu0 0.0
  %9651 = vmatpush1.msra.mxu0 %v9599
  %9652 = vmatprep.subr.mxu0 0.0
  %9653 = vmatpush1.msra.mxu0 %v9600
  %9654 = vmatprep.subr.mxu0 0.0
  %9655 = vmatpush1.msra.mxu0 %v9601
  %9656 = vmatprep.subr.mxu0 0.0
  %9657 = vmatpush1.msra.mxu0 %v9602
  %9658 = vmatprep.subr.mxu0 0.0
  %9659 = vmatpush1.msra.mxu0 %v9603
  %9660 = vmatprep.subr.mxu0 0.0
  %9661 = vmatpush1.msra.mxu0 %v9604
  %9662 = vmatprep.subr.mxu0 0.0
  %9663 = vmatpush1.msra.mxu0 %v9605
  %9664 = vmatprep.subr.mxu0 0.0
  %9665 = vmatpush1.msra.mxu0 %v9606
  %9666 = vmatprep.subr.mxu0 0.0
  %9667 = vmatpush1.msra.mxu0 %v9607
  %9668 = vmatprep.subr.mxu0 0.0
  %9669 = vmatpush1.msra.mxu0 %v9608
  %9670 = vmatprep.subr.mxu0 0.0
  %9671 = vmatpush1.msra.mxu0 %v9609
  %9672 = vmatprep.subr.mxu0 0.0
  %9673 = vmatpush1.msra.mxu0 %v9610
  %9674 = vmatprep.subr.mxu0 0.0
  %9675 = vmatpush1.msra.mxu0 %v9611
  %9676 = vmatprep.mubr.f32.mxu0 %v9452
  %9677 = vmatmul.mubr.f32.gmra.mrb[0].mxu0 %v9451
  %v9678 = vpop.f32.mrb[0].mxu0
  %v9679 = vadd.f32 0.0, %v9678
  %v9680 = vpop.f32.mrb[0].mxu0
  %9681 = vmatprep.mubr.f32.mxu0 %v9454
  %9682 = vmatmul.mubr.f32.gmra.mrb[0].mxu0 %v9453
  %v9683 = vpop.f32.mrb[0].mxu0
  %v9684 = vadd.f32 0.0, %v9683
  %v9685 = vpop.f32.mrb[0].mxu0
  %9686 = vmatprep.mubr.f32.mxu0 %v9456
  %9687 = vmatmul.mubr.f32.gmra.mrb[0].mxu0 %v9455
  %v9688 = vpop.f32.mrb[0].mxu0
  %v9689 = vadd.f32 0.0, %v9688
  %v9690 = vpop.f32.mrb[0].mxu0
  %9691 = vmatprep.mubr.f32.mxu0 %v9458
  %9692 = vmatmul.mubr.f32.gmra.mrb[0].mxu0 %v9457
  %v9693 = vpop.f32.mrb[0].mxu0
  %v9694 = vadd.f32 0.0, %v9693
  %v9695 = vpop.f32.mrb[0].mxu0
  %9696 = vmatprep.mubr.f32.mxu0 %v9460
  %9697 = vmatmul.mubr.f32.gmra.mrb[0].mxu0 %v9459
  %v9698 = vpop.f32.mrb[0].mxu0
  %v9699 = vadd.f32 0.0, %v9698
  %v9700 = vpop.f32.mrb[0].mxu0
  %9701 = vmatprep.mubr.f32.mxu0 %v9462
  %9702 = vmatmul.mubr.f32.gmra.mrb[0].mxu0 %v9461
  %v9703 = vpop.f32.mrb[0].mxu0
  %v9704 = vadd.f32 0.0, %v9703
  %v9705 = vpop.f32.mrb[0].mxu0
  %9706 = vmatprep.mubr.f32.mxu0 %v9464
  %9707 = vmatmul.mubr.f32.gmra.mrb[0].mxu0 %v9463
  %v9708 = vpop.f32.mrb[0].mxu0
  %v9709 = vadd.f32 0.0, %v9708
  %v9710 = vpop.f32.mrb[0].mxu0
  %9711 = vmatprep.mubr.f32.mxu0 %v9466
  %9712 = vmatmul.mubr.f32.gmra.mrb[0].mxu0 %v9465
  %v9713 = vpop.f32.mrb[0].mxu0
  %v9714 = vadd.f32 0.0, %v9713
  %v9715 = vpop.f32.mrb[0].mxu0
  %9716 = vmatprep.mubr.f32.mxu0 %v9468
  %9717 = vmatmul.mubr.f32.gmra.mrb[0].mxu0 %v9467
  %v9718 = vpop.f32.mrb[0].mxu0
  %v9719 = vadd.f32 0.0, %v9718
  %v9720 = vpop.f32.mrb[0].mxu0
  %9721 = vmatprep.mubr.f32.mxu0 %v9470
  %9722 = vmatmul.mubr.f32.gmra.mrb[0].mxu0 %v9469
  %v9723 = vpop.f32.mrb[0].mxu0
  %v9724 = vadd.f32 0.0, %v9723
  %v9725 = vpop.f32.mrb[0].mxu0
  %9726 = vmatprep.mubr.f32.mxu0 %v9472
  %9727 = vmatmul.mubr.f32.gmra.mrb[0].mxu0 %v9471
  %v9728 = vpop.f32.mrb[0].mxu0
  %v9729 = vadd.f32 0.0, %v9728
  %v9730 = vpop.f32.mrb[0].mxu0
  %9731 = vmatprep.mubr.f32.mxu0 %v9474
  %9732 = vmatmul.mubr.f32.gmra.mrb[0].mxu0 %v9473
  %v9733 = vpop.f32.mrb[0].mxu0
  %v9734 = vadd.f32 0.0, %v9733
  %v9735 = vpop.f32.mrb[0].mxu0
  %9736 = vmatprep.mubr.f32.mxu0 %v9476
  %9737 = vmatmul.mubr.f32.gmra.mrb[0].mxu0 %v9475
  %v9738 = vpop.f32.mrb[0].mxu0
  %v9739 = vadd.f32 0.0, %v9738
  %v9740 = vpop.f32.mrb[0].mxu0
  %9741 = vmatprep.mubr.f32.mxu0 %v9478
  %9742 = vmatmul.mubr.f32.gmra.mrb[0].mxu0 %v9477
  %v9743 = vpop.f32.mrb[0].mxu0
  %v9744 = vadd.f32 0.0, %v9743
  %v9745 = vpop.f32.mrb[0].mxu0
  %9746 = vmatprep.mubr.f32.mxu0 %v9480
  %9747 = vmatmul.mubr.f32.gmra.mrb[0].mxu0 %v9479
  %v9748 = vpop.f32.mrb[0].mxu0
  %v9749 = vadd.f32 0.0, %v9748
  %v9750 = vpop.f32.mrb[0].mxu0
  %9751 = vmatprep.mubr.f32.mxu0 %v9482
  %9752 = vmatmul.mubr.f32.gmra.mrb[0].mxu0 %v9481
  %v9753 = vpop.f32.mrb[0].mxu0
  %v9754 = vadd.f32 0.0, %v9753
  %v9755 = vpop.f32.mrb[0].mxu0
  %9756 = vmatprep.mubr.f32.mxu0 %v9484
  %9757 = vmatmul.mubr.f32.gmra.mrb[0].mxu0 %v9483
  %v9758 = vpop.f32.mrb[0].mxu0
  %v9759 = vadd.f32 0.0, %v9758
  %v9760 = vpop.f32.mrb[0].mxu0
  %9761 = vmatprep.mubr.f32.mxu0 %v9486
  %9762 = vmatmul.mubr.f32.gmra.mrb[0].mxu0 %v9485
  %v9763 = vpop.f32.mrb[0].mxu0
  %v9764 = vadd.f32 0.0, %v9763
  %v9765 = vpop.f32.mrb[0].mxu0
  %9766 = vmatprep.mubr.f32.mxu0 %v9488
  %9767 = vmatmul.mubr.f32.gmra.mrb[0].mxu0 %v9487
  %v9768 = vpop.f32.mrb[0].mxu0
  %v9769 = vadd.f32 0.0, %v9768
  %v9770 = vpop.f32.mrb[0].mxu0
  %9771 = vmatprep.mubr.f32.mxu0 %v9490
  %9772 = vmatmul.mubr.f32.gmra.mrb[0].mxu0 %v9489
  %v9773 = vpop.f32.mrb[0].mxu0
  %v9774 = vadd.f32 0.0, %v9773
  %v9775 = vpop.f32.mrb[0].mxu0
  %9776 = vmatprep.mubr.f32.mxu0 %v9492
  %9777 = vmatmul.mubr.f32.gmra.mrb[0].mxu0 %v9491
  %v9778 = vpop.f32.mrb[0].mxu0
  %v9779 = vadd.f32 0.0, %v9778
  %v9780 = vpop.f32.mrb[0].mxu0
  %9781 = vmatprep.mubr.f32.mxu0 %v9494
  %9782 = vmatmul.mubr.f32.gmra.mrb[0].mxu0 %v9493
  %v9783 = vpop.f32.mrb[0].mxu0
  %v9784 = vadd.f32 0.0, %v9783
  %v9785 = vpop.f32.mrb[0].mxu0
  %9786 = vmatprep.mubr.f32.mxu0 %v9496
  %9787 = vmatmul.mubr.f32.gmra.mrb[0].mxu0 %v9495
  %v9788 = vpop.f32.mrb[0].mxu0
  %v9789 = vadd.f32 0.0, %v9788
  %v9790 = vpop.f32.mrb[0].mxu0
  %9791 = vmatprep.mubr.f32.mxu0 %v9498
  %9792 = vmatmul.mubr.f32.gmra.mrb[0].mxu0 %v9497
  %v9793 = vpop.f32.mrb[0].mxu0
  %v9794 = vadd.f32 0.0, %v9793
  %v9795 = vpop.f32.mrb[0].mxu0
  %9796 = vmatprep.mubr.f32.mxu0 %v9500
  %9797 = vmatmul.mubr.f32.gmra.mrb[0].mxu0 %v9499
  %v9798 = vpop.f32.mrb[0].mxu0
  %v9799 = vadd.f32 0.0, %v9798
  %v9800 = vpop.f32.mrb[0].mxu0
  %9801 = vmatprep.mubr.f32.mxu0 %v9502
  %9802 = vmatmul.mubr.f32.gmra.mrb[0].mxu0 %v9501
  %v9803 = vpop.f32.mrb[0].mxu0
  %v9804 = vadd.f32 0.0, %v9803
  %v9805 = vpop.f32.mrb[0].mxu0
  %9806 = vmatprep.mubr.f32.mxu0 %v9504
  %9807 = vmatmul.mubr.f32.gmra.mrb[0].mxu0 %v9503
  %v9808 = vpop.f32.mrb[0].mxu0
  %v9809 = vadd.f32 0.0, %v9808
  %v9810 = vpop.f32.mrb[0].mxu0
  %9811 = vmatprep.mubr.f32.mxu0 %v9506
  %9812 = vmatmul.mubr.f32.gmra.mrb[0].mxu0 %v9505
  %v9813 = vpop.f32.mrb[0].mxu0
  %v9814 = vadd.f32 0.0, %v9813
  %v9815 = vpop.f32.mrb[0].mxu0
  %9816 = vmatprep.mubr.f32.mxu0 %v9508
  %9817 = vmatmul.mubr.f32.gmra.mrb[0].mxu0 %v9507
  %v9818 = vpop.f32.mrb[0].mxu0
  %v9819 = vadd.f32 0.0, %v9818
  %v9820 = vpop.f32.mrb[0].mxu0
  %9821 = vmatprep.mubr.f32.mxu0 %v9510
  %9822 = vmatmul.mubr.f32.gmra.mrb[0].mxu0 %v9509
  %v9823 = vpop.f32.mrb[0].mxu0
  %v9824 = vadd.f32 0.0, %v9823
  %v9825 = vpop.f32.mrb[0].mxu0
  %9826 = vmatprep.mubr.f32.mxu0 %v9512
  %9827 = vmatmul.mubr.f32.gmra.mrb[0].mxu0 %v9511
  %v9828 = vpop.f32.mrb[0].mxu0
  %v9829 = vadd.f32 0.0, %v9828
  %v9830 = vpop.f32.mrb[0].mxu0
  %9831 = vmatprep.mubr.f32.mxu0 %v9514
  %9832 = vmatmul.mubr.f32.gmra.mrb[0].mxu0 %v9513
  %v9833 = vpop.f32.mrb[0].mxu0
  %v9834 = vadd.f32 0.0, %v9833
  %v9835 = vpop.f32.mrb[0].mxu0
  %9836 = vmatprep.mubr.f32.mxu0 %v9516
  %9837 = vmatmul.mubr.f32.gmra.mrb[0].mxu0 %v9515
  %v9838 = vpop.f32.mrb[0].mxu0
  %v9839 = vadd.f32 0.0, %v9838
  %v9840 = vpop.f32.mrb[0].mxu0
  %9841 = vmatprep.mubr.f32.mxu0 %v9518
  %9842 = vmatmul.mubr.f32.gmra.mrb[0].mxu0 %v9517
  %v9843 = vpop.f32.mrb[0].mxu0
  %v9844 = vadd.f32 0.0, %v9843
  %v9845 = vpop.f32.mrb[0].mxu0
  %9846 = vmatprep.mubr.f32.mxu0 %v9520
  %9847 = vmatmul.mubr.f32.gmra.mrb[0].mxu0 %v9519
  %v9848 = vpop.f32.mrb[0].mxu0
  %v9849 = vadd.f32 0.0, %v9848
  %v9850 = vpop.f32.mrb[0].mxu0
  %9851 = vmatprep.mubr.f32.mxu0 %v9522
  %9852 = vmatmul.mubr.f32.gmra.mrb[0].mxu0 %v9521
  %v9853 = vpop.f32.mrb[0].mxu0
  %v9854 = vadd.f32 0.0, %v9853
  %v9855 = vpop.f32.mrb[0].mxu0
  %9856 = vmatprep.mubr.f32.mxu0 %v9524
  %9857 = vmatmul.mubr.f32.gmra.mrb[0].mxu0 %v9523
  %v9858 = vpop.f32.mrb[0].mxu0
  %v9859 = vadd.f32 0.0, %v9858
  %v9860 = vpop.f32.mrb[0].mxu0
  %9861 = vmatprep.mubr.f32.mxu0 %v9526
  %9862 = vmatmul.mubr.f32.gmra.mrb[0].mxu0 %v9525
  %v9863 = vpop.f32.mrb[0].mxu0
  %v9864 = vadd.f32 0.0, %v9863
  %v9865 = vpop.f32.mrb[0].mxu0
  %9866 = vmatprep.mubr.f32.mxu0 %v9528
  %9867 = vmatmul.mubr.f32.gmra.mrb[0].mxu0 %v9527
  %v9868 = vpop.f32.mrb[0].mxu0
  %v9869 = vadd.f32 0.0, %v9868
  %v9870 = vpop.f32.mrb[0].mxu0
  %9871 = vmatprep.mubr.f32.mxu0 %v9530
  %9872 = vmatmul.mubr.f32.gmra.mrb[0].mxu0 %v9529
  %v9873 = vpop.f32.mrb[0].mxu0
  %v9874 = vadd.f32 0.0, %v9873
  %v9875 = vpop.f32.mrb[0].mxu0
  %9876 = vmatprep.mubr.f32.mxu0 %v9532
  %9877 = vmatmul.mubr.f32.gmra.mrb[0].mxu0 %v9531
  %v9878 = vpop.f32.mrb[0].mxu0
  %v9879 = vadd.f32 0.0, %v9878
  %v9880 = vpop.f32.mrb[0].mxu0
  %9881 = vmatprep.mubr.f32.mxu0 %v9534
  %9882 = vmatmul.mubr.f32.gmra.mrb[0].mxu0 %v9533
  %v9883 = vpop.f32.mrb[0].mxu0
  %v9884 = vadd.f32 0.0, %v9883
  %v9885 = vpop.f32.mrb[0].mxu0
  %9886 = vmatprep.mubr.f32.mxu0 %v9536
  %9887 = vmatmul.mubr.f32.gmra.mrb[0].mxu0 %v9535
  %v9888 = vpop.f32.mrb[0].mxu0
  %v9889 = vadd.f32 0.0, %v9888
  %v9890 = vpop.f32.mrb[0].mxu0
  %9891 = vmatprep.mubr.f32.mxu0 %v9538
  %9892 = vmatmul.mubr.f32.gmra.mrb[0].mxu0 %v9537
  %v9893 = vpop.f32.mrb[0].mxu0
  %v9894 = vadd.f32 0.0, %v9893
  %v9895 = vpop.f32.mrb[0].mxu0
  %9896 = vmatprep.mubr.f32.mxu0 %v9540
  %9897 = vmatmul.mubr.f32.gmra.mrb[0].mxu0 %v9539
  %v9898 = vpop.f32.mrb[0].mxu0
  %v9899 = vadd.f32 0.0, %v9898
  %v9900 = vpop.f32.mrb[0].mxu0
  %9901 = vmatprep.mubr.f32.mxu0 %v9542
  %9902 = vmatmul.mubr.f32.gmra.mrb[0].mxu0 %v9541
  %v9903 = vpop.f32.mrb[0].mxu0
  %v9904 = vadd.f32 0.0, %v9903
  %v9905 = vpop.f32.mrb[0].mxu0
  %9906 = vmatprep.mubr.f32.mxu0 %v9544
  %9907 = vmatmul.mubr.f32.gmra.mrb[0].mxu0 %v9543
  %v9908 = vpop.f32.mrb[0].mxu0
  %v9909 = vadd.f32 0.0, %v9908
  %v9910 = vpop.f32.mrb[0].mxu0
  %9911 = vmatprep.mubr.f32.mxu0 %v9546
  %9912 = vmatmul.mubr.f32.gmra.mrb[0].mxu0 %v9545
  %v9913 = vpop.f32.mrb[0].mxu0
  %v9914 = vadd.f32 0.0, %v9913
  %v9915 = vpop.f32.mrb[0].mxu0
  %9916 = vmatprep.mubr.f32.mxu0 %v9548
  %9917 = vmatmul.mubr.f32.gmra.mrb[0].mxu0 %v9547
  %v9918 = vpop.f32.mrb[0].mxu0
  %v9919 = vadd.f32 0.0, %v9918
  %v9920 = vpop.f32.mrb[0].mxu0
  %9921 = vmatprep.mubr.f32.mxu0 %v9550
  %9922 = vmatmul.mubr.f32.gmra.mrb[0].mxu0 %v9549
  %v9923 = vpop.f32.mrb[0].mxu0
  %v9924 = vadd.f32 0.0, %v9923
  %v9925 = vpop.f32.mrb[0].mxu0
  %9926 = vmatprep.mubr.f32.mxu0 %v9552
  %9927 = vmatmul.mubr.f32.gmra.mrb[0].mxu0 %v9551
  %v9928 = vpop.f32.mrb[0].mxu0
  %v9929 = vadd.f32 0.0, %v9928
  %v9930 = vpop.f32.mrb[0].mxu0
  %9931 = vmatprep.mubr.f32.mxu0 %v9554
  %9932 = vmatmul.mubr.f32.gmra.mrb[0].mxu0 %v9553
  %v9933 = vpop.f32.mrb[0].mxu0
  %v9934 = vadd.f32 0.0, %v9933
  %v9935 = vpop.f32.mrb[0].mxu0
  %9936 = vmatprep.mubr.f32.mxu0 %v9556
  %9937 = vmatmul.mubr.f32.gmra.mrb[0].mxu0 %v9555
  %v9938 = vpop.f32.mrb[0].mxu0
  %v9939 = vadd.f32 0.0, %v9938
  %v9940 = vpop.f32.mrb[0].mxu0
  %9941 = vmatprep.mubr.f32.mxu0 %v9558
  %9942 = vmatmul.mubr.f32.gmra.mrb[0].mxu0 %v9557
  %v9943 = vpop.f32.mrb[0].mxu0
  %v9944 = vadd.f32 0.0, %v9943
  %v9945 = vpop.f32.mrb[0].mxu0
  %9946 = vmatprep.mubr.f32.mxu0 %v9560
  %9947 = vmatmul.mubr.f32.gmra.mrb[0].mxu0 %v9559
  %v9948 = vpop.f32.mrb[0].mxu0
  %v9949 = vadd.f32 0.0, %v9948
  %v9950 = vpop.f32.mrb[0].mxu0
  %9951 = vmatprep.mubr.f32.mxu0 %v9562
  %9952 = vmatmul.mubr.f32.gmra.mrb[0].mxu0 %v9561
  %v9953 = vpop.f32.mrb[0].mxu0
  %v9954 = vadd.f32 0.0, %v9953
  %v9955 = vpop.f32.mrb[0].mxu0
  %9956 = vmatprep.mubr.f32.mxu0 %v9564
  %9957 = vmatmul.mubr.f32.gmra.mrb[0].mxu0 %v9563
  %v9958 = vpop.f32.mrb[0].mxu0
  %v9959 = vadd.f32 0.0, %v9958
  %v9960 = vpop.f32.mrb[0].mxu0
  %9961 = vmatprep.mubr.f32.mxu0 %v9566
  %9962 = vmatmul.mubr.f32.gmra.mrb[0].mxu0 %v9565
  %v9963 = vpop.f32.mrb[0].mxu0
  %v9964 = vadd.f32 0.0, %v9963
  %v9965 = vpop.f32.mrb[0].mxu0
  %9966 = vmatprep.mubr.f32.mxu0 %v9568
  %9967 = vmatmul.mubr.f32.gmra.mrb[0].mxu0 %v9567
  %v9968 = vpop.f32.mrb[0].mxu0
  %v9969 = vadd.f32 0.0, %v9968
  %v9970 = vpop.f32.mrb[0].mxu0
  %9971 = vmatprep.mubr.f32.mxu0 %v9570
  %9972 = vmatmul.mubr.f32.gmra.mrb[0].mxu0 %v9569
  %v9973 = vpop.f32.mrb[0].mxu0
  %v9974 = vadd.f32 0.0, %v9973
  %v9975 = vpop.f32.mrb[0].mxu0
  %9976 = vmatprep.mubr.f32.mxu0 %v9572
  %9977 = vmatmul.mubr.f32.gmra.mrb[0].mxu0 %v9571
  %v9978 = vpop.f32.mrb[0].mxu0
  %v9979 = vadd.f32 0.0, %v9978
  %v9980 = vpop.f32.mrb[0].mxu0
  %9981 = vmatprep.mubr.f32.mxu0 %v9574
  %9982 = vmatmul.mubr.f32.gmra.mrb[0].mxu0 %v9573
  %v9983 = vpop.f32.mrb[0].mxu0
  %v9984 = vadd.f32 0.0, %v9983
  %v9985 = vpop.f32.mrb[0].mxu0
  %9986 = vmatprep.mubr.f32.mxu0 %v9576
  %9987 = vmatmul.mubr.f32.gmra.mrb[0].mxu0 %v9575
  %v9988 = vpop.f32.mrb[0].mxu0
  %v9989 = vadd.f32 0.0, %v9988
  %v9990 = vpop.f32.mrb[0].mxu0
  %9991 = vmatprep.mubr.f32.mxu0 %v9578
  %9992 = vmatmul.mubr.f32.gmra.mrb[0].mxu0 %v9577
  %v9993 = vpop.f32.mrb[0].mxu0
  %v9994 = vadd.f32 0.0, %v9993
  %v9995 = vpop.f32.mrb[0].mxu0
  %9996 = vdwg.mxu0
  %v9997 = vadd.f32 %v8877, %v9679
  %v9998 = vadd.f32 %v8882, %v9684
  %v9999 = vadd.f32 %v8887, %v9689
  %v10000 = vadd.f32 %v8892, %v9694
  %v10001 = vadd.f32 %v8897, %v9699
  %v10002 = vadd.f32 %v8902, %v9704
  %v10003 = vadd.f32 %v8907, %v9709
  %v10004 = vadd.f32 %v8912, %v9714
  %v10005 = vadd.f32 %v8917, %v9719
  %v10006 = vadd.f32 %v8922, %v9724
  %v10007 = vadd.f32 %v8927, %v9729
  %v10008 = vadd.f32 %v8932, %v9734
  %v10009 = vadd.f32 %v8937, %v9739
  %v10010 = vadd.f32 %v8942, %v9744
  %v10011 = vadd.f32 %v8947, %v9749
  %v10012 = vadd.f32 %v8952, %v9754
  %v10013 = vadd.f32 %v8957, %v9759
  %v10014 = vadd.f32 %v8962, %v9764
  %v10015 = vadd.f32 %v8967, %v9769
  %v10016 = vadd.f32 %v8972, %v9774
  %v10017 = vadd.f32 %v8977, %v9779
  %v10018 = vadd.f32 %v8982, %v9784
  %v10019 = vadd.f32 %v8987, %v9789
  %v10020 = vadd.f32 %v8992, %v9794
  %v10021 = vadd.f32 %v8997, %v9799
  %v10022 = vadd.f32 %v9002, %v9804
  %v10023 = vadd.f32 %v9007, %v9809
  %v10024 = vadd.f32 %v9012, %v9814
  %v10025 = vadd.f32 %v9017, %v9819
  %v10026 = vadd.f32 %v9022, %v9824
  %v10027 = vadd.f32 %v9027, %v9829
  %v10028 = vadd.f32 %v9032, %v9834
  %v10029 = vadd.f32 %v9037, %v9839
  %v10030 = vadd.f32 %v9042, %v9844
  %v10031 = vadd.f32 %v9047, %v9849
  %v10032 = vadd.f32 %v9052, %v9854
  %v10033 = vadd.f32 %v9057, %v9859
  %v10034 = vadd.f32 %v9062, %v9864
  %v10035 = vadd.f32 %v9067, %v9869
  %v10036 = vadd.f32 %v9072, %v9874
  %v10037 = vadd.f32 %v9077, %v9879
  %v10038 = vadd.f32 %v9082, %v9884
  %v10039 = vadd.f32 %v9087, %v9889
  %v10040 = vadd.f32 %v9092, %v9894
  %v10041 = vadd.f32 %v9097, %v9899
  %v10042 = vadd.f32 %v9102, %v9904
  %v10043 = vadd.f32 %v9107, %v9909
  %v10044 = vadd.f32 %v9112, %v9914
  %v10045 = vadd.f32 %v9117, %v9919
  %v10046 = vadd.f32 %v9122, %v9924
  %v10047 = vadd.f32 %v9127, %v9929
  %v10048 = vadd.f32 %v9132, %v9934
  %v10049 = vadd.f32 %v9137, %v9939
  %v10050 = vadd.f32 %v9142, %v9944
  %v10051 = vadd.f32 %v9147, %v9949
  %v10052 = vadd.f32 %v9152, %v9954
  %v10053 = vadd.f32 %v9157, %v9959
  %v10054 = vadd.f32 %v9162, %v9964
  %v10055 = vadd.f32 %v9167, %v9969
  %v10056 = vadd.f32 %v9172, %v9974
  %v10057 = vadd.f32 %v9177, %v9979
  %v10058 = vadd.f32 %v9182, %v9984
  %v10059 = vadd.f32 %v9187, %v9989
  %v10060 = vadd.f32 %v9192, %v9994
  %v10061 = vadd.f32 %v9997, %v9998
  %v10062 = vadd.f32 %v10061, %v9999
  %v10063 = vadd.f32 %v10062, %v10000
  %v10064 = vadd.f32 %v10063, %v10001
  %v10065 = vadd.f32 %v10064, %v10002
  %v10066 = vadd.f32 %v10065, %v10003
  %v10067 = vadd.f32 %v10066, %v10004
  %v10068 = vrot.slane %v10067, 4
  %v10069 = vadd.f32 %v10067, %v10068
  %v10070 = vrot.slane %v10069, 2
  %v10071 = vadd.f32 %v10069, %v10070
  %v10072 = vrot.slane %v10071, 1
  %v10073 = vadd.f32 %v10071, %v10072
  %v10074 = vadd.f32 %v10005, %v10006
  %v10075 = vadd.f32 %v10074, %v10007
  %v10076 = vadd.f32 %v10075, %v10008
  %v10077 = vadd.f32 %v10076, %v10009
  %v10078 = vadd.f32 %v10077, %v10010
  %v10079 = vadd.f32 %v10078, %v10011
  %v10080 = vadd.f32 %v10079, %v10012
  %v10081 = vrot.slane %v10080, 4
  %v10082 = vadd.f32 %v10080, %v10081
  %v10083 = vrot.slane %v10082, 2
  %v10084 = vadd.f32 %v10082, %v10083
  %v10085 = vrot.slane %v10084, 1
  %v10086 = vadd.f32 %v10084, %v10085
  %v10087 = vadd.f32 %v10013, %v10014
  %v10088 = vadd.f32 %v10087, %v10015
  %v10089 = vadd.f32 %v10088, %v10016
  %v10090 = vadd.f32 %v10089, %v10017
  %v10091 = vadd.f32 %v10090, %v10018
  %v10092 = vadd.f32 %v10091, %v10019
  %v10093 = vadd.f32 %v10092, %v10020
  %v10094 = vrot.slane %v10093, 4
  %v10095 = vadd.f32 %v10093, %v10094
  %v10096 = vrot.slane %v10095, 2
  %v10097 = vadd.f32 %v10095, %v10096
  %v10098 = vrot.slane %v10097, 1
  %v10099 = vadd.f32 %v10097, %v10098
  %v10100 = vadd.f32 %v10021, %v10022
  %v10101 = vadd.f32 %v10100, %v10023
  %v10102 = vadd.f32 %v10101, %v10024
  %v10103 = vadd.f32 %v10102, %v10025
  %v10104 = vadd.f32 %v10103, %v10026
  %v10105 = vadd.f32 %v10104, %v10027
  %v10106 = vadd.f32 %v10105, %v10028
  %v10107 = vrot.slane %v10106, 4
  %v10108 = vadd.f32 %v10106, %v10107
  %v10109 = vrot.slane %v10108, 2
  %v10110 = vadd.f32 %v10108, %v10109
  %v10111 = vrot.slane %v10110, 1
  %v10112 = vadd.f32 %v10110, %v10111
  %v10113 = vadd.f32 %v10029, %v10030
  %v10114 = vadd.f32 %v10113, %v10031
  %v10115 = vadd.f32 %v10114, %v10032
  %v10116 = vadd.f32 %v10115, %v10033
  %v10117 = vadd.f32 %v10116, %v10034
  %v10118 = vadd.f32 %v10117, %v10035
  %v10119 = vadd.f32 %v10118, %v10036
  %v10120 = vrot.slane %v10119, 4
  %v10121 = vadd.f32 %v10119, %v10120
  %v10122 = vrot.slane %v10121, 2
  %v10123 = vadd.f32 %v10121, %v10122
  %v10124 = vrot.slane %v10123, 1
  %v10125 = vadd.f32 %v10123, %v10124
  %v10126 = vadd.f32 %v10037, %v10038
  %v10127 = vadd.f32 %v10126, %v10039
  %v10128 = vadd.f32 %v10127, %v10040
  %v10129 = vadd.f32 %v10128, %v10041
  %v10130 = vadd.f32 %v10129, %v10042
  %v10131 = vadd.f32 %v10130, %v10043
  %v10132 = vadd.f32 %v10131, %v10044
  %v10133 = vrot.slane %v10132, 4
  %v10134 = vadd.f32 %v10132, %v10133
  %v10135 = vrot.slane %v10134, 2
  %v10136 = vadd.f32 %v10134, %v10135
  %v10137 = vrot.slane %v10136, 1
  %v10138 = vadd.f32 %v10136, %v10137
  %v10139 = vadd.f32 %v10045, %v10046
  %v10140 = vadd.f32 %v10139, %v10047
  %v10141 = vadd.f32 %v10140, %v10048
  %v10142 = vadd.f32 %v10141, %v10049
  %v10143 = vadd.f32 %v10142, %v10050
  %v10144 = vadd.f32 %v10143, %v10051
  %v10145 = vadd.f32 %v10144, %v10052
  %v10146 = vrot.slane %v10145, 4
  %v10147 = vadd.f32 %v10145, %v10146
  %v10148 = vrot.slane %v10147, 2
  %v10149 = vadd.f32 %v10147, %v10148
  %v10150 = vrot.slane %v10149, 1
  %v10151 = vadd.f32 %v10149, %v10150
  %v10152 = vadd.f32 %v10053, %v10054
  %v10153 = vadd.f32 %v10152, %v10055
  %v10154 = vadd.f32 %v10153, %v10056
  %v10155 = vadd.f32 %v10154, %v10057
  %v10156 = vadd.f32 %v10155, %v10058
  %v10157 = vadd.f32 %v10156, %v10059
  %v10158 = vadd.f32 %v10157, %v10060
  %v10159 = vrot.slane %v10158, 4
  %v10160 = vadd.f32 %v10158, %v10159
  %v10161 = vrot.slane %v10160, 2
  %v10162 = vadd.f32 %v10160, %v10161
  %v10163 = vrot.slane %v10162, 1
  %v10164 = vadd.f32 %v10162, %v10163
  %v10165 = vmul.f32 %v9997, %v9997
  %v10166 = vmul.f32 %v9998, %v9998
  %v10167 = vmul.f32 %v9999, %v9999
  %v10168 = vmul.f32 %v10000, %v10000
  %v10169 = vmul.f32 %v10001, %v10001
  %v10170 = vmul.f32 %v10002, %v10002
  %v10171 = vmul.f32 %v10003, %v10003
  %v10172 = vmul.f32 %v10004, %v10004
  %v10173 = vmul.f32 %v10005, %v10005
  %v10174 = vmul.f32 %v10006, %v10006
  %v10175 = vmul.f32 %v10007, %v10007
  %v10176 = vmul.f32 %v10008, %v10008
  %v10177 = vmul.f32 %v10009, %v10009
  %v10178 = vmul.f32 %v10010, %v10010
  %v10179 = vmul.f32 %v10011, %v10011
  %v10180 = vmul.f32 %v10012, %v10012
  %v10181 = vmul.f32 %v10013, %v10013
  %v10182 = vmul.f32 %v10014, %v10014
  %v10183 = vmul.f32 %v10015, %v10015
  %v10184 = vmul.f32 %v10016, %v10016
  %v10185 = vmul.f32 %v10017, %v10017
  %v10186 = vmul.f32 %v10018, %v10018
  %v10187 = vmul.f32 %v10019, %v10019
  %v10188 = vmul.f32 %v10020, %v10020
  %v10189 = vmul.f32 %v10021, %v10021
  %v10190 = vmul.f32 %v10022, %v10022
  %v10191 = vmul.f32 %v10023, %v10023
  %v10192 = vmul.f32 %v10024, %v10024
  %v10193 = vmul.f32 %v10025, %v10025
  %v10194 = vmul.f32 %v10026, %v10026
  %v10195 = vmul.f32 %v10027, %v10027
  %v10196 = vmul.f32 %v10028, %v10028
  %v10197 = vmul.f32 %v10029, %v10029
  %v10198 = vmul.f32 %v10030, %v10030
  %v10199 = vmul.f32 %v10031, %v10031
  %v10200 = vmul.f32 %v10032, %v10032
  %v10201 = vmul.f32 %v10033, %v10033
  %v10202 = vmul.f32 %v10034, %v10034
  %v10203 = vmul.f32 %v10035, %v10035
  %v10204 = vmul.f32 %v10036, %v10036
  %v10205 = vmul.f32 %v10037, %v10037
  %v10206 = vmul.f32 %v10038, %v10038
  %v10207 = vmul.f32 %v10039, %v10039
  %v10208 = vmul.f32 %v10040, %v10040
  %v10209 = vmul.f32 %v10041, %v10041
  %v10210 = vmul.f32 %v10042, %v10042
  %v10211 = vmul.f32 %v10043, %v10043
  %v10212 = vmul.f32 %v10044, %v10044
  %v10213 = vmul.f32 %v10045, %v10045
  %v10214 = vmul.f32 %v10046, %v10046
  %v10215 = vmul.f32 %v10047, %v10047
  %v10216 = vmul.f32 %v10048, %v10048
  %v10217 = vmul.f32 %v10049, %v10049
  %v10218 = vmul.f32 %v10050, %v10050
  %v10219 = vmul.f32 %v10051, %v10051
  %v10220 = vmul.f32 %v10052, %v10052
  %v10221 = vmul.f32 %v10053, %v10053
  %v10222 = vmul.f32 %v10054, %v10054
  %v10223 = vmul.f32 %v10055, %v10055
  %v10224 = vmul.f32 %v10056, %v10056
  %v10225 = vmul.f32 %v10057, %v10057
  %v10226 = vmul.f32 %v10058, %v10058
  %v10227 = vmul.f32 %v10059, %v10059
  %v10228 = vmul.f32 %v10060, %v10060
  %v10229 = vadd.f32 %v10165, %v10166
  %v10230 = vadd.f32 %v10229, %v10167
  %v10231 = vadd.f32 %v10230, %v10168
  %v10232 = vadd.f32 %v10231, %v10169
  %v10233 = vadd.f32 %v10232, %v10170
  %v10234 = vadd.f32 %v10233, %v10171
  %v10235 = vadd.f32 %v10234, %v10172
  %v10236 = vrot.slane %v10235, 4
  %v10237 = vadd.f32 %v10235, %v10236
  %v10238 = vrot.slane %v10237, 2
  %v10239 = vadd.f32 %v10237, %v10238
  %v10240 = vrot.slane %v10239, 1
  %v10241 = vadd.f32 %v10239, %v10240
  %v10242 = vadd.f32 %v10173, %v10174
  %v10243 = vadd.f32 %v10242, %v10175
  %v10244 = vadd.f32 %v10243, %v10176
  %v10245 = vadd.f32 %v10244, %v10177
  %v10246 = vadd.f32 %v10245, %v10178
  %v10247 = vadd.f32 %v10246, %v10179
  %v10248 = vadd.f32 %v10247, %v10180
  %v10249 = vrot.slane %v10248, 4
  %v10250 = vadd.f32 %v10248, %v10249
  %v10251 = vrot.slane %v10250, 2
  %v10252 = vadd.f32 %v10250, %v10251
  %v10253 = vrot.slane %v10252, 1
  %v10254 = vadd.f32 %v10252, %v10253
  %v10255 = vadd.f32 %v10181, %v10182
  %v10256 = vadd.f32 %v10255, %v10183
  %v10257 = vadd.f32 %v10256, %v10184
  %v10258 = vadd.f32 %v10257, %v10185
  %v10259 = vadd.f32 %v10258, %v10186
  %v10260 = vadd.f32 %v10259, %v10187
  %v10261 = vadd.f32 %v10260, %v10188
  %v10262 = vrot.slane %v10261, 4
  %v10263 = vadd.f32 %v10261, %v10262
  %v10264 = vrot.slane %v10263, 2
  %v10265 = vadd.f32 %v10263, %v10264
  %v10266 = vrot.slane %v10265, 1
  %v10267 = vadd.f32 %v10265, %v10266
  %v10268 = vadd.f32 %v10189, %v10190
  %v10269 = vadd.f32 %v10268, %v10191
  %v10270 = vadd.f32 %v10269, %v10192
  %v10271 = vadd.f32 %v10270, %v10193
  %v10272 = vadd.f32 %v10271, %v10194
  %v10273 = vadd.f32 %v10272, %v10195
  %v10274 = vadd.f32 %v10273, %v10196
  %v10275 = vrot.slane %v10274, 4
  %v10276 = vadd.f32 %v10274, %v10275
  %v10277 = vrot.slane %v10276, 2
  %v10278 = vadd.f32 %v10276, %v10277
  %v10279 = vrot.slane %v10278, 1
  %v10280 = vadd.f32 %v10278, %v10279
  %v10281 = vadd.f32 %v10197, %v10198
  %v10282 = vadd.f32 %v10281, %v10199
  %v10283 = vadd.f32 %v10282, %v10200
  %v10284 = vadd.f32 %v10283, %v10201
  %v10285 = vadd.f32 %v10284, %v10202
  %v10286 = vadd.f32 %v10285, %v10203
  %v10287 = vadd.f32 %v10286, %v10204
  %v10288 = vrot.slane %v10287, 4
  %v10289 = vadd.f32 %v10287, %v10288
  %v10290 = vrot.slane %v10289, 2
  %v10291 = vadd.f32 %v10289, %v10290
  %v10292 = vrot.slane %v10291, 1
  %v10293 = vadd.f32 %v10291, %v10292
  %v10294 = vadd.f32 %v10205, %v10206
  %v10295 = vadd.f32 %v10294, %v10207
  %v10296 = vadd.f32 %v10295, %v10208
  %v10297 = vadd.f32 %v10296, %v10209
  %v10298 = vadd.f32 %v10297, %v10210
  %v10299 = vadd.f32 %v10298, %v10211
  %v10300 = vadd.f32 %v10299, %v10212
  %v10301 = vrot.slane %v10300, 4
  %v10302 = vadd.f32 %v10300, %v10301
  %v10303 = vrot.slane %v10302, 2
  %v10304 = vadd.f32 %v10302, %v10303
  %v10305 = vrot.slane %v10304, 1
  %v10306 = vadd.f32 %v10304, %v10305
  %v10307 = vadd.f32 %v10213, %v10214
  %v10308 = vadd.f32 %v10307, %v10215
  %v10309 = vadd.f32 %v10308, %v10216
  %v10310 = vadd.f32 %v10309, %v10217
  %v10311 = vadd.f32 %v10310, %v10218
  %v10312 = vadd.f32 %v10311, %v10219
  %v10313 = vadd.f32 %v10312, %v10220
  %v10314 = vrot.slane %v10313, 4
  %v10315 = vadd.f32 %v10313, %v10314
  %v10316 = vrot.slane %v10315, 2
  %v10317 = vadd.f32 %v10315, %v10316
  %v10318 = vrot.slane %v10317, 1
  %v10319 = vadd.f32 %v10317, %v10318
  %v10320 = vadd.f32 %v10221, %v10222
  %v10321 = vadd.f32 %v10320, %v10223
  %v10322 = vadd.f32 %v10321, %v10224
  %v10323 = vadd.f32 %v10322, %v10225
  %v10324 = vadd.f32 %v10323, %v10226
  %v10325 = vadd.f32 %v10324, %v10227
  %v10326 = vadd.f32 %v10325, %v10228
  %v10327 = vrot.slane %v10326, 4
  %v10328 = vadd.f32 %v10326, %v10327
  %v10329 = vrot.slane %v10328, 2
  %v10330 = vadd.f32 %v10328, %v10329
  %v10331 = vrot.slane %v10330, 1
  %v10332 = vadd.f32 %v10330, %v10331
  %v10333 = vmul.f32 %v10073, 0.015625
  %v10334 = vmul.f32 %v10086, 0.015625
  %v10335 = vmul.f32 %v10099, 0.015625
  %v10336 = vmul.f32 %v10112, 0.015625
  %v10337 = vmul.f32 %v10125, 0.015625
  %v10338 = vmul.f32 %v10138, 0.015625
  %v10339 = vmul.f32 %v10151, 0.015625
  %v10340 = vmul.f32 %v10164, 0.015625
  %v10341 = vmul.f32 %v10241, 0.015625
  %v10342 = vmul.f32 %v10254, 0.015625
  %v10343 = vmul.f32 %v10267, 0.015625
  %v10344 = vmul.f32 %v10280, 0.015625
  %v10345 = vmul.f32 %v10293, 0.015625
  %v10346 = vmul.f32 %v10306, 0.015625
  %v10347 = vmul.f32 %v10319, 0.015625
  %v10348 = vmul.f32 %v10332, 0.015625
  %v10349 = vmul.f32 %v10333, %v10333
  %v10350 = vmul.f32 %v10334, %v10334
  %v10351 = vmul.f32 %v10335, %v10335
  %v10352 = vmul.f32 %v10336, %v10336
  %v10353 = vmul.f32 %v10337, %v10337
  %v10354 = vmul.f32 %v10338, %v10338
  %v10355 = vmul.f32 %v10339, %v10339
  %v10356 = vmul.f32 %v10340, %v10340
  %v10357 = vsub.f32 %v10341, %v10349
  %v10358 = vsub.f32 %v10342, %v10350
  %v10359 = vsub.f32 %v10343, %v10351
  %v10360 = vsub.f32 %v10344, %v10352
  %v10361 = vsub.f32 %v10345, %v10353
  %v10362 = vsub.f32 %v10346, %v10354
  %v10363 = vsub.f32 %v10347, %v10355
  %v10364 = vsub.f32 %v10348, %v10356
  %v10365 = vmax.f32 %v10357, 0.0
  %v10366 = vmax.f32 %v10358, 0.0
  %v10367 = vmax.f32 %v10359, 0.0
  %v10368 = vmax.f32 %v10360, 0.0
  %v10369 = vmax.f32 %v10361, 0.0
  %v10370 = vmax.f32 %v10362, 0.0
  %v10371 = vmax.f32 %v10363, 0.0
  %v10372 = vmax.f32 %v10364, 0.0
  %v10373 = vsub.f32 %v9997, %v10333
  %v10374 = vsub.f32 %v9998, %v10333
  %v10375 = vsub.f32 %v9999, %v10333
  %v10376 = vsub.f32 %v10000, %v10333
  %v10377 = vsub.f32 %v10001, %v10333
  %v10378 = vsub.f32 %v10002, %v10333
  %v10379 = vsub.f32 %v10003, %v10333
  %v10380 = vsub.f32 %v10004, %v10333
  %v10381 = vsub.f32 %v10005, %v10334
  %v10382 = vsub.f32 %v10006, %v10334
  %v10383 = vsub.f32 %v10007, %v10334
  %v10384 = vsub.f32 %v10008, %v10334
  %v10385 = vsub.f32 %v10009, %v10334
  %v10386 = vsub.f32 %v10010, %v10334
  %v10387 = vsub.f32 %v10011, %v10334
  %v10388 = vsub.f32 %v10012, %v10334
  %v10389 = vsub.f32 %v10013, %v10335
  %v10390 = vsub.f32 %v10014, %v10335
  %v10391 = vsub.f32 %v10015, %v10335
  %v10392 = vsub.f32 %v10016, %v10335
  %v10393 = vsub.f32 %v10017, %v10335
  %v10394 = vsub.f32 %v10018, %v10335
  %v10395 = vsub.f32 %v10019, %v10335
  %v10396 = vsub.f32 %v10020, %v10335
  %v10397 = vsub.f32 %v10021, %v10336
  %v10398 = vsub.f32 %v10022, %v10336
  %v10399 = vsub.f32 %v10023, %v10336
  %v10400 = vsub.f32 %v10024, %v10336
  %v10401 = vsub.f32 %v10025, %v10336
  %v10402 = vsub.f32 %v10026, %v10336
  %v10403 = vsub.f32 %v10027, %v10336
  %v10404 = vsub.f32 %v10028, %v10336
  %v10405 = vsub.f32 %v10029, %v10337
  %v10406 = vsub.f32 %v10030, %v10337
  %v10407 = vsub.f32 %v10031, %v10337
  %v10408 = vsub.f32 %v10032, %v10337
  %v10409 = vsub.f32 %v10033, %v10337
  %v10410 = vsub.f32 %v10034, %v10337
  %v10411 = vsub.f32 %v10035, %v10337
  %v10412 = vsub.f32 %v10036, %v10337
  %v10413 = vsub.f32 %v10037, %v10338
  %v10414 = vsub.f32 %v10038, %v10338
  %v10415 = vsub.f32 %v10039, %v10338
  %v10416 = vsub.f32 %v10040, %v10338
  %v10417 = vsub.f32 %v10041, %v10338
  %v10418 = vsub.f32 %v10042, %v10338
  %v10419 = vsub.f32 %v10043, %v10338
  %v10420 = vsub.f32 %v10044, %v10338
  %v10421 = vsub.f32 %v10045, %v10339
  %v10422 = vsub.f32 %v10046, %v10339
  %v10423 = vsub.f32 %v10047, %v10339
  %v10424 = vsub.f32 %v10048, %v10339
  %v10425 = vsub.f32 %v10049, %v10339
  %v10426 = vsub.f32 %v10050, %v10339
  %v10427 = vsub.f32 %v10051, %v10339
  %v10428 = vsub.f32 %v10052, %v10339
  %v10429 = vsub.f32 %v10053, %v10340
  %v10430 = vsub.f32 %v10054, %v10340
  %v10431 = vsub.f32 %v10055, %v10340
  %v10432 = vsub.f32 %v10056, %v10340
  %v10433 = vsub.f32 %v10057, %v10340
  %v10434 = vsub.f32 %v10058, %v10340
  %v10435 = vsub.f32 %v10059, %v10340
  %v10436 = vsub.f32 %v10060, %v10340
  %v10437 = vadd.f32 %v10365, 1e-05
  %v10438 = vadd.f32 %v10366, 1e-05
  %v10439 = vadd.f32 %v10367, 1e-05
  %v10440 = vadd.f32 %v10368, 1e-05
  %v10441 = vadd.f32 %v10369, 1e-05
  %v10442 = vadd.f32 %v10370, 1e-05
  %v10443 = vadd.f32 %v10371, 1e-05
  %v10444 = vadd.f32 %v10372, 1e-05
  %v10445 = vrsqrt.pop %v10437
  %v10446 = vrsqrt.pop %v10438
  %v10447 = vrsqrt.pop %v10439
  %v10448 = vrsqrt.pop %v10440
  %v10449 = vrsqrt.pop %v10441
  %v10450 = vrsqrt.pop %v10442
  %v10451 = vrsqrt.pop %v10443
  %v10452 = vrsqrt.pop %v10444
  %v10453 = vmul.f32 %v10373, %v10445
  %v10454 = vmul.f32 %v10374, %v10445
  %v10455 = vmul.f32 %v10375, %v10445
  %v10456 = vmul.f32 %v10376, %v10445
  %v10457 = vmul.f32 %v10377, %v10445
  %v10458 = vmul.f32 %v10378, %v10445
  %v10459 = vmul.f32 %v10379, %v10445
  %v10460 = vmul.f32 %v10380, %v10445
  %v10461 = vmul.f32 %v10381, %v10446
  %v10462 = vmul.f32 %v10382, %v10446
  %v10463 = vmul.f32 %v10383, %v10446
  %v10464 = vmul.f32 %v10384, %v10446
  %v10465 = vmul.f32 %v10385, %v10446
  %v10466 = vmul.f32 %v10386, %v10446
  %v10467 = vmul.f32 %v10387, %v10446
  %v10468 = vmul.f32 %v10388, %v10446
  %v10469 = vmul.f32 %v10389, %v10447
  %v10470 = vmul.f32 %v10390, %v10447
  %v10471 = vmul.f32 %v10391, %v10447
  %v10472 = vmul.f32 %v10392, %v10447
  %v10473 = vmul.f32 %v10393, %v10447
  %v10474 = vmul.f32 %v10394, %v10447
  %v10475 = vmul.f32 %v10395, %v10447
  %v10476 = vmul.f32 %v10396, %v10447
  %v10477 = vmul.f32 %v10397, %v10448
  %v10478 = vmul.f32 %v10398, %v10448
  %v10479 = vmul.f32 %v10399, %v10448
  %v10480 = vmul.f32 %v10400, %v10448
  %v10481 = vmul.f32 %v10401, %v10448
  %v10482 = vmul.f32 %v10402, %v10448
  %v10483 = vmul.f32 %v10403, %v10448
  %v10484 = vmul.f32 %v10404, %v10448
  %v10485 = vmul.f32 %v10405, %v10449
  %v10486 = vmul.f32 %v10406, %v10449
  %v10487 = vmul.f32 %v10407, %v10449
  %v10488 = vmul.f32 %v10408, %v10449
  %v10489 = vmul.f32 %v10409, %v10449
  %v10490 = vmul.f32 %v10410, %v10449
  %v10491 = vmul.f32 %v10411, %v10449
  %v10492 = vmul.f32 %v10412, %v10449
  %v10493 = vmul.f32 %v10413, %v10450
  %v10494 = vmul.f32 %v10414, %v10450
  %v10495 = vmul.f32 %v10415, %v10450
  %v10496 = vmul.f32 %v10416, %v10450
  %v10497 = vmul.f32 %v10417, %v10450
  %v10498 = vmul.f32 %v10418, %v10450
  %v10499 = vmul.f32 %v10419, %v10450
  %v10500 = vmul.f32 %v10420, %v10450
  %v10501 = vmul.f32 %v10421, %v10451
  %v10502 = vmul.f32 %v10422, %v10451
  %v10503 = vmul.f32 %v10423, %v10451
  %v10504 = vmul.f32 %v10424, %v10451
  %v10505 = vmul.f32 %v10425, %v10451
  %v10506 = vmul.f32 %v10426, %v10451
  %v10507 = vmul.f32 %v10427, %v10451
  %v10508 = vmul.f32 %v10428, %v10451
  %v10509 = vmul.f32 %v10429, %v10452
  %v10510 = vmul.f32 %v10430, %v10452
  %v10511 = vmul.f32 %v10431, %v10452
  %v10512 = vmul.f32 %v10432, %v10452
  %v10513 = vmul.f32 %v10433, %v10452
  %v10514 = vmul.f32 %v10434, %v10452
  %v10515 = vmul.f32 %v10435, %v10452
  %v10516 = vmul.f32 %v10436, %v10452
  %v10517 = vmax.f32 %v10453, 0.0
  %v10518 = vmax.f32 %v10454, 0.0
  %v10519 = vmax.f32 %v10455, 0.0
  %v10520 = vmax.f32 %v10456, 0.0
  %v10521 = vmax.f32 %v10457, 0.0
  %v10522 = vmax.f32 %v10458, 0.0
  %v10523 = vmax.f32 %v10459, 0.0
  %v10524 = vmax.f32 %v10460, 0.0
  %v10525 = vmax.f32 %v10461, 0.0
  %v10526 = vmax.f32 %v10462, 0.0
  %v10527 = vmax.f32 %v10463, 0.0
  %v10528 = vmax.f32 %v10464, 0.0
  %v10529 = vmax.f32 %v10465, 0.0
  %v10530 = vmax.f32 %v10466, 0.0
  %v10531 = vmax.f32 %v10467, 0.0
  %v10532 = vmax.f32 %v10468, 0.0
  %v10533 = vmax.f32 %v10469, 0.0
  %v10534 = vmax.f32 %v10470, 0.0
  %v10535 = vmax.f32 %v10471, 0.0
  %v10536 = vmax.f32 %v10472, 0.0
  %v10537 = vmax.f32 %v10473, 0.0
  %v10538 = vmax.f32 %v10474, 0.0
  %v10539 = vmax.f32 %v10475, 0.0
  %v10540 = vmax.f32 %v10476, 0.0
  %v10541 = vmax.f32 %v10477, 0.0
  %v10542 = vmax.f32 %v10478, 0.0
  %v10543 = vmax.f32 %v10479, 0.0
  %v10544 = vmax.f32 %v10480, 0.0
  %v10545 = vmax.f32 %v10481, 0.0
  %v10546 = vmax.f32 %v10482, 0.0
  %v10547 = vmax.f32 %v10483, 0.0
  %v10548 = vmax.f32 %v10484, 0.0
  %v10549 = vmax.f32 %v10485, 0.0
  %v10550 = vmax.f32 %v10486, 0.0
  %v10551 = vmax.f32 %v10487, 0.0
  %v10552 = vmax.f32 %v10488, 0.0
  %v10553 = vmax.f32 %v10489, 0.0
  %v10554 = vmax.f32 %v10490, 0.0
  %v10555 = vmax.f32 %v10491, 0.0
  %v10556 = vmax.f32 %v10492, 0.0
  %v10557 = vmax.f32 %v10493, 0.0
  %v10558 = vmax.f32 %v10494, 0.0
  %v10559 = vmax.f32 %v10495, 0.0
  %v10560 = vmax.f32 %v10496, 0.0
  %v10561 = vmax.f32 %v10497, 0.0
  %v10562 = vmax.f32 %v10498, 0.0
  %v10563 = vmax.f32 %v10499, 0.0
  %v10564 = vmax.f32 %v10500, 0.0
  %v10565 = vmax.f32 %v10501, 0.0
  %v10566 = vmax.f32 %v10502, 0.0
  %v10567 = vmax.f32 %v10503, 0.0
  %v10568 = vmax.f32 %v10504, 0.0
  %v10569 = vmax.f32 %v10505, 0.0
  %v10570 = vmax.f32 %v10506, 0.0
  %v10571 = vmax.f32 %v10507, 0.0
  %v10572 = vmax.f32 %v10508, 0.0
  %v10573 = vmax.f32 %v10509, 0.0
  %v10574 = vmax.f32 %v10510, 0.0
  %v10575 = vmax.f32 %v10511, 0.0
  %v10576 = vmax.f32 %v10512, 0.0
  %v10577 = vmax.f32 %v10513, 0.0
  %v10578 = vmax.f32 %v10514, 0.0
  %v10579 = vmax.f32 %v10515, 0.0
  %v10580 = vmax.f32 %v10516, 0.0
  %v10581 = vadd.f32 %v10517, %v10518
  %v10582 = vadd.f32 %v10581, %v10519
  %v10583 = vadd.f32 %v10582, %v10520
  %v10584 = vadd.f32 %v10583, %v10521
  %v10585 = vadd.f32 %v10584, %v10522
  %v10586 = vadd.f32 %v10585, %v10523
  %v10587 = vadd.f32 %v10586, %v10524
  %v10588 = vrot.slane %v10587, 4
  %v10589 = vadd.f32 %v10587, %v10588
  %v10590 = vrot.slane %v10589, 2
  %v10591 = vadd.f32 %v10589, %v10590
  %v10592 = vrot.slane %v10591, 1
  %v10593 = vadd.f32 %v10591, %v10592
  %v10594 = vadd.f32 %v10525, %v10526
  %v10595 = vadd.f32 %v10594, %v10527
  %v10596 = vadd.f32 %v10595, %v10528
  %v10597 = vadd.f32 %v10596, %v10529
  %v10598 = vadd.f32 %v10597, %v10530
  %v10599 = vadd.f32 %v10598, %v10531
  %v10600 = vadd.f32 %v10599, %v10532
  %v10601 = vrot.slane %v10600, 4
  %v10602 = vadd.f32 %v10600, %v10601
  %v10603 = vrot.slane %v10602, 2
  %v10604 = vadd.f32 %v10602, %v10603
  %v10605 = vrot.slane %v10604, 1
  %v10606 = vadd.f32 %v10604, %v10605
  %v10607 = vadd.f32 %v10533, %v10534
  %v10608 = vadd.f32 %v10607, %v10535
  %v10609 = vadd.f32 %v10608, %v10536
  %v10610 = vadd.f32 %v10609, %v10537
  %v10611 = vadd.f32 %v10610, %v10538
  %v10612 = vadd.f32 %v10611, %v10539
  %v10613 = vadd.f32 %v10612, %v10540
  %v10614 = vrot.slane %v10613, 4
  %v10615 = vadd.f32 %v10613, %v10614
  %v10616 = vrot.slane %v10615, 2
  %v10617 = vadd.f32 %v10615, %v10616
  %v10618 = vrot.slane %v10617, 1
  %v10619 = vadd.f32 %v10617, %v10618
  %v10620 = vadd.f32 %v10541, %v10542
  %v10621 = vadd.f32 %v10620, %v10543
  %v10622 = vadd.f32 %v10621, %v10544
  %v10623 = vadd.f32 %v10622, %v10545
  %v10624 = vadd.f32 %v10623, %v10546
  %v10625 = vadd.f32 %v10624, %v10547
  %v10626 = vadd.f32 %v10625, %v10548
  %v10627 = vrot.slane %v10626, 4
  %v10628 = vadd.f32 %v10626, %v10627
  %v10629 = vrot.slane %v10628, 2
  %v10630 = vadd.f32 %v10628, %v10629
  %v10631 = vrot.slane %v10630, 1
  %v10632 = vadd.f32 %v10630, %v10631
  %v10633 = vadd.f32 %v10549, %v10550
  %v10634 = vadd.f32 %v10633, %v10551
  %v10635 = vadd.f32 %v10634, %v10552
  %v10636 = vadd.f32 %v10635, %v10553
  %v10637 = vadd.f32 %v10636, %v10554
  %v10638 = vadd.f32 %v10637, %v10555
  %v10639 = vadd.f32 %v10638, %v10556
  %v10640 = vrot.slane %v10639, 4
  %v10641 = vadd.f32 %v10639, %v10640
  %v10642 = vrot.slane %v10641, 2
  %v10643 = vadd.f32 %v10641, %v10642
  %v10644 = vrot.slane %v10643, 1
  %v10645 = vadd.f32 %v10643, %v10644
  %v10646 = vadd.f32 %v10557, %v10558
  %v10647 = vadd.f32 %v10646, %v10559
  %v10648 = vadd.f32 %v10647, %v10560
  %v10649 = vadd.f32 %v10648, %v10561
  %v10650 = vadd.f32 %v10649, %v10562
  %v10651 = vadd.f32 %v10650, %v10563
  %v10652 = vadd.f32 %v10651, %v10564
  %v10653 = vrot.slane %v10652, 4
  %v10654 = vadd.f32 %v10652, %v10653
  %v10655 = vrot.slane %v10654, 2
  %v10656 = vadd.f32 %v10654, %v10655
  %v10657 = vrot.slane %v10656, 1
  %v10658 = vadd.f32 %v10656, %v10657
  %v10659 = vadd.f32 %v10565, %v10566
  %v10660 = vadd.f32 %v10659, %v10567
  %v10661 = vadd.f32 %v10660, %v10568
  %v10662 = vadd.f32 %v10661, %v10569
  %v10663 = vadd.f32 %v10662, %v10570
  %v10664 = vadd.f32 %v10663, %v10571
  %v10665 = vadd.f32 %v10664, %v10572
  %v10666 = vrot.slane %v10665, 4
  %v10667 = vadd.f32 %v10665, %v10666
  %v10668 = vrot.slane %v10667, 2
  %v10669 = vadd.f32 %v10667, %v10668
  %v10670 = vrot.slane %v10669, 1
  %v10671 = vadd.f32 %v10669, %v10670
  %v10672 = vadd.f32 %v10573, %v10574
  %v10673 = vadd.f32 %v10672, %v10575
  %v10674 = vadd.f32 %v10673, %v10576
  %v10675 = vadd.f32 %v10674, %v10577
  %v10676 = vadd.f32 %v10675, %v10578
  %v10677 = vadd.f32 %v10676, %v10579
  %v10678 = vadd.f32 %v10677, %v10580
  %v10679 = vrot.slane %v10678, 4
  %v10680 = vadd.f32 %v10678, %v10679
  %v10681 = vrot.slane %v10680, 2
  %v10682 = vadd.f32 %v10680, %v10681
  %v10683 = vrot.slane %v10682, 1
  %v10684 = vadd.f32 %v10682, %v10683
  %v10685 = vrcp.pop 64.0
  %v10686 = vmul.f32 %v10593, %v10685
  %v10687 = vmul.f32 %v10606, %v10685
  %v10688 = vmul.f32 %v10619, %v10685
  %v10689 = vmul.f32 %v10632, %v10685
  %v10690 = vmul.f32 %v10645, %v10685
  %v10691 = vmul.f32 %v10658, %v10685
  %v10692 = vmul.f32 %v10671, %v10685
  %v10693 = vmul.f32 %v10684, %v10685
  %vm10702 = vcmask 1041409
  %v10703 = vsel %vm10702, %v10687, %v10686
  %vm10704 = vcmask 1042434
  %v10705 = vsel %vm10704, %v10688, %v10703
  %vm10706 = vcmask 1043459
  %v10707 = vsel %vm10706, %v10689, %v10705
  %vm10708 = vcmask 1044484
  %v10709 = vsel %vm10708, %v10690, %v10707
  %vm10710 = vcmask 1045509
  %v10711 = vsel %vm10710, %v10691, %v10709
  %vm10712 = vcmask 1046534
  %v10713 = vsel %vm10712, %v10692, %v10711
  %vm10714 = vcmask 1047559
  %v10715 = vsel %vm10714, %v10693, %v10713
  %10717 = vst [vmem:[%s4] sm:$0xff] %v10715
  // Predicated region
  $region18: #{_fcn_encoder_forward_jit.1} parent=0 // pred_check
    _
  $region19: #{_fcn_encoder_forward_jit.1} parent=0 // pred_check_branch
    %10719 = sbr.rel (0) target = $region21
  $region20: #{_fcn_encoder_forward_jit.1} parent=0 // pred_region
    _
  $region21: #{_fcn_encoder_forward_jit.1} parent=0 // pred_fallthru
    _
  // Predicated region
  $region22: #{_fcn_encoder_forward_jit.1} parent=0 // pred_check
    _
  $region23: #{_fcn_encoder_forward_jit.1} parent=0 // pred_check_branch
    %10721 = sbr.rel (0) target = $region25
  $region24: #{_fcn_encoder_forward_jit.1} parent=0 // pred_region
    _
  $region25: #{_fcn_encoder_forward_jit.1} parent=0 // pred_fallthru
    _

</llo_original>
